<compile_context>
chip_gen: v7x
topology: tpu7x:2x2x1
jax: 0.10.0
libtpu: 0.0.40
codegen_flags: <defaults>
</compile_context>

<pallas_src>
import functools

import jax
import jax.numpy as jnp
from jax.experimental import pallas as pl
from jax.experimental.pallas import tpu as pltpu

LANE = 128
W_OFF = 16  # interior column offset in scratch (aligned for f32(8) and bf16(16) sublanes)


def _round_up(x, m):
    return ((x + m - 1) // m) * m


# --------------------------------------------------------------------------
# Fused kernel: all conv layers in one pallas_call, activations in VMEM.
# --------------------------------------------------------------------------
def _make_kernel(layer_channels, H, W, B_tile, K_pad, C_out_pad, c_act):
    """layer_channels: static tuple of (c_in, c_out) per layer."""
    L = len(layer_channels)
    W_s = W_OFF + W + 8  # scratch width: left halo block + interior + right halo block

    def kernel(x_ref, w_ref, b_ref, o_ref, ping_ref, pong_ref):
        bufs = (ping_ref, pong_ref)

        # ---- zero ONLY the 1-pixel halo ring (per step; megacore-safe). ----
        # Interior lanes/rows are always fully written before being read, and
        # taps slice to the real channel count, so no other init is needed.
        for buf in bufs[: (2 if L > 1 else 1)]:
            buf[:, :, 0:W_OFF, :] = jnp.zeros((B_tile, H + 2, W_OFF, c_act), jnp.bfloat16)
            buf[:, :, W_OFF + W:W_s, :] = jnp.zeros(
                (B_tile, H + 2, W_s - (W_OFF + W), c_act), jnp.bfloat16)
            buf[:, 0:1, W_OFF:W_OFF + W, :] = jnp.zeros((B_tile, 1, W, c_act), jnp.bfloat16)
            buf[:, H + 1:H + 2, W_OFF:W_OFF + W, :] = jnp.zeros((B_tile, 1, W, c_act), jnp.bfloat16)

        # Real input channels into ping's interior (cast to bf16 for the MXU).
        c0 = layer_channels[0][0]
        ping_ref[:, 1:H + 1, W_OFF:W_OFF + W, :c0] = x_ref[...].astype(jnp.bfloat16)

        for layer, (c_in, c_out) in enumerate(layer_channels):  # static Python loop
            src = bufs[layer % 2]

            # 3 dx-shifted (sublane) views built once per layer; dy slices on
            # the untiled H axis are free.
            dxv = [src[:, :, W_OFF - 1 + dx: W_OFF - 1 + dx + W, :c_in] for dx in range(3)]
            taps = [dxv[dx][:, dy:dy + H] for dy in range(3) for dx in range(3)]

            # Dense im2col: K = 9*c_in real columns, zero-padded once to K_pad.
            # (The matching weight rows beyond 9*c_in are zero.)
            k_real = 9 * c_in
            if k_real < K_pad:
                taps = taps + [jnp.zeros((B_tile, H, W, K_pad - k_real), jnp.bfloat16)]
            patches = jnp.concatenate(taps, axis=-1).reshape(B_tile * H * W, K_pad)

            # One MXU matmul per layer: bf16 x bf16 -> f32 accumulate.
            y = jnp.dot(patches, w_ref[layer], preferred_element_type=jnp.float32)

            if layer < L - 1:
                ys = y[:, :c_out] + b_ref[layer][:, :c_out]       # f32 epilogue
                ys = jnp.maximum(ys, 0.0).astype(jnp.bfloat16)    # hidden: ReLU
                dst = bufs[(layer + 1) % 2]
                dst[:, 1:H + 1, W_OFF:W_OFF + W, :c_out] = ys.reshape(B_tile, H, W, c_out)
            else:
                # Output layer: padded lanes are exactly 0 (zero weight cols /
                # bias), so we can write all C_out_pad lanes (lane-dense store)
                # and slice in the wrapper.
                yo = jnp.clip(y + b_ref[layer], 0.0, 255.0)
                o_ref[...] = yo.reshape(B_tile, H, W, C_out_pad).astype(o_ref.dtype)

    return kernel, W_s


def fused_convnet(x_nhwc, w_all, b_all, layer_channels, *, b_tile=None):
    """One pallas_call over the whole layer stack; grid over batch tiles."""
    N, H, W, C0 = x_nhwc.shape
    L, K_pad, C_out_pad = w_all.shape
    assert L == len(layer_channels) and layer_channels[0][0] == C0
    c_act = max(ci for ci, _ in layer_channels)   # widest activation stored in scratch

    if b_tile is None:
        # Batch images per step so M = b_tile*H*W ~ a few thousand rows.
        target = min(N, max(1, 4096 // (H * W)))
        b_tile = 1
        for cand in range(target, 0, -1):
            if N % cand == 0:
                b_tile = cand
                break

    kernel, W_s = _make_kernel(tuple(layer_channels), H, W, b_tile, K_pad, C_out_pad, c_act)

    return pl.pallas_call(
        kernel,
        out_shape=jax.ShapeDtypeStruct((N, H, W, C_out_pad), jnp.float32),
        grid_spec=pltpu.PrefetchScalarGridSpec(
            num_scalar_prefetch=0,
            grid=(N // b_tile,),
            in_specs=[
                pl.BlockSpec((b_tile, H, W, C0), lambda n: (n, 0, 0, 0)),
                # Weights/bias: constant block index -> fetched once, resident.
                pl.BlockSpec((L, K_pad, C_out_pad), lambda n: (0, 0, 0)),
                pl.BlockSpec((L, 1, C_out_pad), lambda n: (0, 0, 0)),
            ],
            out_specs=pl.BlockSpec((b_tile, H, W, C_out_pad), lambda n: (n, 0, 0, 0)),
            scratch_shapes=[
                pltpu.VMEM((b_tile, H + 2, W_s, c_act), jnp.bfloat16),
                pltpu.VMEM((b_tile, H + 2, W_s, c_act), jnp.bfloat16),
            ],
        ),
        compiler_params=pltpu.CompilerParams(
            dimension_semantics=("parallel",)),
    )(x_nhwc, w_all, b_all)


# --------------------------------------------------------------------------
# Parameter handling (PyTorch OIHW layout -> packed MXU-ready layout, once).
# --------------------------------------------------------------------------
def init_params(key, n_input_channels, n_hidden_layers, n_hidden_kernels,
                n_output_channels):
    """Deterministic parameter init; shapes match the PyTorch module (OIHW)."""
    params = []
    c_in = n_input_channels
    for _ in range(n_hidden_layers):
        key, kw, kb = jax.random.split(key, 3)
        w = 0.1 * jax.random.normal(kw, (n_hidden_kernels, c_in, 3, 3), dtype=jnp.float32)
        b = 0.1 * jax.random.normal(kb, (n_hidden_kernels,), dtype=jnp.float32)
        params.append((w, b))
        c_in = n_hidden_kernels
    key, kw, kb = jax.random.split(key, 3)
    w = 0.1 * jax.random.normal(kw, (n_output_channels, c_in, 3, 3), dtype=jnp.float32)
    b = 0.1 * jax.random.normal(kb, (n_output_channels,), dtype=jnp.float32)
    params.append((w, b))
    return params


def prepare_params(params, n_input_channels):
    """One-time OIHW -> dense im2col packing (bf16 weights for the MXU).

    Returns:
      (w_all, b_all): w_all (L, K_pad, C_out_pad) bf16, rows ordered
                      (dy, dx, cin) with zero padding; b_all (L, 1, C_out_pad) f32.
      layer_channels: tuple of (c_in, c_out) per layer (static metadata).
    """
    layer_channels = []
    c_in = n_input_channels
    for w, _ in params:
        assert w.shape[1] == c_in and w.shape[2:] == (3, 3)
        layer_channels.append((c_in, int(w.shape[0])))
        c_in = int(w.shape[0])

    k_pad = _round_up(max(9 * ci for ci, _ in layer_channels), LANE)
    c_out_pad = _round_up(max(co for _, co in layer_channels), LANE)

    w_list, b_list = [], []
    for (ci, co), (w_oihw, b) in zip(layer_channels, params):
        w_packed = jnp.transpose(w_oihw, (2, 3, 1, 0)).reshape(9 * ci, co)   # (dy,dx,cin) x cout
        w_pad = jnp.zeros((k_pad, c_out_pad), jnp.float32).at[:9 * ci, :co].set(w_packed)
        w_list.append(w_pad)
        b_list.append(jnp.zeros((1, c_out_pad), jnp.float32).at[0, :co].set(b))

    w_all = jnp.stack(w_list, axis=0).astype(jnp.bfloat16)
    b_all = jnp.stack(b_list, axis=0)                       # bias stays f32
    return (w_all, b_all), tuple(layer_channels)


# --------------------------------------------------------------------------
# Forward pass (PyTorch semantics: NCHW in / NCHW out).
# --------------------------------------------------------------------------
@functools.partial(jax.jit, static_argnames=("layer_channels", "n_output_channels"))
def image_pixel_predictor(prepared_params, input_arr, known_arr, *,
                          layer_channels, n_output_channels):
    w_all, b_all = prepared_params
    x_nchw = jnp.concatenate((input_arr, known_arr), axis=1)
    x_nhwc = jnp.transpose(x_nchw, (0, 2, 3, 1)).astype(jnp.float32)
    out_pad = fused_convnet(x_nhwc, w_all, b_all, layer_channels)   # (N, H, W, C_out_pad)
    out_nhwc = out_pad[..., :n_output_channels]                     # slice lane-dense output
    return jnp.transpose(out_nhwc, (0, 3, 1, 2))


# --------------------------------------------------------------------------
# References for correctness checks.
# --------------------------------------------------------------------------
def _reference_forward_f32(params, input_arr, known_arr):
    """Full-f32 XLA reference with PyTorch semantics."""
    x = jnp.concatenate((input_arr, known_arr), axis=1)
    n_layers = len(params)
    for i, (w, b) in enumerate(params):
        x = jax.lax.conv_general_dilated(
            x, w, window_strides=(1, 1), padding="SAME",
            dimension_numbers=("NCHW", "OIHW", "NCHW"))
        x = x + b[None, :, None, None]
        x = jnp.maximum(x, 0.0) if i < n_layers - 1 else jnp.clip(x, 0.0, 255.0)
    return x


def _reference_forward_bf16(params, input_arr, known_arr):
    """Numerics-matched reference: bf16 matmul operands, f32 accumulate/epilogue."""
    x = jnp.concatenate((input_arr, known_arr), axis=1)
    n_layers = len(params)
    for i, (w, b) in enumerate(params):
        y = jax.lax.conv_general_dilated(
            x.astype(jnp.bfloat16), w.astype(jnp.bfloat16),
            window_strides=(1, 1), padding="SAME",
            dimension_numbers=("NCHW", "OIHW", "NCHW"),
            preferred_element_type=jnp.float32)
        y = y + b[None, :, None, None]
        x = jnp.maximum(y, 0.0) if i < n_layers - 1 else jnp.clip(y, 0.0, 255.0)
    return x


if __name__ == "__main__":
    # batch=2, input channels=2 + known channels=2 -> 4 concat channels,
    # spatial 16x16, 2 hidden layers of 8 kernels, 3 output channels.
    N, C_IN, C_KNOWN, H, W = 2, 2, 2, 16, 16
    N_HIDDEN_LAYERS, N_HIDDEN_KERNELS, N_OUT = 2, 8, 3

    key = jax.random.PRNGKey(0)
    k_params, k_in, k_known = jax.random.split(key, 3)

    params = init_params(k_params,
                         n_input_channels=C_IN + C_KNOWN,
                         n_hidden_layers=N_HIDDEN_LAYERS,
                         n_hidden_kernels=N_HIDDEN_KERNELS,
                         n_output_channels=N_OUT)
    prepared, layer_channels = prepare_params(params, n_input_channels=C_IN + C_KNOWN)

    input_arr = jax.random.uniform(k_in, (N, C_IN, H, W), dtype=jnp.float32) * 255.0
    known_arr = (jax.random.uniform(k_known, (N, C_KNOWN, H, W),
                                    dtype=jnp.float32) > 0.5).astype(jnp.float32)

    out = image_pixel_predictor(prepared, input_arr, known_arr,
                                layer_channels=layer_channels,
                                n_output_channels=N_OUT)
    out = jax.block_until_ready(out)

    assert out.shape == (N, N_OUT, H, W), out.shape
    assert bool(jnp.all(out >= 0.0)) and bool(jnp.all(out <= 255.0))

    # Tight structural check vs. the numerics-matched (bf16-operand, f32-acc)
    # reference: only f32 summation-order differences remain, so any tap-order
    # or weight-transpose bug would fail this.
    ref_bf16 = jax.block_until_ready(_reference_forward_bf16(params, input_arr, known_arr))
    err_matched = float(jnp.max(jnp.abs(out - ref_bf16)))
    assert err_matched < 0.2, f"mismatch vs bf16-matched reference: {err_matched}"

    # Sanity check vs. the full-f32 reference; bound = bf16 quantization budget
    # on a 0..255 scale (inputs up to 255 -> ~0.5 abs quantization per operand,
    # propagated through 3 layers).
    ref_f32 = jax.block_until_ready(_reference_forward_f32(params, input_arr, known_arr))
    err_f32 = float(jnp.max(jnp.abs(out - ref_f32)))
    assert err_f32 < 10.0, f"bf16 error vs f32 reference too large: {err_f32}"

    print("KERNEL_OK")
</pallas_src>

<mosaic_0001>
module attributes {stable_mosaic.version = 11 : i64} {
  func.func @kernel(%arg0: i32, %arg1: memref<2x16x16x4xf32, #tpu.memory_space<vmem>>, %arg2: memref<3x128x128xbf16, #tpu.memory_space<vmem>>, %arg3: memref<3x1x128xf32, #tpu.memory_space<vmem>>, %arg4: memref<2x16x16x128xf32, #tpu.memory_space<vmem>>, %arg5: memref<2x18x40x8xbf16, #tpu.memory_space<vmem>>, %arg6: memref<2x18x40x8xbf16, #tpu.memory_space<vmem>>) attributes {dimension_semantics = [#tpu.dimension_semantics<parallel>], iteration_bounds = array<i64: 1>, scalar_prefetch = 0 : i64, scratch_operands = 2 : i64, tpu.core_type = #tpu.core_type<tc>, window_params = [{transform_indices = @transform_0, window_bounds = array<i64: 2, 16, 16, 4>}, {pipeline_mode = #tpu.pipeline_mode<synchronous>, transform_indices = @transform_1, window_bounds = array<i64: 3, 128, 128>}, {pipeline_mode = #tpu.pipeline_mode<synchronous>, transform_indices = @transform_2, window_bounds = array<i64: 3, 1, 128>}, {transform_indices = @transform_3, window_bounds = array<i64: 2, 16, 16, 128>}]} {
    %cst = arith.constant 0.000000e+00 : bf16
    %0 = vector.broadcast %cst : bf16 to vector<2x18x16x8xbf16>
    %c0 = arith.constant 0 : index
    %c0_0 = arith.constant 0 : index
    %c0_1 = arith.constant 0 : index
    %c0_2 = arith.constant 0 : index
    %1 = vector.load %arg5[%c0, %c0_0, %c0_1, %c0_2] : memref<2x18x40x8xbf16, #tpu.memory_space<vmem>>, vector<2x18x16x8xbf16>
    tpu.vector_store %arg5[%c0, %c0_0, %c0_1, %c0_2], %0 {strides = array<i32>} : memref<2x18x40x8xbf16, #tpu.memory_space<vmem>>, vector<2x18x16x8xbf16>,
    %cst_3 = arith.constant 0.000000e+00 : bf16
    %2 = vector.broadcast %cst_3 : bf16 to vector<2x18x8x8xbf16>
    %c0_4 = arith.constant 0 : index
    %c0_5 = arith.constant 0 : index
    %c32 = arith.constant 32 : index
    %c0_6 = arith.constant 0 : index
    %3 = vector.load %arg5[%c0_4, %c0_5, %c32, %c0_6] : memref<2x18x40x8xbf16, #tpu.memory_space<vmem>>, vector<2x18x8x8xbf16>
    tpu.vector_store %arg5[%c0_4, %c0_5, %c32, %c0_6], %2 {strides = array<i32>} : memref<2x18x40x8xbf16, #tpu.memory_space<vmem>>, vector<2x18x8x8xbf16>,
    %cst_7 = arith.constant 0.000000e+00 : bf16
    %4 = vector.broadcast %cst_7 : bf16 to vector<2x1x16x8xbf16>
    %c0_8 = arith.constant 0 : index
    %c0_9 = arith.constant 0 : index
    %c16 = arith.constant 16 : index
    %c0_10 = arith.constant 0 : index
    %5 = vector.load %arg5[%c0_8, %c0_9, %c16, %c0_10] : memref<2x18x40x8xbf16, #tpu.memory_space<vmem>>, vector<2x1x16x8xbf16>
    tpu.vector_store %arg5[%c0_8, %c0_9, %c16, %c0_10], %4 {strides = array<i32>} : memref<2x18x40x8xbf16, #tpu.memory_space<vmem>>, vector<2x1x16x8xbf16>,
    %cst_11 = arith.constant 0.000000e+00 : bf16
    %6 = vector.broadcast %cst_11 : bf16 to vector<2x1x16x8xbf16>
    %c0_12 = arith.constant 0 : index
    %c17 = arith.constant 17 : index
    %c16_13 = arith.constant 16 : index
    %c0_14 = arith.constant 0 : index
    %7 = vector.load %arg5[%c0_12, %c17, %c16_13, %c0_14] : memref<2x18x40x8xbf16, #tpu.memory_space<vmem>>, vector<2x1x16x8xbf16>
    tpu.vector_store %arg5[%c0_12, %c17, %c16_13, %c0_14], %6 {strides = array<i32>} : memref<2x18x40x8xbf16, #tpu.memory_space<vmem>>, vector<2x1x16x8xbf16>,
    %cst_15 = arith.constant 0.000000e+00 : bf16
    %8 = vector.broadcast %cst_15 : bf16 to vector<2x18x16x8xbf16>
    %c0_16 = arith.constant 0 : index
    %c0_17 = arith.constant 0 : index
    %c0_18 = arith.constant 0 : index
    %c0_19 = arith.constant 0 : index
    %9 = vector.load %arg6[%c0_16, %c0_17, %c0_18, %c0_19] : memref<2x18x40x8xbf16, #tpu.memory_space<vmem>>, vector<2x18x16x8xbf16>
    tpu.vector_store %arg6[%c0_16, %c0_17, %c0_18, %c0_19], %8 {strides = array<i32>} : memref<2x18x40x8xbf16, #tpu.memory_space<vmem>>, vector<2x18x16x8xbf16>,
    %cst_20 = arith.constant 0.000000e+00 : bf16
    %10 = vector.broadcast %cst_20 : bf16 to vector<2x18x8x8xbf16>
    %c0_21 = arith.constant 0 : index
    %c0_22 = arith.constant 0 : index
    %c32_23 = arith.constant 32 : index
    %c0_24 = arith.constant 0 : index
    %11 = vector.load %arg6[%c0_21, %c0_22, %c32_23, %c0_24] : memref<2x18x40x8xbf16, #tpu.memory_space<vmem>>, vector<2x18x8x8xbf16>
    tpu.vector_store %arg6[%c0_21, %c0_22, %c32_23, %c0_24], %10 {strides = array<i32>} : memref<2x18x40x8xbf16, #tpu.memory_space<vmem>>, vector<2x18x8x8xbf16>,
    %cst_25 = arith.constant 0.000000e+00 : bf16
    %12 = vector.broadcast %cst_25 : bf16 to vector<2x1x16x8xbf16>
    %c0_26 = arith.constant 0 : index
    %c0_27 = arith.constant 0 : index
    %c16_28 = arith.constant 16 : index
    %c0_29 = arith.constant 0 : index
    %13 = vector.load %arg6[%c0_26, %c0_27, %c16_28, %c0_29] : memref<2x18x40x8xbf16, #tpu.memory_space<vmem>>, vector<2x1x16x8xbf16>
    tpu.vector_store %arg6[%c0_26, %c0_27, %c16_28, %c0_29], %12 {strides = array<i32>} : memref<2x18x40x8xbf16, #tpu.memory_space<vmem>>, vector<2x1x16x8xbf16>,
    %cst_30 = arith.constant 0.000000e+00 : bf16
    %14 = vector.broadcast %cst_30 : bf16 to vector<2x1x16x8xbf16>
    %c0_31 = arith.constant 0 : index
    %c17_32 = arith.constant 17 : index
    %c16_33 = arith.constant 16 : index
    %c0_34 = arith.constant 0 : index
    %15 = vector.load %arg6[%c0_31, %c17_32, %c16_33, %c0_34] : memref<2x18x40x8xbf16, #tpu.memory_space<vmem>>, vector<2x1x16x8xbf16>
    tpu.vector_store %arg6[%c0_31, %c17_32, %c16_33, %c0_34], %14 {strides = array<i32>} : memref<2x18x40x8xbf16, #tpu.memory_space<vmem>>, vector<2x1x16x8xbf16>,
    %c0_35 = arith.constant 0 : index
    %c0_36 = arith.constant 0 : index
    %c0_37 = arith.constant 0 : index
    %c0_38 = arith.constant 0 : index
    %16 = vector.load %arg1[%c0_35, %c0_36, %c0_37, %c0_38] : memref<2x16x16x4xf32, #tpu.memory_space<vmem>>, vector<2x16x16x4xf32>
    %17 = arith.truncf %16 : vector<2x16x16x4xf32> to vector<2x16x16x4xbf16>
    %c0_39 = arith.constant 0 : index
    %c1 = arith.constant 1 : index
    %c16_40 = arith.constant 16 : index
    %c0_41 = arith.constant 0 : index
    %18 = vector.load %arg5[%c0_39, %c1, %c16_40, %c0_41] : memref<2x18x40x8xbf16, #tpu.memory_space<vmem>>, vector<2x16x16x4xbf16>
    tpu.vector_store %arg5[%c0_39, %c1, %c16_40, %c0_41], %17 {strides = array<i32>} : memref<2x18x40x8xbf16, #tpu.memory_space<vmem>>, vector<2x16x16x4xbf16>,
    %c0_42 = arith.constant 0 : index
    %c0_43 = arith.constant 0 : index
    %c15 = arith.constant 15 : index
    %c0_44 = arith.constant 0 : index
    %19 = vector.load %arg5[%c0_42, %c0_43, %c15, %c0_44] : memref<2x18x40x8xbf16, #tpu.memory_space<vmem>>, vector<2x18x16x4xbf16>
    %c0_45 = arith.constant 0 : index
    %c0_46 = arith.constant 0 : index
    %c16_47 = arith.constant 16 : index
    %c0_48 = arith.constant 0 : index
    %20 = vector.load %arg5[%c0_45, %c0_46, %c16_47, %c0_48] : memref<2x18x40x8xbf16, #tpu.memory_space<vmem>>, vector<2x18x16x4xbf16>
    %c0_49 = arith.constant 0 : index
    %c0_50 = arith.constant 0 : index
    %c17_51 = arith.constant 17 : index
    %c0_52 = arith.constant 0 : index
    %21 = vector.load %arg5[%c0_49, %c0_50, %c17_51, %c0_52] : memref<2x18x40x8xbf16, #tpu.memory_space<vmem>>, vector<2x18x16x4xbf16>
    %22 = vector.extract_strided_slice %19 {offsets = [0, 0, 0, 0], sizes = [2, 16, 16, 4], strides = [1, 1, 1, 1]} : vector<2x18x16x4xbf16> to vector<2x16x16x4xbf16>
    %23 = vector.extract_strided_slice %20 {offsets = [0, 0, 0, 0], sizes = [2, 16, 16, 4], strides = [1, 1, 1, 1]} : vector<2x18x16x4xbf16> to vector<2x16x16x4xbf16>
    %24 = vector.extract_strided_slice %21 {offsets = [0, 0, 0, 0], sizes = [2, 16, 16, 4], strides = [1, 1, 1, 1]} : vector<2x18x16x4xbf16> to vector<2x16x16x4xbf16>
    %25 = vector.extract_strided_slice %19 {offsets = [0, 1, 0, 0], sizes = [2, 16, 16, 4], strides = [1, 1, 1, 1]} : vector<2x18x16x4xbf16> to vector<2x16x16x4xbf16>
    %26 = vector.extract_strided_slice %20 {offsets = [0, 1, 0, 0], sizes = [2, 16, 16, 4], strides = [1, 1, 1, 1]} : vector<2x18x16x4xbf16> to vector<2x16x16x4xbf16>
    %27 = vector.extract_strided_slice %21 {offsets = [0, 1, 0, 0], sizes = [2, 16, 16, 4], strides = [1, 1, 1, 1]} : vector<2x18x16x4xbf16> to vector<2x16x16x4xbf16>
    %28 = vector.extract_strided_slice %19 {offsets = [0, 2, 0, 0], sizes = [2, 16, 16, 4], strides = [1, 1, 1, 1]} : vector<2x18x16x4xbf16> to vector<2x16x16x4xbf16>
    %29 = vector.extract_strided_slice %20 {offsets = [0, 2, 0, 0], sizes = [2, 16, 16, 4], strides = [1, 1, 1, 1]} : vector<2x18x16x4xbf16> to vector<2x16x16x4xbf16>
    %30 = vector.extract_strided_slice %21 {offsets = [0, 2, 0, 0], sizes = [2, 16, 16, 4], strides = [1, 1, 1, 1]} : vector<2x18x16x4xbf16> to vector<2x16x16x4xbf16>
    %cst_53 = arith.constant 0.000000e+00 : bf16
    %31 = vector.broadcast %cst_53 : bf16 to vector<2x16x16x92xbf16>
    %32 = tpu.concatenate %22, %23, %24, %25, %26, %27, %28, %29, %30, %31 in 3 : vector<2x16x16x4xbf16>, vector<2x16x16x4xbf16>, vector<2x16x16x4xbf16>, vector<2x16x16x4xbf16>, vector<2x16x16x4xbf16>, vector<2x16x16x4xbf16>, vector<2x16x16x4xbf16>, vector<2x16x16x4xbf16>, vector<2x16x16x4xbf16>, vector<2x16x16x92xbf16> -> vector<2x16x16x128xbf16>
    %33 = vector.shape_cast %32 : vector<2x16x16x128xbf16> to vector<512x128xbf16>
    %c0_54 = arith.constant 0 : index
    %c0_55 = arith.constant 0 : index
    %c0_56 = arith.constant 0 : index
    %34 = vector.load %arg2[%c0_54, %c0_55, %c0_56] : memref<3x128x128xbf16, #tpu.memory_space<vmem>>, vector<1x128x128xbf16>
    %35 = vector.shape_cast %34 : vector<1x128x128xbf16> to vector<128x128xbf16>
    %cst_57 = arith.constant dense<0.000000e+00> : vector<512x128xf32>
    %36 = tpu.matmul %33, %35, %cst_57 {dimension_numbers = #tpu.dot_dimension_numbers<[1], [0], [0], [1], [0, 0, 1, 1], [], []>} : vector<512x128xbf16>, vector<128x128xbf16>, vector<512x128xf32> -> vector<512x128xf32>
    %37 = vector.extract_strided_slice %36 {offsets = [0, 0], sizes = [512, 8], strides = [1, 1]} : vector<512x128xf32> to vector<512x8xf32>
    %c0_58 = arith.constant 0 : index
    %c0_59 = arith.constant 0 : index
    %c0_60 = arith.constant 0 : index
    %38 = vector.load %arg3[%c0_58, %c0_59, %c0_60] : memref<3x1x128xf32, #tpu.memory_space<vmem>>, vector<1x1x128xf32>
    %39 = vector.shape_cast %38 : vector<1x1x128xf32> to vector<1x128xf32>
    %40 = vector.extract_strided_slice %39 {offsets = [0, 0], sizes = [1, 8], strides = [1, 1]} : vector<1x128xf32> to vector<1x8xf32>
    %41 = vector.broadcast %40 : vector<1x8xf32> to vector<512x8xf32>
    %42 = arith.addf %37, %41 : vector<512x8xf32>
    %cst_61 = arith.constant 0.000000e+00 : f32
    %43 = vector.broadcast %cst_61 : f32 to vector<512x8xf32>
    %44 = arith.maximumf %42, %43 : vector<512x8xf32>
    %45 = arith.truncf %44 : vector<512x8xf32> to vector<512x8xbf16>
    %46 = vector.shape_cast %45 : vector<512x8xbf16> to vector<2x16x16x8xbf16>
    %c0_62 = arith.constant 0 : index
    %c1_63 = arith.constant 1 : index
    %c16_64 = arith.constant 16 : index
    %c0_65 = arith.constant 0 : index
    %47 = vector.load %arg6[%c0_62, %c1_63, %c16_64, %c0_65] : memref<2x18x40x8xbf16, #tpu.memory_space<vmem>>, vector<2x16x16x8xbf16>
    tpu.vector_store %arg6[%c0_62, %c1_63, %c16_64, %c0_65], %46 {strides = array<i32>} : memref<2x18x40x8xbf16, #tpu.memory_space<vmem>>, vector<2x16x16x8xbf16>,
    %c0_66 = arith.constant 0 : index
    %c0_67 = arith.constant 0 : index
    %c15_68 = arith.constant 15 : index
    %c0_69 = arith.constant 0 : index
    %48 = vector.load %arg6[%c0_66, %c0_67, %c15_68, %c0_69] : memref<2x18x40x8xbf16, #tpu.memory_space<vmem>>, vector<2x18x16x8xbf16>
    %c0_70 = arith.constant 0 : index
    %c0_71 = arith.constant 0 : index
    %c16_72 = arith.constant 16 : index
    %c0_73 = arith.constant 0 : index
    %49 = vector.load %arg6[%c0_70, %c0_71, %c16_72, %c0_73] : memref<2x18x40x8xbf16, #tpu.memory_space<vmem>>, vector<2x18x16x8xbf16>
    %c0_74 = arith.constant 0 : index
    %c0_75 = arith.constant 0 : index
    %c17_76 = arith.constant 17 : index
    %c0_77 = arith.constant 0 : index
    %50 = vector.load %arg6[%c0_74, %c0_75, %c17_76, %c0_77] : memref<2x18x40x8xbf16, #tpu.memory_space<vmem>>, vector<2x18x16x8xbf16>
    %51 = vector.extract_strided_slice %48 {offsets = [0, 0, 0, 0], sizes = [2, 16, 16, 8], strides = [1, 1, 1, 1]} : vector<2x18x16x8xbf16> to vector<2x16x16x8xbf16>
    %52 = vector.extract_strided_slice %49 {offsets = [0, 0, 0, 0], sizes = [2, 16, 16, 8], strides = [1, 1, 1, 1]} : vector<2x18x16x8xbf16> to vector<2x16x16x8xbf16>
    %53 = vector.extract_strided_slice %50 {offsets = [0, 0, 0, 0], sizes = [2, 16, 16, 8], strides = [1, 1, 1, 1]} : vector<2x18x16x8xbf16> to vector<2x16x16x8xbf16>
    %54 = vector.extract_strided_slice %48 {offsets = [0, 1, 0, 0], sizes = [2, 16, 16, 8], strides = [1, 1, 1, 1]} : vector<2x18x16x8xbf16> to vector<2x16x16x8xbf16>
    %55 = vector.extract_strided_slice %49 {offsets = [0, 1, 0, 0], sizes = [2, 16, 16, 8], strides = [1, 1, 1, 1]} : vector<2x18x16x8xbf16> to vector<2x16x16x8xbf16>
    %56 = vector.extract_strided_slice %50 {offsets = [0, 1, 0, 0], sizes = [2, 16, 16, 8], strides = [1, 1, 1, 1]} : vector<2x18x16x8xbf16> to vector<2x16x16x8xbf16>
    %57 = vector.extract_strided_slice %48 {offsets = [0, 2, 0, 0], sizes = [2, 16, 16, 8], strides = [1, 1, 1, 1]} : vector<2x18x16x8xbf16> to vector<2x16x16x8xbf16>
    %58 = vector.extract_strided_slice %49 {offsets = [0, 2, 0, 0], sizes = [2, 16, 16, 8], strides = [1, 1, 1, 1]} : vector<2x18x16x8xbf16> to vector<2x16x16x8xbf16>
    %59 = vector.extract_strided_slice %50 {offsets = [0, 2, 0, 0], sizes = [2, 16, 16, 8], strides = [1, 1, 1, 1]} : vector<2x18x16x8xbf16> to vector<2x16x16x8xbf16>
    %cst_78 = arith.constant 0.000000e+00 : bf16
    %60 = vector.broadcast %cst_78 : bf16 to vector<2x16x16x56xbf16>
    %61 = tpu.concatenate %51, %52, %53, %54, %55, %56, %57, %58, %59, %60 in 3 : vector<2x16x16x8xbf16>, vector<2x16x16x8xbf16>, vector<2x16x16x8xbf16>, vector<2x16x16x8xbf16>, vector<2x16x16x8xbf16>, vector<2x16x16x8xbf16>, vector<2x16x16x8xbf16>, vector<2x16x16x8xbf16>, vector<2x16x16x8xbf16>, vector<2x16x16x56xbf16> -> vector<2x16x16x128xbf16>
    %62 = vector.shape_cast %61 : vector<2x16x16x128xbf16> to vector<512x128xbf16>
    %c1_79 = arith.constant 1 : index
    %c0_80 = arith.constant 0 : index
    %c0_81 = arith.constant 0 : index
    %63 = vector.load %arg2[%c1_79, %c0_80, %c0_81] : memref<3x128x128xbf16, #tpu.memory_space<vmem>>, vector<1x128x128xbf16>
    %64 = vector.shape_cast %63 : vector<1x128x128xbf16> to vector<128x128xbf16>
    %cst_82 = arith.constant dense<0.000000e+00> : vector<512x128xf32>
    %65 = tpu.matmul %62, %64, %cst_82 {dimension_numbers = #tpu.dot_dimension_numbers<[1], [0], [0], [1], [0, 0, 1, 1], [], []>} : vector<512x128xbf16>, vector<128x128xbf16>, vector<512x128xf32> -> vector<512x128xf32>
    %66 = vector.extract_strided_slice %65 {offsets = [0, 0], sizes = [512, 8], strides = [1, 1]} : vector<512x128xf32> to vector<512x8xf32>
    %c1_83 = arith.constant 1 : index
    %c0_84 = arith.constant 0 : index
    %c0_85 = arith.constant 0 : index
    %67 = vector.load %arg3[%c1_83, %c0_84, %c0_85] : memref<3x1x128xf32, #tpu.memory_space<vmem>>, vector<1x1x128xf32>
    %68 = vector.shape_cast %67 : vector<1x1x128xf32> to vector<1x128xf32>
    %69 = vector.extract_strided_slice %68 {offsets = [0, 0], sizes = [1, 8], strides = [1, 1]} : vector<1x128xf32> to vector<1x8xf32>
    %70 = vector.broadcast %69 : vector<1x8xf32> to vector<512x8xf32>
    %71 = arith.addf %66, %70 : vector<512x8xf32>
    %cst_86 = arith.constant 0.000000e+00 : f32
    %72 = vector.broadcast %cst_86 : f32 to vector<512x8xf32>
    %73 = arith.maximumf %71, %72 : vector<512x8xf32>
    %74 = arith.truncf %73 : vector<512x8xf32> to vector<512x8xbf16>
    %75 = vector.shape_cast %74 : vector<512x8xbf16> to vector<2x16x16x8xbf16>
    %c0_87 = arith.constant 0 : index
    %c1_88 = arith.constant 1 : index
    %c16_89 = arith.constant 16 : index
    %c0_90 = arith.constant 0 : index
    %76 = vector.load %arg5[%c0_87, %c1_88, %c16_89, %c0_90] : memref<2x18x40x8xbf16, #tpu.memory_space<vmem>>, vector<2x16x16x8xbf16>
    tpu.vector_store %arg5[%c0_87, %c1_88, %c16_89, %c0_90], %75 {strides = array<i32>} : memref<2x18x40x8xbf16, #tpu.memory_space<vmem>>, vector<2x16x16x8xbf16>,
    %c0_91 = arith.constant 0 : index
    %c0_92 = arith.constant 0 : index
    %c15_93 = arith.constant 15 : index
    %c0_94 = arith.constant 0 : index
    %77 = vector.load %arg5[%c0_91, %c0_92, %c15_93, %c0_94] : memref<2x18x40x8xbf16, #tpu.memory_space<vmem>>, vector<2x18x16x8xbf16>
    %c0_95 = arith.constant 0 : index
    %c0_96 = arith.constant 0 : index
    %c16_97 = arith.constant 16 : index
    %c0_98 = arith.constant 0 : index
    %78 = vector.load %arg5[%c0_95, %c0_96, %c16_97, %c0_98] : memref<2x18x40x8xbf16, #tpu.memory_space<vmem>>, vector<2x18x16x8xbf16>
    %c0_99 = arith.constant 0 : index
    %c0_100 = arith.constant 0 : index
    %c17_101 = arith.constant 17 : index
    %c0_102 = arith.constant 0 : index
    %79 = vector.load %arg5[%c0_99, %c0_100, %c17_101, %c0_102] : memref<2x18x40x8xbf16, #tpu.memory_space<vmem>>, vector<2x18x16x8xbf16>
    %80 = vector.extract_strided_slice %77 {offsets = [0, 0, 0, 0], sizes = [2, 16, 16, 8], strides = [1, 1, 1, 1]} : vector<2x18x16x8xbf16> to vector<2x16x16x8xbf16>
    %81 = vector.extract_strided_slice %78 {offsets = [0, 0, 0, 0], sizes = [2, 16, 16, 8], strides = [1, 1, 1, 1]} : vector<2x18x16x8xbf16> to vector<2x16x16x8xbf16>
    %82 = vector.extract_strided_slice %79 {offsets = [0, 0, 0, 0], sizes = [2, 16, 16, 8], strides = [1, 1, 1, 1]} : vector<2x18x16x8xbf16> to vector<2x16x16x8xbf16>
    %83 = vector.extract_strided_slice %77 {offsets = [0, 1, 0, 0], sizes = [2, 16, 16, 8], strides = [1, 1, 1, 1]} : vector<2x18x16x8xbf16> to vector<2x16x16x8xbf16>
    %84 = vector.extract_strided_slice %78 {offsets = [0, 1, 0, 0], sizes = [2, 16, 16, 8], strides = [1, 1, 1, 1]} : vector<2x18x16x8xbf16> to vector<2x16x16x8xbf16>
    %85 = vector.extract_strided_slice %79 {offsets = [0, 1, 0, 0], sizes = [2, 16, 16, 8], strides = [1, 1, 1, 1]} : vector<2x18x16x8xbf16> to vector<2x16x16x8xbf16>
    %86 = vector.extract_strided_slice %77 {offsets = [0, 2, 0, 0], sizes = [2, 16, 16, 8], strides = [1, 1, 1, 1]} : vector<2x18x16x8xbf16> to vector<2x16x16x8xbf16>
    %87 = vector.extract_strided_slice %78 {offsets = [0, 2, 0, 0], sizes = [2, 16, 16, 8], strides = [1, 1, 1, 1]} : vector<2x18x16x8xbf16> to vector<2x16x16x8xbf16>
    %88 = vector.extract_strided_slice %79 {offsets = [0, 2, 0, 0], sizes = [2, 16, 16, 8], strides = [1, 1, 1, 1]} : vector<2x18x16x8xbf16> to vector<2x16x16x8xbf16>
    %cst_103 = arith.constant 0.000000e+00 : bf16
    %89 = vector.broadcast %cst_103 : bf16 to vector<2x16x16x56xbf16>
    %90 = tpu.concatenate %80, %81, %82, %83, %84, %85, %86, %87, %88, %89 in 3 : vector<2x16x16x8xbf16>, vector<2x16x16x8xbf16>, vector<2x16x16x8xbf16>, vector<2x16x16x8xbf16>, vector<2x16x16x8xbf16>, vector<2x16x16x8xbf16>, vector<2x16x16x8xbf16>, vector<2x16x16x8xbf16>, vector<2x16x16x8xbf16>, vector<2x16x16x56xbf16> -> vector<2x16x16x128xbf16>
    %91 = vector.shape_cast %90 : vector<2x16x16x128xbf16> to vector<512x128xbf16>
    %c2 = arith.constant 2 : index
    %c0_104 = arith.constant 0 : index
    %c0_105 = arith.constant 0 : index
    %92 = vector.load %arg2[%c2, %c0_104, %c0_105] : memref<3x128x128xbf16, #tpu.memory_space<vmem>>, vector<1x128x128xbf16>
    %93 = vector.shape_cast %92 : vector<1x128x128xbf16> to vector<128x128xbf16>
    %cst_106 = arith.constant dense<0.000000e+00> : vector<512x128xf32>
    %94 = tpu.matmul %91, %93, %cst_106 {dimension_numbers = #tpu.dot_dimension_numbers<[1], [0], [0], [1], [0, 0, 1, 1], [], []>} : vector<512x128xbf16>, vector<128x128xbf16>, vector<512x128xf32> -> vector<512x128xf32>
    %c2_107 = arith.constant 2 : index
    %c0_108 = arith.constant 0 : index
    %c0_109 = arith.constant 0 : index
    %95 = vector.load %arg3[%c2_107, %c0_108, %c0_109] : memref<3x1x128xf32, #tpu.memory_space<vmem>>, vector<1x1x128xf32>
    %96 = vector.shape_cast %95 : vector<1x1x128xf32> to vector<1x128xf32>
    %97 = vector.broadcast %96 : vector<1x128xf32> to vector<512x128xf32>
    %98 = arith.addf %94, %97 : vector<512x128xf32>
    %cst_110 = arith.constant 0.000000e+00 : f32
    %cst_111 = arith.constant 2.550000e+02 : f32
    %99 = vector.broadcast %cst_110 : f32 to vector<512x128xf32>
    %100 = arith.maximumf %99, %98 : vector<512x128xf32>
    %101 = vector.broadcast %cst_111 : f32 to vector<512x128xf32>
    %102 = arith.minimumf %101, %100 : vector<512x128xf32>
    %103 = vector.shape_cast %102 : vector<512x128xf32> to vector<2x16x16x128xf32>
    %c0_112 = arith.constant 0 : index
    %c0_113 = arith.constant 0 : index
    %c0_114 = arith.constant 0 : index
    %c0_115 = arith.constant 0 : index
    %104 = vector.load %arg4[%c0_112, %c0_113, %c0_114, %c0_115] : memref<2x16x16x128xf32, #tpu.memory_space<vmem>>, vector<2x16x16x128xf32>
    tpu.vector_store %arg4[%c0_112, %c0_113, %c0_114, %c0_115], %103 {strides = array<i32>} : memref<2x16x16x128xf32, #tpu.memory_space<vmem>>, vector<2x16x16x128xf32>,
    return
  }
  func.func @transform_0(%arg0: i32) -> (i32, i32, i32, i32) {
    %c0_i32 = arith.constant 0 : i32
    %c0_i32_0 = arith.constant 0 : i32
    %c0_i32_1 = arith.constant 0 : i32
    %c0_i32_2 = arith.constant 0 : i32
    return %arg0, %c0_i32, %c0_i32_0, %c0_i32_1 : i32, i32, i32, i32
  }
  func.func @transform_1(%arg0: i32) -> (i32, i32, i32) {
    %c0_i32 = arith.constant 0 : i32
    %c0_i32_0 = arith.constant 0 : i32
    %c0_i32_1 = arith.constant 0 : i32
    %c0_i32_2 = arith.constant 0 : i32
    return %c0_i32, %c0_i32_0, %c0_i32_1 : i32, i32, i32
  }
  func.func @transform_2(%arg0: i32) -> (i32, i32, i32) {
    %c0_i32 = arith.constant 0 : i32
    %c0_i32_0 = arith.constant 0 : i32
    %c0_i32_1 = arith.constant 0 : i32
    %c0_i32_2 = arith.constant 0 : i32
    return %c0_i32, %c0_i32_0, %c0_i32_1 : i32, i32, i32
  }
  func.func @transform_3(%arg0: i32) -> (i32, i32, i32, i32) {
    %c0_i32 = arith.constant 0 : i32
    %c0_i32_0 = arith.constant 0 : i32
    %c0_i32_1 = arith.constant 0 : i32
    %c0_i32_2 = arith.constant 0 : i32
    return %arg0, %c0_i32, %c0_i32_0, %c0_i32_1 : i32, i32, i32, i32
  }
}

</mosaic_0001>

<llo_original>
// kernel: image_pixel_predictor.1
$region0: #{image_pixel_predictor.1}
  #allocation0 [shape = 'u32[]', space=smem, size = 0x4, offset = 0x4, fixed_abs, tag = 'smem constant byte address 0x4 - core index']
  #allocation1 [shape = 'u32[144,128]{1,0:T(1,128)}', space=vmem, size = 0x12000, scoped, tag = 'internal scratch']
  #allocation2 [shape = 'bf16[2,18,40,8]{3,2,1,0:T(8,128)(2,1)}', space=vmem, size = 0x5a000, scoped, tag = 'scratch operand']
  #allocation3 [shape = 'bf16[2,18,40,8]{3,2,1,0:T(8,128)(2,1)}', space=vmem, size = 0x5a000, scoped, tag = 'scratch operand']
  %s0 = inlined_call_operand.vmem [shape: f32[2,16,16,4], index: 0, kind: input, shape index: {}]
  %s1 = inlined_call_operand.vmem [shape: bf16[3,128,128], index: 1, kind: input, shape index: {}]
  %s2 = inlined_call_operand.vmem [shape: f32[3,1,128], index: 2, kind: input, shape index: {}]
  %s3 = inlined_call_operand.vmem [shape: f32[2,16,16,128], index: 3, kind: output, shape index: {}]
  %s4 = sld [smem:[#allocation0]]
  $region22: #{image_pixel_predictor.1} parent=0
    _
  %s6 = ssub.s32 1, %s4
  %s7 = scalar_select 0, %s6, %s4
  // Predicated region
  $region2: #{image_pixel_predictor.1} parent=0 // pred_check
    _
  $region3: #{image_pixel_predictor.1} parent=0 // pred_check_branch
    %9 = sbr.rel (0) target = $region5
  $region4: #{image_pixel_predictor.1} parent=0 // pred_region
    _
  $region5: #{image_pixel_predictor.1} parent=0 // pred_fallthru
    _
  // Predicated region
  $region6: #{image_pixel_predictor.1} parent=0 // pred_check
    _
  $region7: #{image_pixel_predictor.1} parent=0 // pred_check_branch
    %11 = sbr.rel (0) target = $region9
  $region8: #{image_pixel_predictor.1} parent=0 // pred_region
    _
  $region9: #{image_pixel_predictor.1} parent=0 // pred_fallthru
    _
  // Predicated region
  $region10: #{image_pixel_predictor.1} parent=0 // pred_check
    _
  $region11: #{image_pixel_predictor.1} parent=0 // pred_check_branch
    %13 = sbr.rel (0) target = $region13
  $region12: #{image_pixel_predictor.1} parent=0 // pred_region
    _
  $region13: #{image_pixel_predictor.1} parent=0 // pred_fallthru
    _
  %vm15 = vcmask 60416
  %16 = vst.msk [vmem:[#allocation2] sm:$0xf] %vm15, 0
  %17 = vst.msk [vmem:[#allocation2 + $0x4] sm:$0xf] %vm15, 0
  %18 = vst.msk [vmem:[#allocation2 + $0x14] sm:$0xf] %vm15, 0
  %19 = vst.msk [vmem:[#allocation2 + $0x18] sm:$0xf] %vm15, 0
  %20 = vst.msk [vmem:[#allocation2 + $0x28] sm:$0xf] %vm15, 0
  %21 = vst.msk [vmem:[#allocation2 + $0x2c] sm:$0xf] %vm15, 0
  %22 = vst.msk [vmem:[#allocation2 + $0x3c] sm:$0xf] %vm15, 0
  %23 = vst.msk [vmem:[#allocation2 + $0x40] sm:$0xf] %vm15, 0
  %24 = vst.msk [vmem:[#allocation2 + $0x50] sm:$0xf] %vm15, 0
  %25 = vst.msk [vmem:[#allocation2 + $0x54] sm:$0xf] %vm15, 0
  %26 = vst.msk [vmem:[#allocation2 + $0x64] sm:$0xf] %vm15, 0
  %27 = vst.msk [vmem:[#allocation2 + $0x68] sm:$0xf] %vm15, 0
  %28 = vst.msk [vmem:[#allocation2 + $0x78] sm:$0xf] %vm15, 0
  %29 = vst.msk [vmem:[#allocation2 + $0x7c] sm:$0xf] %vm15, 0
  %30 = vst.msk [vmem:[#allocation2 + $0x8c] sm:$0xf] %vm15, 0
  %31 = vst.msk [vmem:[#allocation2 + $0x90] sm:$0xf] %vm15, 0
  %32 = vst.msk [vmem:[#allocation2 + $0xa0] sm:$0xf] %vm15, 0
  %33 = vst.msk [vmem:[#allocation2 + $0xa4] sm:$0xf] %vm15, 0
  %34 = vst.msk [vmem:[#allocation2 + $0xb4] sm:$0xf] %vm15, 0
  %35 = vst.msk [vmem:[#allocation2 + $0xb8] sm:$0xf] %vm15, 0
  %36 = vst.msk [vmem:[#allocation2 + $0xc8] sm:$0xf] %vm15, 0
  %37 = vst.msk [vmem:[#allocation2 + $0xcc] sm:$0xf] %vm15, 0
  %38 = vst.msk [vmem:[#allocation2 + $0xdc] sm:$0xf] %vm15, 0
  %39 = vst.msk [vmem:[#allocation2 + $0xe0] sm:$0xf] %vm15, 0
  %40 = vst.msk [vmem:[#allocation2 + $0xf0] sm:$0xf] %vm15, 0
  %41 = vst.msk [vmem:[#allocation2 + $0xf4] sm:$0xf] %vm15, 0
  %42 = vst.msk [vmem:[#allocation2 + $0x104] sm:$0xf] %vm15, 0
  %43 = vst.msk [vmem:[#allocation2 + $0x108] sm:$0xf] %vm15, 0
  %44 = vst.msk [vmem:[#allocation2 + $0x118] sm:$0xf] %vm15, 0
  %45 = vst.msk [vmem:[#allocation2 + $0x11c] sm:$0xf] %vm15, 0
  %46 = vst.msk [vmem:[#allocation2 + $0x12c] sm:$0xf] %vm15, 0
  %47 = vst.msk [vmem:[#allocation2 + $0x130] sm:$0xf] %vm15, 0
  %48 = vst.msk [vmem:[#allocation2 + $0x140] sm:$0xf] %vm15, 0
  %49 = vst.msk [vmem:[#allocation2 + $0x144] sm:$0xf] %vm15, 0
  %50 = vst.msk [vmem:[#allocation2 + $0x154] sm:$0xf] %vm15, 0
  %51 = vst.msk [vmem:[#allocation2 + $0x158] sm:$0xf] %vm15, 0
  %52 = vst.msk [vmem:[#allocation2 + $0x168] sm:$0xf] %vm15, 0
  %53 = vst.msk [vmem:[#allocation2 + $0x16c] sm:$0xf] %vm15, 0
  %54 = vst.msk [vmem:[#allocation2 + $0x17c] sm:$0xf] %vm15, 0
  %55 = vst.msk [vmem:[#allocation2 + $0x180] sm:$0xf] %vm15, 0
  %56 = vst.msk [vmem:[#allocation2 + $0x190] sm:$0xf] %vm15, 0
  %57 = vst.msk [vmem:[#allocation2 + $0x194] sm:$0xf] %vm15, 0
  %58 = vst.msk [vmem:[#allocation2 + $0x1a4] sm:$0xf] %vm15, 0
  %59 = vst.msk [vmem:[#allocation2 + $0x1a8] sm:$0xf] %vm15, 0
  %60 = vst.msk [vmem:[#allocation2 + $0x1b8] sm:$0xf] %vm15, 0
  %61 = vst.msk [vmem:[#allocation2 + $0x1bc] sm:$0xf] %vm15, 0
  %62 = vst.msk [vmem:[#allocation2 + $0x1cc] sm:$0xf] %vm15, 0
  %63 = vst.msk [vmem:[#allocation2 + $0x1d0] sm:$0xf] %vm15, 0
  %64 = vst.msk [vmem:[#allocation2 + $0x1e0] sm:$0xf] %vm15, 0
  %65 = vst.msk [vmem:[#allocation2 + $0x1e4] sm:$0xf] %vm15, 0
  %66 = vst.msk [vmem:[#allocation2 + $0x1f4] sm:$0xf] %vm15, 0
  %67 = vst.msk [vmem:[#allocation2 + $0x1f8] sm:$0xf] %vm15, 0
  %68 = vst.msk [vmem:[#allocation2 + $0x208] sm:$0xf] %vm15, 0
  %69 = vst.msk [vmem:[#allocation2 + $0x20c] sm:$0xf] %vm15, 0
  %70 = vst.msk [vmem:[#allocation2 + $0x21c] sm:$0xf] %vm15, 0
  %71 = vst.msk [vmem:[#allocation2 + $0x220] sm:$0xf] %vm15, 0
  %72 = vst.msk [vmem:[#allocation2 + $0x230] sm:$0xf] %vm15, 0
  %73 = vst.msk [vmem:[#allocation2 + $0x234] sm:$0xf] %vm15, 0
  %74 = vst.msk [vmem:[#allocation2 + $0x244] sm:$0xf] %vm15, 0
  %75 = vst.msk [vmem:[#allocation2 + $0x248] sm:$0xf] %vm15, 0
  %76 = vst.msk [vmem:[#allocation2 + $0x258] sm:$0xf] %vm15, 0
  %77 = vst.msk [vmem:[#allocation2 + $0x25c] sm:$0xf] %vm15, 0
  %78 = vst.msk [vmem:[#allocation2 + $0x26c] sm:$0xf] %vm15, 0
  %79 = vst.msk [vmem:[#allocation2 + $0x270] sm:$0xf] %vm15, 0
  %80 = vst.msk [vmem:[#allocation2 + $0x280] sm:$0xf] %vm15, 0
  %81 = vst.msk [vmem:[#allocation2 + $0x284] sm:$0xf] %vm15, 0
  %82 = vst.msk [vmem:[#allocation2 + $0x294] sm:$0xf] %vm15, 0
  %83 = vst.msk [vmem:[#allocation2 + $0x298] sm:$0xf] %vm15, 0
  %84 = vst.msk [vmem:[#allocation2 + $0x2a8] sm:$0xf] %vm15, 0
  %85 = vst.msk [vmem:[#allocation2 + $0x2ac] sm:$0xf] %vm15, 0
  %86 = vst.msk [vmem:[#allocation2 + $0x2bc] sm:$0xf] %vm15, 0
  %87 = vst.msk [vmem:[#allocation2 + $0x2c0] sm:$0xf] %vm15, 0
  %88 = vst.msk [vmem:[#allocation2 + $0x10] sm:$0xf] %vm15, 0
  %89 = vst.msk [vmem:[#allocation2 + $0x24] sm:$0xf] %vm15, 0
  %90 = vst.msk [vmem:[#allocation2 + $0x38] sm:$0xf] %vm15, 0
  %91 = vst.msk [vmem:[#allocation2 + $0x4c] sm:$0xf] %vm15, 0
  %92 = vst.msk [vmem:[#allocation2 + $0x60] sm:$0xf] %vm15, 0
  %93 = vst.msk [vmem:[#allocation2 + $0x74] sm:$0xf] %vm15, 0
  %94 = vst.msk [vmem:[#allocation2 + $0x88] sm:$0xf] %vm15, 0
  %95 = vst.msk [vmem:[#allocation2 + $0x9c] sm:$0xf] %vm15, 0
  %96 = vst.msk [vmem:[#allocation2 + $0xb0] sm:$0xf] %vm15, 0
  %97 = vst.msk [vmem:[#allocation2 + $0xc4] sm:$0xf] %vm15, 0
  %98 = vst.msk [vmem:[#allocation2 + $0xd8] sm:$0xf] %vm15, 0
  %99 = vst.msk [vmem:[#allocation2 + $0xec] sm:$0xf] %vm15, 0
  %100 = vst.msk [vmem:[#allocation2 + $0x100] sm:$0xf] %vm15, 0
  %101 = vst.msk [vmem:[#allocation2 + $0x114] sm:$0xf] %vm15, 0
  %102 = vst.msk [vmem:[#allocation2 + $0x128] sm:$0xf] %vm15, 0
  %103 = vst.msk [vmem:[#allocation2 + $0x13c] sm:$0xf] %vm15, 0
  %104 = vst.msk [vmem:[#allocation2 + $0x150] sm:$0xf] %vm15, 0
  %105 = vst.msk [vmem:[#allocation2 + $0x164] sm:$0xf] %vm15, 0
  %106 = vst.msk [vmem:[#allocation2 + $0x178] sm:$0xf] %vm15, 0
  %107 = vst.msk [vmem:[#allocation2 + $0x18c] sm:$0xf] %vm15, 0
  %108 = vst.msk [vmem:[#allocation2 + $0x1a0] sm:$0xf] %vm15, 0
  %109 = vst.msk [vmem:[#allocation2 + $0x1b4] sm:$0xf] %vm15, 0
  %110 = vst.msk [vmem:[#allocation2 + $0x1c8] sm:$0xf] %vm15, 0
  %111 = vst.msk [vmem:[#allocation2 + $0x1dc] sm:$0xf] %vm15, 0
  %112 = vst.msk [vmem:[#allocation2 + $0x1f0] sm:$0xf] %vm15, 0
  %113 = vst.msk [vmem:[#allocation2 + $0x204] sm:$0xf] %vm15, 0
  %114 = vst.msk [vmem:[#allocation2 + $0x218] sm:$0xf] %vm15, 0
  %115 = vst.msk [vmem:[#allocation2 + $0x22c] sm:$0xf] %vm15, 0
  %116 = vst.msk [vmem:[#allocation2 + $0x240] sm:$0xf] %vm15, 0
  %117 = vst.msk [vmem:[#allocation2 + $0x254] sm:$0xf] %vm15, 0
  %118 = vst.msk [vmem:[#allocation2 + $0x268] sm:$0xf] %vm15, 0
  %119 = vst.msk [vmem:[#allocation2 + $0x27c] sm:$0xf] %vm15, 0
  %120 = vst.msk [vmem:[#allocation2 + $0x290] sm:$0xf] %vm15, 0
  %121 = vst.msk [vmem:[#allocation2 + $0x2a4] sm:$0xf] %vm15, 0
  %122 = vst.msk [vmem:[#allocation2 + $0x2b8] sm:$0xf] %vm15, 0
  %123 = vst.msk [vmem:[#allocation2 + $0x2cc] sm:$0xf] %vm15, 0
  %124 = vst.msk [vmem:[#allocation2 + $0x8] sm:$0xf] %vm15, 0
  %125 = vst.msk [vmem:[#allocation2 + $0xc] sm:$0xf] %vm15, 0
  %126 = vst.msk [vmem:[#allocation2 + $0x170] sm:$0xf] %vm15, 0
  %127 = vst.msk [vmem:[#allocation2 + $0x174] sm:$0xf] %vm15, 0
  %s128 = scalar_lea.vmem [#allocation2], 340
  %129 = vst.msk [vmem:[%s128 + $0x8] sm:$0xf] %vm15, 0
  %130 = vst.msk [vmem:[%s128 + $0xc] sm:$0xf] %vm15, 0
  %131 = vst.msk [vmem:[%s128 + $0x170] sm:$0xf] %vm15, 0
  %132 = vst.msk [vmem:[%s128 + $0x174] sm:$0xf] %vm15, 0
  %133 = vst.msk [vmem:[#allocation3] sm:$0xf] %vm15, 0
  %134 = vst.msk [vmem:[#allocation3 + $0x4] sm:$0xf] %vm15, 0
  %135 = vst.msk [vmem:[#allocation3 + $0x14] sm:$0xf] %vm15, 0
  %136 = vst.msk [vmem:[#allocation3 + $0x18] sm:$0xf] %vm15, 0
  %137 = vst.msk [vmem:[#allocation3 + $0x28] sm:$0xf] %vm15, 0
  %138 = vst.msk [vmem:[#allocation3 + $0x2c] sm:$0xf] %vm15, 0
  %139 = vst.msk [vmem:[#allocation3 + $0x3c] sm:$0xf] %vm15, 0
  %140 = vst.msk [vmem:[#allocation3 + $0x40] sm:$0xf] %vm15, 0
  %141 = vst.msk [vmem:[#allocation3 + $0x50] sm:$0xf] %vm15, 0
  %142 = vst.msk [vmem:[#allocation3 + $0x54] sm:$0xf] %vm15, 0
  %143 = vst.msk [vmem:[#allocation3 + $0x64] sm:$0xf] %vm15, 0
  %144 = vst.msk [vmem:[#allocation3 + $0x68] sm:$0xf] %vm15, 0
  %145 = vst.msk [vmem:[#allocation3 + $0x78] sm:$0xf] %vm15, 0
  %146 = vst.msk [vmem:[#allocation3 + $0x7c] sm:$0xf] %vm15, 0
  %147 = vst.msk [vmem:[#allocation3 + $0x8c] sm:$0xf] %vm15, 0
  %148 = vst.msk [vmem:[#allocation3 + $0x90] sm:$0xf] %vm15, 0
  %149 = vst.msk [vmem:[#allocation3 + $0xa0] sm:$0xf] %vm15, 0
  %150 = vst.msk [vmem:[#allocation3 + $0xa4] sm:$0xf] %vm15, 0
  %151 = vst.msk [vmem:[#allocation3 + $0xb4] sm:$0xf] %vm15, 0
  %152 = vst.msk [vmem:[#allocation3 + $0xb8] sm:$0xf] %vm15, 0
  %153 = vst.msk [vmem:[#allocation3 + $0xc8] sm:$0xf] %vm15, 0
  %154 = vst.msk [vmem:[#allocation3 + $0xcc] sm:$0xf] %vm15, 0
  %155 = vst.msk [vmem:[#allocation3 + $0xdc] sm:$0xf] %vm15, 0
  %156 = vst.msk [vmem:[#allocation3 + $0xe0] sm:$0xf] %vm15, 0
  %157 = vst.msk [vmem:[#allocation3 + $0xf0] sm:$0xf] %vm15, 0
  %158 = vst.msk [vmem:[#allocation3 + $0xf4] sm:$0xf] %vm15, 0
  %159 = vst.msk [vmem:[#allocation3 + $0x104] sm:$0xf] %vm15, 0
  %160 = vst.msk [vmem:[#allocation3 + $0x108] sm:$0xf] %vm15, 0
  %161 = vst.msk [vmem:[#allocation3 + $0x118] sm:$0xf] %vm15, 0
  %162 = vst.msk [vmem:[#allocation3 + $0x11c] sm:$0xf] %vm15, 0
  %163 = vst.msk [vmem:[#allocation3 + $0x12c] sm:$0xf] %vm15, 0
  %164 = vst.msk [vmem:[#allocation3 + $0x130] sm:$0xf] %vm15, 0
  %165 = vst.msk [vmem:[#allocation3 + $0x140] sm:$0xf] %vm15, 0
  %166 = vst.msk [vmem:[#allocation3 + $0x144] sm:$0xf] %vm15, 0
  %167 = vst.msk [vmem:[#allocation3 + $0x154] sm:$0xf] %vm15, 0
  %168 = vst.msk [vmem:[#allocation3 + $0x158] sm:$0xf] %vm15, 0
  %169 = vst.msk [vmem:[#allocation3 + $0x168] sm:$0xf] %vm15, 0
  %170 = vst.msk [vmem:[#allocation3 + $0x16c] sm:$0xf] %vm15, 0
  %171 = vst.msk [vmem:[#allocation3 + $0x17c] sm:$0xf] %vm15, 0
  %172 = vst.msk [vmem:[#allocation3 + $0x180] sm:$0xf] %vm15, 0
  %173 = vst.msk [vmem:[#allocation3 + $0x190] sm:$0xf] %vm15, 0
  %174 = vst.msk [vmem:[#allocation3 + $0x194] sm:$0xf] %vm15, 0
  %175 = vst.msk [vmem:[#allocation3 + $0x1a4] sm:$0xf] %vm15, 0
  %176 = vst.msk [vmem:[#allocation3 + $0x1a8] sm:$0xf] %vm15, 0
  %177 = vst.msk [vmem:[#allocation3 + $0x1b8] sm:$0xf] %vm15, 0
  %178 = vst.msk [vmem:[#allocation3 + $0x1bc] sm:$0xf] %vm15, 0
  %179 = vst.msk [vmem:[#allocation3 + $0x1cc] sm:$0xf] %vm15, 0
  %180 = vst.msk [vmem:[#allocation3 + $0x1d0] sm:$0xf] %vm15, 0
  %181 = vst.msk [vmem:[#allocation3 + $0x1e0] sm:$0xf] %vm15, 0
  %182 = vst.msk [vmem:[#allocation3 + $0x1e4] sm:$0xf] %vm15, 0
  %183 = vst.msk [vmem:[#allocation3 + $0x1f4] sm:$0xf] %vm15, 0
  %184 = vst.msk [vmem:[#allocation3 + $0x1f8] sm:$0xf] %vm15, 0
  %185 = vst.msk [vmem:[#allocation3 + $0x208] sm:$0xf] %vm15, 0
  %186 = vst.msk [vmem:[#allocation3 + $0x20c] sm:$0xf] %vm15, 0
  %187 = vst.msk [vmem:[#allocation3 + $0x21c] sm:$0xf] %vm15, 0
  %188 = vst.msk [vmem:[#allocation3 + $0x220] sm:$0xf] %vm15, 0
  %189 = vst.msk [vmem:[#allocation3 + $0x230] sm:$0xf] %vm15, 0
  %190 = vst.msk [vmem:[#allocation3 + $0x234] sm:$0xf] %vm15, 0
  %191 = vst.msk [vmem:[#allocation3 + $0x244] sm:$0xf] %vm15, 0
  %192 = vst.msk [vmem:[#allocation3 + $0x248] sm:$0xf] %vm15, 0
  %193 = vst.msk [vmem:[#allocation3 + $0x258] sm:$0xf] %vm15, 0
  %194 = vst.msk [vmem:[#allocation3 + $0x25c] sm:$0xf] %vm15, 0
  %195 = vst.msk [vmem:[#allocation3 + $0x26c] sm:$0xf] %vm15, 0
  %196 = vst.msk [vmem:[#allocation3 + $0x270] sm:$0xf] %vm15, 0
  %197 = vst.msk [vmem:[#allocation3 + $0x280] sm:$0xf] %vm15, 0
  %198 = vst.msk [vmem:[#allocation3 + $0x284] sm:$0xf] %vm15, 0
  %199 = vst.msk [vmem:[#allocation3 + $0x294] sm:$0xf] %vm15, 0
  %200 = vst.msk [vmem:[#allocation3 + $0x298] sm:$0xf] %vm15, 0
  %201 = vst.msk [vmem:[#allocation3 + $0x2a8] sm:$0xf] %vm15, 0
  %202 = vst.msk [vmem:[#allocation3 + $0x2ac] sm:$0xf] %vm15, 0
  %203 = vst.msk [vmem:[#allocation3 + $0x2bc] sm:$0xf] %vm15, 0
  %204 = vst.msk [vmem:[#allocation3 + $0x2c0] sm:$0xf] %vm15, 0
  %205 = vst.msk [vmem:[#allocation3 + $0x10] sm:$0xf] %vm15, 0
  %206 = vst.msk [vmem:[#allocation3 + $0x24] sm:$0xf] %vm15, 0
  %207 = vst.msk [vmem:[#allocation3 + $0x38] sm:$0xf] %vm15, 0
  %208 = vst.msk [vmem:[#allocation3 + $0x4c] sm:$0xf] %vm15, 0
  %209 = vst.msk [vmem:[#allocation3 + $0x60] sm:$0xf] %vm15, 0
  %210 = vst.msk [vmem:[#allocation3 + $0x74] sm:$0xf] %vm15, 0
  %211 = vst.msk [vmem:[#allocation3 + $0x88] sm:$0xf] %vm15, 0
  %212 = vst.msk [vmem:[#allocation3 + $0x9c] sm:$0xf] %vm15, 0
  %213 = vst.msk [vmem:[#allocation3 + $0xb0] sm:$0xf] %vm15, 0
  %214 = vst.msk [vmem:[#allocation3 + $0xc4] sm:$0xf] %vm15, 0
  %215 = vst.msk [vmem:[#allocation3 + $0xd8] sm:$0xf] %vm15, 0
  %216 = vst.msk [vmem:[#allocation3 + $0xec] sm:$0xf] %vm15, 0
  %217 = vst.msk [vmem:[#allocation3 + $0x100] sm:$0xf] %vm15, 0
  %218 = vst.msk [vmem:[#allocation3 + $0x114] sm:$0xf] %vm15, 0
  %219 = vst.msk [vmem:[#allocation3 + $0x128] sm:$0xf] %vm15, 0
  %220 = vst.msk [vmem:[#allocation3 + $0x13c] sm:$0xf] %vm15, 0
  %221 = vst.msk [vmem:[#allocation3 + $0x150] sm:$0xf] %vm15, 0
  %222 = vst.msk [vmem:[#allocation3 + $0x164] sm:$0xf] %vm15, 0
  %223 = vst.msk [vmem:[#allocation3 + $0x178] sm:$0xf] %vm15, 0
  %224 = vst.msk [vmem:[#allocation3 + $0x18c] sm:$0xf] %vm15, 0
  %225 = vst.msk [vmem:[#allocation3 + $0x1a0] sm:$0xf] %vm15, 0
  %226 = vst.msk [vmem:[#allocation3 + $0x1b4] sm:$0xf] %vm15, 0
  %227 = vst.msk [vmem:[#allocation3 + $0x1c8] sm:$0xf] %vm15, 0
  %228 = vst.msk [vmem:[#allocation3 + $0x1dc] sm:$0xf] %vm15, 0
  %229 = vst.msk [vmem:[#allocation3 + $0x1f0] sm:$0xf] %vm15, 0
  %230 = vst.msk [vmem:[#allocation3 + $0x204] sm:$0xf] %vm15, 0
  %231 = vst.msk [vmem:[#allocation3 + $0x218] sm:$0xf] %vm15, 0
  %232 = vst.msk [vmem:[#allocation3 + $0x22c] sm:$0xf] %vm15, 0
  %233 = vst.msk [vmem:[#allocation3 + $0x240] sm:$0xf] %vm15, 0
  %234 = vst.msk [vmem:[#allocation3 + $0x254] sm:$0xf] %vm15, 0
  %235 = vst.msk [vmem:[#allocation3 + $0x268] sm:$0xf] %vm15, 0
  %236 = vst.msk [vmem:[#allocation3 + $0x27c] sm:$0xf] %vm15, 0
  %237 = vst.msk [vmem:[#allocation3 + $0x290] sm:$0xf] %vm15, 0
  %238 = vst.msk [vmem:[#allocation3 + $0x2a4] sm:$0xf] %vm15, 0
  %239 = vst.msk [vmem:[#allocation3 + $0x2b8] sm:$0xf] %vm15, 0
  %240 = vst.msk [vmem:[#allocation3 + $0x2cc] sm:$0xf] %vm15, 0
  %241 = vst.msk [vmem:[#allocation3 + $0x8] sm:$0xf] %vm15, 0
  %242 = vst.msk [vmem:[#allocation3 + $0xc] sm:$0xf] %vm15, 0
  %243 = vst.msk [vmem:[#allocation3 + $0x170] sm:$0xf] %vm15, 0
  %244 = vst.msk [vmem:[#allocation3 + $0x174] sm:$0xf] %vm15, 0
  %s245 = scalar_lea.vmem [#allocation3], 340
  %246 = vst.msk [vmem:[%s245 + $0x8] sm:$0xf] %vm15, 0
  %247 = vst.msk [vmem:[%s245 + $0xc] sm:$0xf] %vm15, 0
  %248 = vst.msk [vmem:[%s245 + $0x170] sm:$0xf] %vm15, 0
  %249 = vst.msk [vmem:[%s245 + $0x174] sm:$0xf] %vm15, 0
  %v250 = vld [vmem:[%s0] sm:$0xff]
  %v251 = vld [vmem:[%s0 + $0x8] sm:$0xff]
  %v252 = vld [vmem:[%s0 + $0x10] sm:$0xff]
  %v253 = vld [vmem:[%s0 + $0x18] sm:$0xff]
  %v254 = vld [vmem:[%s0 + $0x20] sm:$0xff]
  %v255 = vld [vmem:[%s0 + $0x28] sm:$0xff]
  %v256 = vld [vmem:[%s0 + $0x30] sm:$0xff]
  %v257 = vld [vmem:[%s0 + $0x38] sm:$0xff]
  %v258 = vld [vmem:[%s0 + $0x40] sm:$0xff]
  %v259 = vld [vmem:[%s0 + $0x48] sm:$0xff]
  %v260 = vld [vmem:[%s0 + $0x50] sm:$0xff]
  %v261 = vld [vmem:[%s0 + $0x58] sm:$0xff]
  %v262 = vld [vmem:[%s0 + $0x60] sm:$0xff]
  %v263 = vld [vmem:[%s0 + $0x68] sm:$0xff]
  %v264 = vld [vmem:[%s0 + $0x70] sm:$0xff]
  %v265 = vld [vmem:[%s0 + $0x78] sm:$0xff]
  %v266 = vld [vmem:[%s0 + $0x80] sm:$0xff]
  %v267 = vld [vmem:[%s0 + $0x88] sm:$0xff]
  %v268 = vld [vmem:[%s0 + $0x90] sm:$0xff]
  %v269 = vld [vmem:[%s0 + $0x98] sm:$0xff]
  %v270 = vld [vmem:[%s0 + $0xa0] sm:$0xff]
  %v271 = vld [vmem:[%s0 + $0xa8] sm:$0xff]
  %v272 = vld [vmem:[%s0 + $0xb0] sm:$0xff]
  %v273 = vld [vmem:[%s0 + $0xb8] sm:$0xff]
  %v274 = vld [vmem:[%s0 + $0xc0] sm:$0xff]
  %v275 = vld [vmem:[%s0 + $0xc8] sm:$0xff]
  %v276 = vld [vmem:[%s0 + $0xd0] sm:$0xff]
  %v277 = vld [vmem:[%s0 + $0xd8] sm:$0xff]
  %v278 = vld [vmem:[%s0 + $0xe0] sm:$0xff]
  %v279 = vld [vmem:[%s0 + $0xe8] sm:$0xff]
  %v280 = vld [vmem:[%s0 + $0xf0] sm:$0xff]
  %v281 = vld [vmem:[%s0 + $0xf8] sm:$0xff]
  %v282 = vld [vmem:[%s0 + $0x100] sm:$0xff]
  %v283 = vld [vmem:[%s0 + $0x108] sm:$0xff]
  %v284 = vld [vmem:[%s0 + $0x110] sm:$0xff]
  %v285 = vld [vmem:[%s0 + $0x118] sm:$0xff]
  %v286 = vld [vmem:[%s0 + $0x120] sm:$0xff]
  %v287 = vld [vmem:[%s0 + $0x128] sm:$0xff]
  %v288 = vld [vmem:[%s0 + $0x130] sm:$0xff]
  %v289 = vld [vmem:[%s0 + $0x138] sm:$0xff]
  %v290 = vld [vmem:[%s0 + $0x140] sm:$0xff]
  %v291 = vld [vmem:[%s0 + $0x148] sm:$0xff]
  %v292 = vld [vmem:[%s0 + $0x150] sm:$0xff]
  %v293 = vld [vmem:[%s0 + $0x158] sm:$0xff]
  %v294 = vld [vmem:[%s0 + $0x160] sm:$0xff]
  %v295 = vld [vmem:[%s0 + $0x168] sm:$0xff]
  %v296 = vld [vmem:[%s0 + $0x170] sm:$0xff]
  %v297 = vld [vmem:[%s0 + $0x178] sm:$0xff]
  %v298 = vld [vmem:[%s0 + $0x180] sm:$0xff]
  %v299 = vld [vmem:[%s0 + $0x188] sm:$0xff]
  %v300 = vld [vmem:[%s0 + $0x190] sm:$0xff]
  %v301 = vld [vmem:[%s0 + $0x198] sm:$0xff]
  %v302 = vld [vmem:[%s0 + $0x1a0] sm:$0xff]
  %v303 = vld [vmem:[%s0 + $0x1a8] sm:$0xff]
  %v304 = vld [vmem:[%s0 + $0x1b0] sm:$0xff]
  %v305 = vld [vmem:[%s0 + $0x1b8] sm:$0xff]
  %v306 = vld [vmem:[%s0 + $0x1c0] sm:$0xff]
  %v307 = vld [vmem:[%s0 + $0x1c8] sm:$0xff]
  %v308 = vld [vmem:[%s0 + $0x1d0] sm:$0xff]
  %v309 = vld [vmem:[%s0 + $0x1d8] sm:$0xff]
  %v310 = vld [vmem:[%s0 + $0x1e0] sm:$0xff]
  %v311 = vld [vmem:[%s0 + $0x1e8] sm:$0xff]
  %v312 = vld [vmem:[%s0 + $0x1f0] sm:$0xff]
  %v313 = vld [vmem:[%s0 + $0x1f8] sm:$0xff]
  %v314 = vpack.c.bf16 %v251, %v250
  %v315 = vpack.c.bf16 %v253, %v252
  %v316 = vpack.c.bf16 %v255, %v254
  %v317 = vpack.c.bf16 %v257, %v256
  %v318 = vpack.c.bf16 %v259, %v258
  %v319 = vpack.c.bf16 %v261, %v260
  %v320 = vpack.c.bf16 %v263, %v262
  %v321 = vpack.c.bf16 %v265, %v264
  %v322 = vpack.c.bf16 %v267, %v266
  %v323 = vpack.c.bf16 %v269, %v268
  %v324 = vpack.c.bf16 %v271, %v270
  %v325 = vpack.c.bf16 %v273, %v272
  %v326 = vpack.c.bf16 %v275, %v274
  %v327 = vpack.c.bf16 %v277, %v276
  %v328 = vpack.c.bf16 %v279, %v278
  %v329 = vpack.c.bf16 %v281, %v280
  %v330 = vpack.c.bf16 %v283, %v282
  %v331 = vpack.c.bf16 %v285, %v284
  %v332 = vpack.c.bf16 %v287, %v286
  %v333 = vpack.c.bf16 %v289, %v288
  %v334 = vpack.c.bf16 %v291, %v290
  %v335 = vpack.c.bf16 %v293, %v292
  %v336 = vpack.c.bf16 %v295, %v294
  %v337 = vpack.c.bf16 %v297, %v296
  %v338 = vpack.c.bf16 %v299, %v298
  %v339 = vpack.c.bf16 %v301, %v300
  %v340 = vpack.c.bf16 %v303, %v302
  %v341 = vpack.c.bf16 %v305, %v304
  %v342 = vpack.c.bf16 %v307, %v306
  %v343 = vpack.c.bf16 %v309, %v308
  %v344 = vpack.c.bf16 %v311, %v310
  %v345 = vpack.c.bf16 %v313, %v312
  %v378 = vunpack.c.l.b16 %v314
  %v379 = vunpack.c.h.b16 %v314
  %v380 = vunpack.c.l.b16 %v315
  %v381 = vunpack.c.h.b16 %v315
  %v382 = vunpack.c.l.b16 %v316
  %v383 = vunpack.c.h.b16 %v316
  %v384 = vunpack.c.l.b16 %v317
  %v385 = vunpack.c.h.b16 %v317
  %v386 = vunpack.c.l.b16 %v318
  %v387 = vunpack.c.h.b16 %v318
  %v388 = vunpack.c.l.b16 %v319
  %v389 = vunpack.c.h.b16 %v319
  %v390 = vunpack.c.l.b16 %v320
  %v391 = vunpack.c.h.b16 %v320
  %v392 = vunpack.c.l.b16 %v321
  %v393 = vunpack.c.h.b16 %v321
  %v394 = vunpack.c.l.b16 %v322
  %v395 = vunpack.c.h.b16 %v322
  %v396 = vunpack.c.l.b16 %v323
  %v397 = vunpack.c.h.b16 %v323
  %v398 = vunpack.c.l.b16 %v324
  %v399 = vunpack.c.h.b16 %v324
  %v400 = vunpack.c.l.b16 %v325
  %v401 = vunpack.c.h.b16 %v325
  %v402 = vunpack.c.l.b16 %v326
  %v403 = vunpack.c.h.b16 %v326
  %v404 = vunpack.c.l.b16 %v327
  %v405 = vunpack.c.h.b16 %v327
  %v406 = vunpack.c.l.b16 %v328
  %v407 = vunpack.c.h.b16 %v328
  %v408 = vunpack.c.l.b16 %v329
  %v409 = vunpack.c.h.b16 %v329
  %v410 = vunpack.c.l.b16 %v330
  %v411 = vunpack.c.h.b16 %v330
  %v412 = vunpack.c.l.b16 %v331
  %v413 = vunpack.c.h.b16 %v331
  %v414 = vunpack.c.l.b16 %v332
  %v415 = vunpack.c.h.b16 %v332
  %v416 = vunpack.c.l.b16 %v333
  %v417 = vunpack.c.h.b16 %v333
  %v418 = vunpack.c.l.b16 %v334
  %v419 = vunpack.c.h.b16 %v334
  %v420 = vunpack.c.l.b16 %v335
  %v421 = vunpack.c.h.b16 %v335
  %v422 = vunpack.c.l.b16 %v336
  %v423 = vunpack.c.h.b16 %v336
  %v424 = vunpack.c.l.b16 %v337
  %v425 = vunpack.c.h.b16 %v337
  %v426 = vunpack.c.l.b16 %v338
  %v427 = vunpack.c.h.b16 %v338
  %v428 = vunpack.c.l.b16 %v339
  %v429 = vunpack.c.h.b16 %v339
  %v430 = vunpack.c.l.b16 %v340
  %v431 = vunpack.c.h.b16 %v340
  %v432 = vunpack.c.l.b16 %v341
  %v433 = vunpack.c.h.b16 %v341
  %v434 = vunpack.c.l.b16 %v342
  %v435 = vunpack.c.h.b16 %v342
  %v436 = vunpack.c.l.b16 %v343
  %v437 = vunpack.c.h.b16 %v343
  %v438 = vunpack.c.l.b16 %v344
  %v439 = vunpack.c.h.b16 %v344
  %v440 = vunpack.c.l.b16 %v345
  %v441 = vunpack.c.h.b16 %v345
  %v442 = vpack.c.b16 %v378, %v378
  %v443 = vpack.c.b16 %v379, %v379
  %v444 = vpack.c.b16 %v380, %v380
  %v445 = vpack.c.b16 %v381, %v381
  %v446 = vpack.c.b16 %v382, %v382
  %v447 = vpack.c.b16 %v383, %v383
  %v448 = vpack.c.b16 %v384, %v384
  %v449 = vpack.c.b16 %v385, %v385
  %v450 = vpack.c.b16 %v386, %v386
  %v451 = vpack.c.b16 %v387, %v387
  %v452 = vpack.c.b16 %v388, %v388
  %v453 = vpack.c.b16 %v389, %v389
  %v454 = vpack.c.b16 %v390, %v390
  %v455 = vpack.c.b16 %v391, %v391
  %v456 = vpack.c.b16 %v392, %v392
  %v457 = vpack.c.b16 %v393, %v393
  %v458 = vpack.c.b16 %v394, %v394
  %v459 = vpack.c.b16 %v395, %v395
  %v460 = vpack.c.b16 %v396, %v396
  %v461 = vpack.c.b16 %v397, %v397
  %v462 = vpack.c.b16 %v398, %v398
  %v463 = vpack.c.b16 %v399, %v399
  %v464 = vpack.c.b16 %v400, %v400
  %v465 = vpack.c.b16 %v401, %v401
  %v466 = vpack.c.b16 %v402, %v402
  %v467 = vpack.c.b16 %v403, %v403
  %v468 = vpack.c.b16 %v404, %v404
  %v469 = vpack.c.b16 %v405, %v405
  %v470 = vpack.c.b16 %v406, %v406
  %v471 = vpack.c.b16 %v407, %v407
  %v472 = vpack.c.b16 %v408, %v408
  %v473 = vpack.c.b16 %v409, %v409
  %v474 = vpack.c.b16 %v410, %v410
  %v475 = vpack.c.b16 %v411, %v411
  %v476 = vpack.c.b16 %v412, %v412
  %v477 = vpack.c.b16 %v413, %v413
  %v478 = vpack.c.b16 %v414, %v414
  %v479 = vpack.c.b16 %v415, %v415
  %v480 = vpack.c.b16 %v416, %v416
  %v481 = vpack.c.b16 %v417, %v417
  %v482 = vpack.c.b16 %v418, %v418
  %v483 = vpack.c.b16 %v419, %v419
  %v484 = vpack.c.b16 %v420, %v420
  %v485 = vpack.c.b16 %v421, %v421
  %v486 = vpack.c.b16 %v422, %v422
  %v487 = vpack.c.b16 %v423, %v423
  %v488 = vpack.c.b16 %v424, %v424
  %v489 = vpack.c.b16 %v425, %v425
  %v490 = vpack.c.b16 %v426, %v426
  %v491 = vpack.c.b16 %v427, %v427
  %v492 = vpack.c.b16 %v428, %v428
  %v493 = vpack.c.b16 %v429, %v429
  %v494 = vpack.c.b16 %v430, %v430
  %v495 = vpack.c.b16 %v431, %v431
  %v496 = vpack.c.b16 %v432, %v432
  %v497 = vpack.c.b16 %v433, %v433
  %v498 = vpack.c.b16 %v434, %v434
  %v499 = vpack.c.b16 %v435, %v435
  %v500 = vpack.c.b16 %v436, %v436
  %v501 = vpack.c.b16 %v437, %v437
  %v502 = vpack.c.b16 %v438, %v438
  %v503 = vpack.c.b16 %v439, %v439
  %v504 = vpack.c.b16 %v440, %v440
  %v505 = vpack.c.b16 %v441, %v441
  %s570 = scalar_lea.vmem [#allocation2], 20
  %vm571 = vcmask 27648
  %572 = vst.msk [vmem:[%s570 + $0x8] sm:$0xf] %vm571, %v442
  %573 = vst.msk [vmem:[%s570 + $0xc] sm:$0xf] %vm571, %v443
  %574 = vst.msk [vmem:[%s570 + $0x1c] sm:$0xf] %vm571, %v444
  %575 = vst.msk [vmem:[%s570 + $0x20] sm:$0xf] %vm571, %v445
  %576 = vst.msk [vmem:[%s570 + $0x30] sm:$0xf] %vm571, %v446
  %577 = vst.msk [vmem:[%s570 + $0x34] sm:$0xf] %vm571, %v447
  %578 = vst.msk [vmem:[%s570 + $0x44] sm:$0xf] %vm571, %v448
  %579 = vst.msk [vmem:[%s570 + $0x48] sm:$0xf] %vm571, %v449
  %580 = vst.msk [vmem:[%s570 + $0x58] sm:$0xf] %vm571, %v450
  %581 = vst.msk [vmem:[%s570 + $0x5c] sm:$0xf] %vm571, %v451
  %582 = vst.msk [vmem:[%s570 + $0x6c] sm:$0xf] %vm571, %v452
  %583 = vst.msk [vmem:[%s570 + $0x70] sm:$0xf] %vm571, %v453
  %584 = vst.msk [vmem:[%s570 + $0x80] sm:$0xf] %vm571, %v454
  %585 = vst.msk [vmem:[%s570 + $0x84] sm:$0xf] %vm571, %v455
  %586 = vst.msk [vmem:[%s570 + $0x94] sm:$0xf] %vm571, %v456
  %587 = vst.msk [vmem:[%s570 + $0x98] sm:$0xf] %vm571, %v457
  %588 = vst.msk [vmem:[%s570 + $0xa8] sm:$0xf] %vm571, %v458
  %589 = vst.msk [vmem:[%s570 + $0xac] sm:$0xf] %vm571, %v459
  %590 = vst.msk [vmem:[%s570 + $0xbc] sm:$0xf] %vm571, %v460
  %591 = vst.msk [vmem:[%s570 + $0xc0] sm:$0xf] %vm571, %v461
  %592 = vst.msk [vmem:[%s570 + $0xd0] sm:$0xf] %vm571, %v462
  %593 = vst.msk [vmem:[%s570 + $0xd4] sm:$0xf] %vm571, %v463
  %594 = vst.msk [vmem:[%s570 + $0xe4] sm:$0xf] %vm571, %v464
  %595 = vst.msk [vmem:[%s570 + $0xe8] sm:$0xf] %vm571, %v465
  %596 = vst.msk [vmem:[%s570 + $0xf8] sm:$0xf] %vm571, %v466
  %597 = vst.msk [vmem:[%s570 + $0xfc] sm:$0xf] %vm571, %v467
  %598 = vst.msk [vmem:[%s570 + $0x10c] sm:$0xf] %vm571, %v468
  %599 = vst.msk [vmem:[%s570 + $0x110] sm:$0xf] %vm571, %v469
  %600 = vst.msk [vmem:[%s570 + $0x120] sm:$0xf] %vm571, %v470
  %601 = vst.msk [vmem:[%s570 + $0x124] sm:$0xf] %vm571, %v471
  %602 = vst.msk [vmem:[%s570 + $0x134] sm:$0xf] %vm571, %v472
  %603 = vst.msk [vmem:[%s570 + $0x138] sm:$0xf] %vm571, %v473
  %604 = vst.msk [vmem:[%s570 + $0x170] sm:$0xf] %vm571, %v474
  %605 = vst.msk [vmem:[%s570 + $0x174] sm:$0xf] %vm571, %v475
  %606 = vst.msk [vmem:[%s570 + $0x184] sm:$0xf] %vm571, %v476
  %607 = vst.msk [vmem:[%s570 + $0x188] sm:$0xf] %vm571, %v477
  %608 = vst.msk [vmem:[%s570 + $0x198] sm:$0xf] %vm571, %v478
  %609 = vst.msk [vmem:[%s570 + $0x19c] sm:$0xf] %vm571, %v479
  %610 = vst.msk [vmem:[%s570 + $0x1ac] sm:$0xf] %vm571, %v480
  %611 = vst.msk [vmem:[%s570 + $0x1b0] sm:$0xf] %vm571, %v481
  %612 = vst.msk [vmem:[%s570 + $0x1c0] sm:$0xf] %vm571, %v482
  %613 = vst.msk [vmem:[%s570 + $0x1c4] sm:$0xf] %vm571, %v483
  %614 = vst.msk [vmem:[%s570 + $0x1d4] sm:$0xf] %vm571, %v484
  %615 = vst.msk [vmem:[%s570 + $0x1d8] sm:$0xf] %vm571, %v485
  %616 = vst.msk [vmem:[%s570 + $0x1e8] sm:$0xf] %vm571, %v486
  %617 = vst.msk [vmem:[%s570 + $0x1ec] sm:$0xf] %vm571, %v487
  %618 = vst.msk [vmem:[%s570 + $0x1fc] sm:$0xf] %vm571, %v488
  %619 = vst.msk [vmem:[%s570 + $0x200] sm:$0xf] %vm571, %v489
  %620 = vst.msk [vmem:[%s570 + $0x210] sm:$0xf] %vm571, %v490
  %621 = vst.msk [vmem:[%s570 + $0x214] sm:$0xf] %vm571, %v491
  %622 = vst.msk [vmem:[%s570 + $0x224] sm:$0xf] %vm571, %v492
  %623 = vst.msk [vmem:[%s570 + $0x228] sm:$0xf] %vm571, %v493
  %624 = vst.msk [vmem:[%s570 + $0x238] sm:$0xf] %vm571, %v494
  %625 = vst.msk [vmem:[%s570 + $0x23c] sm:$0xf] %vm571, %v495
  %626 = vst.msk [vmem:[%s570 + $0x24c] sm:$0xf] %vm571, %v496
  %627 = vst.msk [vmem:[%s570 + $0x250] sm:$0xf] %vm571, %v497
  %628 = vst.msk [vmem:[%s570 + $0x260] sm:$0xf] %vm571, %v498
  %629 = vst.msk [vmem:[%s570 + $0x264] sm:$0xf] %vm571, %v499
  %630 = vst.msk [vmem:[%s570 + $0x274] sm:$0xf] %vm571, %v500
  %631 = vst.msk [vmem:[%s570 + $0x278] sm:$0xf] %vm571, %v501
  %632 = vst.msk [vmem:[%s570 + $0x288] sm:$0xf] %vm571, %v502
  %633 = vst.msk [vmem:[%s570 + $0x28c] sm:$0xf] %vm571, %v503
  %634 = vst.msk [vmem:[%s570 + $0x29c] sm:$0xf] %vm571, %v504
  %635 = vst.msk [vmem:[%s570 + $0x2a0] sm:$0xf] %vm571, %v505
  %v636 = vld [vmem:[#allocation2 + $0x4] sm:$0x8]
  %v637 = vld [vmem:[#allocation2 + $0x8] sm:$0xf]
  %v638 = vld [vmem:[#allocation2 + $0xc] sm:$0xf]
  %v639 = vld [vmem:[#allocation2 + $0x18] sm:$0x8]
  %v640 = vld [vmem:[#allocation2 + $0x1c] sm:$0xf]
  %v641 = vld [vmem:[#allocation2 + $0x20] sm:$0xf]
  %v642 = vld [vmem:[#allocation2 + $0x2c] sm:$0x8]
  %v643 = vld [vmem:[#allocation2 + $0x30] sm:$0xf]
  %v644 = vld [vmem:[#allocation2 + $0x34] sm:$0xf]
  %v645 = vld [vmem:[#allocation2 + $0x40] sm:$0x8]
  %v646 = vld [vmem:[#allocation2 + $0x44] sm:$0xf]
  %v647 = vld [vmem:[#allocation2 + $0x48] sm:$0xf]
  %v648 = vld [vmem:[#allocation2 + $0x54] sm:$0x8]
  %v649 = vld [vmem:[#allocation2 + $0x58] sm:$0xf]
  %v650 = vld [vmem:[#allocation2 + $0x5c] sm:$0xf]
  %v651 = vld [vmem:[#allocation2 + $0x68] sm:$0x8]
  %v652 = vld [vmem:[#allocation2 + $0x6c] sm:$0xf]
  %v653 = vld [vmem:[#allocation2 + $0x70] sm:$0xf]
  %v654 = vld [vmem:[#allocation2 + $0x7c] sm:$0x8]
  %v655 = vld [vmem:[#allocation2 + $0x80] sm:$0xf]
  %v656 = vld [vmem:[#allocation2 + $0x84] sm:$0xf]
  %v657 = vld [vmem:[#allocation2 + $0x90] sm:$0x8]
  %v658 = vld [vmem:[#allocation2 + $0x94] sm:$0xf]
  %v659 = vld [vmem:[#allocation2 + $0x98] sm:$0xf]
  %v660 = vld [vmem:[#allocation2 + $0xa4] sm:$0x8]
  %v661 = vld [vmem:[#allocation2 + $0xa8] sm:$0xf]
  %v662 = vld [vmem:[#allocation2 + $0xac] sm:$0xf]
  %v663 = vld [vmem:[#allocation2 + $0xb8] sm:$0x8]
  %v664 = vld [vmem:[#allocation2 + $0xbc] sm:$0xf]
  %v665 = vld [vmem:[#allocation2 + $0xc0] sm:$0xf]
  %v666 = vld [vmem:[#allocation2 + $0xcc] sm:$0x8]
  %v667 = vld [vmem:[#allocation2 + $0xd0] sm:$0xf]
  %v668 = vld [vmem:[#allocation2 + $0xd4] sm:$0xf]
  %v669 = vld [vmem:[#allocation2 + $0xe0] sm:$0x8]
  %v670 = vld [vmem:[#allocation2 + $0xe4] sm:$0xf]
  %v671 = vld [vmem:[#allocation2 + $0xe8] sm:$0xf]
  %v672 = vld [vmem:[#allocation2 + $0xf4] sm:$0x8]
  %v673 = vld [vmem:[#allocation2 + $0xf8] sm:$0xf]
  %v674 = vld [vmem:[#allocation2 + $0xfc] sm:$0xf]
  %v675 = vld [vmem:[#allocation2 + $0x108] sm:$0x8]
  %v676 = vld [vmem:[#allocation2 + $0x10c] sm:$0xf]
  %v677 = vld [vmem:[#allocation2 + $0x110] sm:$0xf]
  %v678 = vld [vmem:[#allocation2 + $0x11c] sm:$0x8]
  %v679 = vld [vmem:[#allocation2 + $0x120] sm:$0xf]
  %v680 = vld [vmem:[#allocation2 + $0x124] sm:$0xf]
  %v681 = vld [vmem:[#allocation2 + $0x130] sm:$0x8]
  %v682 = vld [vmem:[#allocation2 + $0x134] sm:$0xf]
  %v683 = vld [vmem:[#allocation2 + $0x138] sm:$0xf]
  %v684 = vld [vmem:[#allocation2 + $0x144] sm:$0x8]
  %v685 = vld [vmem:[#allocation2 + $0x148] sm:$0xf]
  %v686 = vld [vmem:[#allocation2 + $0x14c] sm:$0xf]
  %v687 = vld [vmem:[#allocation2 + $0x158] sm:$0x8]
  %v688 = vld [vmem:[#allocation2 + $0x15c] sm:$0xf]
  %v689 = vld [vmem:[#allocation2 + $0x160] sm:$0xf]
  %v690 = vld [vmem:[#allocation2 + $0x16c] sm:$0x8]
  %v691 = vld [vmem:[#allocation2 + $0x170] sm:$0xf]
  %v692 = vld [vmem:[#allocation2 + $0x174] sm:$0xf]
  %v693 = vld [vmem:[#allocation2 + $0x180] sm:$0x8]
  %v694 = vld [vmem:[#allocation2 + $0x184] sm:$0xf]
  %v695 = vld [vmem:[#allocation2 + $0x188] sm:$0xf]
  %v696 = vld [vmem:[#allocation2 + $0x194] sm:$0x8]
  %v697 = vld [vmem:[#allocation2 + $0x198] sm:$0xf]
  %v698 = vld [vmem:[#allocation2 + $0x19c] sm:$0xf]
  %v699 = vld [vmem:[#allocation2 + $0x1a8] sm:$0x8]
  %v700 = vld [vmem:[#allocation2 + $0x1ac] sm:$0xf]
  %v701 = vld [vmem:[#allocation2 + $0x1b0] sm:$0xf]
  %v702 = vld [vmem:[#allocation2 + $0x1bc] sm:$0x8]
  %v703 = vld [vmem:[#allocation2 + $0x1c0] sm:$0xf]
  %v704 = vld [vmem:[#allocation2 + $0x1c4] sm:$0xf]
  %v705 = vld [vmem:[#allocation2 + $0x1d0] sm:$0x8]
  %v706 = vld [vmem:[#allocation2 + $0x1d4] sm:$0xf]
  %v707 = vld [vmem:[#allocation2 + $0x1d8] sm:$0xf]
  %v708 = vld [vmem:[#allocation2 + $0x1e4] sm:$0x8]
  %v709 = vld [vmem:[#allocation2 + $0x1e8] sm:$0xf]
  %v710 = vld [vmem:[#allocation2 + $0x1ec] sm:$0xf]
  %v711 = vld [vmem:[#allocation2 + $0x1f8] sm:$0x8]
  %v712 = vld [vmem:[#allocation2 + $0x1fc] sm:$0xf]
  %v713 = vld [vmem:[#allocation2 + $0x200] sm:$0xf]
  %v714 = vld [vmem:[#allocation2 + $0x20c] sm:$0x8]
  %v715 = vld [vmem:[#allocation2 + $0x210] sm:$0xf]
  %v716 = vld [vmem:[#allocation2 + $0x214] sm:$0xf]
  %v717 = vld [vmem:[#allocation2 + $0x220] sm:$0x8]
  %v718 = vld [vmem:[#allocation2 + $0x224] sm:$0xf]
  %v719 = vld [vmem:[#allocation2 + $0x228] sm:$0xf]
  %v720 = vld [vmem:[#allocation2 + $0x234] sm:$0x8]
  %v721 = vld [vmem:[#allocation2 + $0x238] sm:$0xf]
  %v722 = vld [vmem:[#allocation2 + $0x23c] sm:$0xf]
  %v723 = vld [vmem:[#allocation2 + $0x248] sm:$0x8]
  %v724 = vld [vmem:[#allocation2 + $0x24c] sm:$0xf]
  %v725 = vld [vmem:[#allocation2 + $0x250] sm:$0xf]
  %v726 = vld [vmem:[#allocation2 + $0x25c] sm:$0x8]
  %v727 = vld [vmem:[#allocation2 + $0x260] sm:$0xf]
  %v728 = vld [vmem:[#allocation2 + $0x264] sm:$0xf]
  %v729 = vld [vmem:[#allocation2 + $0x270] sm:$0x8]
  %v730 = vld [vmem:[#allocation2 + $0x274] sm:$0xf]
  %v731 = vld [vmem:[#allocation2 + $0x278] sm:$0xf]
  %v732 = vld [vmem:[#allocation2 + $0x284] sm:$0x8]
  %v733 = vld [vmem:[#allocation2 + $0x288] sm:$0xf]
  %v734 = vld [vmem:[#allocation2 + $0x28c] sm:$0xf]
  %v735 = vld [vmem:[#allocation2 + $0x298] sm:$0x8]
  %v736 = vld [vmem:[#allocation2 + $0x29c] sm:$0xf]
  %v737 = vld [vmem:[#allocation2 + $0x2a0] sm:$0xf]
  %v738 = vld [vmem:[#allocation2 + $0x2ac] sm:$0x8]
  %v739 = vld [vmem:[#allocation2 + $0x2b0] sm:$0xf]
  %v740 = vld [vmem:[#allocation2 + $0x2b4] sm:$0xf]
  %v741 = vld [vmem:[#allocation2 + $0x2c0] sm:$0x8]
  %v742 = vld [vmem:[#allocation2 + $0x2c4] sm:$0xf]
  %v743 = vld [vmem:[#allocation2 + $0x2c8] sm:$0xf]
  %v744 = vld [vmem:[#allocation2 + $0x10] sm:$0x1]
  %v745 = vld [vmem:[#allocation2 + $0x24] sm:$0x1]
  %v746 = vld [vmem:[#allocation2 + $0x38] sm:$0x1]
  %v747 = vld [vmem:[#allocation2 + $0x4c] sm:$0x1]
  %v748 = vld [vmem:[#allocation2 + $0x60] sm:$0x1]
  %v749 = vld [vmem:[#allocation2 + $0x74] sm:$0x1]
  %v750 = vld [vmem:[#allocation2 + $0x88] sm:$0x1]
  %v751 = vld [vmem:[#allocation2 + $0x9c] sm:$0x1]
  %v752 = vld [vmem:[#allocation2 + $0xb0] sm:$0x1]
  %v753 = vld [vmem:[#allocation2 + $0xc4] sm:$0x1]
  %v754 = vld [vmem:[#allocation2 + $0xd8] sm:$0x1]
  %v755 = vld [vmem:[#allocation2 + $0xec] sm:$0x1]
  %v756 = vld [vmem:[#allocation2 + $0x100] sm:$0x1]
  %v757 = vld [vmem:[#allocation2 + $0x114] sm:$0x1]
  %v758 = vld [vmem:[#allocation2 + $0x128] sm:$0x1]
  %v759 = vld [vmem:[#allocation2 + $0x13c] sm:$0x1]
  %v760 = vld [vmem:[#allocation2 + $0x150] sm:$0x1]
  %v761 = vld [vmem:[#allocation2 + $0x164] sm:$0x1]
  %v762 = vld [vmem:[#allocation2 + $0x178] sm:$0x1]
  %v763 = vld [vmem:[#allocation2 + $0x18c] sm:$0x1]
  %v764 = vld [vmem:[#allocation2 + $0x1a0] sm:$0x1]
  %v765 = vld [vmem:[#allocation2 + $0x1b4] sm:$0x1]
  %v766 = vld [vmem:[#allocation2 + $0x1c8] sm:$0x1]
  %v767 = vld [vmem:[#allocation2 + $0x1dc] sm:$0x1]
  %v768 = vld [vmem:[#allocation2 + $0x1f0] sm:$0x1]
  %v769 = vld [vmem:[#allocation2 + $0x204] sm:$0x1]
  %v770 = vld [vmem:[#allocation2 + $0x218] sm:$0x1]
  %v771 = vld [vmem:[#allocation2 + $0x22c] sm:$0x1]
  %v772 = vld [vmem:[#allocation2 + $0x240] sm:$0x1]
  %v773 = vld [vmem:[#allocation2 + $0x254] sm:$0x1]
  %v774 = vld [vmem:[#allocation2 + $0x268] sm:$0x1]
  %v775 = vld [vmem:[#allocation2 + $0x27c] sm:$0x1]
  %v776 = vld [vmem:[#allocation2 + $0x290] sm:$0x1]
  %v777 = vld [vmem:[#allocation2 + $0x2a4] sm:$0x1]
  %v778 = vld [vmem:[#allocation2 + $0x2b8] sm:$0x1]
  %v779 = vld [vmem:[#allocation2 + $0x2cc] sm:$0x1]
  %v876 = vunpack.c.l.b16 %v636
  %v877 = vunpack.c.l.b16 %v637
  %v878 = vunpack.c.l.b16 %v638
  %v879 = vunpack.c.l.b16 %v639
  %v880 = vunpack.c.l.b16 %v640
  %v881 = vunpack.c.l.b16 %v641
  %v882 = vunpack.c.l.b16 %v642
  %v883 = vunpack.c.l.b16 %v643
  %v884 = vunpack.c.l.b16 %v644
  %v885 = vunpack.c.l.b16 %v645
  %v886 = vunpack.c.l.b16 %v646
  %v887 = vunpack.c.l.b16 %v647
  %v888 = vunpack.c.l.b16 %v648
  %v889 = vunpack.c.l.b16 %v649
  %v890 = vunpack.c.l.b16 %v650
  %v891 = vunpack.c.l.b16 %v651
  %v892 = vunpack.c.l.b16 %v652
  %v893 = vunpack.c.l.b16 %v653
  %v894 = vunpack.c.l.b16 %v654
  %v895 = vunpack.c.l.b16 %v655
  %v896 = vunpack.c.l.b16 %v656
  %v897 = vunpack.c.l.b16 %v657
  %v898 = vunpack.c.l.b16 %v658
  %v899 = vunpack.c.l.b16 %v659
  %v900 = vunpack.c.l.b16 %v660
  %v901 = vunpack.c.l.b16 %v661
  %v902 = vunpack.c.l.b16 %v662
  %v903 = vunpack.c.l.b16 %v663
  %v904 = vunpack.c.l.b16 %v664
  %v905 = vunpack.c.l.b16 %v665
  %v906 = vunpack.c.l.b16 %v666
  %v907 = vunpack.c.l.b16 %v667
  %v908 = vunpack.c.l.b16 %v668
  %v909 = vunpack.c.l.b16 %v669
  %v910 = vunpack.c.l.b16 %v670
  %v911 = vunpack.c.l.b16 %v671
  %v912 = vunpack.c.l.b16 %v672
  %v913 = vunpack.c.l.b16 %v673
  %v914 = vunpack.c.l.b16 %v674
  %v915 = vunpack.c.l.b16 %v675
  %v916 = vunpack.c.l.b16 %v676
  %v917 = vunpack.c.l.b16 %v677
  %v918 = vunpack.c.l.b16 %v678
  %v919 = vunpack.c.l.b16 %v679
  %v920 = vunpack.c.l.b16 %v680
  %v921 = vunpack.c.l.b16 %v681
  %v922 = vunpack.c.l.b16 %v682
  %v923 = vunpack.c.l.b16 %v683
  %v924 = vunpack.c.l.b16 %v690
  %v925 = vunpack.c.l.b16 %v691
  %v926 = vunpack.c.l.b16 %v692
  %v927 = vunpack.c.l.b16 %v693
  %v928 = vunpack.c.l.b16 %v694
  %v929 = vunpack.c.l.b16 %v695
  %v930 = vunpack.c.l.b16 %v696
  %v931 = vunpack.c.l.b16 %v697
  %v932 = vunpack.c.l.b16 %v698
  %v933 = vunpack.c.l.b16 %v699
  %v934 = vunpack.c.l.b16 %v700
  %v935 = vunpack.c.l.b16 %v701
  %v936 = vunpack.c.l.b16 %v702
  %v937 = vunpack.c.l.b16 %v703
  %v938 = vunpack.c.l.b16 %v704
  %v939 = vunpack.c.l.b16 %v705
  %v940 = vunpack.c.l.b16 %v706
  %v941 = vunpack.c.l.b16 %v707
  %v942 = vunpack.c.l.b16 %v708
  %v943 = vunpack.c.l.b16 %v709
  %v944 = vunpack.c.l.b16 %v710
  %v945 = vunpack.c.l.b16 %v711
  %v946 = vunpack.c.l.b16 %v712
  %v947 = vunpack.c.l.b16 %v713
  %v948 = vunpack.c.l.b16 %v714
  %v949 = vunpack.c.l.b16 %v715
  %v950 = vunpack.c.l.b16 %v716
  %v951 = vunpack.c.l.b16 %v717
  %v952 = vunpack.c.l.b16 %v718
  %v953 = vunpack.c.l.b16 %v719
  %v954 = vunpack.c.l.b16 %v720
  %v955 = vunpack.c.l.b16 %v721
  %v956 = vunpack.c.l.b16 %v722
  %v957 = vunpack.c.l.b16 %v723
  %v958 = vunpack.c.l.b16 %v724
  %v959 = vunpack.c.l.b16 %v725
  %v960 = vunpack.c.l.b16 %v726
  %v961 = vunpack.c.l.b16 %v727
  %v962 = vunpack.c.l.b16 %v728
  %v963 = vunpack.c.l.b16 %v729
  %v964 = vunpack.c.l.b16 %v730
  %v965 = vunpack.c.l.b16 %v731
  %v966 = vunpack.c.l.b16 %v732
  %v967 = vunpack.c.l.b16 %v733
  %v968 = vunpack.c.l.b16 %v734
  %v969 = vunpack.c.l.b16 %v735
  %v970 = vunpack.c.l.b16 %v736
  %v971 = vunpack.c.l.b16 %v737
  %v972 = vpack.c.b16 %v877, %v876
  %v973 = vpack.c.b16 %v878, %v878
  %v974 = vpack.c.b16 %v880, %v879
  %v975 = vpack.c.b16 %v881, %v881
  %v976 = vpack.c.b16 %v883, %v882
  %v977 = vpack.c.b16 %v884, %v884
  %v978 = vpack.c.b16 %v886, %v885
  %v979 = vpack.c.b16 %v887, %v887
  %v980 = vpack.c.b16 %v889, %v888
  %v981 = vpack.c.b16 %v890, %v890
  %v982 = vpack.c.b16 %v892, %v891
  %v983 = vpack.c.b16 %v893, %v893
  %v984 = vpack.c.b16 %v895, %v894
  %v985 = vpack.c.b16 %v896, %v896
  %v986 = vpack.c.b16 %v898, %v897
  %v987 = vpack.c.b16 %v899, %v899
  %v988 = vpack.c.b16 %v901, %v900
  %v989 = vpack.c.b16 %v902, %v902
  %v990 = vpack.c.b16 %v904, %v903
  %v991 = vpack.c.b16 %v905, %v905
  %v992 = vpack.c.b16 %v907, %v906
  %v993 = vpack.c.b16 %v908, %v908
  %v994 = vpack.c.b16 %v910, %v909
  %v995 = vpack.c.b16 %v911, %v911
  %v996 = vpack.c.b16 %v913, %v912
  %v997 = vpack.c.b16 %v914, %v914
  %v998 = vpack.c.b16 %v916, %v915
  %v999 = vpack.c.b16 %v917, %v917
  %v1000 = vpack.c.b16 %v919, %v918
  %v1001 = vpack.c.b16 %v920, %v920
  %v1002 = vpack.c.b16 %v922, %v921
  %v1003 = vpack.c.b16 %v923, %v923
  %v1004 = vpack.c.b16 %v925, %v924
  %v1005 = vpack.c.b16 %v926, %v926
  %v1006 = vpack.c.b16 %v928, %v927
  %v1007 = vpack.c.b16 %v929, %v929
  %v1008 = vpack.c.b16 %v931, %v930
  %v1009 = vpack.c.b16 %v932, %v932
  %v1010 = vpack.c.b16 %v934, %v933
  %v1011 = vpack.c.b16 %v935, %v935
  %v1012 = vpack.c.b16 %v937, %v936
  %v1013 = vpack.c.b16 %v938, %v938
  %v1014 = vpack.c.b16 %v940, %v939
  %v1015 = vpack.c.b16 %v941, %v941
  %v1016 = vpack.c.b16 %v943, %v942
  %v1017 = vpack.c.b16 %v944, %v944
  %v1018 = vpack.c.b16 %v946, %v945
  %v1019 = vpack.c.b16 %v947, %v947
  %v1020 = vpack.c.b16 %v949, %v948
  %v1021 = vpack.c.b16 %v950, %v950
  %v1022 = vpack.c.b16 %v952, %v951
  %v1023 = vpack.c.b16 %v953, %v953
  %v1024 = vpack.c.b16 %v955, %v954
  %v1025 = vpack.c.b16 %v956, %v956
  %v1026 = vpack.c.b16 %v958, %v957
  %v1027 = vpack.c.b16 %v959, %v959
  %v1028 = vpack.c.b16 %v961, %v960
  %v1029 = vpack.c.b16 %v962, %v962
  %v1030 = vpack.c.b16 %v964, %v963
  %v1031 = vpack.c.b16 %v965, %v965
  %v1032 = vpack.c.b16 %v967, %v966
  %v1033 = vpack.c.b16 %v968, %v968
  %v1034 = vpack.c.b16 %v970, %v969
  %v1035 = vpack.c.b16 %v971, %v971
  %v1036 = vpack.c.b16 %v878, %v877
  %v1037 = vpack.c.b16 %v881, %v880
  %v1038 = vpack.c.b16 %v884, %v883
  %v1039 = vpack.c.b16 %v887, %v886
  %v1040 = vpack.c.b16 %v890, %v889
  %v1041 = vpack.c.b16 %v893, %v892
  %v1042 = vpack.c.b16 %v896, %v895
  %v1043 = vpack.c.b16 %v899, %v898
  %v1044 = vpack.c.b16 %v902, %v901
  %v1045 = vpack.c.b16 %v905, %v904
  %v1046 = vpack.c.b16 %v908, %v907
  %v1047 = vpack.c.b16 %v911, %v910
  %v1048 = vpack.c.b16 %v914, %v913
  %v1049 = vpack.c.b16 %v917, %v916
  %v1050 = vpack.c.b16 %v920, %v919
  %v1051 = vpack.c.b16 %v923, %v922
  %v1052 = vpack.c.b16 %v926, %v925
  %v1053 = vpack.c.b16 %v929, %v928
  %v1054 = vpack.c.b16 %v932, %v931
  %v1055 = vpack.c.b16 %v935, %v934
  %v1056 = vpack.c.b16 %v938, %v937
  %v1057 = vpack.c.b16 %v941, %v940
  %v1058 = vpack.c.b16 %v944, %v943
  %v1059 = vpack.c.b16 %v947, %v946
  %v1060 = vpack.c.b16 %v950, %v949
  %v1061 = vpack.c.b16 %v953, %v952
  %v1062 = vpack.c.b16 %v956, %v955
  %v1063 = vpack.c.b16 %v959, %v958
  %v1064 = vpack.c.b16 %v962, %v961
  %v1065 = vpack.c.b16 %v965, %v964
  %v1066 = vpack.c.b16 %v968, %v967
  %v1067 = vpack.c.b16 %v971, %v970
  %v1069 = vshrl.u32 %v1036, 16
  %v1071 = vrot.slane %v1069, 4
  %v1072 = vshll.u32 %v1036, 16
  %v1074 = vrot.slane %v1072, 5
  %v1075 = vor.u32 %v1071, %v1074
  %v1077 = vshrl.u32 %v1037, 16
  %v1079 = vrot.slane %v1077, 4
  %v1080 = vshll.u32 %v1037, 16
  %v1082 = vrot.slane %v1080, 5
  %v1083 = vor.u32 %v1079, %v1082
  %v1085 = vshrl.u32 %v1038, 16
  %v1087 = vrot.slane %v1085, 4
  %v1088 = vshll.u32 %v1038, 16
  %v1090 = vrot.slane %v1088, 5
  %v1091 = vor.u32 %v1087, %v1090
  %v1093 = vshrl.u32 %v1039, 16
  %v1095 = vrot.slane %v1093, 4
  %v1096 = vshll.u32 %v1039, 16
  %v1098 = vrot.slane %v1096, 5
  %v1099 = vor.u32 %v1095, %v1098
  %v1101 = vshrl.u32 %v1040, 16
  %v1103 = vrot.slane %v1101, 4
  %v1104 = vshll.u32 %v1040, 16
  %v1106 = vrot.slane %v1104, 5
  %v1107 = vor.u32 %v1103, %v1106
  %v1109 = vshrl.u32 %v1041, 16
  %v1111 = vrot.slane %v1109, 4
  %v1112 = vshll.u32 %v1041, 16
  %v1114 = vrot.slane %v1112, 5
  %v1115 = vor.u32 %v1111, %v1114
  %v1117 = vshrl.u32 %v1042, 16
  %v1119 = vrot.slane %v1117, 4
  %v1120 = vshll.u32 %v1042, 16
  %v1122 = vrot.slane %v1120, 5
  %v1123 = vor.u32 %v1119, %v1122
  %v1125 = vshrl.u32 %v1043, 16
  %v1127 = vrot.slane %v1125, 4
  %v1128 = vshll.u32 %v1043, 16
  %v1130 = vrot.slane %v1128, 5
  %v1131 = vor.u32 %v1127, %v1130
  %v1133 = vshrl.u32 %v1044, 16
  %v1135 = vrot.slane %v1133, 4
  %v1136 = vshll.u32 %v1044, 16
  %v1138 = vrot.slane %v1136, 5
  %v1139 = vor.u32 %v1135, %v1138
  %v1141 = vshrl.u32 %v1045, 16
  %v1143 = vrot.slane %v1141, 4
  %v1144 = vshll.u32 %v1045, 16
  %v1146 = vrot.slane %v1144, 5
  %v1147 = vor.u32 %v1143, %v1146
  %v1149 = vshrl.u32 %v1046, 16
  %v1151 = vrot.slane %v1149, 4
  %v1152 = vshll.u32 %v1046, 16
  %v1154 = vrot.slane %v1152, 5
  %v1155 = vor.u32 %v1151, %v1154
  %v1157 = vshrl.u32 %v1047, 16
  %v1159 = vrot.slane %v1157, 4
  %v1160 = vshll.u32 %v1047, 16
  %v1162 = vrot.slane %v1160, 5
  %v1163 = vor.u32 %v1159, %v1162
  %v1165 = vshrl.u32 %v1048, 16
  %v1167 = vrot.slane %v1165, 4
  %v1168 = vshll.u32 %v1048, 16
  %v1170 = vrot.slane %v1168, 5
  %v1171 = vor.u32 %v1167, %v1170
  %v1173 = vshrl.u32 %v1049, 16
  %v1175 = vrot.slane %v1173, 4
  %v1176 = vshll.u32 %v1049, 16
  %v1178 = vrot.slane %v1176, 5
  %v1179 = vor.u32 %v1175, %v1178
  %v1181 = vshrl.u32 %v1050, 16
  %v1183 = vrot.slane %v1181, 4
  %v1184 = vshll.u32 %v1050, 16
  %v1186 = vrot.slane %v1184, 5
  %v1187 = vor.u32 %v1183, %v1186
  %v1189 = vshrl.u32 %v1051, 16
  %v1191 = vrot.slane %v1189, 4
  %v1192 = vshll.u32 %v1051, 16
  %v1194 = vrot.slane %v1192, 5
  %v1195 = vor.u32 %v1191, %v1194
  %v1197 = vshrl.u32 %v1052, 16
  %v1199 = vrot.slane %v1197, 4
  %v1200 = vshll.u32 %v1052, 16
  %v1202 = vrot.slane %v1200, 5
  %v1203 = vor.u32 %v1199, %v1202
  %v1205 = vshrl.u32 %v1053, 16
  %v1207 = vrot.slane %v1205, 4
  %v1208 = vshll.u32 %v1053, 16
  %v1210 = vrot.slane %v1208, 5
  %v1211 = vor.u32 %v1207, %v1210
  %v1213 = vshrl.u32 %v1054, 16
  %v1215 = vrot.slane %v1213, 4
  %v1216 = vshll.u32 %v1054, 16
  %v1218 = vrot.slane %v1216, 5
  %v1219 = vor.u32 %v1215, %v1218
  %v1221 = vshrl.u32 %v1055, 16
  %v1223 = vrot.slane %v1221, 4
  %v1224 = vshll.u32 %v1055, 16
  %v1226 = vrot.slane %v1224, 5
  %v1227 = vor.u32 %v1223, %v1226
  %v1229 = vshrl.u32 %v1056, 16
  %v1231 = vrot.slane %v1229, 4
  %v1232 = vshll.u32 %v1056, 16
  %v1234 = vrot.slane %v1232, 5
  %v1235 = vor.u32 %v1231, %v1234
  %v1237 = vshrl.u32 %v1057, 16
  %v1239 = vrot.slane %v1237, 4
  %v1240 = vshll.u32 %v1057, 16
  %v1242 = vrot.slane %v1240, 5
  %v1243 = vor.u32 %v1239, %v1242
  %v1245 = vshrl.u32 %v1058, 16
  %v1247 = vrot.slane %v1245, 4
  %v1248 = vshll.u32 %v1058, 16
  %v1250 = vrot.slane %v1248, 5
  %v1251 = vor.u32 %v1247, %v1250
  %v1253 = vshrl.u32 %v1059, 16
  %v1255 = vrot.slane %v1253, 4
  %v1256 = vshll.u32 %v1059, 16
  %v1258 = vrot.slane %v1256, 5
  %v1259 = vor.u32 %v1255, %v1258
  %v1261 = vshrl.u32 %v1060, 16
  %v1263 = vrot.slane %v1261, 4
  %v1264 = vshll.u32 %v1060, 16
  %v1266 = vrot.slane %v1264, 5
  %v1267 = vor.u32 %v1263, %v1266
  %v1269 = vshrl.u32 %v1061, 16
  %v1271 = vrot.slane %v1269, 4
  %v1272 = vshll.u32 %v1061, 16
  %v1274 = vrot.slane %v1272, 5
  %v1275 = vor.u32 %v1271, %v1274
  %v1277 = vshrl.u32 %v1062, 16
  %v1279 = vrot.slane %v1277, 4
  %v1280 = vshll.u32 %v1062, 16
  %v1282 = vrot.slane %v1280, 5
  %v1283 = vor.u32 %v1279, %v1282
  %v1285 = vshrl.u32 %v1063, 16
  %v1287 = vrot.slane %v1285, 4
  %v1288 = vshll.u32 %v1063, 16
  %v1290 = vrot.slane %v1288, 5
  %v1291 = vor.u32 %v1287, %v1290
  %v1293 = vshrl.u32 %v1064, 16
  %v1295 = vrot.slane %v1293, 4
  %v1296 = vshll.u32 %v1064, 16
  %v1298 = vrot.slane %v1296, 5
  %v1299 = vor.u32 %v1295, %v1298
  %v1301 = vshrl.u32 %v1065, 16
  %v1303 = vrot.slane %v1301, 4
  %v1304 = vshll.u32 %v1065, 16
  %v1306 = vrot.slane %v1304, 5
  %v1307 = vor.u32 %v1303, %v1306
  %v1309 = vshrl.u32 %v1066, 16
  %v1311 = vrot.slane %v1309, 4
  %v1312 = vshll.u32 %v1066, 16
  %v1314 = vrot.slane %v1312, 5
  %v1315 = vor.u32 %v1311, %v1314
  %v1317 = vshrl.u32 %v1067, 16
  %v1319 = vrot.slane %v1317, 4
  %v1320 = vshll.u32 %v1067, 16
  %v1322 = vrot.slane %v1320, 5
  %v1323 = vor.u32 %v1319, %v1322
  %1324 = vrot.lane.b32.xlu0 %v1075, 4
  %v1325 = vpop.permute.xlu0 %1324
  %1326 = vrot.lane.b32.xlu0 %v1083, 4
  %v1327 = vpop.permute.xlu0 %1326
  %1328 = vrot.lane.b32.xlu0 %v1091, 4
  %v1329 = vpop.permute.xlu0 %1328
  %1330 = vrot.lane.b32.xlu0 %v1099, 4
  %v1331 = vpop.permute.xlu0 %1330
  %1332 = vrot.lane.b32.xlu0 %v1107, 4
  %v1333 = vpop.permute.xlu0 %1332
  %1334 = vrot.lane.b32.xlu0 %v1115, 4
  %v1335 = vpop.permute.xlu0 %1334
  %1336 = vrot.lane.b32.xlu0 %v1123, 4
  %v1337 = vpop.permute.xlu0 %1336
  %1338 = vrot.lane.b32.xlu0 %v1131, 4
  %v1339 = vpop.permute.xlu0 %1338
  %1340 = vrot.lane.b32.xlu0 %v1139, 4
  %v1341 = vpop.permute.xlu0 %1340
  %1342 = vrot.lane.b32.xlu0 %v1147, 4
  %v1343 = vpop.permute.xlu0 %1342
  %1344 = vrot.lane.b32.xlu0 %v1155, 4
  %v1345 = vpop.permute.xlu0 %1344
  %1346 = vrot.lane.b32.xlu0 %v1163, 4
  %v1347 = vpop.permute.xlu0 %1346
  %1348 = vrot.lane.b32.xlu0 %v1171, 4
  %v1349 = vpop.permute.xlu0 %1348
  %1350 = vrot.lane.b32.xlu0 %v1179, 4
  %v1351 = vpop.permute.xlu0 %1350
  %1352 = vrot.lane.b32.xlu0 %v1187, 4
  %v1353 = vpop.permute.xlu0 %1352
  %1354 = vrot.lane.b32.xlu0 %v1195, 4
  %v1355 = vpop.permute.xlu0 %1354
  %1356 = vrot.lane.b32.xlu0 %v1203, 4
  %v1357 = vpop.permute.xlu0 %1356
  %1358 = vrot.lane.b32.xlu0 %v1211, 4
  %v1359 = vpop.permute.xlu0 %1358
  %1360 = vrot.lane.b32.xlu0 %v1219, 4
  %v1361 = vpop.permute.xlu0 %1360
  %1362 = vrot.lane.b32.xlu0 %v1227, 4
  %v1363 = vpop.permute.xlu0 %1362
  %1364 = vrot.lane.b32.xlu0 %v1235, 4
  %v1365 = vpop.permute.xlu0 %1364
  %1366 = vrot.lane.b32.xlu0 %v1243, 4
  %v1367 = vpop.permute.xlu0 %1366
  %1368 = vrot.lane.b32.xlu0 %v1251, 4
  %v1369 = vpop.permute.xlu0 %1368
  %1370 = vrot.lane.b32.xlu0 %v1259, 4
  %v1371 = vpop.permute.xlu0 %1370
  %1372 = vrot.lane.b32.xlu0 %v1267, 4
  %v1373 = vpop.permute.xlu0 %1372
  %1374 = vrot.lane.b32.xlu0 %v1275, 4
  %v1375 = vpop.permute.xlu0 %1374
  %1376 = vrot.lane.b32.xlu0 %v1283, 4
  %v1377 = vpop.permute.xlu0 %1376
  %1378 = vrot.lane.b32.xlu0 %v1291, 4
  %v1379 = vpop.permute.xlu0 %1378
  %1380 = vrot.lane.b32.xlu0 %v1299, 4
  %v1381 = vpop.permute.xlu0 %1380
  %1382 = vrot.lane.b32.xlu0 %v1307, 4
  %v1383 = vpop.permute.xlu0 %1382
  %1384 = vrot.lane.b32.xlu0 %v1315, 4
  %v1385 = vpop.permute.xlu0 %1384
  %1386 = vrot.lane.b32.xlu0 %v1323, 4
  %v1387 = vpop.permute.xlu0 %1386
  %v1420 = vunpack.c.l.b16 %v744
  %v1421 = vunpack.c.l.b16 %v745
  %v1422 = vunpack.c.l.b16 %v746
  %v1423 = vunpack.c.l.b16 %v747
  %v1424 = vunpack.c.l.b16 %v748
  %v1425 = vunpack.c.l.b16 %v749
  %v1426 = vunpack.c.l.b16 %v750
  %v1427 = vunpack.c.l.b16 %v751
  %v1428 = vunpack.c.l.b16 %v752
  %v1429 = vunpack.c.l.b16 %v753
  %v1430 = vunpack.c.l.b16 %v754
  %v1431 = vunpack.c.l.b16 %v755
  %v1432 = vunpack.c.l.b16 %v756
  %v1433 = vunpack.c.l.b16 %v757
  %v1434 = vunpack.c.l.b16 %v758
  %v1435 = vunpack.c.l.b16 %v759
  %v1436 = vunpack.c.l.b16 %v762
  %v1437 = vunpack.c.l.b16 %v763
  %v1438 = vunpack.c.l.b16 %v764
  %v1439 = vunpack.c.l.b16 %v765
  %v1440 = vunpack.c.l.b16 %v766
  %v1441 = vunpack.c.l.b16 %v767
  %v1442 = vunpack.c.l.b16 %v768
  %v1443 = vunpack.c.l.b16 %v769
  %v1444 = vunpack.c.l.b16 %v770
  %v1445 = vunpack.c.l.b16 %v771
  %v1446 = vunpack.c.l.b16 %v772
  %v1447 = vunpack.c.l.b16 %v773
  %v1448 = vunpack.c.l.b16 %v774
  %v1449 = vunpack.c.l.b16 %v775
  %v1450 = vunpack.c.l.b16 %v776
  %v1451 = vunpack.c.l.b16 %v777
  %v1452 = vpack.c.b16 %v1420, %v1420
  %v1453 = vpack.c.b16 %v1421, %v1421
  %v1454 = vpack.c.b16 %v1422, %v1422
  %v1455 = vpack.c.b16 %v1423, %v1423
  %v1456 = vpack.c.b16 %v1424, %v1424
  %v1457 = vpack.c.b16 %v1425, %v1425
  %v1458 = vpack.c.b16 %v1426, %v1426
  %v1459 = vpack.c.b16 %v1427, %v1427
  %v1460 = vpack.c.b16 %v1428, %v1428
  %v1461 = vpack.c.b16 %v1429, %v1429
  %v1462 = vpack.c.b16 %v1430, %v1430
  %v1463 = vpack.c.b16 %v1431, %v1431
  %v1464 = vpack.c.b16 %v1432, %v1432
  %v1465 = vpack.c.b16 %v1433, %v1433
  %v1466 = vpack.c.b16 %v1434, %v1434
  %v1467 = vpack.c.b16 %v1435, %v1435
  %v1468 = vpack.c.b16 %v1436, %v1436
  %v1469 = vpack.c.b16 %v1437, %v1437
  %v1470 = vpack.c.b16 %v1438, %v1438
  %v1471 = vpack.c.b16 %v1439, %v1439
  %v1472 = vpack.c.b16 %v1440, %v1440
  %v1473 = vpack.c.b16 %v1441, %v1441
  %v1474 = vpack.c.b16 %v1442, %v1442
  %v1475 = vpack.c.b16 %v1443, %v1443
  %v1476 = vpack.c.b16 %v1444, %v1444
  %v1477 = vpack.c.b16 %v1445, %v1445
  %v1478 = vpack.c.b16 %v1446, %v1446
  %v1479 = vpack.c.b16 %v1447, %v1447
  %v1480 = vpack.c.b16 %v1448, %v1448
  %v1481 = vpack.c.b16 %v1449, %v1449
  %v1482 = vpack.c.b16 %v1450, %v1450
  %v1483 = vpack.c.b16 %v1451, %v1451
  %vm1484 = vcmask 1042432
  %v1485 = vrot.slane %v1036, 5
  %v1486 = vrot.slane %v1452, 5
  %v1487 = vsel %vm1484, %v1485, %v1486
  %v1488 = vrot.slane %v1037, 5
  %v1489 = vrot.slane %v1453, 5
  %v1490 = vsel %vm1484, %v1488, %v1489
  %v1491 = vrot.slane %v1038, 5
  %v1492 = vrot.slane %v1454, 5
  %v1493 = vsel %vm1484, %v1491, %v1492
  %v1494 = vrot.slane %v1039, 5
  %v1495 = vrot.slane %v1455, 5
  %v1496 = vsel %vm1484, %v1494, %v1495
  %v1497 = vrot.slane %v1040, 5
  %v1498 = vrot.slane %v1456, 5
  %v1499 = vsel %vm1484, %v1497, %v1498
  %v1500 = vrot.slane %v1041, 5
  %v1501 = vrot.slane %v1457, 5
  %v1502 = vsel %vm1484, %v1500, %v1501
  %v1503 = vrot.slane %v1042, 5
  %v1504 = vrot.slane %v1458, 5
  %v1505 = vsel %vm1484, %v1503, %v1504
  %v1506 = vrot.slane %v1043, 5
  %v1507 = vrot.slane %v1459, 5
  %v1508 = vsel %vm1484, %v1506, %v1507
  %v1509 = vrot.slane %v1044, 5
  %v1510 = vrot.slane %v1460, 5
  %v1511 = vsel %vm1484, %v1509, %v1510
  %v1512 = vrot.slane %v1045, 5
  %v1513 = vrot.slane %v1461, 5
  %v1514 = vsel %vm1484, %v1512, %v1513
  %v1515 = vrot.slane %v1046, 5
  %v1516 = vrot.slane %v1462, 5
  %v1517 = vsel %vm1484, %v1515, %v1516
  %v1518 = vrot.slane %v1047, 5
  %v1519 = vrot.slane %v1463, 5
  %v1520 = vsel %vm1484, %v1518, %v1519
  %v1521 = vrot.slane %v1048, 5
  %v1522 = vrot.slane %v1464, 5
  %v1523 = vsel %vm1484, %v1521, %v1522
  %v1524 = vrot.slane %v1049, 5
  %v1525 = vrot.slane %v1465, 5
  %v1526 = vsel %vm1484, %v1524, %v1525
  %v1527 = vrot.slane %v1050, 5
  %v1528 = vrot.slane %v1466, 5
  %v1529 = vsel %vm1484, %v1527, %v1528
  %v1530 = vrot.slane %v1051, 5
  %v1531 = vrot.slane %v1467, 5
  %v1532 = vsel %vm1484, %v1530, %v1531
  %v1533 = vrot.slane %v1052, 5
  %v1534 = vrot.slane %v1468, 5
  %v1535 = vsel %vm1484, %v1533, %v1534
  %v1536 = vrot.slane %v1053, 5
  %v1537 = vrot.slane %v1469, 5
  %v1538 = vsel %vm1484, %v1536, %v1537
  %v1539 = vrot.slane %v1054, 5
  %v1540 = vrot.slane %v1470, 5
  %v1541 = vsel %vm1484, %v1539, %v1540
  %v1542 = vrot.slane %v1055, 5
  %v1543 = vrot.slane %v1471, 5
  %v1544 = vsel %vm1484, %v1542, %v1543
  %v1545 = vrot.slane %v1056, 5
  %v1546 = vrot.slane %v1472, 5
  %v1547 = vsel %vm1484, %v1545, %v1546
  %v1548 = vrot.slane %v1057, 5
  %v1549 = vrot.slane %v1473, 5
  %v1550 = vsel %vm1484, %v1548, %v1549
  %v1551 = vrot.slane %v1058, 5
  %v1552 = vrot.slane %v1474, 5
  %v1553 = vsel %vm1484, %v1551, %v1552
  %v1554 = vrot.slane %v1059, 5
  %v1555 = vrot.slane %v1475, 5
  %v1556 = vsel %vm1484, %v1554, %v1555
  %v1557 = vrot.slane %v1060, 5
  %v1558 = vrot.slane %v1476, 5
  %v1559 = vsel %vm1484, %v1557, %v1558
  %v1560 = vrot.slane %v1061, 5
  %v1561 = vrot.slane %v1477, 5
  %v1562 = vsel %vm1484, %v1560, %v1561
  %v1563 = vrot.slane %v1062, 5
  %v1564 = vrot.slane %v1478, 5
  %v1565 = vsel %vm1484, %v1563, %v1564
  %v1566 = vrot.slane %v1063, 5
  %v1567 = vrot.slane %v1479, 5
  %v1568 = vsel %vm1484, %v1566, %v1567
  %v1569 = vrot.slane %v1064, 5
  %v1570 = vrot.slane %v1480, 5
  %v1571 = vsel %vm1484, %v1569, %v1570
  %v1572 = vrot.slane %v1065, 5
  %v1573 = vrot.slane %v1481, 5
  %v1574 = vsel %vm1484, %v1572, %v1573
  %v1575 = vrot.slane %v1066, 5
  %v1576 = vrot.slane %v1482, 5
  %v1577 = vsel %vm1484, %v1575, %v1576
  %v1578 = vrot.slane %v1067, 5
  %v1579 = vrot.slane %v1483, 5
  %v1580 = vsel %vm1484, %v1578, %v1579
  %1581 = vrot.lane.b32.xlu0 %v1485, 8
  %v1582 = vpop.permute.xlu0 %1581
  %1583 = vrot.lane.b32.xlu0 %v1487, 8
  %v1584 = vpop.permute.xlu0 %1583
  %1585 = vrot.lane.b32.xlu0 %v1488, 8
  %v1586 = vpop.permute.xlu0 %1585
  %1587 = vrot.lane.b32.xlu0 %v1490, 8
  %v1588 = vpop.permute.xlu0 %1587
  %1589 = vrot.lane.b32.xlu0 %v1491, 8
  %v1590 = vpop.permute.xlu0 %1589
  %1591 = vrot.lane.b32.xlu0 %v1493, 8
  %v1592 = vpop.permute.xlu0 %1591
  %1593 = vrot.lane.b32.xlu0 %v1494, 8
  %v1594 = vpop.permute.xlu0 %1593
  %1595 = vrot.lane.b32.xlu0 %v1496, 8
  %v1596 = vpop.permute.xlu0 %1595
  %1597 = vrot.lane.b32.xlu0 %v1497, 8
  %v1598 = vpop.permute.xlu0 %1597
  %1599 = vrot.lane.b32.xlu0 %v1499, 8
  %v1600 = vpop.permute.xlu0 %1599
  %1601 = vrot.lane.b32.xlu0 %v1500, 8
  %v1602 = vpop.permute.xlu0 %1601
  %1603 = vrot.lane.b32.xlu0 %v1502, 8
  %v1604 = vpop.permute.xlu0 %1603
  %1605 = vrot.lane.b32.xlu0 %v1503, 8
  %v1606 = vpop.permute.xlu0 %1605
  %1607 = vrot.lane.b32.xlu0 %v1505, 8
  %v1608 = vpop.permute.xlu0 %1607
  %1609 = vrot.lane.b32.xlu0 %v1506, 8
  %v1610 = vpop.permute.xlu0 %1609
  %1611 = vrot.lane.b32.xlu0 %v1508, 8
  %v1612 = vpop.permute.xlu0 %1611
  %1613 = vrot.lane.b32.xlu0 %v1509, 8
  %v1614 = vpop.permute.xlu0 %1613
  %1615 = vrot.lane.b32.xlu0 %v1511, 8
  %v1616 = vpop.permute.xlu0 %1615
  %1617 = vrot.lane.b32.xlu0 %v1512, 8
  %v1618 = vpop.permute.xlu0 %1617
  %1619 = vrot.lane.b32.xlu0 %v1514, 8
  %v1620 = vpop.permute.xlu0 %1619
  %1621 = vrot.lane.b32.xlu0 %v1515, 8
  %v1622 = vpop.permute.xlu0 %1621
  %1623 = vrot.lane.b32.xlu0 %v1517, 8
  %v1624 = vpop.permute.xlu0 %1623
  %1625 = vrot.lane.b32.xlu0 %v1518, 8
  %v1626 = vpop.permute.xlu0 %1625
  %1627 = vrot.lane.b32.xlu0 %v1520, 8
  %v1628 = vpop.permute.xlu0 %1627
  %1629 = vrot.lane.b32.xlu0 %v1521, 8
  %v1630 = vpop.permute.xlu0 %1629
  %1631 = vrot.lane.b32.xlu0 %v1523, 8
  %v1632 = vpop.permute.xlu0 %1631
  %1633 = vrot.lane.b32.xlu0 %v1524, 8
  %v1634 = vpop.permute.xlu0 %1633
  %1635 = vrot.lane.b32.xlu0 %v1526, 8
  %v1636 = vpop.permute.xlu0 %1635
  %1637 = vrot.lane.b32.xlu0 %v1527, 8
  %v1638 = vpop.permute.xlu0 %1637
  %1639 = vrot.lane.b32.xlu0 %v1529, 8
  %v1640 = vpop.permute.xlu0 %1639
  %1641 = vrot.lane.b32.xlu0 %v1530, 8
  %v1642 = vpop.permute.xlu0 %1641
  %1643 = vrot.lane.b32.xlu0 %v1532, 8
  %v1644 = vpop.permute.xlu0 %1643
  %1645 = vrot.lane.b32.xlu0 %v1533, 8
  %v1646 = vpop.permute.xlu0 %1645
  %1647 = vrot.lane.b32.xlu0 %v1535, 8
  %v1648 = vpop.permute.xlu0 %1647
  %1649 = vrot.lane.b32.xlu0 %v1536, 8
  %v1650 = vpop.permute.xlu0 %1649
  %1651 = vrot.lane.b32.xlu0 %v1538, 8
  %v1652 = vpop.permute.xlu0 %1651
  %1653 = vrot.lane.b32.xlu0 %v1539, 8
  %v1654 = vpop.permute.xlu0 %1653
  %1655 = vrot.lane.b32.xlu0 %v1541, 8
  %v1656 = vpop.permute.xlu0 %1655
  %1657 = vrot.lane.b32.xlu0 %v1542, 8
  %v1658 = vpop.permute.xlu0 %1657
  %1659 = vrot.lane.b32.xlu0 %v1544, 8
  %v1660 = vpop.permute.xlu0 %1659
  %1661 = vrot.lane.b32.xlu0 %v1545, 8
  %v1662 = vpop.permute.xlu0 %1661
  %1663 = vrot.lane.b32.xlu0 %v1547, 8
  %v1664 = vpop.permute.xlu0 %1663
  %1665 = vrot.lane.b32.xlu0 %v1548, 8
  %v1666 = vpop.permute.xlu0 %1665
  %1667 = vrot.lane.b32.xlu0 %v1550, 8
  %v1668 = vpop.permute.xlu0 %1667
  %1669 = vrot.lane.b32.xlu0 %v1551, 8
  %v1670 = vpop.permute.xlu0 %1669
  %1671 = vrot.lane.b32.xlu0 %v1553, 8
  %v1672 = vpop.permute.xlu0 %1671
  %1673 = vrot.lane.b32.xlu0 %v1554, 8
  %v1674 = vpop.permute.xlu0 %1673
  %1675 = vrot.lane.b32.xlu0 %v1556, 8
  %v1676 = vpop.permute.xlu0 %1675
  %1677 = vrot.lane.b32.xlu0 %v1557, 8
  %v1678 = vpop.permute.xlu0 %1677
  %1679 = vrot.lane.b32.xlu0 %v1559, 8
  %v1680 = vpop.permute.xlu0 %1679
  %1681 = vrot.lane.b32.xlu0 %v1560, 8
  %v1682 = vpop.permute.xlu0 %1681
  %1683 = vrot.lane.b32.xlu0 %v1562, 8
  %v1684 = vpop.permute.xlu0 %1683
  %1685 = vrot.lane.b32.xlu0 %v1563, 8
  %v1686 = vpop.permute.xlu0 %1685
  %1687 = vrot.lane.b32.xlu0 %v1565, 8
  %v1688 = vpop.permute.xlu0 %1687
  %1689 = vrot.lane.b32.xlu0 %v1566, 8
  %v1690 = vpop.permute.xlu0 %1689
  %1691 = vrot.lane.b32.xlu0 %v1568, 8
  %v1692 = vpop.permute.xlu0 %1691
  %1693 = vrot.lane.b32.xlu0 %v1569, 8
  %v1694 = vpop.permute.xlu0 %1693
  %1695 = vrot.lane.b32.xlu0 %v1571, 8
  %v1696 = vpop.permute.xlu0 %1695
  %1697 = vrot.lane.b32.xlu0 %v1572, 8
  %v1698 = vpop.permute.xlu0 %1697
  %1699 = vrot.lane.b32.xlu0 %v1574, 8
  %v1700 = vpop.permute.xlu0 %1699
  %1701 = vrot.lane.b32.xlu0 %v1575, 8
  %v1702 = vpop.permute.xlu0 %1701
  %1703 = vrot.lane.b32.xlu0 %v1577, 8
  %v1704 = vpop.permute.xlu0 %1703
  %1705 = vrot.lane.b32.xlu0 %v1578, 8
  %v1706 = vpop.permute.xlu0 %1705
  %1707 = vrot.lane.b32.xlu0 %v1580, 8
  %v1708 = vpop.permute.xlu0 %1707
  %v1715 = vunpack.c.l.b16 %v684
  %v1716 = vunpack.c.l.b16 %v685
  %v1717 = vunpack.c.l.b16 %v686
  %v1718 = vunpack.c.l.b16 %v738
  %v1719 = vunpack.c.l.b16 %v739
  %v1720 = vunpack.c.l.b16 %v740
  %v1721 = vpack.c.b16 %v1716, %v1715
  %v1722 = vpack.c.b16 %v1717, %v1717
  %v1723 = vpack.c.b16 %v1719, %v1718
  %v1724 = vpack.c.b16 %v1720, %v1720
  %1725 = vrot.lane.b32.xlu0 %v974, 12
  %v1726 = vpop.permute.xlu0 %1725
  %1727 = vrot.lane.b32.xlu0 %v975, 12
  %v1728 = vpop.permute.xlu0 %1727
  %1729 = vrot.lane.b32.xlu0 %v976, 12
  %v1730 = vpop.permute.xlu0 %1729
  %1731 = vrot.lane.b32.xlu0 %v977, 12
  %v1732 = vpop.permute.xlu0 %1731
  %1733 = vrot.lane.b32.xlu0 %v978, 12
  %v1734 = vpop.permute.xlu0 %1733
  %1735 = vrot.lane.b32.xlu0 %v979, 12
  %v1736 = vpop.permute.xlu0 %1735
  %1737 = vrot.lane.b32.xlu0 %v980, 12
  %v1738 = vpop.permute.xlu0 %1737
  %1739 = vrot.lane.b32.xlu0 %v981, 12
  %v1740 = vpop.permute.xlu0 %1739
  %1741 = vrot.lane.b32.xlu0 %v982, 12
  %v1742 = vpop.permute.xlu0 %1741
  %1743 = vrot.lane.b32.xlu0 %v983, 12
  %v1744 = vpop.permute.xlu0 %1743
  %1745 = vrot.lane.b32.xlu0 %v984, 12
  %v1746 = vpop.permute.xlu0 %1745
  %1747 = vrot.lane.b32.xlu0 %v985, 12
  %v1748 = vpop.permute.xlu0 %1747
  %1749 = vrot.lane.b32.xlu0 %v986, 12
  %v1750 = vpop.permute.xlu0 %1749
  %1751 = vrot.lane.b32.xlu0 %v987, 12
  %v1752 = vpop.permute.xlu0 %1751
  %1753 = vrot.lane.b32.xlu0 %v988, 12
  %v1754 = vpop.permute.xlu0 %1753
  %1755 = vrot.lane.b32.xlu0 %v989, 12
  %v1756 = vpop.permute.xlu0 %1755
  %1757 = vrot.lane.b32.xlu0 %v990, 12
  %v1758 = vpop.permute.xlu0 %1757
  %1759 = vrot.lane.b32.xlu0 %v991, 12
  %v1760 = vpop.permute.xlu0 %1759
  %1761 = vrot.lane.b32.xlu0 %v992, 12
  %v1762 = vpop.permute.xlu0 %1761
  %1763 = vrot.lane.b32.xlu0 %v993, 12
  %v1764 = vpop.permute.xlu0 %1763
  %1765 = vrot.lane.b32.xlu0 %v994, 12
  %v1766 = vpop.permute.xlu0 %1765
  %1767 = vrot.lane.b32.xlu0 %v995, 12
  %v1768 = vpop.permute.xlu0 %1767
  %1769 = vrot.lane.b32.xlu0 %v996, 12
  %v1770 = vpop.permute.xlu0 %1769
  %1771 = vrot.lane.b32.xlu0 %v997, 12
  %v1772 = vpop.permute.xlu0 %1771
  %1773 = vrot.lane.b32.xlu0 %v998, 12
  %v1774 = vpop.permute.xlu0 %1773
  %1775 = vrot.lane.b32.xlu0 %v999, 12
  %v1776 = vpop.permute.xlu0 %1775
  %1777 = vrot.lane.b32.xlu0 %v1000, 12
  %v1778 = vpop.permute.xlu0 %1777
  %1779 = vrot.lane.b32.xlu0 %v1001, 12
  %v1780 = vpop.permute.xlu0 %1779
  %1781 = vrot.lane.b32.xlu0 %v1002, 12
  %v1782 = vpop.permute.xlu0 %1781
  %1783 = vrot.lane.b32.xlu0 %v1003, 12
  %v1784 = vpop.permute.xlu0 %1783
  %1785 = vrot.lane.b32.xlu0 %v1721, 12
  %v1786 = vpop.permute.xlu0 %1785
  %1787 = vrot.lane.b32.xlu0 %v1722, 12
  %v1788 = vpop.permute.xlu0 %1787
  %1789 = vrot.lane.b32.xlu0 %v1006, 12
  %v1790 = vpop.permute.xlu0 %1789
  %1791 = vrot.lane.b32.xlu0 %v1007, 12
  %v1792 = vpop.permute.xlu0 %1791
  %1793 = vrot.lane.b32.xlu0 %v1008, 12
  %v1794 = vpop.permute.xlu0 %1793
  %1795 = vrot.lane.b32.xlu0 %v1009, 12
  %v1796 = vpop.permute.xlu0 %1795
  %1797 = vrot.lane.b32.xlu0 %v1010, 12
  %v1798 = vpop.permute.xlu0 %1797
  %1799 = vrot.lane.b32.xlu0 %v1011, 12
  %v1800 = vpop.permute.xlu0 %1799
  %1801 = vrot.lane.b32.xlu0 %v1012, 12
  %v1802 = vpop.permute.xlu0 %1801
  %1803 = vrot.lane.b32.xlu0 %v1013, 12
  %v1804 = vpop.permute.xlu0 %1803
  %1805 = vrot.lane.b32.xlu0 %v1014, 12
  %v1806 = vpop.permute.xlu0 %1805
  %1807 = vrot.lane.b32.xlu0 %v1015, 12
  %v1808 = vpop.permute.xlu0 %1807
  %1809 = vrot.lane.b32.xlu0 %v1016, 12
  %v1810 = vpop.permute.xlu0 %1809
  %1811 = vrot.lane.b32.xlu0 %v1017, 12
  %v1812 = vpop.permute.xlu0 %1811
  %1813 = vrot.lane.b32.xlu0 %v1018, 12
  %v1814 = vpop.permute.xlu0 %1813
  %1815 = vrot.lane.b32.xlu0 %v1019, 12
  %v1816 = vpop.permute.xlu0 %1815
  %1817 = vrot.lane.b32.xlu0 %v1020, 12
  %v1818 = vpop.permute.xlu0 %1817
  %1819 = vrot.lane.b32.xlu0 %v1021, 12
  %v1820 = vpop.permute.xlu0 %1819
  %1821 = vrot.lane.b32.xlu0 %v1022, 12
  %v1822 = vpop.permute.xlu0 %1821
  %1823 = vrot.lane.b32.xlu0 %v1023, 12
  %v1824 = vpop.permute.xlu0 %1823
  %1825 = vrot.lane.b32.xlu0 %v1024, 12
  %v1826 = vpop.permute.xlu0 %1825
  %1827 = vrot.lane.b32.xlu0 %v1025, 12
  %v1828 = vpop.permute.xlu0 %1827
  %1829 = vrot.lane.b32.xlu0 %v1026, 12
  %v1830 = vpop.permute.xlu0 %1829
  %1831 = vrot.lane.b32.xlu0 %v1027, 12
  %v1832 = vpop.permute.xlu0 %1831
  %1833 = vrot.lane.b32.xlu0 %v1028, 12
  %v1834 = vpop.permute.xlu0 %1833
  %1835 = vrot.lane.b32.xlu0 %v1029, 12
  %v1836 = vpop.permute.xlu0 %1835
  %1837 = vrot.lane.b32.xlu0 %v1030, 12
  %v1838 = vpop.permute.xlu0 %1837
  %1839 = vrot.lane.b32.xlu0 %v1031, 12
  %v1840 = vpop.permute.xlu0 %1839
  %1841 = vrot.lane.b32.xlu0 %v1032, 12
  %v1842 = vpop.permute.xlu0 %1841
  %1843 = vrot.lane.b32.xlu0 %v1033, 12
  %v1844 = vpop.permute.xlu0 %1843
  %1845 = vrot.lane.b32.xlu0 %v1034, 12
  %v1846 = vpop.permute.xlu0 %1845
  %1847 = vrot.lane.b32.xlu0 %v1035, 12
  %v1848 = vpop.permute.xlu0 %1847
  %1849 = vrot.lane.b32.xlu0 %v1723, 12
  %v1850 = vpop.permute.xlu0 %1849
  %1851 = vrot.lane.b32.xlu0 %v1724, 12
  %v1852 = vpop.permute.xlu0 %1851
  %v1853 = vpack.c.b16 %v1717, %v1716
  %v1854 = vpack.c.b16 %v1720, %v1719
  %v1856 = vshrl.u32 %v1853, 16
  %v1858 = vrot.slane %v1856, 4
  %v1859 = vshll.u32 %v1853, 16
  %v1861 = vrot.slane %v1859, 5
  %v1862 = vor.u32 %v1858, %v1861
  %v1864 = vshrl.u32 %v1854, 16
  %v1866 = vrot.slane %v1864, 4
  %v1867 = vshll.u32 %v1854, 16
  %v1869 = vrot.slane %v1867, 5
  %v1870 = vor.u32 %v1866, %v1869
  %1871 = vrot.lane.b32.xlu0 %v1083, 16
  %v1872 = vpop.permute.xlu0 %1871
  %1873 = vrot.lane.b32.xlu0 %v1091, 16
  %v1874 = vpop.permute.xlu0 %1873
  %1875 = vrot.lane.b32.xlu0 %v1099, 16
  %v1876 = vpop.permute.xlu0 %1875
  %1877 = vrot.lane.b32.xlu0 %v1107, 16
  %v1878 = vpop.permute.xlu0 %1877
  %1879 = vrot.lane.b32.xlu0 %v1115, 16
  %v1880 = vpop.permute.xlu0 %1879
  %1881 = vrot.lane.b32.xlu0 %v1123, 16
  %v1882 = vpop.permute.xlu0 %1881
  %1883 = vrot.lane.b32.xlu0 %v1131, 16
  %v1884 = vpop.permute.xlu0 %1883
  %1885 = vrot.lane.b32.xlu0 %v1139, 16
  %v1886 = vpop.permute.xlu0 %1885
  %1887 = vrot.lane.b32.xlu0 %v1147, 16
  %v1888 = vpop.permute.xlu0 %1887
  %1889 = vrot.lane.b32.xlu0 %v1155, 16
  %v1890 = vpop.permute.xlu0 %1889
  %1891 = vrot.lane.b32.xlu0 %v1163, 16
  %v1892 = vpop.permute.xlu0 %1891
  %1893 = vrot.lane.b32.xlu0 %v1171, 16
  %v1894 = vpop.permute.xlu0 %1893
  %1895 = vrot.lane.b32.xlu0 %v1179, 16
  %v1896 = vpop.permute.xlu0 %1895
  %1897 = vrot.lane.b32.xlu0 %v1187, 16
  %v1898 = vpop.permute.xlu0 %1897
  %1899 = vrot.lane.b32.xlu0 %v1195, 16
  %v1900 = vpop.permute.xlu0 %1899
  %1901 = vrot.lane.b32.xlu0 %v1862, 16
  %v1902 = vpop.permute.xlu0 %1901
  %1903 = vrot.lane.b32.xlu0 %v1211, 16
  %v1904 = vpop.permute.xlu0 %1903
  %1905 = vrot.lane.b32.xlu0 %v1219, 16
  %v1906 = vpop.permute.xlu0 %1905
  %1907 = vrot.lane.b32.xlu0 %v1227, 16
  %v1908 = vpop.permute.xlu0 %1907
  %1909 = vrot.lane.b32.xlu0 %v1235, 16
  %v1910 = vpop.permute.xlu0 %1909
  %1911 = vrot.lane.b32.xlu0 %v1243, 16
  %v1912 = vpop.permute.xlu0 %1911
  %1913 = vrot.lane.b32.xlu0 %v1251, 16
  %v1914 = vpop.permute.xlu0 %1913
  %1915 = vrot.lane.b32.xlu0 %v1259, 16
  %v1916 = vpop.permute.xlu0 %1915
  %1917 = vrot.lane.b32.xlu0 %v1267, 16
  %v1918 = vpop.permute.xlu0 %1917
  %1919 = vrot.lane.b32.xlu0 %v1275, 16
  %v1920 = vpop.permute.xlu0 %1919
  %1921 = vrot.lane.b32.xlu0 %v1283, 16
  %v1922 = vpop.permute.xlu0 %1921
  %1923 = vrot.lane.b32.xlu0 %v1291, 16
  %v1924 = vpop.permute.xlu0 %1923
  %1925 = vrot.lane.b32.xlu0 %v1299, 16
  %v1926 = vpop.permute.xlu0 %1925
  %1927 = vrot.lane.b32.xlu0 %v1307, 16
  %v1928 = vpop.permute.xlu0 %1927
  %1929 = vrot.lane.b32.xlu0 %v1315, 16
  %v1930 = vpop.permute.xlu0 %1929
  %1931 = vrot.lane.b32.xlu0 %v1323, 16
  %v1932 = vpop.permute.xlu0 %1931
  %1933 = vrot.lane.b32.xlu0 %v1870, 16
  %v1934 = vpop.permute.xlu0 %1933
  %v1937 = vunpack.c.l.b16 %v760
  %v1938 = vunpack.c.l.b16 %v778
  %v1939 = vpack.c.b16 %v1937, %v1937
  %v1940 = vpack.c.b16 %v1938, %v1938
  %v1941 = vrot.slane %v1853, 5
  %v1942 = vrot.slane %v1939, 5
  %v1943 = vsel %vm1484, %v1941, %v1942
  %v1944 = vrot.slane %v1854, 5
  %v1945 = vrot.slane %v1940, 5
  %v1946 = vsel %vm1484, %v1944, %v1945
  %1947 = vrot.lane.b32.xlu0 %v1488, 20
  %v1948 = vpop.permute.xlu0 %1947
  %1949 = vrot.lane.b32.xlu0 %v1490, 20
  %v1950 = vpop.permute.xlu0 %1949
  %1951 = vrot.lane.b32.xlu0 %v1491, 20
  %v1952 = vpop.permute.xlu0 %1951
  %1953 = vrot.lane.b32.xlu0 %v1493, 20
  %v1954 = vpop.permute.xlu0 %1953
  %1955 = vrot.lane.b32.xlu0 %v1494, 20
  %v1956 = vpop.permute.xlu0 %1955
  %1957 = vrot.lane.b32.xlu0 %v1496, 20
  %v1958 = vpop.permute.xlu0 %1957
  %1959 = vrot.lane.b32.xlu0 %v1497, 20
  %v1960 = vpop.permute.xlu0 %1959
  %1961 = vrot.lane.b32.xlu0 %v1499, 20
  %v1962 = vpop.permute.xlu0 %1961
  %1963 = vrot.lane.b32.xlu0 %v1500, 20
  %v1964 = vpop.permute.xlu0 %1963
  %1965 = vrot.lane.b32.xlu0 %v1502, 20
  %v1966 = vpop.permute.xlu0 %1965
  %1967 = vrot.lane.b32.xlu0 %v1503, 20
  %v1968 = vpop.permute.xlu0 %1967
  %1969 = vrot.lane.b32.xlu0 %v1505, 20
  %v1970 = vpop.permute.xlu0 %1969
  %1971 = vrot.lane.b32.xlu0 %v1506, 20
  %v1972 = vpop.permute.xlu0 %1971
  %1973 = vrot.lane.b32.xlu0 %v1508, 20
  %v1974 = vpop.permute.xlu0 %1973
  %1975 = vrot.lane.b32.xlu0 %v1509, 20
  %v1976 = vpop.permute.xlu0 %1975
  %1977 = vrot.lane.b32.xlu0 %v1511, 20
  %v1978 = vpop.permute.xlu0 %1977
  %1979 = vrot.lane.b32.xlu0 %v1512, 20
  %v1980 = vpop.permute.xlu0 %1979
  %1981 = vrot.lane.b32.xlu0 %v1514, 20
  %v1982 = vpop.permute.xlu0 %1981
  %1983 = vrot.lane.b32.xlu0 %v1515, 20
  %v1984 = vpop.permute.xlu0 %1983
  %1985 = vrot.lane.b32.xlu0 %v1517, 20
  %v1986 = vpop.permute.xlu0 %1985
  %1987 = vrot.lane.b32.xlu0 %v1518, 20
  %v1988 = vpop.permute.xlu0 %1987
  %1989 = vrot.lane.b32.xlu0 %v1520, 20
  %v1990 = vpop.permute.xlu0 %1989
  %1991 = vrot.lane.b32.xlu0 %v1521, 20
  %v1992 = vpop.permute.xlu0 %1991
  %1993 = vrot.lane.b32.xlu0 %v1523, 20
  %v1994 = vpop.permute.xlu0 %1993
  %1995 = vrot.lane.b32.xlu0 %v1524, 20
  %v1996 = vpop.permute.xlu0 %1995
  %1997 = vrot.lane.b32.xlu0 %v1526, 20
  %v1998 = vpop.permute.xlu0 %1997
  %1999 = vrot.lane.b32.xlu0 %v1527, 20
  %v2000 = vpop.permute.xlu0 %1999
  %2001 = vrot.lane.b32.xlu0 %v1529, 20
  %v2002 = vpop.permute.xlu0 %2001
  %2003 = vrot.lane.b32.xlu0 %v1530, 20
  %v2004 = vpop.permute.xlu0 %2003
  %2005 = vrot.lane.b32.xlu0 %v1532, 20
  %v2006 = vpop.permute.xlu0 %2005
  %2007 = vrot.lane.b32.xlu0 %v1941, 20
  %v2008 = vpop.permute.xlu0 %2007
  %2009 = vrot.lane.b32.xlu0 %v1943, 20
  %v2010 = vpop.permute.xlu0 %2009
  %2011 = vrot.lane.b32.xlu0 %v1536, 20
  %v2012 = vpop.permute.xlu0 %2011
  %2013 = vrot.lane.b32.xlu0 %v1538, 20
  %v2014 = vpop.permute.xlu0 %2013
  %2015 = vrot.lane.b32.xlu0 %v1539, 20
  %v2016 = vpop.permute.xlu0 %2015
  %2017 = vrot.lane.b32.xlu0 %v1541, 20
  %v2018 = vpop.permute.xlu0 %2017
  %2019 = vrot.lane.b32.xlu0 %v1542, 20
  %v2020 = vpop.permute.xlu0 %2019
  %2021 = vrot.lane.b32.xlu0 %v1544, 20
  %v2022 = vpop.permute.xlu0 %2021
  %2023 = vrot.lane.b32.xlu0 %v1545, 20
  %v2024 = vpop.permute.xlu0 %2023
  %2025 = vrot.lane.b32.xlu0 %v1547, 20
  %v2026 = vpop.permute.xlu0 %2025
  %2027 = vrot.lane.b32.xlu0 %v1548, 20
  %v2028 = vpop.permute.xlu0 %2027
  %2029 = vrot.lane.b32.xlu0 %v1550, 20
  %v2030 = vpop.permute.xlu0 %2029
  %2031 = vrot.lane.b32.xlu0 %v1551, 20
  %v2032 = vpop.permute.xlu0 %2031
  %2033 = vrot.lane.b32.xlu0 %v1553, 20
  %v2034 = vpop.permute.xlu0 %2033
  %2035 = vrot.lane.b32.xlu0 %v1554, 20
  %v2036 = vpop.permute.xlu0 %2035
  %2037 = vrot.lane.b32.xlu0 %v1556, 20
  %v2038 = vpop.permute.xlu0 %2037
  %2039 = vrot.lane.b32.xlu0 %v1557, 20
  %v2040 = vpop.permute.xlu0 %2039
  %2041 = vrot.lane.b32.xlu0 %v1559, 20
  %v2042 = vpop.permute.xlu0 %2041
  %2043 = vrot.lane.b32.xlu0 %v1560, 20
  %v2044 = vpop.permute.xlu0 %2043
  %2045 = vrot.lane.b32.xlu0 %v1562, 20
  %v2046 = vpop.permute.xlu0 %2045
  %2047 = vrot.lane.b32.xlu0 %v1563, 20
  %v2048 = vpop.permute.xlu0 %2047
  %2049 = vrot.lane.b32.xlu0 %v1565, 20
  %v2050 = vpop.permute.xlu0 %2049
  %2051 = vrot.lane.b32.xlu0 %v1566, 20
  %v2052 = vpop.permute.xlu0 %2051
  %2053 = vrot.lane.b32.xlu0 %v1568, 20
  %v2054 = vpop.permute.xlu0 %2053
  %2055 = vrot.lane.b32.xlu0 %v1569, 20
  %v2056 = vpop.permute.xlu0 %2055
  %2057 = vrot.lane.b32.xlu0 %v1571, 20
  %v2058 = vpop.permute.xlu0 %2057
  %2059 = vrot.lane.b32.xlu0 %v1572, 20
  %v2060 = vpop.permute.xlu0 %2059
  %2061 = vrot.lane.b32.xlu0 %v1574, 20
  %v2062 = vpop.permute.xlu0 %2061
  %2063 = vrot.lane.b32.xlu0 %v1575, 20
  %v2064 = vpop.permute.xlu0 %2063
  %2065 = vrot.lane.b32.xlu0 %v1577, 20
  %v2066 = vpop.permute.xlu0 %2065
  %2067 = vrot.lane.b32.xlu0 %v1578, 20
  %v2068 = vpop.permute.xlu0 %2067
  %2069 = vrot.lane.b32.xlu0 %v1580, 20
  %v2070 = vpop.permute.xlu0 %2069
  %2071 = vrot.lane.b32.xlu0 %v1944, 20
  %v2072 = vpop.permute.xlu0 %2071
  %2073 = vrot.lane.b32.xlu0 %v1946, 20
  %v2074 = vpop.permute.xlu0 %2073
  %v2081 = vunpack.c.l.b16 %v687
  %v2082 = vunpack.c.l.b16 %v688
  %v2083 = vunpack.c.l.b16 %v689
  %v2084 = vunpack.c.l.b16 %v741
  %v2085 = vunpack.c.l.b16 %v742
  %v2086 = vunpack.c.l.b16 %v743
  %v2087 = vpack.c.b16 %v2082, %v2081
  %v2088 = vpack.c.b16 %v2083, %v2083
  %v2089 = vpack.c.b16 %v2085, %v2084
  %v2090 = vpack.c.b16 %v2086, %v2086
  %2091 = vrot.lane.b32.xlu0 %v976, 24
  %v2092 = vpop.permute.xlu0 %2091
  %2093 = vrot.lane.b32.xlu0 %v977, 24
  %v2094 = vpop.permute.xlu0 %2093
  %2095 = vrot.lane.b32.xlu0 %v978, 24
  %v2096 = vpop.permute.xlu0 %2095
  %2097 = vrot.lane.b32.xlu0 %v979, 24
  %v2098 = vpop.permute.xlu0 %2097
  %2099 = vrot.lane.b32.xlu0 %v980, 24
  %v2100 = vpop.permute.xlu0 %2099
  %2101 = vrot.lane.b32.xlu0 %v981, 24
  %v2102 = vpop.permute.xlu0 %2101
  %2103 = vrot.lane.b32.xlu0 %v982, 24
  %v2104 = vpop.permute.xlu0 %2103
  %2105 = vrot.lane.b32.xlu0 %v983, 24
  %v2106 = vpop.permute.xlu0 %2105
  %2107 = vrot.lane.b32.xlu0 %v984, 24
  %v2108 = vpop.permute.xlu0 %2107
  %2109 = vrot.lane.b32.xlu0 %v985, 24
  %v2110 = vpop.permute.xlu0 %2109
  %2111 = vrot.lane.b32.xlu0 %v986, 24
  %v2112 = vpop.permute.xlu0 %2111
  %2113 = vrot.lane.b32.xlu0 %v987, 24
  %v2114 = vpop.permute.xlu0 %2113
  %2115 = vrot.lane.b32.xlu0 %v988, 24
  %v2116 = vpop.permute.xlu0 %2115
  %2117 = vrot.lane.b32.xlu0 %v989, 24
  %v2118 = vpop.permute.xlu0 %2117
  %2119 = vrot.lane.b32.xlu0 %v990, 24
  %v2120 = vpop.permute.xlu0 %2119
  %2121 = vrot.lane.b32.xlu0 %v991, 24
  %v2122 = vpop.permute.xlu0 %2121
  %2123 = vrot.lane.b32.xlu0 %v992, 24
  %v2124 = vpop.permute.xlu0 %2123
  %2125 = vrot.lane.b32.xlu0 %v993, 24
  %v2126 = vpop.permute.xlu0 %2125
  %2127 = vrot.lane.b32.xlu0 %v994, 24
  %v2128 = vpop.permute.xlu0 %2127
  %2129 = vrot.lane.b32.xlu0 %v995, 24
  %v2130 = vpop.permute.xlu0 %2129
  %2131 = vrot.lane.b32.xlu0 %v996, 24
  %v2132 = vpop.permute.xlu0 %2131
  %2133 = vrot.lane.b32.xlu0 %v997, 24
  %v2134 = vpop.permute.xlu0 %2133
  %2135 = vrot.lane.b32.xlu0 %v998, 24
  %v2136 = vpop.permute.xlu0 %2135
  %2137 = vrot.lane.b32.xlu0 %v999, 24
  %v2138 = vpop.permute.xlu0 %2137
  %2139 = vrot.lane.b32.xlu0 %v1000, 24
  %v2140 = vpop.permute.xlu0 %2139
  %2141 = vrot.lane.b32.xlu0 %v1001, 24
  %v2142 = vpop.permute.xlu0 %2141
  %2143 = vrot.lane.b32.xlu0 %v1002, 24
  %v2144 = vpop.permute.xlu0 %2143
  %2145 = vrot.lane.b32.xlu0 %v1003, 24
  %v2146 = vpop.permute.xlu0 %2145
  %2147 = vrot.lane.b32.xlu0 %v1721, 24
  %v2148 = vpop.permute.xlu0 %2147
  %2149 = vrot.lane.b32.xlu0 %v1722, 24
  %v2150 = vpop.permute.xlu0 %2149
  %2151 = vrot.lane.b32.xlu0 %v2087, 24
  %v2152 = vpop.permute.xlu0 %2151
  %2153 = vrot.lane.b32.xlu0 %v2088, 24
  %v2154 = vpop.permute.xlu0 %2153
  %2155 = vrot.lane.b32.xlu0 %v1008, 24
  %v2156 = vpop.permute.xlu0 %2155
  %2157 = vrot.lane.b32.xlu0 %v1009, 24
  %v2158 = vpop.permute.xlu0 %2157
  %2159 = vrot.lane.b32.xlu0 %v1010, 24
  %v2160 = vpop.permute.xlu0 %2159
  %2161 = vrot.lane.b32.xlu0 %v1011, 24
  %v2162 = vpop.permute.xlu0 %2161
  %2163 = vrot.lane.b32.xlu0 %v1012, 24
  %v2164 = vpop.permute.xlu0 %2163
  %2165 = vrot.lane.b32.xlu0 %v1013, 24
  %v2166 = vpop.permute.xlu0 %2165
  %2167 = vrot.lane.b32.xlu0 %v1014, 24
  %v2168 = vpop.permute.xlu0 %2167
  %2169 = vrot.lane.b32.xlu0 %v1015, 24
  %v2170 = vpop.permute.xlu0 %2169
  %2171 = vrot.lane.b32.xlu0 %v1016, 24
  %v2172 = vpop.permute.xlu0 %2171
  %2173 = vrot.lane.b32.xlu0 %v1017, 24
  %v2174 = vpop.permute.xlu0 %2173
  %2175 = vrot.lane.b32.xlu0 %v1018, 24
  %v2176 = vpop.permute.xlu0 %2175
  %2177 = vrot.lane.b32.xlu0 %v1019, 24
  %v2178 = vpop.permute.xlu0 %2177
  %2179 = vrot.lane.b32.xlu0 %v1020, 24
  %v2180 = vpop.permute.xlu0 %2179
  %2181 = vrot.lane.b32.xlu0 %v1021, 24
  %v2182 = vpop.permute.xlu0 %2181
  %2183 = vrot.lane.b32.xlu0 %v1022, 24
  %v2184 = vpop.permute.xlu0 %2183
  %2185 = vrot.lane.b32.xlu0 %v1023, 24
  %v2186 = vpop.permute.xlu0 %2185
  %2187 = vrot.lane.b32.xlu0 %v1024, 24
  %v2188 = vpop.permute.xlu0 %2187
  %2189 = vrot.lane.b32.xlu0 %v1025, 24
  %v2190 = vpop.permute.xlu0 %2189
  %2191 = vrot.lane.b32.xlu0 %v1026, 24
  %v2192 = vpop.permute.xlu0 %2191
  %2193 = vrot.lane.b32.xlu0 %v1027, 24
  %v2194 = vpop.permute.xlu0 %2193
  %2195 = vrot.lane.b32.xlu0 %v1028, 24
  %v2196 = vpop.permute.xlu0 %2195
  %2197 = vrot.lane.b32.xlu0 %v1029, 24
  %v2198 = vpop.permute.xlu0 %2197
  %2199 = vrot.lane.b32.xlu0 %v1030, 24
  %v2200 = vpop.permute.xlu0 %2199
  %2201 = vrot.lane.b32.xlu0 %v1031, 24
  %v2202 = vpop.permute.xlu0 %2201
  %2203 = vrot.lane.b32.xlu0 %v1032, 24
  %v2204 = vpop.permute.xlu0 %2203
  %2205 = vrot.lane.b32.xlu0 %v1033, 24
  %v2206 = vpop.permute.xlu0 %2205
  %2207 = vrot.lane.b32.xlu0 %v1034, 24
  %v2208 = vpop.permute.xlu0 %2207
  %2209 = vrot.lane.b32.xlu0 %v1035, 24
  %v2210 = vpop.permute.xlu0 %2209
  %2211 = vrot.lane.b32.xlu0 %v1723, 24
  %v2212 = vpop.permute.xlu0 %2211
  %2213 = vrot.lane.b32.xlu0 %v1724, 24
  %v2214 = vpop.permute.xlu0 %2213
  %2215 = vrot.lane.b32.xlu0 %v2089, 24
  %v2216 = vpop.permute.xlu0 %2215
  %2217 = vrot.lane.b32.xlu0 %v2090, 24
  %v2218 = vpop.permute.xlu0 %2217
  %v2219 = vpack.c.b16 %v2083, %v2082
  %v2220 = vpack.c.b16 %v2086, %v2085
  %v2222 = vshrl.u32 %v2219, 16
  %v2224 = vrot.slane %v2222, 4
  %v2225 = vshll.u32 %v2219, 16
  %v2227 = vrot.slane %v2225, 5
  %v2228 = vor.u32 %v2224, %v2227
  %v2230 = vshrl.u32 %v2220, 16
  %v2232 = vrot.slane %v2230, 4
  %v2233 = vshll.u32 %v2220, 16
  %v2235 = vrot.slane %v2233, 5
  %v2236 = vor.u32 %v2232, %v2235
  %2237 = vrot.lane.b32.xlu0 %v1091, 28
  %v2238 = vpop.permute.xlu0 %2237
  %2239 = vrot.lane.b32.xlu0 %v1099, 28
  %v2240 = vpop.permute.xlu0 %2239
  %2241 = vrot.lane.b32.xlu0 %v1107, 28
  %v2242 = vpop.permute.xlu0 %2241
  %2243 = vrot.lane.b32.xlu0 %v1115, 28
  %v2244 = vpop.permute.xlu0 %2243
  %2245 = vrot.lane.b32.xlu0 %v1123, 28
  %v2246 = vpop.permute.xlu0 %2245
  %2247 = vrot.lane.b32.xlu0 %v1131, 28
  %v2248 = vpop.permute.xlu0 %2247
  %2249 = vrot.lane.b32.xlu0 %v1139, 28
  %v2250 = vpop.permute.xlu0 %2249
  %2251 = vrot.lane.b32.xlu0 %v1147, 28
  %v2252 = vpop.permute.xlu0 %2251
  %2253 = vrot.lane.b32.xlu0 %v1155, 28
  %v2254 = vpop.permute.xlu0 %2253
  %2255 = vrot.lane.b32.xlu0 %v1163, 28
  %v2256 = vpop.permute.xlu0 %2255
  %2257 = vrot.lane.b32.xlu0 %v1171, 28
  %v2258 = vpop.permute.xlu0 %2257
  %2259 = vrot.lane.b32.xlu0 %v1179, 28
  %v2260 = vpop.permute.xlu0 %2259
  %2261 = vrot.lane.b32.xlu0 %v1187, 28
  %v2262 = vpop.permute.xlu0 %2261
  %2263 = vrot.lane.b32.xlu0 %v1195, 28
  %v2264 = vpop.permute.xlu0 %2263
  %2265 = vrot.lane.b32.xlu0 %v1862, 28
  %v2266 = vpop.permute.xlu0 %2265
  %2267 = vrot.lane.b32.xlu0 %v2228, 28
  %v2268 = vpop.permute.xlu0 %2267
  %2269 = vrot.lane.b32.xlu0 %v1219, 28
  %v2270 = vpop.permute.xlu0 %2269
  %2271 = vrot.lane.b32.xlu0 %v1227, 28
  %v2272 = vpop.permute.xlu0 %2271
  %2273 = vrot.lane.b32.xlu0 %v1235, 28
  %v2274 = vpop.permute.xlu0 %2273
  %2275 = vrot.lane.b32.xlu0 %v1243, 28
  %v2276 = vpop.permute.xlu0 %2275
  %2277 = vrot.lane.b32.xlu0 %v1251, 28
  %v2278 = vpop.permute.xlu0 %2277
  %2279 = vrot.lane.b32.xlu0 %v1259, 28
  %v2280 = vpop.permute.xlu0 %2279
  %2281 = vrot.lane.b32.xlu0 %v1267, 28
  %v2282 = vpop.permute.xlu0 %2281
  %2283 = vrot.lane.b32.xlu0 %v1275, 28
  %v2284 = vpop.permute.xlu0 %2283
  %2285 = vrot.lane.b32.xlu0 %v1283, 28
  %v2286 = vpop.permute.xlu0 %2285
  %2287 = vrot.lane.b32.xlu0 %v1291, 28
  %v2288 = vpop.permute.xlu0 %2287
  %2289 = vrot.lane.b32.xlu0 %v1299, 28
  %v2290 = vpop.permute.xlu0 %2289
  %2291 = vrot.lane.b32.xlu0 %v1307, 28
  %v2292 = vpop.permute.xlu0 %2291
  %2293 = vrot.lane.b32.xlu0 %v1315, 28
  %v2294 = vpop.permute.xlu0 %2293
  %2295 = vrot.lane.b32.xlu0 %v1323, 28
  %v2296 = vpop.permute.xlu0 %2295
  %2297 = vrot.lane.b32.xlu0 %v1870, 28
  %v2298 = vpop.permute.xlu0 %2297
  %2299 = vrot.lane.b32.xlu0 %v2236, 28
  %v2300 = vpop.permute.xlu0 %2299
  %v2303 = vunpack.c.l.b16 %v761
  %v2304 = vunpack.c.l.b16 %v779
  %v2305 = vpack.c.b16 %v2303, %v2303
  %v2306 = vpack.c.b16 %v2304, %v2304
  %v2307 = vrot.slane %v2219, 5
  %v2308 = vrot.slane %v2305, 5
  %v2309 = vsel %vm1484, %v2307, %v2308
  %v2310 = vrot.slane %v2220, 5
  %v2311 = vrot.slane %v2306, 5
  %v2312 = vsel %vm1484, %v2310, %v2311
  %2313 = vrot.lane.b32.xlu0 %v1491, 32
  %v2314 = vpop.permute.xlu0 %2313
  %2315 = vrot.lane.b32.xlu0 %v1493, 32
  %v2316 = vpop.permute.xlu0 %2315
  %2317 = vrot.lane.b32.xlu0 %v1494, 32
  %v2318 = vpop.permute.xlu0 %2317
  %2319 = vrot.lane.b32.xlu0 %v1496, 32
  %v2320 = vpop.permute.xlu0 %2319
  %2321 = vrot.lane.b32.xlu0 %v1497, 32
  %v2322 = vpop.permute.xlu0 %2321
  %2323 = vrot.lane.b32.xlu0 %v1499, 32
  %v2324 = vpop.permute.xlu0 %2323
  %2325 = vrot.lane.b32.xlu0 %v1500, 32
  %v2326 = vpop.permute.xlu0 %2325
  %2327 = vrot.lane.b32.xlu0 %v1502, 32
  %v2328 = vpop.permute.xlu0 %2327
  %2329 = vrot.lane.b32.xlu0 %v1503, 32
  %v2330 = vpop.permute.xlu0 %2329
  %2331 = vrot.lane.b32.xlu0 %v1505, 32
  %v2332 = vpop.permute.xlu0 %2331
  %2333 = vrot.lane.b32.xlu0 %v1506, 32
  %v2334 = vpop.permute.xlu0 %2333
  %2335 = vrot.lane.b32.xlu0 %v1508, 32
  %v2336 = vpop.permute.xlu0 %2335
  %2337 = vrot.lane.b32.xlu0 %v1509, 32
  %v2338 = vpop.permute.xlu0 %2337
  %2339 = vrot.lane.b32.xlu0 %v1511, 32
  %v2340 = vpop.permute.xlu0 %2339
  %2341 = vrot.lane.b32.xlu0 %v1512, 32
  %v2342 = vpop.permute.xlu0 %2341
  %2343 = vrot.lane.b32.xlu0 %v1514, 32
  %v2344 = vpop.permute.xlu0 %2343
  %2345 = vrot.lane.b32.xlu0 %v1515, 32
  %v2346 = vpop.permute.xlu0 %2345
  %2347 = vrot.lane.b32.xlu0 %v1517, 32
  %v2348 = vpop.permute.xlu0 %2347
  %2349 = vrot.lane.b32.xlu0 %v1518, 32
  %v2350 = vpop.permute.xlu0 %2349
  %2351 = vrot.lane.b32.xlu0 %v1520, 32
  %v2352 = vpop.permute.xlu0 %2351
  %2353 = vrot.lane.b32.xlu0 %v1521, 32
  %v2354 = vpop.permute.xlu0 %2353
  %2355 = vrot.lane.b32.xlu0 %v1523, 32
  %v2356 = vpop.permute.xlu0 %2355
  %2357 = vrot.lane.b32.xlu0 %v1524, 32
  %v2358 = vpop.permute.xlu0 %2357
  %2359 = vrot.lane.b32.xlu0 %v1526, 32
  %v2360 = vpop.permute.xlu0 %2359
  %2361 = vrot.lane.b32.xlu0 %v1527, 32
  %v2362 = vpop.permute.xlu0 %2361
  %2363 = vrot.lane.b32.xlu0 %v1529, 32
  %v2364 = vpop.permute.xlu0 %2363
  %2365 = vrot.lane.b32.xlu0 %v1530, 32
  %v2366 = vpop.permute.xlu0 %2365
  %2367 = vrot.lane.b32.xlu0 %v1532, 32
  %v2368 = vpop.permute.xlu0 %2367
  %2369 = vrot.lane.b32.xlu0 %v1941, 32
  %v2370 = vpop.permute.xlu0 %2369
  %2371 = vrot.lane.b32.xlu0 %v1943, 32
  %v2372 = vpop.permute.xlu0 %2371
  %2373 = vrot.lane.b32.xlu0 %v2307, 32
  %v2374 = vpop.permute.xlu0 %2373
  %2375 = vrot.lane.b32.xlu0 %v2309, 32
  %v2376 = vpop.permute.xlu0 %2375
  %2377 = vrot.lane.b32.xlu0 %v1539, 32
  %v2378 = vpop.permute.xlu0 %2377
  %2379 = vrot.lane.b32.xlu0 %v1541, 32
  %v2380 = vpop.permute.xlu0 %2379
  %2381 = vrot.lane.b32.xlu0 %v1542, 32
  %v2382 = vpop.permute.xlu0 %2381
  %2383 = vrot.lane.b32.xlu0 %v1544, 32
  %v2384 = vpop.permute.xlu0 %2383
  %2385 = vrot.lane.b32.xlu0 %v1545, 32
  %v2386 = vpop.permute.xlu0 %2385
  %2387 = vrot.lane.b32.xlu0 %v1547, 32
  %v2388 = vpop.permute.xlu0 %2387
  %2389 = vrot.lane.b32.xlu0 %v1548, 32
  %v2390 = vpop.permute.xlu0 %2389
  %2391 = vrot.lane.b32.xlu0 %v1550, 32
  %v2392 = vpop.permute.xlu0 %2391
  %2393 = vrot.lane.b32.xlu0 %v1551, 32
  %v2394 = vpop.permute.xlu0 %2393
  %2395 = vrot.lane.b32.xlu0 %v1553, 32
  %v2396 = vpop.permute.xlu0 %2395
  %2397 = vrot.lane.b32.xlu0 %v1554, 32
  %v2398 = vpop.permute.xlu0 %2397
  %2399 = vrot.lane.b32.xlu0 %v1556, 32
  %v2400 = vpop.permute.xlu0 %2399
  %2401 = vrot.lane.b32.xlu0 %v1557, 32
  %v2402 = vpop.permute.xlu0 %2401
  %2403 = vrot.lane.b32.xlu0 %v1559, 32
  %v2404 = vpop.permute.xlu0 %2403
  %2405 = vrot.lane.b32.xlu0 %v1560, 32
  %v2406 = vpop.permute.xlu0 %2405
  %2407 = vrot.lane.b32.xlu0 %v1562, 32
  %v2408 = vpop.permute.xlu0 %2407
  %2409 = vrot.lane.b32.xlu0 %v1563, 32
  %v2410 = vpop.permute.xlu0 %2409
  %2411 = vrot.lane.b32.xlu0 %v1565, 32
  %v2412 = vpop.permute.xlu0 %2411
  %2413 = vrot.lane.b32.xlu0 %v1566, 32
  %v2414 = vpop.permute.xlu0 %2413
  %2415 = vrot.lane.b32.xlu0 %v1568, 32
  %v2416 = vpop.permute.xlu0 %2415
  %2417 = vrot.lane.b32.xlu0 %v1569, 32
  %v2418 = vpop.permute.xlu0 %2417
  %2419 = vrot.lane.b32.xlu0 %v1571, 32
  %v2420 = vpop.permute.xlu0 %2419
  %2421 = vrot.lane.b32.xlu0 %v1572, 32
  %v2422 = vpop.permute.xlu0 %2421
  %2423 = vrot.lane.b32.xlu0 %v1574, 32
  %v2424 = vpop.permute.xlu0 %2423
  %2425 = vrot.lane.b32.xlu0 %v1575, 32
  %v2426 = vpop.permute.xlu0 %2425
  %2427 = vrot.lane.b32.xlu0 %v1577, 32
  %v2428 = vpop.permute.xlu0 %2427
  %2429 = vrot.lane.b32.xlu0 %v1578, 32
  %v2430 = vpop.permute.xlu0 %2429
  %2431 = vrot.lane.b32.xlu0 %v1580, 32
  %v2432 = vpop.permute.xlu0 %2431
  %2433 = vrot.lane.b32.xlu0 %v1944, 32
  %v2434 = vpop.permute.xlu0 %2433
  %2435 = vrot.lane.b32.xlu0 %v1946, 32
  %v2436 = vpop.permute.xlu0 %2435
  %2437 = vrot.lane.b32.xlu0 %v2310, 32
  %v2438 = vpop.permute.xlu0 %2437
  %2439 = vrot.lane.b32.xlu0 %v2312, 32
  %v2440 = vpop.permute.xlu0 %2439
  %vm2441 = vcmask 31744
  %v2444 = vsel %vm2441, %v972, %v1325
  %v2446 = vsel %vm2441, %v973, %v1325
  %v2449 = vsel %vm2441, %v974, %v1327
  %v2451 = vsel %vm2441, %v975, %v1327
  %v2454 = vsel %vm2441, %v976, %v1329
  %v2456 = vsel %vm2441, %v977, %v1329
  %v2459 = vsel %vm2441, %v978, %v1331
  %v2461 = vsel %vm2441, %v979, %v1331
  %v2464 = vsel %vm2441, %v980, %v1333
  %v2466 = vsel %vm2441, %v981, %v1333
  %v2469 = vsel %vm2441, %v982, %v1335
  %v2471 = vsel %vm2441, %v983, %v1335
  %v2474 = vsel %vm2441, %v984, %v1337
  %v2476 = vsel %vm2441, %v985, %v1337
  %v2479 = vsel %vm2441, %v986, %v1339
  %v2481 = vsel %vm2441, %v987, %v1339
  %v2484 = vsel %vm2441, %v988, %v1341
  %v2486 = vsel %vm2441, %v989, %v1341
  %v2489 = vsel %vm2441, %v990, %v1343
  %v2491 = vsel %vm2441, %v991, %v1343
  %v2494 = vsel %vm2441, %v992, %v1345
  %v2496 = vsel %vm2441, %v993, %v1345
  %v2499 = vsel %vm2441, %v994, %v1347
  %v2501 = vsel %vm2441, %v995, %v1347
  %v2504 = vsel %vm2441, %v996, %v1349
  %v2506 = vsel %vm2441, %v997, %v1349
  %v2509 = vsel %vm2441, %v998, %v1351
  %v2511 = vsel %vm2441, %v999, %v1351
  %v2514 = vsel %vm2441, %v1000, %v1353
  %v2516 = vsel %vm2441, %v1001, %v1353
  %v2519 = vsel %vm2441, %v1002, %v1355
  %v2521 = vsel %vm2441, %v1003, %v1355
  %v2524 = vsel %vm2441, %v1004, %v1357
  %v2526 = vsel %vm2441, %v1005, %v1357
  %v2529 = vsel %vm2441, %v1006, %v1359
  %v2531 = vsel %vm2441, %v1007, %v1359
  %v2534 = vsel %vm2441, %v1008, %v1361
  %v2536 = vsel %vm2441, %v1009, %v1361
  %v2539 = vsel %vm2441, %v1010, %v1363
  %v2541 = vsel %vm2441, %v1011, %v1363
  %v2544 = vsel %vm2441, %v1012, %v1365
  %v2546 = vsel %vm2441, %v1013, %v1365
  %v2549 = vsel %vm2441, %v1014, %v1367
  %v2551 = vsel %vm2441, %v1015, %v1367
  %v2554 = vsel %vm2441, %v1016, %v1369
  %v2556 = vsel %vm2441, %v1017, %v1369
  %v2559 = vsel %vm2441, %v1018, %v1371
  %v2561 = vsel %vm2441, %v1019, %v1371
  %v2564 = vsel %vm2441, %v1020, %v1373
  %v2566 = vsel %vm2441, %v1021, %v1373
  %v2569 = vsel %vm2441, %v1022, %v1375
  %v2571 = vsel %vm2441, %v1023, %v1375
  %v2574 = vsel %vm2441, %v1024, %v1377
  %v2576 = vsel %vm2441, %v1025, %v1377
  %v2579 = vsel %vm2441, %v1026, %v1379
  %v2581 = vsel %vm2441, %v1027, %v1379
  %v2584 = vsel %vm2441, %v1028, %v1381
  %v2586 = vsel %vm2441, %v1029, %v1381
  %v2589 = vsel %vm2441, %v1030, %v1383
  %v2591 = vsel %vm2441, %v1031, %v1383
  %v2594 = vsel %vm2441, %v1032, %v1385
  %v2596 = vsel %vm2441, %v1033, %v1385
  %v2599 = vsel %vm2441, %v1034, %v1387
  %v2601 = vsel %vm2441, %v1035, %v1387
  %vm2602 = vcmask 64512
  %v2604 = vsel %vm2602, %v2444, %v1582
  %v2606 = vsel %vm2602, %v2446, %v1584
  %v2608 = vsel %vm2602, %v2449, %v1586
  %v2610 = vsel %vm2602, %v2451, %v1588
  %v2612 = vsel %vm2602, %v2454, %v1590
  %v2614 = vsel %vm2602, %v2456, %v1592
  %v2616 = vsel %vm2602, %v2459, %v1594
  %v2618 = vsel %vm2602, %v2461, %v1596
  %v2620 = vsel %vm2602, %v2464, %v1598
  %v2622 = vsel %vm2602, %v2466, %v1600
  %v2624 = vsel %vm2602, %v2469, %v1602
  %v2626 = vsel %vm2602, %v2471, %v1604
  %v2628 = vsel %vm2602, %v2474, %v1606
  %v2630 = vsel %vm2602, %v2476, %v1608
  %v2632 = vsel %vm2602, %v2479, %v1610
  %v2634 = vsel %vm2602, %v2481, %v1612
  %v2636 = vsel %vm2602, %v2484, %v1614
  %v2638 = vsel %vm2602, %v2486, %v1616
  %v2640 = vsel %vm2602, %v2489, %v1618
  %v2642 = vsel %vm2602, %v2491, %v1620
  %v2644 = vsel %vm2602, %v2494, %v1622
  %v2646 = vsel %vm2602, %v2496, %v1624
  %v2648 = vsel %vm2602, %v2499, %v1626
  %v2650 = vsel %vm2602, %v2501, %v1628
  %v2652 = vsel %vm2602, %v2504, %v1630
  %v2654 = vsel %vm2602, %v2506, %v1632
  %v2656 = vsel %vm2602, %v2509, %v1634
  %v2658 = vsel %vm2602, %v2511, %v1636
  %v2660 = vsel %vm2602, %v2514, %v1638
  %v2662 = vsel %vm2602, %v2516, %v1640
  %v2664 = vsel %vm2602, %v2519, %v1642
  %v2666 = vsel %vm2602, %v2521, %v1644
  %v2668 = vsel %vm2602, %v2524, %v1646
  %v2670 = vsel %vm2602, %v2526, %v1648
  %v2672 = vsel %vm2602, %v2529, %v1650
  %v2674 = vsel %vm2602, %v2531, %v1652
  %v2676 = vsel %vm2602, %v2534, %v1654
  %v2678 = vsel %vm2602, %v2536, %v1656
  %v2680 = vsel %vm2602, %v2539, %v1658
  %v2682 = vsel %vm2602, %v2541, %v1660
  %v2684 = vsel %vm2602, %v2544, %v1662
  %v2686 = vsel %vm2602, %v2546, %v1664
  %v2688 = vsel %vm2602, %v2549, %v1666
  %v2690 = vsel %vm2602, %v2551, %v1668
  %v2692 = vsel %vm2602, %v2554, %v1670
  %v2694 = vsel %vm2602, %v2556, %v1672
  %v2696 = vsel %vm2602, %v2559, %v1674
  %v2698 = vsel %vm2602, %v2561, %v1676
  %v2700 = vsel %vm2602, %v2564, %v1678
  %v2702 = vsel %vm2602, %v2566, %v1680
  %v2704 = vsel %vm2602, %v2569, %v1682
  %v2706 = vsel %vm2602, %v2571, %v1684
  %v2708 = vsel %vm2602, %v2574, %v1686
  %v2710 = vsel %vm2602, %v2576, %v1688
  %v2712 = vsel %vm2602, %v2579, %v1690
  %v2714 = vsel %vm2602, %v2581, %v1692
  %v2716 = vsel %vm2602, %v2584, %v1694
  %v2718 = vsel %vm2602, %v2586, %v1696
  %v2720 = vsel %vm2602, %v2589, %v1698
  %v2722 = vsel %vm2602, %v2591, %v1700
  %v2724 = vsel %vm2602, %v2594, %v1702
  %v2726 = vsel %vm2602, %v2596, %v1704
  %v2728 = vsel %vm2602, %v2599, %v1706
  %v2730 = vsel %vm2602, %v2601, %v1708
  %vm2731 = vcmask 97280
  %v2733 = vsel %vm2731, %v2604, %v1726
  %v2735 = vsel %vm2731, %v2606, %v1728
  %v2737 = vsel %vm2731, %v2608, %v1730
  %v2739 = vsel %vm2731, %v2610, %v1732
  %v2741 = vsel %vm2731, %v2612, %v1734
  %v2743 = vsel %vm2731, %v2614, %v1736
  %v2745 = vsel %vm2731, %v2616, %v1738
  %v2747 = vsel %vm2731, %v2618, %v1740
  %v2749 = vsel %vm2731, %v2620, %v1742
  %v2751 = vsel %vm2731, %v2622, %v1744
  %v2753 = vsel %vm2731, %v2624, %v1746
  %v2755 = vsel %vm2731, %v2626, %v1748
  %v2757 = vsel %vm2731, %v2628, %v1750
  %v2759 = vsel %vm2731, %v2630, %v1752
  %v2761 = vsel %vm2731, %v2632, %v1754
  %v2763 = vsel %vm2731, %v2634, %v1756
  %v2765 = vsel %vm2731, %v2636, %v1758
  %v2767 = vsel %vm2731, %v2638, %v1760
  %v2769 = vsel %vm2731, %v2640, %v1762
  %v2771 = vsel %vm2731, %v2642, %v1764
  %v2773 = vsel %vm2731, %v2644, %v1766
  %v2775 = vsel %vm2731, %v2646, %v1768
  %v2777 = vsel %vm2731, %v2648, %v1770
  %v2779 = vsel %vm2731, %v2650, %v1772
  %v2781 = vsel %vm2731, %v2652, %v1774
  %v2783 = vsel %vm2731, %v2654, %v1776
  %v2785 = vsel %vm2731, %v2656, %v1778
  %v2787 = vsel %vm2731, %v2658, %v1780
  %v2789 = vsel %vm2731, %v2660, %v1782
  %v2791 = vsel %vm2731, %v2662, %v1784
  %v2793 = vsel %vm2731, %v2664, %v1786
  %v2795 = vsel %vm2731, %v2666, %v1788
  %v2797 = vsel %vm2731, %v2668, %v1790
  %v2799 = vsel %vm2731, %v2670, %v1792
  %v2801 = vsel %vm2731, %v2672, %v1794
  %v2803 = vsel %vm2731, %v2674, %v1796
  %v2805 = vsel %vm2731, %v2676, %v1798
  %v2807 = vsel %vm2731, %v2678, %v1800
  %v2809 = vsel %vm2731, %v2680, %v1802
  %v2811 = vsel %vm2731, %v2682, %v1804
  %v2813 = vsel %vm2731, %v2684, %v1806
  %v2815 = vsel %vm2731, %v2686, %v1808
  %v2817 = vsel %vm2731, %v2688, %v1810
  %v2819 = vsel %vm2731, %v2690, %v1812
  %v2821 = vsel %vm2731, %v2692, %v1814
  %v2823 = vsel %vm2731, %v2694, %v1816
  %v2825 = vsel %vm2731, %v2696, %v1818
  %v2827 = vsel %vm2731, %v2698, %v1820
  %v2829 = vsel %vm2731, %v2700, %v1822
  %v2831 = vsel %vm2731, %v2702, %v1824
  %v2833 = vsel %vm2731, %v2704, %v1826
  %v2835 = vsel %vm2731, %v2706, %v1828
  %v2837 = vsel %vm2731, %v2708, %v1830
  %v2839 = vsel %vm2731, %v2710, %v1832
  %v2841 = vsel %vm2731, %v2712, %v1834
  %v2843 = vsel %vm2731, %v2714, %v1836
  %v2845 = vsel %vm2731, %v2716, %v1838
  %v2847 = vsel %vm2731, %v2718, %v1840
  %v2849 = vsel %vm2731, %v2720, %v1842
  %v2851 = vsel %vm2731, %v2722, %v1844
  %v2853 = vsel %vm2731, %v2724, %v1846
  %v2855 = vsel %vm2731, %v2726, %v1848
  %v2857 = vsel %vm2731, %v2728, %v1850
  %v2859 = vsel %vm2731, %v2730, %v1852
  %vm2860 = vcmask 130048
  %v2862 = vsel %vm2860, %v2733, %v1872
  %v2863 = vsel %vm2860, %v2735, %v1872
  %v2865 = vsel %vm2860, %v2737, %v1874
  %v2866 = vsel %vm2860, %v2739, %v1874
  %v2868 = vsel %vm2860, %v2741, %v1876
  %v2869 = vsel %vm2860, %v2743, %v1876
  %v2871 = vsel %vm2860, %v2745, %v1878
  %v2872 = vsel %vm2860, %v2747, %v1878
  %v2874 = vsel %vm2860, %v2749, %v1880
  %v2875 = vsel %vm2860, %v2751, %v1880
  %v2877 = vsel %vm2860, %v2753, %v1882
  %v2878 = vsel %vm2860, %v2755, %v1882
  %v2880 = vsel %vm2860, %v2757, %v1884
  %v2881 = vsel %vm2860, %v2759, %v1884
  %v2883 = vsel %vm2860, %v2761, %v1886
  %v2884 = vsel %vm2860, %v2763, %v1886
  %v2886 = vsel %vm2860, %v2765, %v1888
  %v2887 = vsel %vm2860, %v2767, %v1888
  %v2889 = vsel %vm2860, %v2769, %v1890
  %v2890 = vsel %vm2860, %v2771, %v1890
  %v2892 = vsel %vm2860, %v2773, %v1892
  %v2893 = vsel %vm2860, %v2775, %v1892
  %v2895 = vsel %vm2860, %v2777, %v1894
  %v2896 = vsel %vm2860, %v2779, %v1894
  %v2898 = vsel %vm2860, %v2781, %v1896
  %v2899 = vsel %vm2860, %v2783, %v1896
  %v2901 = vsel %vm2860, %v2785, %v1898
  %v2902 = vsel %vm2860, %v2787, %v1898
  %v2904 = vsel %vm2860, %v2789, %v1900
  %v2905 = vsel %vm2860, %v2791, %v1900
  %v2907 = vsel %vm2860, %v2793, %v1902
  %v2908 = vsel %vm2860, %v2795, %v1902
  %v2910 = vsel %vm2860, %v2797, %v1904
  %v2911 = vsel %vm2860, %v2799, %v1904
  %v2913 = vsel %vm2860, %v2801, %v1906
  %v2914 = vsel %vm2860, %v2803, %v1906
  %v2916 = vsel %vm2860, %v2805, %v1908
  %v2917 = vsel %vm2860, %v2807, %v1908
  %v2919 = vsel %vm2860, %v2809, %v1910
  %v2920 = vsel %vm2860, %v2811, %v1910
  %v2922 = vsel %vm2860, %v2813, %v1912
  %v2923 = vsel %vm2860, %v2815, %v1912
  %v2925 = vsel %vm2860, %v2817, %v1914
  %v2926 = vsel %vm2860, %v2819, %v1914
  %v2928 = vsel %vm2860, %v2821, %v1916
  %v2929 = vsel %vm2860, %v2823, %v1916
  %v2931 = vsel %vm2860, %v2825, %v1918
  %v2932 = vsel %vm2860, %v2827, %v1918
  %v2934 = vsel %vm2860, %v2829, %v1920
  %v2935 = vsel %vm2860, %v2831, %v1920
  %v2937 = vsel %vm2860, %v2833, %v1922
  %v2938 = vsel %vm2860, %v2835, %v1922
  %v2940 = vsel %vm2860, %v2837, %v1924
  %v2941 = vsel %vm2860, %v2839, %v1924
  %v2943 = vsel %vm2860, %v2841, %v1926
  %v2944 = vsel %vm2860, %v2843, %v1926
  %v2946 = vsel %vm2860, %v2845, %v1928
  %v2947 = vsel %vm2860, %v2847, %v1928
  %v2949 = vsel %vm2860, %v2849, %v1930
  %v2950 = vsel %vm2860, %v2851, %v1930
  %v2952 = vsel %vm2860, %v2853, %v1932
  %v2953 = vsel %vm2860, %v2855, %v1932
  %v2955 = vsel %vm2860, %v2857, %v1934
  %v2956 = vsel %vm2860, %v2859, %v1934
  %vm2957 = vcmask 162816
  %v2959 = vsel %vm2957, %v2862, %v1948
  %v2961 = vsel %vm2957, %v2863, %v1950
  %v2963 = vsel %vm2957, %v2865, %v1952
  %v2965 = vsel %vm2957, %v2866, %v1954
  %v2967 = vsel %vm2957, %v2868, %v1956
  %v2969 = vsel %vm2957, %v2869, %v1958
  %v2971 = vsel %vm2957, %v2871, %v1960
  %v2973 = vsel %vm2957, %v2872, %v1962
  %v2975 = vsel %vm2957, %v2874, %v1964
  %v2977 = vsel %vm2957, %v2875, %v1966
  %v2979 = vsel %vm2957, %v2877, %v1968
  %v2981 = vsel %vm2957, %v2878, %v1970
  %v2983 = vsel %vm2957, %v2880, %v1972
  %v2985 = vsel %vm2957, %v2881, %v1974
  %v2987 = vsel %vm2957, %v2883, %v1976
  %v2989 = vsel %vm2957, %v2884, %v1978
  %v2991 = vsel %vm2957, %v2886, %v1980
  %v2993 = vsel %vm2957, %v2887, %v1982
  %v2995 = vsel %vm2957, %v2889, %v1984
  %v2997 = vsel %vm2957, %v2890, %v1986
  %v2999 = vsel %vm2957, %v2892, %v1988
  %v3001 = vsel %vm2957, %v2893, %v1990
  %v3003 = vsel %vm2957, %v2895, %v1992
  %v3005 = vsel %vm2957, %v2896, %v1994
  %v3007 = vsel %vm2957, %v2898, %v1996
  %v3009 = vsel %vm2957, %v2899, %v1998
  %v3011 = vsel %vm2957, %v2901, %v2000
  %v3013 = vsel %vm2957, %v2902, %v2002
  %v3015 = vsel %vm2957, %v2904, %v2004
  %v3017 = vsel %vm2957, %v2905, %v2006
  %v3019 = vsel %vm2957, %v2907, %v2008
  %v3021 = vsel %vm2957, %v2908, %v2010
  %v3023 = vsel %vm2957, %v2910, %v2012
  %v3025 = vsel %vm2957, %v2911, %v2014
  %v3027 = vsel %vm2957, %v2913, %v2016
  %v3029 = vsel %vm2957, %v2914, %v2018
  %v3031 = vsel %vm2957, %v2916, %v2020
  %v3033 = vsel %vm2957, %v2917, %v2022
  %v3035 = vsel %vm2957, %v2919, %v2024
  %v3037 = vsel %vm2957, %v2920, %v2026
  %v3039 = vsel %vm2957, %v2922, %v2028
  %v3041 = vsel %vm2957, %v2923, %v2030
  %v3043 = vsel %vm2957, %v2925, %v2032
  %v3045 = vsel %vm2957, %v2926, %v2034
  %v3047 = vsel %vm2957, %v2928, %v2036
  %v3049 = vsel %vm2957, %v2929, %v2038
  %v3051 = vsel %vm2957, %v2931, %v2040
  %v3053 = vsel %vm2957, %v2932, %v2042
  %v3055 = vsel %vm2957, %v2934, %v2044
  %v3057 = vsel %vm2957, %v2935, %v2046
  %v3059 = vsel %vm2957, %v2937, %v2048
  %v3061 = vsel %vm2957, %v2938, %v2050
  %v3063 = vsel %vm2957, %v2940, %v2052
  %v3065 = vsel %vm2957, %v2941, %v2054
  %v3067 = vsel %vm2957, %v2943, %v2056
  %v3069 = vsel %vm2957, %v2944, %v2058
  %v3071 = vsel %vm2957, %v2946, %v2060
  %v3073 = vsel %vm2957, %v2947, %v2062
  %v3075 = vsel %vm2957, %v2949, %v2064
  %v3077 = vsel %vm2957, %v2950, %v2066
  %v3079 = vsel %vm2957, %v2952, %v2068
  %v3081 = vsel %vm2957, %v2953, %v2070
  %v3083 = vsel %vm2957, %v2955, %v2072
  %v3085 = vsel %vm2957, %v2956, %v2074
  %vm3086 = vcmask 195584
  %v3088 = vsel %vm3086, %v2959, %v2092
  %v3090 = vsel %vm3086, %v2961, %v2094
  %v3092 = vsel %vm3086, %v2963, %v2096
  %v3094 = vsel %vm3086, %v2965, %v2098
  %v3096 = vsel %vm3086, %v2967, %v2100
  %v3098 = vsel %vm3086, %v2969, %v2102
  %v3100 = vsel %vm3086, %v2971, %v2104
  %v3102 = vsel %vm3086, %v2973, %v2106
  %v3104 = vsel %vm3086, %v2975, %v2108
  %v3106 = vsel %vm3086, %v2977, %v2110
  %v3108 = vsel %vm3086, %v2979, %v2112
  %v3110 = vsel %vm3086, %v2981, %v2114
  %v3112 = vsel %vm3086, %v2983, %v2116
  %v3114 = vsel %vm3086, %v2985, %v2118
  %v3116 = vsel %vm3086, %v2987, %v2120
  %v3118 = vsel %vm3086, %v2989, %v2122
  %v3120 = vsel %vm3086, %v2991, %v2124
  %v3122 = vsel %vm3086, %v2993, %v2126
  %v3124 = vsel %vm3086, %v2995, %v2128
  %v3126 = vsel %vm3086, %v2997, %v2130
  %v3128 = vsel %vm3086, %v2999, %v2132
  %v3130 = vsel %vm3086, %v3001, %v2134
  %v3132 = vsel %vm3086, %v3003, %v2136
  %v3134 = vsel %vm3086, %v3005, %v2138
  %v3136 = vsel %vm3086, %v3007, %v2140
  %v3138 = vsel %vm3086, %v3009, %v2142
  %v3140 = vsel %vm3086, %v3011, %v2144
  %v3142 = vsel %vm3086, %v3013, %v2146
  %v3144 = vsel %vm3086, %v3015, %v2148
  %v3146 = vsel %vm3086, %v3017, %v2150
  %v3148 = vsel %vm3086, %v3019, %v2152
  %v3150 = vsel %vm3086, %v3021, %v2154
  %v3152 = vsel %vm3086, %v3023, %v2156
  %v3154 = vsel %vm3086, %v3025, %v2158
  %v3156 = vsel %vm3086, %v3027, %v2160
  %v3158 = vsel %vm3086, %v3029, %v2162
  %v3160 = vsel %vm3086, %v3031, %v2164
  %v3162 = vsel %vm3086, %v3033, %v2166
  %v3164 = vsel %vm3086, %v3035, %v2168
  %v3166 = vsel %vm3086, %v3037, %v2170
  %v3168 = vsel %vm3086, %v3039, %v2172
  %v3170 = vsel %vm3086, %v3041, %v2174
  %v3172 = vsel %vm3086, %v3043, %v2176
  %v3174 = vsel %vm3086, %v3045, %v2178
  %v3176 = vsel %vm3086, %v3047, %v2180
  %v3178 = vsel %vm3086, %v3049, %v2182
  %v3180 = vsel %vm3086, %v3051, %v2184
  %v3182 = vsel %vm3086, %v3053, %v2186
  %v3184 = vsel %vm3086, %v3055, %v2188
  %v3186 = vsel %vm3086, %v3057, %v2190
  %v3188 = vsel %vm3086, %v3059, %v2192
  %v3190 = vsel %vm3086, %v3061, %v2194
  %v3192 = vsel %vm3086, %v3063, %v2196
  %v3194 = vsel %vm3086, %v3065, %v2198
  %v3196 = vsel %vm3086, %v3067, %v2200
  %v3198 = vsel %vm3086, %v3069, %v2202
  %v3200 = vsel %vm3086, %v3071, %v2204
  %v3202 = vsel %vm3086, %v3073, %v2206
  %v3204 = vsel %vm3086, %v3075, %v2208
  %v3206 = vsel %vm3086, %v3077, %v2210
  %v3208 = vsel %vm3086, %v3079, %v2212
  %v3210 = vsel %vm3086, %v3081, %v2214
  %v3212 = vsel %vm3086, %v3083, %v2216
  %v3214 = vsel %vm3086, %v3085, %v2218
  %vm3215 = vcmask 228352
  %v3217 = vsel %vm3215, %v3088, %v2238
  %v3218 = vsel %vm3215, %v3090, %v2238
  %v3220 = vsel %vm3215, %v3092, %v2240
  %v3221 = vsel %vm3215, %v3094, %v2240
  %v3223 = vsel %vm3215, %v3096, %v2242
  %v3224 = vsel %vm3215, %v3098, %v2242
  %v3226 = vsel %vm3215, %v3100, %v2244
  %v3227 = vsel %vm3215, %v3102, %v2244
  %v3229 = vsel %vm3215, %v3104, %v2246
  %v3230 = vsel %vm3215, %v3106, %v2246
  %v3232 = vsel %vm3215, %v3108, %v2248
  %v3233 = vsel %vm3215, %v3110, %v2248
  %v3235 = vsel %vm3215, %v3112, %v2250
  %v3236 = vsel %vm3215, %v3114, %v2250
  %v3238 = vsel %vm3215, %v3116, %v2252
  %v3239 = vsel %vm3215, %v3118, %v2252
  %v3241 = vsel %vm3215, %v3120, %v2254
  %v3242 = vsel %vm3215, %v3122, %v2254
  %v3244 = vsel %vm3215, %v3124, %v2256
  %v3245 = vsel %vm3215, %v3126, %v2256
  %v3247 = vsel %vm3215, %v3128, %v2258
  %v3248 = vsel %vm3215, %v3130, %v2258
  %v3250 = vsel %vm3215, %v3132, %v2260
  %v3251 = vsel %vm3215, %v3134, %v2260
  %v3253 = vsel %vm3215, %v3136, %v2262
  %v3254 = vsel %vm3215, %v3138, %v2262
  %v3256 = vsel %vm3215, %v3140, %v2264
  %v3257 = vsel %vm3215, %v3142, %v2264
  %v3259 = vsel %vm3215, %v3144, %v2266
  %v3260 = vsel %vm3215, %v3146, %v2266
  %v3262 = vsel %vm3215, %v3148, %v2268
  %v3263 = vsel %vm3215, %v3150, %v2268
  %v3265 = vsel %vm3215, %v3152, %v2270
  %v3266 = vsel %vm3215, %v3154, %v2270
  %v3268 = vsel %vm3215, %v3156, %v2272
  %v3269 = vsel %vm3215, %v3158, %v2272
  %v3271 = vsel %vm3215, %v3160, %v2274
  %v3272 = vsel %vm3215, %v3162, %v2274
  %v3274 = vsel %vm3215, %v3164, %v2276
  %v3275 = vsel %vm3215, %v3166, %v2276
  %v3277 = vsel %vm3215, %v3168, %v2278
  %v3278 = vsel %vm3215, %v3170, %v2278
  %v3280 = vsel %vm3215, %v3172, %v2280
  %v3281 = vsel %vm3215, %v3174, %v2280
  %v3283 = vsel %vm3215, %v3176, %v2282
  %v3284 = vsel %vm3215, %v3178, %v2282
  %v3286 = vsel %vm3215, %v3180, %v2284
  %v3287 = vsel %vm3215, %v3182, %v2284
  %v3289 = vsel %vm3215, %v3184, %v2286
  %v3290 = vsel %vm3215, %v3186, %v2286
  %v3292 = vsel %vm3215, %v3188, %v2288
  %v3293 = vsel %vm3215, %v3190, %v2288
  %v3295 = vsel %vm3215, %v3192, %v2290
  %v3296 = vsel %vm3215, %v3194, %v2290
  %v3298 = vsel %vm3215, %v3196, %v2292
  %v3299 = vsel %vm3215, %v3198, %v2292
  %v3301 = vsel %vm3215, %v3200, %v2294
  %v3302 = vsel %vm3215, %v3202, %v2294
  %v3304 = vsel %vm3215, %v3204, %v2296
  %v3305 = vsel %vm3215, %v3206, %v2296
  %v3307 = vsel %vm3215, %v3208, %v2298
  %v3308 = vsel %vm3215, %v3210, %v2298
  %v3310 = vsel %vm3215, %v3212, %v2300
  %v3311 = vsel %vm3215, %v3214, %v2300
  %vm3312 = vcmask 261120
  %v3314 = vsel %vm3312, %v3217, %v2314
  %v3316 = vsel %vm3312, %v3218, %v2316
  %v3318 = vsel %vm3312, %v3220, %v2318
  %v3320 = vsel %vm3312, %v3221, %v2320
  %v3322 = vsel %vm3312, %v3223, %v2322
  %v3324 = vsel %vm3312, %v3224, %v2324
  %v3326 = vsel %vm3312, %v3226, %v2326
  %v3328 = vsel %vm3312, %v3227, %v2328
  %v3330 = vsel %vm3312, %v3229, %v2330
  %v3332 = vsel %vm3312, %v3230, %v2332
  %v3334 = vsel %vm3312, %v3232, %v2334
  %v3336 = vsel %vm3312, %v3233, %v2336
  %v3338 = vsel %vm3312, %v3235, %v2338
  %v3340 = vsel %vm3312, %v3236, %v2340
  %v3342 = vsel %vm3312, %v3238, %v2342
  %v3344 = vsel %vm3312, %v3239, %v2344
  %v3346 = vsel %vm3312, %v3241, %v2346
  %v3348 = vsel %vm3312, %v3242, %v2348
  %v3350 = vsel %vm3312, %v3244, %v2350
  %v3352 = vsel %vm3312, %v3245, %v2352
  %v3354 = vsel %vm3312, %v3247, %v2354
  %v3356 = vsel %vm3312, %v3248, %v2356
  %v3358 = vsel %vm3312, %v3250, %v2358
  %v3360 = vsel %vm3312, %v3251, %v2360
  %v3362 = vsel %vm3312, %v3253, %v2362
  %v3364 = vsel %vm3312, %v3254, %v2364
  %v3366 = vsel %vm3312, %v3256, %v2366
  %v3368 = vsel %vm3312, %v3257, %v2368
  %v3370 = vsel %vm3312, %v3259, %v2370
  %v3372 = vsel %vm3312, %v3260, %v2372
  %v3374 = vsel %vm3312, %v3262, %v2374
  %v3376 = vsel %vm3312, %v3263, %v2376
  %v3378 = vsel %vm3312, %v3265, %v2378
  %v3380 = vsel %vm3312, %v3266, %v2380
  %v3382 = vsel %vm3312, %v3268, %v2382
  %v3384 = vsel %vm3312, %v3269, %v2384
  %v3386 = vsel %vm3312, %v3271, %v2386
  %v3388 = vsel %vm3312, %v3272, %v2388
  %v3390 = vsel %vm3312, %v3274, %v2390
  %v3392 = vsel %vm3312, %v3275, %v2392
  %v3394 = vsel %vm3312, %v3277, %v2394
  %v3396 = vsel %vm3312, %v3278, %v2396
  %v3398 = vsel %vm3312, %v3280, %v2398
  %v3400 = vsel %vm3312, %v3281, %v2400
  %v3402 = vsel %vm3312, %v3283, %v2402
  %v3404 = vsel %vm3312, %v3284, %v2404
  %v3406 = vsel %vm3312, %v3286, %v2406
  %v3408 = vsel %vm3312, %v3287, %v2408
  %v3410 = vsel %vm3312, %v3289, %v2410
  %v3412 = vsel %vm3312, %v3290, %v2412
  %v3414 = vsel %vm3312, %v3292, %v2414
  %v3416 = vsel %vm3312, %v3293, %v2416
  %v3418 = vsel %vm3312, %v3295, %v2418
  %v3420 = vsel %vm3312, %v3296, %v2420
  %v3422 = vsel %vm3312, %v3298, %v2422
  %v3424 = vsel %vm3312, %v3299, %v2424
  %v3426 = vsel %vm3312, %v3301, %v2426
  %v3428 = vsel %vm3312, %v3302, %v2428
  %v3430 = vsel %vm3312, %v3304, %v2430
  %v3432 = vsel %vm3312, %v3305, %v2432
  %v3434 = vsel %vm3312, %v3307, %v2434
  %v3436 = vsel %vm3312, %v3308, %v2436
  %v3438 = vsel %vm3312, %v3310, %v2438
  %v3440 = vsel %vm3312, %v3311, %v2440
  %vm3441 = vcmask 293888
  %v3443 = vsel %vm3441, %v3314, 0
  %v3444 = vsel %vm3441, %v3316, 0
  %v3445 = vsel %vm3441, %v3318, 0
  %v3446 = vsel %vm3441, %v3320, 0
  %v3447 = vsel %vm3441, %v3322, 0
  %v3448 = vsel %vm3441, %v3324, 0
  %v3449 = vsel %vm3441, %v3326, 0
  %v3450 = vsel %vm3441, %v3328, 0
  %v3451 = vsel %vm3441, %v3330, 0
  %v3452 = vsel %vm3441, %v3332, 0
  %v3453 = vsel %vm3441, %v3334, 0
  %v3454 = vsel %vm3441, %v3336, 0
  %v3455 = vsel %vm3441, %v3338, 0
  %v3456 = vsel %vm3441, %v3340, 0
  %v3457 = vsel %vm3441, %v3342, 0
  %v3458 = vsel %vm3441, %v3344, 0
  %v3459 = vsel %vm3441, %v3346, 0
  %v3460 = vsel %vm3441, %v3348, 0
  %v3461 = vsel %vm3441, %v3350, 0
  %v3462 = vsel %vm3441, %v3352, 0
  %v3463 = vsel %vm3441, %v3354, 0
  %v3464 = vsel %vm3441, %v3356, 0
  %v3465 = vsel %vm3441, %v3358, 0
  %v3466 = vsel %vm3441, %v3360, 0
  %v3467 = vsel %vm3441, %v3362, 0
  %v3468 = vsel %vm3441, %v3364, 0
  %v3469 = vsel %vm3441, %v3366, 0
  %v3470 = vsel %vm3441, %v3368, 0
  %v3471 = vsel %vm3441, %v3370, 0
  %v3472 = vsel %vm3441, %v3372, 0
  %v3473 = vsel %vm3441, %v3374, 0
  %v3474 = vsel %vm3441, %v3376, 0
  %v3475 = vsel %vm3441, %v3378, 0
  %v3476 = vsel %vm3441, %v3380, 0
  %v3477 = vsel %vm3441, %v3382, 0
  %v3478 = vsel %vm3441, %v3384, 0
  %v3479 = vsel %vm3441, %v3386, 0
  %v3480 = vsel %vm3441, %v3388, 0
  %v3481 = vsel %vm3441, %v3390, 0
  %v3482 = vsel %vm3441, %v3392, 0
  %v3483 = vsel %vm3441, %v3394, 0
  %v3484 = vsel %vm3441, %v3396, 0
  %v3485 = vsel %vm3441, %v3398, 0
  %v3486 = vsel %vm3441, %v3400, 0
  %v3487 = vsel %vm3441, %v3402, 0
  %v3488 = vsel %vm3441, %v3404, 0
  %v3489 = vsel %vm3441, %v3406, 0
  %v3490 = vsel %vm3441, %v3408, 0
  %v3491 = vsel %vm3441, %v3410, 0
  %v3492 = vsel %vm3441, %v3412, 0
  %v3493 = vsel %vm3441, %v3414, 0
  %v3494 = vsel %vm3441, %v3416, 0
  %v3495 = vsel %vm3441, %v3418, 0
  %v3496 = vsel %vm3441, %v3420, 0
  %v3497 = vsel %vm3441, %v3422, 0
  %v3498 = vsel %vm3441, %v3424, 0
  %v3499 = vsel %vm3441, %v3426, 0
  %v3500 = vsel %vm3441, %v3428, 0
  %v3501 = vsel %vm3441, %v3430, 0
  %v3502 = vsel %vm3441, %v3432, 0
  %v3503 = vsel %vm3441, %v3434, 0
  %v3504 = vsel %vm3441, %v3436, 0
  %v3505 = vsel %vm3441, %v3438, 0
  %v3506 = vsel %vm3441, %v3440, 0
  %vm3507 = vsmask.f32 4352
  %v3508 = vshrl.u32 %v3443, 16
  %v3510 = vrot.slane %v3508, 3
  %v3511 = vshll.u32 %v3443, 16
  %v3513 = vrot.slane %v3511, 4
  %v3514 = vor.u32 %v3510, %v3513
  %v3515 = vshrl.u32 %v3444, 16
  %v3517 = vrot.slane %v3515, 3
  %v3518 = vshll.u32 %v3444, 16
  %v3520 = vrot.slane %v3518, 4
  %v3521 = vor.u32 %v3517, %v3520
  %v3522 = vsel %vm3507, %v3514, %v3521
  %v3523 = vshrl.u32 %v3445, 16
  %v3525 = vrot.slane %v3523, 3
  %v3526 = vshll.u32 %v3445, 16
  %v3528 = vrot.slane %v3526, 4
  %v3529 = vor.u32 %v3525, %v3528
  %v3530 = vshrl.u32 %v3446, 16
  %v3532 = vrot.slane %v3530, 3
  %v3533 = vshll.u32 %v3446, 16
  %v3535 = vrot.slane %v3533, 4
  %v3536 = vor.u32 %v3532, %v3535
  %v3537 = vsel %vm3507, %v3529, %v3536
  %v3538 = vshrl.u32 %v3447, 16
  %v3540 = vrot.slane %v3538, 3
  %v3541 = vshll.u32 %v3447, 16
  %v3543 = vrot.slane %v3541, 4
  %v3544 = vor.u32 %v3540, %v3543
  %v3545 = vshrl.u32 %v3448, 16
  %v3547 = vrot.slane %v3545, 3
  %v3548 = vshll.u32 %v3448, 16
  %v3550 = vrot.slane %v3548, 4
  %v3551 = vor.u32 %v3547, %v3550
  %v3552 = vsel %vm3507, %v3544, %v3551
  %v3553 = vshrl.u32 %v3449, 16
  %v3555 = vrot.slane %v3553, 3
  %v3556 = vshll.u32 %v3449, 16
  %v3558 = vrot.slane %v3556, 4
  %v3559 = vor.u32 %v3555, %v3558
  %v3560 = vshrl.u32 %v3450, 16
  %v3562 = vrot.slane %v3560, 3
  %v3563 = vshll.u32 %v3450, 16
  %v3565 = vrot.slane %v3563, 4
  %v3566 = vor.u32 %v3562, %v3565
  %v3567 = vsel %vm3507, %v3559, %v3566
  %v3568 = vshrl.u32 %v3451, 16
  %v3570 = vrot.slane %v3568, 3
  %v3571 = vshll.u32 %v3451, 16
  %v3573 = vrot.slane %v3571, 4
  %v3574 = vor.u32 %v3570, %v3573
  %v3575 = vshrl.u32 %v3452, 16
  %v3577 = vrot.slane %v3575, 3
  %v3578 = vshll.u32 %v3452, 16
  %v3580 = vrot.slane %v3578, 4
  %v3581 = vor.u32 %v3577, %v3580
  %v3582 = vsel %vm3507, %v3574, %v3581
  %v3583 = vshrl.u32 %v3453, 16
  %v3585 = vrot.slane %v3583, 3
  %v3586 = vshll.u32 %v3453, 16
  %v3588 = vrot.slane %v3586, 4
  %v3589 = vor.u32 %v3585, %v3588
  %v3590 = vshrl.u32 %v3454, 16
  %v3592 = vrot.slane %v3590, 3
  %v3593 = vshll.u32 %v3454, 16
  %v3595 = vrot.slane %v3593, 4
  %v3596 = vor.u32 %v3592, %v3595
  %v3597 = vsel %vm3507, %v3589, %v3596
  %v3598 = vshrl.u32 %v3455, 16
  %v3600 = vrot.slane %v3598, 3
  %v3601 = vshll.u32 %v3455, 16
  %v3603 = vrot.slane %v3601, 4
  %v3604 = vor.u32 %v3600, %v3603
  %v3605 = vshrl.u32 %v3456, 16
  %v3607 = vrot.slane %v3605, 3
  %v3608 = vshll.u32 %v3456, 16
  %v3610 = vrot.slane %v3608, 4
  %v3611 = vor.u32 %v3607, %v3610
  %v3612 = vsel %vm3507, %v3604, %v3611
  %v3613 = vshrl.u32 %v3457, 16
  %v3615 = vrot.slane %v3613, 3
  %v3616 = vshll.u32 %v3457, 16
  %v3618 = vrot.slane %v3616, 4
  %v3619 = vor.u32 %v3615, %v3618
  %v3620 = vshrl.u32 %v3458, 16
  %v3622 = vrot.slane %v3620, 3
  %v3623 = vshll.u32 %v3458, 16
  %v3625 = vrot.slane %v3623, 4
  %v3626 = vor.u32 %v3622, %v3625
  %v3627 = vsel %vm3507, %v3619, %v3626
  %v3628 = vshrl.u32 %v3459, 16
  %v3630 = vrot.slane %v3628, 3
  %v3631 = vshll.u32 %v3459, 16
  %v3633 = vrot.slane %v3631, 4
  %v3634 = vor.u32 %v3630, %v3633
  %v3635 = vshrl.u32 %v3460, 16
  %v3637 = vrot.slane %v3635, 3
  %v3638 = vshll.u32 %v3460, 16
  %v3640 = vrot.slane %v3638, 4
  %v3641 = vor.u32 %v3637, %v3640
  %v3642 = vsel %vm3507, %v3634, %v3641
  %v3643 = vshrl.u32 %v3461, 16
  %v3645 = vrot.slane %v3643, 3
  %v3646 = vshll.u32 %v3461, 16
  %v3648 = vrot.slane %v3646, 4
  %v3649 = vor.u32 %v3645, %v3648
  %v3650 = vshrl.u32 %v3462, 16
  %v3652 = vrot.slane %v3650, 3
  %v3653 = vshll.u32 %v3462, 16
  %v3655 = vrot.slane %v3653, 4
  %v3656 = vor.u32 %v3652, %v3655
  %v3657 = vsel %vm3507, %v3649, %v3656
  %v3658 = vshrl.u32 %v3463, 16
  %v3660 = vrot.slane %v3658, 3
  %v3661 = vshll.u32 %v3463, 16
  %v3663 = vrot.slane %v3661, 4
  %v3664 = vor.u32 %v3660, %v3663
  %v3665 = vshrl.u32 %v3464, 16
  %v3667 = vrot.slane %v3665, 3
  %v3668 = vshll.u32 %v3464, 16
  %v3670 = vrot.slane %v3668, 4
  %v3671 = vor.u32 %v3667, %v3670
  %v3672 = vsel %vm3507, %v3664, %v3671
  %v3673 = vshrl.u32 %v3465, 16
  %v3675 = vrot.slane %v3673, 3
  %v3676 = vshll.u32 %v3465, 16
  %v3678 = vrot.slane %v3676, 4
  %v3679 = vor.u32 %v3675, %v3678
  %v3680 = vshrl.u32 %v3466, 16
  %v3682 = vrot.slane %v3680, 3
  %v3683 = vshll.u32 %v3466, 16
  %v3685 = vrot.slane %v3683, 4
  %v3686 = vor.u32 %v3682, %v3685
  %v3687 = vsel %vm3507, %v3679, %v3686
  %v3688 = vshrl.u32 %v3467, 16
  %v3690 = vrot.slane %v3688, 3
  %v3691 = vshll.u32 %v3467, 16
  %v3693 = vrot.slane %v3691, 4
  %v3694 = vor.u32 %v3690, %v3693
  %v3695 = vshrl.u32 %v3468, 16
  %v3697 = vrot.slane %v3695, 3
  %v3698 = vshll.u32 %v3468, 16
  %v3700 = vrot.slane %v3698, 4
  %v3701 = vor.u32 %v3697, %v3700
  %v3702 = vsel %vm3507, %v3694, %v3701
  %v3703 = vshrl.u32 %v3469, 16
  %v3705 = vrot.slane %v3703, 3
  %v3706 = vshll.u32 %v3469, 16
  %v3708 = vrot.slane %v3706, 4
  %v3709 = vor.u32 %v3705, %v3708
  %v3710 = vshrl.u32 %v3470, 16
  %v3712 = vrot.slane %v3710, 3
  %v3713 = vshll.u32 %v3470, 16
  %v3715 = vrot.slane %v3713, 4
  %v3716 = vor.u32 %v3712, %v3715
  %v3717 = vsel %vm3507, %v3709, %v3716
  %v3718 = vshrl.u32 %v3471, 16
  %v3720 = vrot.slane %v3718, 3
  %v3721 = vshll.u32 %v3471, 16
  %v3723 = vrot.slane %v3721, 4
  %v3724 = vor.u32 %v3720, %v3723
  %v3725 = vshrl.u32 %v3472, 16
  %v3727 = vrot.slane %v3725, 3
  %v3728 = vshll.u32 %v3472, 16
  %v3730 = vrot.slane %v3728, 4
  %v3731 = vor.u32 %v3727, %v3730
  %v3732 = vsel %vm3507, %v3724, %v3731
  %v3733 = vshrl.u32 %v3473, 16
  %v3735 = vrot.slane %v3733, 3
  %v3736 = vshll.u32 %v3473, 16
  %v3738 = vrot.slane %v3736, 4
  %v3739 = vor.u32 %v3735, %v3738
  %v3740 = vshrl.u32 %v3474, 16
  %v3742 = vrot.slane %v3740, 3
  %v3743 = vshll.u32 %v3474, 16
  %v3745 = vrot.slane %v3743, 4
  %v3746 = vor.u32 %v3742, %v3745
  %v3747 = vsel %vm3507, %v3739, %v3746
  %v3748 = vshrl.u32 %v3475, 16
  %v3750 = vrot.slane %v3748, 3
  %v3751 = vshll.u32 %v3475, 16
  %v3753 = vrot.slane %v3751, 4
  %v3754 = vor.u32 %v3750, %v3753
  %v3755 = vshrl.u32 %v3476, 16
  %v3757 = vrot.slane %v3755, 3
  %v3758 = vshll.u32 %v3476, 16
  %v3760 = vrot.slane %v3758, 4
  %v3761 = vor.u32 %v3757, %v3760
  %v3762 = vsel %vm3507, %v3754, %v3761
  %v3763 = vshrl.u32 %v3477, 16
  %v3765 = vrot.slane %v3763, 3
  %v3766 = vshll.u32 %v3477, 16
  %v3768 = vrot.slane %v3766, 4
  %v3769 = vor.u32 %v3765, %v3768
  %v3770 = vshrl.u32 %v3478, 16
  %v3772 = vrot.slane %v3770, 3
  %v3773 = vshll.u32 %v3478, 16
  %v3775 = vrot.slane %v3773, 4
  %v3776 = vor.u32 %v3772, %v3775
  %v3777 = vsel %vm3507, %v3769, %v3776
  %v3778 = vshrl.u32 %v3479, 16
  %v3780 = vrot.slane %v3778, 3
  %v3781 = vshll.u32 %v3479, 16
  %v3783 = vrot.slane %v3781, 4
  %v3784 = vor.u32 %v3780, %v3783
  %v3785 = vshrl.u32 %v3480, 16
  %v3787 = vrot.slane %v3785, 3
  %v3788 = vshll.u32 %v3480, 16
  %v3790 = vrot.slane %v3788, 4
  %v3791 = vor.u32 %v3787, %v3790
  %v3792 = vsel %vm3507, %v3784, %v3791
  %v3793 = vshrl.u32 %v3481, 16
  %v3795 = vrot.slane %v3793, 3
  %v3796 = vshll.u32 %v3481, 16
  %v3798 = vrot.slane %v3796, 4
  %v3799 = vor.u32 %v3795, %v3798
  %v3800 = vshrl.u32 %v3482, 16
  %v3802 = vrot.slane %v3800, 3
  %v3803 = vshll.u32 %v3482, 16
  %v3805 = vrot.slane %v3803, 4
  %v3806 = vor.u32 %v3802, %v3805
  %v3807 = vsel %vm3507, %v3799, %v3806
  %v3808 = vshrl.u32 %v3483, 16
  %v3810 = vrot.slane %v3808, 3
  %v3811 = vshll.u32 %v3483, 16
  %v3813 = vrot.slane %v3811, 4
  %v3814 = vor.u32 %v3810, %v3813
  %v3815 = vshrl.u32 %v3484, 16
  %v3817 = vrot.slane %v3815, 3
  %v3818 = vshll.u32 %v3484, 16
  %v3820 = vrot.slane %v3818, 4
  %v3821 = vor.u32 %v3817, %v3820
  %v3822 = vsel %vm3507, %v3814, %v3821
  %v3823 = vshrl.u32 %v3485, 16
  %v3825 = vrot.slane %v3823, 3
  %v3826 = vshll.u32 %v3485, 16
  %v3828 = vrot.slane %v3826, 4
  %v3829 = vor.u32 %v3825, %v3828
  %v3830 = vshrl.u32 %v3486, 16
  %v3832 = vrot.slane %v3830, 3
  %v3833 = vshll.u32 %v3486, 16
  %v3835 = vrot.slane %v3833, 4
  %v3836 = vor.u32 %v3832, %v3835
  %v3837 = vsel %vm3507, %v3829, %v3836
  %v3838 = vshrl.u32 %v3487, 16
  %v3840 = vrot.slane %v3838, 3
  %v3841 = vshll.u32 %v3487, 16
  %v3843 = vrot.slane %v3841, 4
  %v3844 = vor.u32 %v3840, %v3843
  %v3845 = vshrl.u32 %v3488, 16
  %v3847 = vrot.slane %v3845, 3
  %v3848 = vshll.u32 %v3488, 16
  %v3850 = vrot.slane %v3848, 4
  %v3851 = vor.u32 %v3847, %v3850
  %v3852 = vsel %vm3507, %v3844, %v3851
  %v3853 = vshrl.u32 %v3489, 16
  %v3855 = vrot.slane %v3853, 3
  %v3856 = vshll.u32 %v3489, 16
  %v3858 = vrot.slane %v3856, 4
  %v3859 = vor.u32 %v3855, %v3858
  %v3860 = vshrl.u32 %v3490, 16
  %v3862 = vrot.slane %v3860, 3
  %v3863 = vshll.u32 %v3490, 16
  %v3865 = vrot.slane %v3863, 4
  %v3866 = vor.u32 %v3862, %v3865
  %v3867 = vsel %vm3507, %v3859, %v3866
  %v3868 = vshrl.u32 %v3491, 16
  %v3870 = vrot.slane %v3868, 3
  %v3871 = vshll.u32 %v3491, 16
  %v3873 = vrot.slane %v3871, 4
  %v3874 = vor.u32 %v3870, %v3873
  %v3875 = vshrl.u32 %v3492, 16
  %v3877 = vrot.slane %v3875, 3
  %v3878 = vshll.u32 %v3492, 16
  %v3880 = vrot.slane %v3878, 4
  %v3881 = vor.u32 %v3877, %v3880
  %v3882 = vsel %vm3507, %v3874, %v3881
  %v3883 = vshrl.u32 %v3493, 16
  %v3885 = vrot.slane %v3883, 3
  %v3886 = vshll.u32 %v3493, 16
  %v3888 = vrot.slane %v3886, 4
  %v3889 = vor.u32 %v3885, %v3888
  %v3890 = vshrl.u32 %v3494, 16
  %v3892 = vrot.slane %v3890, 3
  %v3893 = vshll.u32 %v3494, 16
  %v3895 = vrot.slane %v3893, 4
  %v3896 = vor.u32 %v3892, %v3895
  %v3897 = vsel %vm3507, %v3889, %v3896
  %v3898 = vshrl.u32 %v3495, 16
  %v3900 = vrot.slane %v3898, 3
  %v3901 = vshll.u32 %v3495, 16
  %v3903 = vrot.slane %v3901, 4
  %v3904 = vor.u32 %v3900, %v3903
  %v3905 = vshrl.u32 %v3496, 16
  %v3907 = vrot.slane %v3905, 3
  %v3908 = vshll.u32 %v3496, 16
  %v3910 = vrot.slane %v3908, 4
  %v3911 = vor.u32 %v3907, %v3910
  %v3912 = vsel %vm3507, %v3904, %v3911
  %v3913 = vshrl.u32 %v3497, 16
  %v3915 = vrot.slane %v3913, 3
  %v3916 = vshll.u32 %v3497, 16
  %v3918 = vrot.slane %v3916, 4
  %v3919 = vor.u32 %v3915, %v3918
  %v3920 = vshrl.u32 %v3498, 16
  %v3922 = vrot.slane %v3920, 3
  %v3923 = vshll.u32 %v3498, 16
  %v3925 = vrot.slane %v3923, 4
  %v3926 = vor.u32 %v3922, %v3925
  %v3927 = vsel %vm3507, %v3919, %v3926
  %v3928 = vshrl.u32 %v3499, 16
  %v3930 = vrot.slane %v3928, 3
  %v3931 = vshll.u32 %v3499, 16
  %v3933 = vrot.slane %v3931, 4
  %v3934 = vor.u32 %v3930, %v3933
  %v3935 = vshrl.u32 %v3500, 16
  %v3937 = vrot.slane %v3935, 3
  %v3938 = vshll.u32 %v3500, 16
  %v3940 = vrot.slane %v3938, 4
  %v3941 = vor.u32 %v3937, %v3940
  %v3942 = vsel %vm3507, %v3934, %v3941
  %v3943 = vshrl.u32 %v3501, 16
  %v3945 = vrot.slane %v3943, 3
  %v3946 = vshll.u32 %v3501, 16
  %v3948 = vrot.slane %v3946, 4
  %v3949 = vor.u32 %v3945, %v3948
  %v3950 = vshrl.u32 %v3502, 16
  %v3952 = vrot.slane %v3950, 3
  %v3953 = vshll.u32 %v3502, 16
  %v3955 = vrot.slane %v3953, 4
  %v3956 = vor.u32 %v3952, %v3955
  %v3957 = vsel %vm3507, %v3949, %v3956
  %v3958 = vshrl.u32 %v3503, 16
  %v3960 = vrot.slane %v3958, 3
  %v3961 = vshll.u32 %v3503, 16
  %v3963 = vrot.slane %v3961, 4
  %v3964 = vor.u32 %v3960, %v3963
  %v3965 = vshrl.u32 %v3504, 16
  %v3967 = vrot.slane %v3965, 3
  %v3968 = vshll.u32 %v3504, 16
  %v3970 = vrot.slane %v3968, 4
  %v3971 = vor.u32 %v3967, %v3970
  %v3972 = vsel %vm3507, %v3964, %v3971
  %v3973 = vshrl.u32 %v3505, 16
  %v3975 = vrot.slane %v3973, 3
  %v3976 = vshll.u32 %v3505, 16
  %v3978 = vrot.slane %v3976, 4
  %v3979 = vor.u32 %v3975, %v3978
  %v3980 = vshrl.u32 %v3506, 16
  %v3982 = vrot.slane %v3980, 3
  %v3983 = vshll.u32 %v3506, 16
  %v3985 = vrot.slane %v3983, 4
  %v3986 = vor.u32 %v3982, %v3985
  %v3987 = vsel %vm3507, %v3979, %v3986
  %v4020 = vld [vmem:[%s1] sm:$0xf]
  %v4021 = vld [vmem:[%s1 + $0x4] sm:$0xf]
  %v4022 = vld [vmem:[%s1 + $0x8] sm:$0xf]
  %v4023 = vld [vmem:[%s1 + $0xc] sm:$0xf]
  %v4024 = vld [vmem:[%s1 + $0x10] sm:$0xf]
  %v4025 = vld [vmem:[%s1 + $0x14] sm:$0xf]
  %v4026 = vld [vmem:[%s1 + $0x18] sm:$0xf]
  %v4027 = vld [vmem:[%s1 + $0x1c] sm:$0xf]
  %v4028 = vld [vmem:[%s1 + $0x20] sm:$0xf]
  %v4029 = vld [vmem:[%s1 + $0x24] sm:$0xf]
  %v4030 = vld [vmem:[%s1 + $0x28] sm:$0xf]
  %v4031 = vld [vmem:[%s1 + $0x2c] sm:$0xf]
  %v4032 = vld [vmem:[%s1 + $0x30] sm:$0xf]
  %v4033 = vld [vmem:[%s1 + $0x34] sm:$0xf]
  %v4034 = vld [vmem:[%s1 + $0x38] sm:$0xf]
  %v4035 = vld [vmem:[%s1 + $0x3c] sm:$0xf]
  %v4052 = vunpack.c.l.b16 %v4020
  %v4053 = vunpack.c.l.b16 %v4021
  %v4054 = vunpack.c.l.b16 %v4022
  %v4055 = vunpack.c.l.b16 %v4023
  %v4056 = vunpack.c.l.b16 %v4024
  %v4057 = vunpack.c.l.b16 %v4025
  %v4058 = vunpack.c.l.b16 %v4026
  %v4059 = vunpack.c.l.b16 %v4027
  %v4060 = vunpack.c.l.b16 %v4028
  %v4061 = vunpack.c.l.b16 %v4029
  %v4062 = vunpack.c.l.b16 %v4030
  %v4063 = vunpack.c.l.b16 %v4031
  %v4064 = vunpack.c.l.b16 %v4032
  %v4065 = vunpack.c.l.b16 %v4033
  %v4066 = vunpack.c.l.b16 %v4034
  %v4067 = vunpack.c.l.b16 %v4035
  %v4068 = vpack.c.b16 %v4053, %v4052
  %v4069 = vpack.c.b16 %v4055, %v4054
  %v4070 = vpack.c.b16 %v4057, %v4056
  %v4071 = vpack.c.b16 %v4059, %v4058
  %v4072 = vpack.c.b16 %v4061, %v4060
  %v4073 = vpack.c.b16 %v4063, %v4062
  %v4074 = vpack.c.b16 %v4065, %v4064
  %v4075 = vpack.c.b16 %v4067, %v4066
  %4084 = vmatprep.subr.bf16.mxu0 0
  %4085 = vmatpush1.bf16.msra.mxu0 %v4068
  %4086 = vmatprep.subr.bf16.mxu0 0
  %4087 = vmatpush1.bf16.msra.mxu0 %v4069
  %4088 = vmatprep.subr.bf16.mxu0 0
  %4089 = vmatpush1.bf16.msra.mxu0 %v4070
  %4090 = vmatprep.subr.bf16.mxu0 0
  %4091 = vmatpush1.bf16.msra.mxu0 %v4071
  %4092 = vmatprep.subr.bf16.mxu0 0
  %4093 = vmatpush1.bf16.msra.mxu0 %v4072
  %4094 = vmatprep.subr.bf16.mxu0 0
  %4095 = vmatpush1.bf16.msra.mxu0 %v4073
  %4096 = vmatprep.subr.bf16.mxu0 0
  %4097 = vmatpush1.bf16.msra.mxu0 %v4074
  %4098 = vmatprep.subr.bf16.mxu0 0
  %4099 = vmatpush1.bf16.msra.mxu0 %v4075
  %4100 = vmatprep.subr.bf16.mxu0 0
  %4101 = vmatpush1.bf16.msra.mxu0 0
  %4102 = vmatprep.subr.bf16.mxu0 0
  %4103 = vmatpush1.bf16.msra.mxu0 0
  %4104 = vmatprep.subr.bf16.mxu0 0
  %4105 = vmatpush1.bf16.msra.mxu0 0
  %4106 = vmatprep.subr.bf16.mxu0 0
  %4107 = vmatpush1.bf16.msra.mxu0 0
  %4108 = vmatprep.subr.bf16.mxu0 0
  %4109 = vmatpush1.bf16.msra.mxu0 0
  %4110 = vmatprep.subr.bf16.mxu0 0
  %4111 = vmatpush1.bf16.msra.mxu0 0
  %4112 = vmatprep.subr.bf16.mxu0 0
  %4113 = vmatpush1.bf16.msra.mxu0 0
  %4114 = vmatprep.subr.bf16.mxu0 0
  %4115 = vmatpush1.bf16.msra.mxu0 0
  %4116 = vmatprep.mubr.bf16.mxu0 0
  %4117 = vmatmul.mubr.bf16.gmra.mrb[0].mxu0 %v3522
  %v4118 = vpop.f32.mrb[0].mxu0
  %v4119 = vadd.f32 0.0, %v4118
  %v4120 = vpop.f32.mrb[0].mxu0
  %v4121 = vpop.f32.mrb[0].mxu0
  %v4122 = vadd.f32 0.0, %v4121
  %v4123 = vpop.f32.mrb[0].mxu0
  %4124 = vmatprep.mubr.bf16.mxu0 0
  %4125 = vmatmul.mubr.bf16.gmra.mrb[0].mxu0 %v3537
  %v4126 = vpop.f32.mrb[0].mxu0
  %v4127 = vadd.f32 0.0, %v4126
  %v4128 = vpop.f32.mrb[0].mxu0
  %v4129 = vpop.f32.mrb[0].mxu0
  %v4130 = vadd.f32 0.0, %v4129
  %v4131 = vpop.f32.mrb[0].mxu0
  %4132 = vmatprep.mubr.bf16.mxu0 0
  %4133 = vmatmul.mubr.bf16.gmra.mrb[0].mxu0 %v3552
  %v4134 = vpop.f32.mrb[0].mxu0
  %v4135 = vadd.f32 0.0, %v4134
  %v4136 = vpop.f32.mrb[0].mxu0
  %v4137 = vpop.f32.mrb[0].mxu0
  %v4138 = vadd.f32 0.0, %v4137
  %v4139 = vpop.f32.mrb[0].mxu0
  %4140 = vmatprep.mubr.bf16.mxu0 0
  %4141 = vmatmul.mubr.bf16.gmra.mrb[0].mxu0 %v3567
  %v4142 = vpop.f32.mrb[0].mxu0
  %v4143 = vadd.f32 0.0, %v4142
  %v4144 = vpop.f32.mrb[0].mxu0
  %v4145 = vpop.f32.mrb[0].mxu0
  %v4146 = vadd.f32 0.0, %v4145
  %v4147 = vpop.f32.mrb[0].mxu0
  %4148 = vmatprep.mubr.bf16.mxu0 0
  %4149 = vmatmul.mubr.bf16.gmra.mrb[0].mxu0 %v3582
  %v4150 = vpop.f32.mrb[0].mxu0
  %v4151 = vadd.f32 0.0, %v4150
  %v4152 = vpop.f32.mrb[0].mxu0
  %v4153 = vpop.f32.mrb[0].mxu0
  %v4154 = vadd.f32 0.0, %v4153
  %v4155 = vpop.f32.mrb[0].mxu0
  %4156 = vmatprep.mubr.bf16.mxu0 0
  %4157 = vmatmul.mubr.bf16.gmra.mrb[0].mxu0 %v3597
  %v4158 = vpop.f32.mrb[0].mxu0
  %v4159 = vadd.f32 0.0, %v4158
  %v4160 = vpop.f32.mrb[0].mxu0
  %v4161 = vpop.f32.mrb[0].mxu0
  %v4162 = vadd.f32 0.0, %v4161
  %v4163 = vpop.f32.mrb[0].mxu0
  %4164 = vmatprep.mubr.bf16.mxu0 0
  %4165 = vmatmul.mubr.bf16.gmra.mrb[0].mxu0 %v3612
  %v4166 = vpop.f32.mrb[0].mxu0
  %v4167 = vadd.f32 0.0, %v4166
  %v4168 = vpop.f32.mrb[0].mxu0
  %v4169 = vpop.f32.mrb[0].mxu0
  %v4170 = vadd.f32 0.0, %v4169
  %v4171 = vpop.f32.mrb[0].mxu0
  %4172 = vmatprep.mubr.bf16.mxu0 0
  %4173 = vmatmul.mubr.bf16.gmra.mrb[0].mxu0 %v3627
  %v4174 = vpop.f32.mrb[0].mxu0
  %v4175 = vadd.f32 0.0, %v4174
  %v4176 = vpop.f32.mrb[0].mxu0
  %v4177 = vpop.f32.mrb[0].mxu0
  %v4178 = vadd.f32 0.0, %v4177
  %v4179 = vpop.f32.mrb[0].mxu0
  %4180 = vmatprep.mubr.bf16.mxu0 0
  %4181 = vmatmul.mubr.bf16.gmra.mrb[0].mxu0 %v3642
  %v4182 = vpop.f32.mrb[0].mxu0
  %v4183 = vadd.f32 0.0, %v4182
  %v4184 = vpop.f32.mrb[0].mxu0
  %v4185 = vpop.f32.mrb[0].mxu0
  %v4186 = vadd.f32 0.0, %v4185
  %v4187 = vpop.f32.mrb[0].mxu0
  %4188 = vmatprep.mubr.bf16.mxu0 0
  %4189 = vmatmul.mubr.bf16.gmra.mrb[0].mxu0 %v3657
  %v4190 = vpop.f32.mrb[0].mxu0
  %v4191 = vadd.f32 0.0, %v4190
  %v4192 = vpop.f32.mrb[0].mxu0
  %v4193 = vpop.f32.mrb[0].mxu0
  %v4194 = vadd.f32 0.0, %v4193
  %v4195 = vpop.f32.mrb[0].mxu0
  %4196 = vmatprep.mubr.bf16.mxu0 0
  %4197 = vmatmul.mubr.bf16.gmra.mrb[0].mxu0 %v3672
  %v4198 = vpop.f32.mrb[0].mxu0
  %v4199 = vadd.f32 0.0, %v4198
  %v4200 = vpop.f32.mrb[0].mxu0
  %v4201 = vpop.f32.mrb[0].mxu0
  %v4202 = vadd.f32 0.0, %v4201
  %v4203 = vpop.f32.mrb[0].mxu0
  %4204 = vmatprep.mubr.bf16.mxu0 0
  %4205 = vmatmul.mubr.bf16.gmra.mrb[0].mxu0 %v3687
  %v4206 = vpop.f32.mrb[0].mxu0
  %v4207 = vadd.f32 0.0, %v4206
  %v4208 = vpop.f32.mrb[0].mxu0
  %v4209 = vpop.f32.mrb[0].mxu0
  %v4210 = vadd.f32 0.0, %v4209
  %v4211 = vpop.f32.mrb[0].mxu0
  %4212 = vmatprep.mubr.bf16.mxu0 0
  %4213 = vmatmul.mubr.bf16.gmra.mrb[0].mxu0 %v3702
  %v4214 = vpop.f32.mrb[0].mxu0
  %v4215 = vadd.f32 0.0, %v4214
  %v4216 = vpop.f32.mrb[0].mxu0
  %v4217 = vpop.f32.mrb[0].mxu0
  %v4218 = vadd.f32 0.0, %v4217
  %v4219 = vpop.f32.mrb[0].mxu0
  %4220 = vmatprep.mubr.bf16.mxu0 0
  %4221 = vmatmul.mubr.bf16.gmra.mrb[0].mxu0 %v3717
  %v4222 = vpop.f32.mrb[0].mxu0
  %v4223 = vadd.f32 0.0, %v4222
  %v4224 = vpop.f32.mrb[0].mxu0
  %v4225 = vpop.f32.mrb[0].mxu0
  %v4226 = vadd.f32 0.0, %v4225
  %v4227 = vpop.f32.mrb[0].mxu0
  %4228 = vmatprep.mubr.bf16.mxu0 0
  %4229 = vmatmul.mubr.bf16.gmra.mrb[0].mxu0 %v3732
  %v4230 = vpop.f32.mrb[0].mxu0
  %v4231 = vadd.f32 0.0, %v4230
  %v4232 = vpop.f32.mrb[0].mxu0
  %v4233 = vpop.f32.mrb[0].mxu0
  %v4234 = vadd.f32 0.0, %v4233
  %v4235 = vpop.f32.mrb[0].mxu0
  %4236 = vmatprep.mubr.bf16.mxu0 0
  %4237 = vmatmul.mubr.bf16.gmra.mrb[0].mxu0 %v3747
  %v4238 = vpop.f32.mrb[0].mxu0
  %v4239 = vadd.f32 0.0, %v4238
  %v4240 = vpop.f32.mrb[0].mxu0
  %v4241 = vpop.f32.mrb[0].mxu0
  %v4242 = vadd.f32 0.0, %v4241
  %v4243 = vpop.f32.mrb[0].mxu0
  %4244 = vmatprep.mubr.bf16.mxu0 0
  %4245 = vmatmul.mubr.bf16.gmra.mrb[0].mxu0 %v3762
  %v4246 = vpop.f32.mrb[0].mxu0
  %v4247 = vadd.f32 0.0, %v4246
  %v4248 = vpop.f32.mrb[0].mxu0
  %v4249 = vpop.f32.mrb[0].mxu0
  %v4250 = vadd.f32 0.0, %v4249
  %v4251 = vpop.f32.mrb[0].mxu0
  %4252 = vmatprep.mubr.bf16.mxu0 0
  %4253 = vmatmul.mubr.bf16.gmra.mrb[0].mxu0 %v3777
  %v4254 = vpop.f32.mrb[0].mxu0
  %v4255 = vadd.f32 0.0, %v4254
  %v4256 = vpop.f32.mrb[0].mxu0
  %v4257 = vpop.f32.mrb[0].mxu0
  %v4258 = vadd.f32 0.0, %v4257
  %v4259 = vpop.f32.mrb[0].mxu0
  %4260 = vmatprep.mubr.bf16.mxu0 0
  %4261 = vmatmul.mubr.bf16.gmra.mrb[0].mxu0 %v3792
  %v4262 = vpop.f32.mrb[0].mxu0
  %v4263 = vadd.f32 0.0, %v4262
  %v4264 = vpop.f32.mrb[0].mxu0
  %v4265 = vpop.f32.mrb[0].mxu0
  %v4266 = vadd.f32 0.0, %v4265
  %v4267 = vpop.f32.mrb[0].mxu0
  %4268 = vmatprep.mubr.bf16.mxu0 0
  %4269 = vmatmul.mubr.bf16.gmra.mrb[0].mxu0 %v3807
  %v4270 = vpop.f32.mrb[0].mxu0
  %v4271 = vadd.f32 0.0, %v4270
  %v4272 = vpop.f32.mrb[0].mxu0
  %v4273 = vpop.f32.mrb[0].mxu0
  %v4274 = vadd.f32 0.0, %v4273
  %v4275 = vpop.f32.mrb[0].mxu0
  %4276 = vmatprep.mubr.bf16.mxu0 0
  %4277 = vmatmul.mubr.bf16.gmra.mrb[0].mxu0 %v3822
  %v4278 = vpop.f32.mrb[0].mxu0
  %v4279 = vadd.f32 0.0, %v4278
  %v4280 = vpop.f32.mrb[0].mxu0
  %v4281 = vpop.f32.mrb[0].mxu0
  %v4282 = vadd.f32 0.0, %v4281
  %v4283 = vpop.f32.mrb[0].mxu0
  %4284 = vmatprep.mubr.bf16.mxu0 0
  %4285 = vmatmul.mubr.bf16.gmra.mrb[0].mxu0 %v3837
  %v4286 = vpop.f32.mrb[0].mxu0
  %v4287 = vadd.f32 0.0, %v4286
  %v4288 = vpop.f32.mrb[0].mxu0
  %v4289 = vpop.f32.mrb[0].mxu0
  %v4290 = vadd.f32 0.0, %v4289
  %v4291 = vpop.f32.mrb[0].mxu0
  %4292 = vmatprep.mubr.bf16.mxu0 0
  %4293 = vmatmul.mubr.bf16.gmra.mrb[0].mxu0 %v3852
  %v4294 = vpop.f32.mrb[0].mxu0
  %v4295 = vadd.f32 0.0, %v4294
  %v4296 = vpop.f32.mrb[0].mxu0
  %v4297 = vpop.f32.mrb[0].mxu0
  %v4298 = vadd.f32 0.0, %v4297
  %v4299 = vpop.f32.mrb[0].mxu0
  %4300 = vmatprep.mubr.bf16.mxu0 0
  %4301 = vmatmul.mubr.bf16.gmra.mrb[0].mxu0 %v3867
  %v4302 = vpop.f32.mrb[0].mxu0
  %v4303 = vadd.f32 0.0, %v4302
  %v4304 = vpop.f32.mrb[0].mxu0
  %v4305 = vpop.f32.mrb[0].mxu0
  %v4306 = vadd.f32 0.0, %v4305
  %v4307 = vpop.f32.mrb[0].mxu0
  %4308 = vmatprep.mubr.bf16.mxu0 0
  %4309 = vmatmul.mubr.bf16.gmra.mrb[0].mxu0 %v3882
  %v4310 = vpop.f32.mrb[0].mxu0
  %v4311 = vadd.f32 0.0, %v4310
  %v4312 = vpop.f32.mrb[0].mxu0
  %v4313 = vpop.f32.mrb[0].mxu0
  %v4314 = vadd.f32 0.0, %v4313
  %v4315 = vpop.f32.mrb[0].mxu0
  %4316 = vmatprep.mubr.bf16.mxu0 0
  %4317 = vmatmul.mubr.bf16.gmra.mrb[0].mxu0 %v3897
  %v4318 = vpop.f32.mrb[0].mxu0
  %v4319 = vadd.f32 0.0, %v4318
  %v4320 = vpop.f32.mrb[0].mxu0
  %v4321 = vpop.f32.mrb[0].mxu0
  %v4322 = vadd.f32 0.0, %v4321
  %v4323 = vpop.f32.mrb[0].mxu0
  %4324 = vmatprep.mubr.bf16.mxu0 0
  %4325 = vmatmul.mubr.bf16.gmra.mrb[0].mxu0 %v3912
  %v4326 = vpop.f32.mrb[0].mxu0
  %v4327 = vadd.f32 0.0, %v4326
  %v4328 = vpop.f32.mrb[0].mxu0
  %v4329 = vpop.f32.mrb[0].mxu0
  %v4330 = vadd.f32 0.0, %v4329
  %v4331 = vpop.f32.mrb[0].mxu0
  %4332 = vmatprep.mubr.bf16.mxu0 0
  %4333 = vmatmul.mubr.bf16.gmra.mrb[0].mxu0 %v3927
  %v4334 = vpop.f32.mrb[0].mxu0
  %v4335 = vadd.f32 0.0, %v4334
  %v4336 = vpop.f32.mrb[0].mxu0
  %v4337 = vpop.f32.mrb[0].mxu0
  %v4338 = vadd.f32 0.0, %v4337
  %v4339 = vpop.f32.mrb[0].mxu0
  %4340 = vmatprep.mubr.bf16.mxu0 0
  %4341 = vmatmul.mubr.bf16.gmra.mrb[0].mxu0 %v3942
  %v4342 = vpop.f32.mrb[0].mxu0
  %v4343 = vadd.f32 0.0, %v4342
  %v4344 = vpop.f32.mrb[0].mxu0
  %v4345 = vpop.f32.mrb[0].mxu0
  %v4346 = vadd.f32 0.0, %v4345
  %v4347 = vpop.f32.mrb[0].mxu0
  %4348 = vmatprep.mubr.bf16.mxu0 0
  %4349 = vmatmul.mubr.bf16.gmra.mrb[0].mxu0 %v3957
  %v4350 = vpop.f32.mrb[0].mxu0
  %v4351 = vadd.f32 0.0, %v4350
  %v4352 = vpop.f32.mrb[0].mxu0
  %v4353 = vpop.f32.mrb[0].mxu0
  %v4354 = vadd.f32 0.0, %v4353
  %v4355 = vpop.f32.mrb[0].mxu0
  %4356 = vmatprep.mubr.bf16.mxu0 0
  %4357 = vmatmul.mubr.bf16.gmra.mrb[0].mxu0 %v3972
  %v4358 = vpop.f32.mrb[0].mxu0
  %v4359 = vadd.f32 0.0, %v4358
  %v4360 = vpop.f32.mrb[0].mxu0
  %v4361 = vpop.f32.mrb[0].mxu0
  %v4362 = vadd.f32 0.0, %v4361
  %v4363 = vpop.f32.mrb[0].mxu0
  %4364 = vmatprep.mubr.bf16.mxu0 0
  %4365 = vmatmul.mubr.bf16.gmra.mrb[0].mxu0 %v3987
  %v4366 = vpop.f32.mrb[0].mxu0
  %v4367 = vadd.f32 0.0, %v4366
  %v4368 = vpop.f32.mrb[0].mxu0
  %v4369 = vpop.f32.mrb[0].mxu0
  %v4370 = vadd.f32 0.0, %v4369
  %v4371 = vpop.f32.mrb[0].mxu0
  %4372 = vdwg.mxu0
  %v4373 = vld [vmem:[%s2] sm:$0x1]
  %v4375 = vlaneseq
  %v4376 = vshrl.u32 %v4375, 7
  %v4377 = vsub.s32 0, %v4376
  %v4378 = vrot.slane %v4373, %v4377
  %v4380 = vadd.f32 %v4119, %v4378
  %v4381 = vadd.f32 %v4122, %v4378
  %v4382 = vadd.f32 %v4127, %v4378
  %v4383 = vadd.f32 %v4130, %v4378
  %v4384 = vadd.f32 %v4135, %v4378
  %v4385 = vadd.f32 %v4138, %v4378
  %v4386 = vadd.f32 %v4143, %v4378
  %v4387 = vadd.f32 %v4146, %v4378
  %v4388 = vadd.f32 %v4151, %v4378
  %v4389 = vadd.f32 %v4154, %v4378
  %v4390 = vadd.f32 %v4159, %v4378
  %v4391 = vadd.f32 %v4162, %v4378
  %v4392 = vadd.f32 %v4167, %v4378
  %v4393 = vadd.f32 %v4170, %v4378
  %v4394 = vadd.f32 %v4175, %v4378
  %v4395 = vadd.f32 %v4178, %v4378
  %v4396 = vadd.f32 %v4183, %v4378
  %v4397 = vadd.f32 %v4186, %v4378
  %v4398 = vadd.f32 %v4191, %v4378
  %v4399 = vadd.f32 %v4194, %v4378
  %v4400 = vadd.f32 %v4199, %v4378
  %v4401 = vadd.f32 %v4202, %v4378
  %v4402 = vadd.f32 %v4207, %v4378
  %v4403 = vadd.f32 %v4210, %v4378
  %v4404 = vadd.f32 %v4215, %v4378
  %v4405 = vadd.f32 %v4218, %v4378
  %v4406 = vadd.f32 %v4223, %v4378
  %v4407 = vadd.f32 %v4226, %v4378
  %v4408 = vadd.f32 %v4231, %v4378
  %v4409 = vadd.f32 %v4234, %v4378
  %v4410 = vadd.f32 %v4239, %v4378
  %v4411 = vadd.f32 %v4242, %v4378
  %v4412 = vadd.f32 %v4247, %v4378
  %v4413 = vadd.f32 %v4250, %v4378
  %v4414 = vadd.f32 %v4255, %v4378
  %v4415 = vadd.f32 %v4258, %v4378
  %v4416 = vadd.f32 %v4263, %v4378
  %v4417 = vadd.f32 %v4266, %v4378
  %v4418 = vadd.f32 %v4271, %v4378
  %v4419 = vadd.f32 %v4274, %v4378
  %v4420 = vadd.f32 %v4279, %v4378
  %v4421 = vadd.f32 %v4282, %v4378
  %v4422 = vadd.f32 %v4287, %v4378
  %v4423 = vadd.f32 %v4290, %v4378
  %v4424 = vadd.f32 %v4295, %v4378
  %v4425 = vadd.f32 %v4298, %v4378
  %v4426 = vadd.f32 %v4303, %v4378
  %v4427 = vadd.f32 %v4306, %v4378
  %v4428 = vadd.f32 %v4311, %v4378
  %v4429 = vadd.f32 %v4314, %v4378
  %v4430 = vadd.f32 %v4319, %v4378
  %v4431 = vadd.f32 %v4322, %v4378
  %v4432 = vadd.f32 %v4327, %v4378
  %v4433 = vadd.f32 %v4330, %v4378
  %v4434 = vadd.f32 %v4335, %v4378
  %v4435 = vadd.f32 %v4338, %v4378
  %v4436 = vadd.f32 %v4343, %v4378
  %v4437 = vadd.f32 %v4346, %v4378
  %v4438 = vadd.f32 %v4351, %v4378
  %v4439 = vadd.f32 %v4354, %v4378
  %v4440 = vadd.f32 %v4359, %v4378
  %v4441 = vadd.f32 %v4362, %v4378
  %v4442 = vadd.f32 %v4367, %v4378
  %v4443 = vadd.f32 %v4370, %v4378
  %v4444 = vmax.f32 %v4380, 0.0
  %v4445 = vmax.f32 %v4381, 0.0
  %v4446 = vmax.f32 %v4382, 0.0
  %v4447 = vmax.f32 %v4383, 0.0
  %v4448 = vmax.f32 %v4384, 0.0
  %v4449 = vmax.f32 %v4385, 0.0
  %v4450 = vmax.f32 %v4386, 0.0
  %v4451 = vmax.f32 %v4387, 0.0
  %v4452 = vmax.f32 %v4388, 0.0
  %v4453 = vmax.f32 %v4389, 0.0
  %v4454 = vmax.f32 %v4390, 0.0
  %v4455 = vmax.f32 %v4391, 0.0
  %v4456 = vmax.f32 %v4392, 0.0
  %v4457 = vmax.f32 %v4393, 0.0
  %v4458 = vmax.f32 %v4394, 0.0
  %v4459 = vmax.f32 %v4395, 0.0
  %v4460 = vmax.f32 %v4396, 0.0
  %v4461 = vmax.f32 %v4397, 0.0
  %v4462 = vmax.f32 %v4398, 0.0
  %v4463 = vmax.f32 %v4399, 0.0
  %v4464 = vmax.f32 %v4400, 0.0
  %v4465 = vmax.f32 %v4401, 0.0
  %v4466 = vmax.f32 %v4402, 0.0
  %v4467 = vmax.f32 %v4403, 0.0
  %v4468 = vmax.f32 %v4404, 0.0
  %v4469 = vmax.f32 %v4405, 0.0
  %v4470 = vmax.f32 %v4406, 0.0
  %v4471 = vmax.f32 %v4407, 0.0
  %v4472 = vmax.f32 %v4408, 0.0
  %v4473 = vmax.f32 %v4409, 0.0
  %v4474 = vmax.f32 %v4410, 0.0
  %v4475 = vmax.f32 %v4411, 0.0
  %v4476 = vmax.f32 %v4412, 0.0
  %v4477 = vmax.f32 %v4413, 0.0
  %v4478 = vmax.f32 %v4414, 0.0
  %v4479 = vmax.f32 %v4415, 0.0
  %v4480 = vmax.f32 %v4416, 0.0
  %v4481 = vmax.f32 %v4417, 0.0
  %v4482 = vmax.f32 %v4418, 0.0
  %v4483 = vmax.f32 %v4419, 0.0
  %v4484 = vmax.f32 %v4420, 0.0
  %v4485 = vmax.f32 %v4421, 0.0
  %v4486 = vmax.f32 %v4422, 0.0
  %v4487 = vmax.f32 %v4423, 0.0
  %v4488 = vmax.f32 %v4424, 0.0
  %v4489 = vmax.f32 %v4425, 0.0
  %v4490 = vmax.f32 %v4426, 0.0
  %v4491 = vmax.f32 %v4427, 0.0
  %v4492 = vmax.f32 %v4428, 0.0
  %v4493 = vmax.f32 %v4429, 0.0
  %v4494 = vmax.f32 %v4430, 0.0
  %v4495 = vmax.f32 %v4431, 0.0
  %v4496 = vmax.f32 %v4432, 0.0
  %v4497 = vmax.f32 %v4433, 0.0
  %v4498 = vmax.f32 %v4434, 0.0
  %v4499 = vmax.f32 %v4435, 0.0
  %v4500 = vmax.f32 %v4436, 0.0
  %v4501 = vmax.f32 %v4437, 0.0
  %v4502 = vmax.f32 %v4438, 0.0
  %v4503 = vmax.f32 %v4439, 0.0
  %v4504 = vmax.f32 %v4440, 0.0
  %v4505 = vmax.f32 %v4441, 0.0
  %v4506 = vmax.f32 %v4442, 0.0
  %v4507 = vmax.f32 %v4443, 0.0
  %v4508 = vpack.c.bf16 %v4445, %v4444
  %v4509 = vpack.c.bf16 %v4447, %v4446
  %v4510 = vpack.c.bf16 %v4449, %v4448
  %v4511 = vpack.c.bf16 %v4451, %v4450
  %v4512 = vpack.c.bf16 %v4453, %v4452
  %v4513 = vpack.c.bf16 %v4455, %v4454
  %v4514 = vpack.c.bf16 %v4457, %v4456
  %v4515 = vpack.c.bf16 %v4459, %v4458
  %v4516 = vpack.c.bf16 %v4461, %v4460
  %v4517 = vpack.c.bf16 %v4463, %v4462
  %v4518 = vpack.c.bf16 %v4465, %v4464
  %v4519 = vpack.c.bf16 %v4467, %v4466
  %v4520 = vpack.c.bf16 %v4469, %v4468
  %v4521 = vpack.c.bf16 %v4471, %v4470
  %v4522 = vpack.c.bf16 %v4473, %v4472
  %v4523 = vpack.c.bf16 %v4475, %v4474
  %v4524 = vpack.c.bf16 %v4477, %v4476
  %v4525 = vpack.c.bf16 %v4479, %v4478
  %v4526 = vpack.c.bf16 %v4481, %v4480
  %v4527 = vpack.c.bf16 %v4483, %v4482
  %v4528 = vpack.c.bf16 %v4485, %v4484
  %v4529 = vpack.c.bf16 %v4487, %v4486
  %v4530 = vpack.c.bf16 %v4489, %v4488
  %v4531 = vpack.c.bf16 %v4491, %v4490
  %v4532 = vpack.c.bf16 %v4493, %v4492
  %v4533 = vpack.c.bf16 %v4495, %v4494
  %v4534 = vpack.c.bf16 %v4497, %v4496
  %v4535 = vpack.c.bf16 %v4499, %v4498
  %v4536 = vpack.c.bf16 %v4501, %v4500
  %v4537 = vpack.c.bf16 %v4503, %v4502
  %v4538 = vpack.c.bf16 %v4505, %v4504
  %v4539 = vpack.c.bf16 %v4507, %v4506
  %v4572 = vunpack.c.l.b16 %v4508
  %v4573 = vunpack.c.h.b16 %v4508
  %v4574 = vunpack.c.l.b16 %v4509
  %v4575 = vunpack.c.h.b16 %v4509
  %v4576 = vunpack.c.l.b16 %v4510
  %v4577 = vunpack.c.h.b16 %v4510
  %v4578 = vunpack.c.l.b16 %v4511
  %v4579 = vunpack.c.h.b16 %v4511
  %v4580 = vunpack.c.l.b16 %v4512
  %v4581 = vunpack.c.h.b16 %v4512
  %v4582 = vunpack.c.l.b16 %v4513
  %v4583 = vunpack.c.h.b16 %v4513
  %v4584 = vunpack.c.l.b16 %v4514
  %v4585 = vunpack.c.h.b16 %v4514
  %v4586 = vunpack.c.l.b16 %v4515
  %v4587 = vunpack.c.h.b16 %v4515
  %v4588 = vunpack.c.l.b16 %v4516
  %v4589 = vunpack.c.h.b16 %v4516
  %v4590 = vunpack.c.l.b16 %v4517
  %v4591 = vunpack.c.h.b16 %v4517
  %v4592 = vunpack.c.l.b16 %v4518
  %v4593 = vunpack.c.h.b16 %v4518
  %v4594 = vunpack.c.l.b16 %v4519
  %v4595 = vunpack.c.h.b16 %v4519
  %v4596 = vunpack.c.l.b16 %v4520
  %v4597 = vunpack.c.h.b16 %v4520
  %v4598 = vunpack.c.l.b16 %v4521
  %v4599 = vunpack.c.h.b16 %v4521
  %v4600 = vunpack.c.l.b16 %v4522
  %v4601 = vunpack.c.h.b16 %v4522
  %v4602 = vunpack.c.l.b16 %v4523
  %v4603 = vunpack.c.h.b16 %v4523
  %v4604 = vunpack.c.l.b16 %v4524
  %v4605 = vunpack.c.h.b16 %v4524
  %v4606 = vunpack.c.l.b16 %v4525
  %v4607 = vunpack.c.h.b16 %v4525
  %v4608 = vunpack.c.l.b16 %v4526
  %v4609 = vunpack.c.h.b16 %v4526
  %v4610 = vunpack.c.l.b16 %v4527
  %v4611 = vunpack.c.h.b16 %v4527
  %v4612 = vunpack.c.l.b16 %v4528
  %v4613 = vunpack.c.h.b16 %v4528
  %v4614 = vunpack.c.l.b16 %v4529
  %v4615 = vunpack.c.h.b16 %v4529
  %v4616 = vunpack.c.l.b16 %v4530
  %v4617 = vunpack.c.h.b16 %v4530
  %v4618 = vunpack.c.l.b16 %v4531
  %v4619 = vunpack.c.h.b16 %v4531
  %v4620 = vunpack.c.l.b16 %v4532
  %v4621 = vunpack.c.h.b16 %v4532
  %v4622 = vunpack.c.l.b16 %v4533
  %v4623 = vunpack.c.h.b16 %v4533
  %v4624 = vunpack.c.l.b16 %v4534
  %v4625 = vunpack.c.h.b16 %v4534
  %v4626 = vunpack.c.l.b16 %v4535
  %v4627 = vunpack.c.h.b16 %v4535
  %v4628 = vunpack.c.l.b16 %v4536
  %v4629 = vunpack.c.h.b16 %v4536
  %v4630 = vunpack.c.l.b16 %v4537
  %v4631 = vunpack.c.h.b16 %v4537
  %v4632 = vunpack.c.l.b16 %v4538
  %v4633 = vunpack.c.h.b16 %v4538
  %v4634 = vunpack.c.l.b16 %v4539
  %v4635 = vunpack.c.h.b16 %v4539
  %v4636 = vpack.c.b16 %v4572, %v4572
  %v4637 = vpack.c.b16 %v4573, %v4573
  %v4638 = vpack.c.b16 %v4574, %v4574
  %v4639 = vpack.c.b16 %v4575, %v4575
  %v4640 = vpack.c.b16 %v4576, %v4576
  %v4641 = vpack.c.b16 %v4577, %v4577
  %v4642 = vpack.c.b16 %v4578, %v4578
  %v4643 = vpack.c.b16 %v4579, %v4579
  %v4644 = vpack.c.b16 %v4580, %v4580
  %v4645 = vpack.c.b16 %v4581, %v4581
  %v4646 = vpack.c.b16 %v4582, %v4582
  %v4647 = vpack.c.b16 %v4583, %v4583
  %v4648 = vpack.c.b16 %v4584, %v4584
  %v4649 = vpack.c.b16 %v4585, %v4585
  %v4650 = vpack.c.b16 %v4586, %v4586
  %v4651 = vpack.c.b16 %v4587, %v4587
  %v4652 = vpack.c.b16 %v4588, %v4588
  %v4653 = vpack.c.b16 %v4589, %v4589
  %v4654 = vpack.c.b16 %v4590, %v4590
  %v4655 = vpack.c.b16 %v4591, %v4591
  %v4656 = vpack.c.b16 %v4592, %v4592
  %v4657 = vpack.c.b16 %v4593, %v4593
  %v4658 = vpack.c.b16 %v4594, %v4594
  %v4659 = vpack.c.b16 %v4595, %v4595
  %v4660 = vpack.c.b16 %v4596, %v4596
  %v4661 = vpack.c.b16 %v4597, %v4597
  %v4662 = vpack.c.b16 %v4598, %v4598
  %v4663 = vpack.c.b16 %v4599, %v4599
  %v4664 = vpack.c.b16 %v4600, %v4600
  %v4665 = vpack.c.b16 %v4601, %v4601
  %v4666 = vpack.c.b16 %v4602, %v4602
  %v4667 = vpack.c.b16 %v4603, %v4603
  %v4668 = vpack.c.b16 %v4604, %v4604
  %v4669 = vpack.c.b16 %v4605, %v4605
  %v4670 = vpack.c.b16 %v4606, %v4606
  %v4671 = vpack.c.b16 %v4607, %v4607
  %v4672 = vpack.c.b16 %v4608, %v4608
  %v4673 = vpack.c.b16 %v4609, %v4609
  %v4674 = vpack.c.b16 %v4610, %v4610
  %v4675 = vpack.c.b16 %v4611, %v4611
  %v4676 = vpack.c.b16 %v4612, %v4612
  %v4677 = vpack.c.b16 %v4613, %v4613
  %v4678 = vpack.c.b16 %v4614, %v4614
  %v4679 = vpack.c.b16 %v4615, %v4615
  %v4680 = vpack.c.b16 %v4616, %v4616
  %v4681 = vpack.c.b16 %v4617, %v4617
  %v4682 = vpack.c.b16 %v4618, %v4618
  %v4683 = vpack.c.b16 %v4619, %v4619
  %v4684 = vpack.c.b16 %v4620, %v4620
  %v4685 = vpack.c.b16 %v4621, %v4621
  %v4686 = vpack.c.b16 %v4622, %v4622
  %v4687 = vpack.c.b16 %v4623, %v4623
  %v4688 = vpack.c.b16 %v4624, %v4624
  %v4689 = vpack.c.b16 %v4625, %v4625
  %v4690 = vpack.c.b16 %v4626, %v4626
  %v4691 = vpack.c.b16 %v4627, %v4627
  %v4692 = vpack.c.b16 %v4628, %v4628
  %v4693 = vpack.c.b16 %v4629, %v4629
  %v4694 = vpack.c.b16 %v4630, %v4630
  %v4695 = vpack.c.b16 %v4631, %v4631
  %v4696 = vpack.c.b16 %v4632, %v4632
  %v4697 = vpack.c.b16 %v4633, %v4633
  %v4698 = vpack.c.b16 %v4634, %v4634
  %v4699 = vpack.c.b16 %v4635, %v4635
  %s4764 = scalar_lea.vmem [#allocation3], 20
  %4765 = vst.msk [vmem:[%s4764 + $0x8] sm:$0xf] %vm15, %v4636
  %4766 = vst.msk [vmem:[%s4764 + $0xc] sm:$0xf] %vm15, %v4637
  %4767 = vst.msk [vmem:[%s4764 + $0x1c] sm:$0xf] %vm15, %v4638
  %4768 = vst.msk [vmem:[%s4764 + $0x20] sm:$0xf] %vm15, %v4639
  %4769 = vst.msk [vmem:[%s4764 + $0x30] sm:$0xf] %vm15, %v4640
  %4770 = vst.msk [vmem:[%s4764 + $0x34] sm:$0xf] %vm15, %v4641
  %4771 = vst.msk [vmem:[%s4764 + $0x44] sm:$0xf] %vm15, %v4642
  %4772 = vst.msk [vmem:[%s4764 + $0x48] sm:$0xf] %vm15, %v4643
  %4773 = vst.msk [vmem:[%s4764 + $0x58] sm:$0xf] %vm15, %v4644
  %4774 = vst.msk [vmem:[%s4764 + $0x5c] sm:$0xf] %vm15, %v4645
  %4775 = vst.msk [vmem:[%s4764 + $0x6c] sm:$0xf] %vm15, %v4646
  %4776 = vst.msk [vmem:[%s4764 + $0x70] sm:$0xf] %vm15, %v4647
  %4777 = vst.msk [vmem:[%s4764 + $0x80] sm:$0xf] %vm15, %v4648
  %4778 = vst.msk [vmem:[%s4764 + $0x84] sm:$0xf] %vm15, %v4649
  %4779 = vst.msk [vmem:[%s4764 + $0x94] sm:$0xf] %vm15, %v4650
  %4780 = vst.msk [vmem:[%s4764 + $0x98] sm:$0xf] %vm15, %v4651
  %4781 = vst.msk [vmem:[%s4764 + $0xa8] sm:$0xf] %vm15, %v4652
  %4782 = vst.msk [vmem:[%s4764 + $0xac] sm:$0xf] %vm15, %v4653
  %4783 = vst.msk [vmem:[%s4764 + $0xbc] sm:$0xf] %vm15, %v4654
  %4784 = vst.msk [vmem:[%s4764 + $0xc0] sm:$0xf] %vm15, %v4655
  %4785 = vst.msk [vmem:[%s4764 + $0xd0] sm:$0xf] %vm15, %v4656
  %4786 = vst.msk [vmem:[%s4764 + $0xd4] sm:$0xf] %vm15, %v4657
  %4787 = vst.msk [vmem:[%s4764 + $0xe4] sm:$0xf] %vm15, %v4658
  %4788 = vst.msk [vmem:[%s4764 + $0xe8] sm:$0xf] %vm15, %v4659
  %4789 = vst.msk [vmem:[%s4764 + $0xf8] sm:$0xf] %vm15, %v4660
  %4790 = vst.msk [vmem:[%s4764 + $0xfc] sm:$0xf] %vm15, %v4661
  %4791 = vst.msk [vmem:[%s4764 + $0x10c] sm:$0xf] %vm15, %v4662
  %4792 = vst.msk [vmem:[%s4764 + $0x110] sm:$0xf] %vm15, %v4663
  %4793 = vst.msk [vmem:[%s4764 + $0x120] sm:$0xf] %vm15, %v4664
  %4794 = vst.msk [vmem:[%s4764 + $0x124] sm:$0xf] %vm15, %v4665
  %4795 = vst.msk [vmem:[%s4764 + $0x134] sm:$0xf] %vm15, %v4666
  %4796 = vst.msk [vmem:[%s4764 + $0x138] sm:$0xf] %vm15, %v4667
  %4797 = vst.msk [vmem:[%s4764 + $0x170] sm:$0xf] %vm15, %v4668
  %4798 = vst.msk [vmem:[%s4764 + $0x174] sm:$0xf] %vm15, %v4669
  %4799 = vst.msk [vmem:[%s4764 + $0x184] sm:$0xf] %vm15, %v4670
  %4800 = vst.msk [vmem:[%s4764 + $0x188] sm:$0xf] %vm15, %v4671
  %4801 = vst.msk [vmem:[%s4764 + $0x198] sm:$0xf] %vm15, %v4672
  %4802 = vst.msk [vmem:[%s4764 + $0x19c] sm:$0xf] %vm15, %v4673
  %4803 = vst.msk [vmem:[%s4764 + $0x1ac] sm:$0xf] %vm15, %v4674
  %4804 = vst.msk [vmem:[%s4764 + $0x1b0] sm:$0xf] %vm15, %v4675
  %4805 = vst.msk [vmem:[%s4764 + $0x1c0] sm:$0xf] %vm15, %v4676
  %4806 = vst.msk [vmem:[%s4764 + $0x1c4] sm:$0xf] %vm15, %v4677
  %4807 = vst.msk [vmem:[%s4764 + $0x1d4] sm:$0xf] %vm15, %v4678
  %4808 = vst.msk [vmem:[%s4764 + $0x1d8] sm:$0xf] %vm15, %v4679
  %4809 = vst.msk [vmem:[%s4764 + $0x1e8] sm:$0xf] %vm15, %v4680
  %4810 = vst.msk [vmem:[%s4764 + $0x1ec] sm:$0xf] %vm15, %v4681
  %4811 = vst.msk [vmem:[%s4764 + $0x1fc] sm:$0xf] %vm15, %v4682
  %4812 = vst.msk [vmem:[%s4764 + $0x200] sm:$0xf] %vm15, %v4683
  %4813 = vst.msk [vmem:[%s4764 + $0x210] sm:$0xf] %vm15, %v4684
  %4814 = vst.msk [vmem:[%s4764 + $0x214] sm:$0xf] %vm15, %v4685
  %4815 = vst.msk [vmem:[%s4764 + $0x224] sm:$0xf] %vm15, %v4686
  %4816 = vst.msk [vmem:[%s4764 + $0x228] sm:$0xf] %vm15, %v4687
  %4817 = vst.msk [vmem:[%s4764 + $0x238] sm:$0xf] %vm15, %v4688
  %4818 = vst.msk [vmem:[%s4764 + $0x23c] sm:$0xf] %vm15, %v4689
  %4819 = vst.msk [vmem:[%s4764 + $0x24c] sm:$0xf] %vm15, %v4690
  %4820 = vst.msk [vmem:[%s4764 + $0x250] sm:$0xf] %vm15, %v4691
  %4821 = vst.msk [vmem:[%s4764 + $0x260] sm:$0xf] %vm15, %v4692
  %4822 = vst.msk [vmem:[%s4764 + $0x264] sm:$0xf] %vm15, %v4693
  %4823 = vst.msk [vmem:[%s4764 + $0x274] sm:$0xf] %vm15, %v4694
  %4824 = vst.msk [vmem:[%s4764 + $0x278] sm:$0xf] %vm15, %v4695
  %4825 = vst.msk [vmem:[%s4764 + $0x288] sm:$0xf] %vm15, %v4696
  %4826 = vst.msk [vmem:[%s4764 + $0x28c] sm:$0xf] %vm15, %v4697
  %4827 = vst.msk [vmem:[%s4764 + $0x29c] sm:$0xf] %vm15, %v4698
  %4828 = vst.msk [vmem:[%s4764 + $0x2a0] sm:$0xf] %vm15, %v4699
  %v4829 = vld [vmem:[#allocation3 + $0x4] sm:$0x8]
  %v4830 = vld [vmem:[#allocation3 + $0x8] sm:$0xf]
  %v4831 = vld [vmem:[#allocation3 + $0xc] sm:$0xf]
  %v4832 = vld [vmem:[#allocation3 + $0x18] sm:$0x8]
  %v4833 = vld [vmem:[#allocation3 + $0x1c] sm:$0xf]
  %v4834 = vld [vmem:[#allocation3 + $0x20] sm:$0xf]
  %v4835 = vld [vmem:[#allocation3 + $0x2c] sm:$0x8]
  %v4836 = vld [vmem:[#allocation3 + $0x30] sm:$0xf]
  %v4837 = vld [vmem:[#allocation3 + $0x34] sm:$0xf]
  %v4838 = vld [vmem:[#allocation3 + $0x40] sm:$0x8]
  %v4839 = vld [vmem:[#allocation3 + $0x44] sm:$0xf]
  %v4840 = vld [vmem:[#allocation3 + $0x48] sm:$0xf]
  %v4841 = vld [vmem:[#allocation3 + $0x54] sm:$0x8]
  %v4842 = vld [vmem:[#allocation3 + $0x58] sm:$0xf]
  %v4843 = vld [vmem:[#allocation3 + $0x5c] sm:$0xf]
  %v4844 = vld [vmem:[#allocation3 + $0x68] sm:$0x8]
  %v4845 = vld [vmem:[#allocation3 + $0x6c] sm:$0xf]
  %v4846 = vld [vmem:[#allocation3 + $0x70] sm:$0xf]
  %v4847 = vld [vmem:[#allocation3 + $0x7c] sm:$0x8]
  %v4848 = vld [vmem:[#allocation3 + $0x80] sm:$0xf]
  %v4849 = vld [vmem:[#allocation3 + $0x84] sm:$0xf]
  %v4850 = vld [vmem:[#allocation3 + $0x90] sm:$0x8]
  %v4851 = vld [vmem:[#allocation3 + $0x94] sm:$0xf]
  %v4852 = vld [vmem:[#allocation3 + $0x98] sm:$0xf]
  %v4853 = vld [vmem:[#allocation3 + $0xa4] sm:$0x8]
  %v4854 = vld [vmem:[#allocation3 + $0xa8] sm:$0xf]
  %v4855 = vld [vmem:[#allocation3 + $0xac] sm:$0xf]
  %v4856 = vld [vmem:[#allocation3 + $0xb8] sm:$0x8]
  %v4857 = vld [vmem:[#allocation3 + $0xbc] sm:$0xf]
  %v4858 = vld [vmem:[#allocation3 + $0xc0] sm:$0xf]
  %v4859 = vld [vmem:[#allocation3 + $0xcc] sm:$0x8]
  %v4860 = vld [vmem:[#allocation3 + $0xd0] sm:$0xf]
  %v4861 = vld [vmem:[#allocation3 + $0xd4] sm:$0xf]
  %v4862 = vld [vmem:[#allocation3 + $0xe0] sm:$0x8]
  %v4863 = vld [vmem:[#allocation3 + $0xe4] sm:$0xf]
  %v4864 = vld [vmem:[#allocation3 + $0xe8] sm:$0xf]
  %v4865 = vld [vmem:[#allocation3 + $0xf4] sm:$0x8]
  %v4866 = vld [vmem:[#allocation3 + $0xf8] sm:$0xf]
  %v4867 = vld [vmem:[#allocation3 + $0xfc] sm:$0xf]
  %v4868 = vld [vmem:[#allocation3 + $0x108] sm:$0x8]
  %v4869 = vld [vmem:[#allocation3 + $0x10c] sm:$0xf]
  %v4870 = vld [vmem:[#allocation3 + $0x110] sm:$0xf]
  %v4871 = vld [vmem:[#allocation3 + $0x11c] sm:$0x8]
  %v4872 = vld [vmem:[#allocation3 + $0x120] sm:$0xf]
  %v4873 = vld [vmem:[#allocation3 + $0x124] sm:$0xf]
  %v4874 = vld [vmem:[#allocation3 + $0x130] sm:$0x8]
  %v4875 = vld [vmem:[#allocation3 + $0x134] sm:$0xf]
  %v4876 = vld [vmem:[#allocation3 + $0x138] sm:$0xf]
  %v4877 = vld [vmem:[#allocation3 + $0x144] sm:$0x8]
  %v4878 = vld [vmem:[#allocation3 + $0x148] sm:$0xf]
  %v4879 = vld [vmem:[#allocation3 + $0x14c] sm:$0xf]
  %v4880 = vld [vmem:[#allocation3 + $0x158] sm:$0x8]
  %v4881 = vld [vmem:[#allocation3 + $0x15c] sm:$0xf]
  %v4882 = vld [vmem:[#allocation3 + $0x160] sm:$0xf]
  %v4883 = vld [vmem:[#allocation3 + $0x16c] sm:$0x8]
  %v4884 = vld [vmem:[#allocation3 + $0x170] sm:$0xf]
  %v4885 = vld [vmem:[#allocation3 + $0x174] sm:$0xf]
  %v4886 = vld [vmem:[#allocation3 + $0x180] sm:$0x8]
  %v4887 = vld [vmem:[#allocation3 + $0x184] sm:$0xf]
  %v4888 = vld [vmem:[#allocation3 + $0x188] sm:$0xf]
  %v4889 = vld [vmem:[#allocation3 + $0x194] sm:$0x8]
  %v4890 = vld [vmem:[#allocation3 + $0x198] sm:$0xf]
  %v4891 = vld [vmem:[#allocation3 + $0x19c] sm:$0xf]
  %v4892 = vld [vmem:[#allocation3 + $0x1a8] sm:$0x8]
  %v4893 = vld [vmem:[#allocation3 + $0x1ac] sm:$0xf]
  %v4894 = vld [vmem:[#allocation3 + $0x1b0] sm:$0xf]
  %v4895 = vld [vmem:[#allocation3 + $0x1bc] sm:$0x8]
  %v4896 = vld [vmem:[#allocation3 + $0x1c0] sm:$0xf]
  %v4897 = vld [vmem:[#allocation3 + $0x1c4] sm:$0xf]
  %v4898 = vld [vmem:[#allocation3 + $0x1d0] sm:$0x8]
  %v4899 = vld [vmem:[#allocation3 + $0x1d4] sm:$0xf]
  %v4900 = vld [vmem:[#allocation3 + $0x1d8] sm:$0xf]
  %v4901 = vld [vmem:[#allocation3 + $0x1e4] sm:$0x8]
  %v4902 = vld [vmem:[#allocation3 + $0x1e8] sm:$0xf]
  %v4903 = vld [vmem:[#allocation3 + $0x1ec] sm:$0xf]
  %v4904 = vld [vmem:[#allocation3 + $0x1f8] sm:$0x8]
  %v4905 = vld [vmem:[#allocation3 + $0x1fc] sm:$0xf]
  %v4906 = vld [vmem:[#allocation3 + $0x200] sm:$0xf]
  %v4907 = vld [vmem:[#allocation3 + $0x20c] sm:$0x8]
  %v4908 = vld [vmem:[#allocation3 + $0x210] sm:$0xf]
  %v4909 = vld [vmem:[#allocation3 + $0x214] sm:$0xf]
  %v4910 = vld [vmem:[#allocation3 + $0x220] sm:$0x8]
  %v4911 = vld [vmem:[#allocation3 + $0x224] sm:$0xf]
  %v4912 = vld [vmem:[#allocation3 + $0x228] sm:$0xf]
  %v4913 = vld [vmem:[#allocation3 + $0x234] sm:$0x8]
  %v4914 = vld [vmem:[#allocation3 + $0x238] sm:$0xf]
  %v4915 = vld [vmem:[#allocation3 + $0x23c] sm:$0xf]
  %v4916 = vld [vmem:[#allocation3 + $0x248] sm:$0x8]
  %v4917 = vld [vmem:[#allocation3 + $0x24c] sm:$0xf]
  %v4918 = vld [vmem:[#allocation3 + $0x250] sm:$0xf]
  %v4919 = vld [vmem:[#allocation3 + $0x25c] sm:$0x8]
  %v4920 = vld [vmem:[#allocation3 + $0x260] sm:$0xf]
  %v4921 = vld [vmem:[#allocation3 + $0x264] sm:$0xf]
  %v4922 = vld [vmem:[#allocation3 + $0x270] sm:$0x8]
  %v4923 = vld [vmem:[#allocation3 + $0x274] sm:$0xf]
  %v4924 = vld [vmem:[#allocation3 + $0x278] sm:$0xf]
  %v4925 = vld [vmem:[#allocation3 + $0x284] sm:$0x8]
  %v4926 = vld [vmem:[#allocation3 + $0x288] sm:$0xf]
  %v4927 = vld [vmem:[#allocation3 + $0x28c] sm:$0xf]
  %v4928 = vld [vmem:[#allocation3 + $0x298] sm:$0x8]
  %v4929 = vld [vmem:[#allocation3 + $0x29c] sm:$0xf]
  %v4930 = vld [vmem:[#allocation3 + $0x2a0] sm:$0xf]
  %v4931 = vld [vmem:[#allocation3 + $0x2ac] sm:$0x8]
  %v4932 = vld [vmem:[#allocation3 + $0x2b0] sm:$0xf]
  %v4933 = vld [vmem:[#allocation3 + $0x2b4] sm:$0xf]
  %v4934 = vld [vmem:[#allocation3 + $0x2c0] sm:$0x8]
  %v4935 = vld [vmem:[#allocation3 + $0x2c4] sm:$0xf]
  %v4936 = vld [vmem:[#allocation3 + $0x2c8] sm:$0xf]
  %v4937 = vld [vmem:[#allocation3 + $0x10] sm:$0x1]
  %v4938 = vld [vmem:[#allocation3 + $0x24] sm:$0x1]
  %v4939 = vld [vmem:[#allocation3 + $0x38] sm:$0x1]
  %v4940 = vld [vmem:[#allocation3 + $0x4c] sm:$0x1]
  %v4941 = vld [vmem:[#allocation3 + $0x60] sm:$0x1]
  %v4942 = vld [vmem:[#allocation3 + $0x74] sm:$0x1]
  %v4943 = vld [vmem:[#allocation3 + $0x88] sm:$0x1]
  %v4944 = vld [vmem:[#allocation3 + $0x9c] sm:$0x1]
  %v4945 = vld [vmem:[#allocation3 + $0xb0] sm:$0x1]
  %v4946 = vld [vmem:[#allocation3 + $0xc4] sm:$0x1]
  %v4947 = vld [vmem:[#allocation3 + $0xd8] sm:$0x1]
  %v4948 = vld [vmem:[#allocation3 + $0xec] sm:$0x1]
  %v4949 = vld [vmem:[#allocation3 + $0x100] sm:$0x1]
  %v4950 = vld [vmem:[#allocation3 + $0x114] sm:$0x1]
  %v4951 = vld [vmem:[#allocation3 + $0x128] sm:$0x1]
  %v4952 = vld [vmem:[#allocation3 + $0x13c] sm:$0x1]
  %v4953 = vld [vmem:[#allocation3 + $0x150] sm:$0x1]
  %v4954 = vld [vmem:[#allocation3 + $0x164] sm:$0x1]
  %v4955 = vld [vmem:[#allocation3 + $0x178] sm:$0x1]
  %v4956 = vld [vmem:[#allocation3 + $0x18c] sm:$0x1]
  %v4957 = vld [vmem:[#allocation3 + $0x1a0] sm:$0x1]
  %v4958 = vld [vmem:[#allocation3 + $0x1b4] sm:$0x1]
  %v4959 = vld [vmem:[#allocation3 + $0x1c8] sm:$0x1]
  %v4960 = vld [vmem:[#allocation3 + $0x1dc] sm:$0x1]
  %v4961 = vld [vmem:[#allocation3 + $0x1f0] sm:$0x1]
  %v4962 = vld [vmem:[#allocation3 + $0x204] sm:$0x1]
  %v4963 = vld [vmem:[#allocation3 + $0x218] sm:$0x1]
  %v4964 = vld [vmem:[#allocation3 + $0x22c] sm:$0x1]
  %v4965 = vld [vmem:[#allocation3 + $0x240] sm:$0x1]
  %v4966 = vld [vmem:[#allocation3 + $0x254] sm:$0x1]
  %v4967 = vld [vmem:[#allocation3 + $0x268] sm:$0x1]
  %v4968 = vld [vmem:[#allocation3 + $0x27c] sm:$0x1]
  %v4969 = vld [vmem:[#allocation3 + $0x290] sm:$0x1]
  %v4970 = vld [vmem:[#allocation3 + $0x2a4] sm:$0x1]
  %v4971 = vld [vmem:[#allocation3 + $0x2b8] sm:$0x1]
  %v4972 = vld [vmem:[#allocation3 + $0x2cc] sm:$0x1]
  %v5069 = vunpack.c.l.b16 %v4829
  %v5070 = vunpack.c.l.b16 %v4830
  %v5071 = vunpack.c.l.b16 %v4831
  %v5072 = vunpack.c.l.b16 %v4832
  %v5073 = vunpack.c.l.b16 %v4833
  %v5074 = vunpack.c.l.b16 %v4834
  %v5075 = vunpack.c.l.b16 %v4835
  %v5076 = vunpack.c.l.b16 %v4836
  %v5077 = vunpack.c.l.b16 %v4837
  %v5078 = vunpack.c.l.b16 %v4838
  %v5079 = vunpack.c.l.b16 %v4839
  %v5080 = vunpack.c.l.b16 %v4840
  %v5081 = vunpack.c.l.b16 %v4841
  %v5082 = vunpack.c.l.b16 %v4842
  %v5083 = vunpack.c.l.b16 %v4843
  %v5084 = vunpack.c.l.b16 %v4844
  %v5085 = vunpack.c.l.b16 %v4845
  %v5086 = vunpack.c.l.b16 %v4846
  %v5087 = vunpack.c.l.b16 %v4847
  %v5088 = vunpack.c.l.b16 %v4848
  %v5089 = vunpack.c.l.b16 %v4849
  %v5090 = vunpack.c.l.b16 %v4850
  %v5091 = vunpack.c.l.b16 %v4851
  %v5092 = vunpack.c.l.b16 %v4852
  %v5093 = vunpack.c.l.b16 %v4853
  %v5094 = vunpack.c.l.b16 %v4854
  %v5095 = vunpack.c.l.b16 %v4855
  %v5096 = vunpack.c.l.b16 %v4856
  %v5097 = vunpack.c.l.b16 %v4857
  %v5098 = vunpack.c.l.b16 %v4858
  %v5099 = vunpack.c.l.b16 %v4859
  %v5100 = vunpack.c.l.b16 %v4860
  %v5101 = vunpack.c.l.b16 %v4861
  %v5102 = vunpack.c.l.b16 %v4862
  %v5103 = vunpack.c.l.b16 %v4863
  %v5104 = vunpack.c.l.b16 %v4864
  %v5105 = vunpack.c.l.b16 %v4865
  %v5106 = vunpack.c.l.b16 %v4866
  %v5107 = vunpack.c.l.b16 %v4867
  %v5108 = vunpack.c.l.b16 %v4868
  %v5109 = vunpack.c.l.b16 %v4869
  %v5110 = vunpack.c.l.b16 %v4870
  %v5111 = vunpack.c.l.b16 %v4871
  %v5112 = vunpack.c.l.b16 %v4872
  %v5113 = vunpack.c.l.b16 %v4873
  %v5114 = vunpack.c.l.b16 %v4874
  %v5115 = vunpack.c.l.b16 %v4875
  %v5116 = vunpack.c.l.b16 %v4876
  %v5117 = vunpack.c.l.b16 %v4883
  %v5118 = vunpack.c.l.b16 %v4884
  %v5119 = vunpack.c.l.b16 %v4885
  %v5120 = vunpack.c.l.b16 %v4886
  %v5121 = vunpack.c.l.b16 %v4887
  %v5122 = vunpack.c.l.b16 %v4888
  %v5123 = vunpack.c.l.b16 %v4889
  %v5124 = vunpack.c.l.b16 %v4890
  %v5125 = vunpack.c.l.b16 %v4891
  %v5126 = vunpack.c.l.b16 %v4892
  %v5127 = vunpack.c.l.b16 %v4893
  %v5128 = vunpack.c.l.b16 %v4894
  %v5129 = vunpack.c.l.b16 %v4895
  %v5130 = vunpack.c.l.b16 %v4896
  %v5131 = vunpack.c.l.b16 %v4897
  %v5132 = vunpack.c.l.b16 %v4898
  %v5133 = vunpack.c.l.b16 %v4899
  %v5134 = vunpack.c.l.b16 %v4900
  %v5135 = vunpack.c.l.b16 %v4901
  %v5136 = vunpack.c.l.b16 %v4902
  %v5137 = vunpack.c.l.b16 %v4903
  %v5138 = vunpack.c.l.b16 %v4904
  %v5139 = vunpack.c.l.b16 %v4905
  %v5140 = vunpack.c.l.b16 %v4906
  %v5141 = vunpack.c.l.b16 %v4907
  %v5142 = vunpack.c.l.b16 %v4908
  %v5143 = vunpack.c.l.b16 %v4909
  %v5144 = vunpack.c.l.b16 %v4910
  %v5145 = vunpack.c.l.b16 %v4911
  %v5146 = vunpack.c.l.b16 %v4912
  %v5147 = vunpack.c.l.b16 %v4913
  %v5148 = vunpack.c.l.b16 %v4914
  %v5149 = vunpack.c.l.b16 %v4915
  %v5150 = vunpack.c.l.b16 %v4916
  %v5151 = vunpack.c.l.b16 %v4917
  %v5152 = vunpack.c.l.b16 %v4918
  %v5153 = vunpack.c.l.b16 %v4919
  %v5154 = vunpack.c.l.b16 %v4920
  %v5155 = vunpack.c.l.b16 %v4921
  %v5156 = vunpack.c.l.b16 %v4922
  %v5157 = vunpack.c.l.b16 %v4923
  %v5158 = vunpack.c.l.b16 %v4924
  %v5159 = vunpack.c.l.b16 %v4925
  %v5160 = vunpack.c.l.b16 %v4926
  %v5161 = vunpack.c.l.b16 %v4927
  %v5162 = vunpack.c.l.b16 %v4928
  %v5163 = vunpack.c.l.b16 %v4929
  %v5164 = vunpack.c.l.b16 %v4930
  %v5165 = vpack.c.b16 %v5070, %v5069
  %v5166 = vpack.c.b16 %v5071, %v5071
  %v5167 = vpack.c.b16 %v5073, %v5072
  %v5168 = vpack.c.b16 %v5074, %v5074
  %v5169 = vpack.c.b16 %v5076, %v5075
  %v5170 = vpack.c.b16 %v5077, %v5077
  %v5171 = vpack.c.b16 %v5079, %v5078
  %v5172 = vpack.c.b16 %v5080, %v5080
  %v5173 = vpack.c.b16 %v5082, %v5081
  %v5174 = vpack.c.b16 %v5083, %v5083
  %v5175 = vpack.c.b16 %v5085, %v5084
  %v5176 = vpack.c.b16 %v5086, %v5086
  %v5177 = vpack.c.b16 %v5088, %v5087
  %v5178 = vpack.c.b16 %v5089, %v5089
  %v5179 = vpack.c.b16 %v5091, %v5090
  %v5180 = vpack.c.b16 %v5092, %v5092
  %v5181 = vpack.c.b16 %v5094, %v5093
  %v5182 = vpack.c.b16 %v5095, %v5095
  %v5183 = vpack.c.b16 %v5097, %v5096
  %v5184 = vpack.c.b16 %v5098, %v5098
  %v5185 = vpack.c.b16 %v5100, %v5099
  %v5186 = vpack.c.b16 %v5101, %v5101
  %v5187 = vpack.c.b16 %v5103, %v5102
  %v5188 = vpack.c.b16 %v5104, %v5104
  %v5189 = vpack.c.b16 %v5106, %v5105
  %v5190 = vpack.c.b16 %v5107, %v5107
  %v5191 = vpack.c.b16 %v5109, %v5108
  %v5192 = vpack.c.b16 %v5110, %v5110
  %v5193 = vpack.c.b16 %v5112, %v5111
  %v5194 = vpack.c.b16 %v5113, %v5113
  %v5195 = vpack.c.b16 %v5115, %v5114
  %v5196 = vpack.c.b16 %v5116, %v5116
  %v5197 = vpack.c.b16 %v5118, %v5117
  %v5198 = vpack.c.b16 %v5119, %v5119
  %v5199 = vpack.c.b16 %v5121, %v5120
  %v5200 = vpack.c.b16 %v5122, %v5122
  %v5201 = vpack.c.b16 %v5124, %v5123
  %v5202 = vpack.c.b16 %v5125, %v5125
  %v5203 = vpack.c.b16 %v5127, %v5126
  %v5204 = vpack.c.b16 %v5128, %v5128
  %v5205 = vpack.c.b16 %v5130, %v5129
  %v5206 = vpack.c.b16 %v5131, %v5131
  %v5207 = vpack.c.b16 %v5133, %v5132
  %v5208 = vpack.c.b16 %v5134, %v5134
  %v5209 = vpack.c.b16 %v5136, %v5135
  %v5210 = vpack.c.b16 %v5137, %v5137
  %v5211 = vpack.c.b16 %v5139, %v5138
  %v5212 = vpack.c.b16 %v5140, %v5140
  %v5213 = vpack.c.b16 %v5142, %v5141
  %v5214 = vpack.c.b16 %v5143, %v5143
  %v5215 = vpack.c.b16 %v5145, %v5144
  %v5216 = vpack.c.b16 %v5146, %v5146
  %v5217 = vpack.c.b16 %v5148, %v5147
  %v5218 = vpack.c.b16 %v5149, %v5149
  %v5219 = vpack.c.b16 %v5151, %v5150
  %v5220 = vpack.c.b16 %v5152, %v5152
  %v5221 = vpack.c.b16 %v5154, %v5153
  %v5222 = vpack.c.b16 %v5155, %v5155
  %v5223 = vpack.c.b16 %v5157, %v5156
  %v5224 = vpack.c.b16 %v5158, %v5158
  %v5225 = vpack.c.b16 %v5160, %v5159
  %v5226 = vpack.c.b16 %v5161, %v5161
  %v5227 = vpack.c.b16 %v5163, %v5162
  %v5228 = vpack.c.b16 %v5164, %v5164
  %v5229 = vpack.c.b16 %v5071, %v5070
  %v5230 = vpack.c.b16 %v5074, %v5073
  %v5231 = vpack.c.b16 %v5077, %v5076
  %v5232 = vpack.c.b16 %v5080, %v5079
  %v5233 = vpack.c.b16 %v5083, %v5082
  %v5234 = vpack.c.b16 %v5086, %v5085
  %v5235 = vpack.c.b16 %v5089, %v5088
  %v5236 = vpack.c.b16 %v5092, %v5091
  %v5237 = vpack.c.b16 %v5095, %v5094
  %v5238 = vpack.c.b16 %v5098, %v5097
  %v5239 = vpack.c.b16 %v5101, %v5100
  %v5240 = vpack.c.b16 %v5104, %v5103
  %v5241 = vpack.c.b16 %v5107, %v5106
  %v5242 = vpack.c.b16 %v5110, %v5109
  %v5243 = vpack.c.b16 %v5113, %v5112
  %v5244 = vpack.c.b16 %v5116, %v5115
  %v5245 = vpack.c.b16 %v5119, %v5118
  %v5246 = vpack.c.b16 %v5122, %v5121
  %v5247 = vpack.c.b16 %v5125, %v5124
  %v5248 = vpack.c.b16 %v5128, %v5127
  %v5249 = vpack.c.b16 %v5131, %v5130
  %v5250 = vpack.c.b16 %v5134, %v5133
  %v5251 = vpack.c.b16 %v5137, %v5136
  %v5252 = vpack.c.b16 %v5140, %v5139
  %v5253 = vpack.c.b16 %v5143, %v5142
  %v5254 = vpack.c.b16 %v5146, %v5145
  %v5255 = vpack.c.b16 %v5149, %v5148
  %v5256 = vpack.c.b16 %v5152, %v5151
  %v5257 = vpack.c.b16 %v5155, %v5154
  %v5258 = vpack.c.b16 %v5158, %v5157
  %v5259 = vpack.c.b16 %v5161, %v5160
  %v5260 = vpack.c.b16 %v5164, %v5163
  %v5262 = vshrl.u32 %v5229, 16
  %v5264 = vrot.slane %v5262, 4
  %v5265 = vshll.u32 %v5229, 16
  %v5267 = vrot.slane %v5265, 5
  %v5268 = vor.u32 %v5264, %v5267
  %v5270 = vshrl.u32 %v5230, 16
  %v5272 = vrot.slane %v5270, 4
  %v5273 = vshll.u32 %v5230, 16
  %v5275 = vrot.slane %v5273, 5
  %v5276 = vor.u32 %v5272, %v5275
  %v5278 = vshrl.u32 %v5231, 16
  %v5280 = vrot.slane %v5278, 4
  %v5281 = vshll.u32 %v5231, 16
  %v5283 = vrot.slane %v5281, 5
  %v5284 = vor.u32 %v5280, %v5283
  %v5286 = vshrl.u32 %v5232, 16
  %v5288 = vrot.slane %v5286, 4
  %v5289 = vshll.u32 %v5232, 16
  %v5291 = vrot.slane %v5289, 5
  %v5292 = vor.u32 %v5288, %v5291
  %v5294 = vshrl.u32 %v5233, 16
  %v5296 = vrot.slane %v5294, 4
  %v5297 = vshll.u32 %v5233, 16
  %v5299 = vrot.slane %v5297, 5
  %v5300 = vor.u32 %v5296, %v5299
  %v5302 = vshrl.u32 %v5234, 16
  %v5304 = vrot.slane %v5302, 4
  %v5305 = vshll.u32 %v5234, 16
  %v5307 = vrot.slane %v5305, 5
  %v5308 = vor.u32 %v5304, %v5307
  %v5310 = vshrl.u32 %v5235, 16
  %v5312 = vrot.slane %v5310, 4
  %v5313 = vshll.u32 %v5235, 16
  %v5315 = vrot.slane %v5313, 5
  %v5316 = vor.u32 %v5312, %v5315
  %v5318 = vshrl.u32 %v5236, 16
  %v5320 = vrot.slane %v5318, 4
  %v5321 = vshll.u32 %v5236, 16
  %v5323 = vrot.slane %v5321, 5
  %v5324 = vor.u32 %v5320, %v5323
  %v5326 = vshrl.u32 %v5237, 16
  %v5328 = vrot.slane %v5326, 4
  %v5329 = vshll.u32 %v5237, 16
  %v5331 = vrot.slane %v5329, 5
  %v5332 = vor.u32 %v5328, %v5331
  %v5334 = vshrl.u32 %v5238, 16
  %v5336 = vrot.slane %v5334, 4
  %v5337 = vshll.u32 %v5238, 16
  %v5339 = vrot.slane %v5337, 5
  %v5340 = vor.u32 %v5336, %v5339
  %v5342 = vshrl.u32 %v5239, 16
  %v5344 = vrot.slane %v5342, 4
  %v5345 = vshll.u32 %v5239, 16
  %v5347 = vrot.slane %v5345, 5
  %v5348 = vor.u32 %v5344, %v5347
  %v5350 = vshrl.u32 %v5240, 16
  %v5352 = vrot.slane %v5350, 4
  %v5353 = vshll.u32 %v5240, 16
  %v5355 = vrot.slane %v5353, 5
  %v5356 = vor.u32 %v5352, %v5355
  %v5358 = vshrl.u32 %v5241, 16
  %v5360 = vrot.slane %v5358, 4
  %v5361 = vshll.u32 %v5241, 16
  %v5363 = vrot.slane %v5361, 5
  %v5364 = vor.u32 %v5360, %v5363
  %v5366 = vshrl.u32 %v5242, 16
  %v5368 = vrot.slane %v5366, 4
  %v5369 = vshll.u32 %v5242, 16
  %v5371 = vrot.slane %v5369, 5
  %v5372 = vor.u32 %v5368, %v5371
  %v5374 = vshrl.u32 %v5243, 16
  %v5376 = vrot.slane %v5374, 4
  %v5377 = vshll.u32 %v5243, 16
  %v5379 = vrot.slane %v5377, 5
  %v5380 = vor.u32 %v5376, %v5379
  %v5382 = vshrl.u32 %v5244, 16
  %v5384 = vrot.slane %v5382, 4
  %v5385 = vshll.u32 %v5244, 16
  %v5387 = vrot.slane %v5385, 5
  %v5388 = vor.u32 %v5384, %v5387
  %v5390 = vshrl.u32 %v5245, 16
  %v5392 = vrot.slane %v5390, 4
  %v5393 = vshll.u32 %v5245, 16
  %v5395 = vrot.slane %v5393, 5
  %v5396 = vor.u32 %v5392, %v5395
  %v5398 = vshrl.u32 %v5246, 16
  %v5400 = vrot.slane %v5398, 4
  %v5401 = vshll.u32 %v5246, 16
  %v5403 = vrot.slane %v5401, 5
  %v5404 = vor.u32 %v5400, %v5403
  %v5406 = vshrl.u32 %v5247, 16
  %v5408 = vrot.slane %v5406, 4
  %v5409 = vshll.u32 %v5247, 16
  %v5411 = vrot.slane %v5409, 5
  %v5412 = vor.u32 %v5408, %v5411
  %v5414 = vshrl.u32 %v5248, 16
  %v5416 = vrot.slane %v5414, 4
  %v5417 = vshll.u32 %v5248, 16
  %v5419 = vrot.slane %v5417, 5
  %v5420 = vor.u32 %v5416, %v5419
  %v5422 = vshrl.u32 %v5249, 16
  %v5424 = vrot.slane %v5422, 4
  %v5425 = vshll.u32 %v5249, 16
  %v5427 = vrot.slane %v5425, 5
  %v5428 = vor.u32 %v5424, %v5427
  %v5430 = vshrl.u32 %v5250, 16
  %v5432 = vrot.slane %v5430, 4
  %v5433 = vshll.u32 %v5250, 16
  %v5435 = vrot.slane %v5433, 5
  %v5436 = vor.u32 %v5432, %v5435
  %v5438 = vshrl.u32 %v5251, 16
  %v5440 = vrot.slane %v5438, 4
  %v5441 = vshll.u32 %v5251, 16
  %v5443 = vrot.slane %v5441, 5
  %v5444 = vor.u32 %v5440, %v5443
  %v5446 = vshrl.u32 %v5252, 16
  %v5448 = vrot.slane %v5446, 4
  %v5449 = vshll.u32 %v5252, 16
  %v5451 = vrot.slane %v5449, 5
  %v5452 = vor.u32 %v5448, %v5451
  %v5454 = vshrl.u32 %v5253, 16
  %v5456 = vrot.slane %v5454, 4
  %v5457 = vshll.u32 %v5253, 16
  %v5459 = vrot.slane %v5457, 5
  %v5460 = vor.u32 %v5456, %v5459
  %v5462 = vshrl.u32 %v5254, 16
  %v5464 = vrot.slane %v5462, 4
  %v5465 = vshll.u32 %v5254, 16
  %v5467 = vrot.slane %v5465, 5
  %v5468 = vor.u32 %v5464, %v5467
  %v5470 = vshrl.u32 %v5255, 16
  %v5472 = vrot.slane %v5470, 4
  %v5473 = vshll.u32 %v5255, 16
  %v5475 = vrot.slane %v5473, 5
  %v5476 = vor.u32 %v5472, %v5475
  %v5478 = vshrl.u32 %v5256, 16
  %v5480 = vrot.slane %v5478, 4
  %v5481 = vshll.u32 %v5256, 16
  %v5483 = vrot.slane %v5481, 5
  %v5484 = vor.u32 %v5480, %v5483
  %v5486 = vshrl.u32 %v5257, 16
  %v5488 = vrot.slane %v5486, 4
  %v5489 = vshll.u32 %v5257, 16
  %v5491 = vrot.slane %v5489, 5
  %v5492 = vor.u32 %v5488, %v5491
  %v5494 = vshrl.u32 %v5258, 16
  %v5496 = vrot.slane %v5494, 4
  %v5497 = vshll.u32 %v5258, 16
  %v5499 = vrot.slane %v5497, 5
  %v5500 = vor.u32 %v5496, %v5499
  %v5502 = vshrl.u32 %v5259, 16
  %v5504 = vrot.slane %v5502, 4
  %v5505 = vshll.u32 %v5259, 16
  %v5507 = vrot.slane %v5505, 5
  %v5508 = vor.u32 %v5504, %v5507
  %v5510 = vshrl.u32 %v5260, 16
  %v5512 = vrot.slane %v5510, 4
  %v5513 = vshll.u32 %v5260, 16
  %v5515 = vrot.slane %v5513, 5
  %v5516 = vor.u32 %v5512, %v5515
  %5517 = vrot.lane.b32.xlu0 %v5268, 8
  %v5518 = vpop.permute.xlu0 %5517
  %5519 = vrot.lane.b32.xlu0 %v5276, 8
  %v5520 = vpop.permute.xlu0 %5519
  %5521 = vrot.lane.b32.xlu0 %v5284, 8
  %v5522 = vpop.permute.xlu0 %5521
  %5523 = vrot.lane.b32.xlu0 %v5292, 8
  %v5524 = vpop.permute.xlu0 %5523
  %5525 = vrot.lane.b32.xlu0 %v5300, 8
  %v5526 = vpop.permute.xlu0 %5525
  %5527 = vrot.lane.b32.xlu0 %v5308, 8
  %v5528 = vpop.permute.xlu0 %5527
  %5529 = vrot.lane.b32.xlu0 %v5316, 8
  %v5530 = vpop.permute.xlu0 %5529
  %5531 = vrot.lane.b32.xlu0 %v5324, 8
  %v5532 = vpop.permute.xlu0 %5531
  %5533 = vrot.lane.b32.xlu0 %v5332, 8
  %v5534 = vpop.permute.xlu0 %5533
  %5535 = vrot.lane.b32.xlu0 %v5340, 8
  %v5536 = vpop.permute.xlu0 %5535
  %5537 = vrot.lane.b32.xlu0 %v5348, 8
  %v5538 = vpop.permute.xlu0 %5537
  %5539 = vrot.lane.b32.xlu0 %v5356, 8
  %v5540 = vpop.permute.xlu0 %5539
  %5541 = vrot.lane.b32.xlu0 %v5364, 8
  %v5542 = vpop.permute.xlu0 %5541
  %5543 = vrot.lane.b32.xlu0 %v5372, 8
  %v5544 = vpop.permute.xlu0 %5543
  %5545 = vrot.lane.b32.xlu0 %v5380, 8
  %v5546 = vpop.permute.xlu0 %5545
  %5547 = vrot.lane.b32.xlu0 %v5388, 8
  %v5548 = vpop.permute.xlu0 %5547
  %5549 = vrot.lane.b32.xlu0 %v5396, 8
  %v5550 = vpop.permute.xlu0 %5549
  %5551 = vrot.lane.b32.xlu0 %v5404, 8
  %v5552 = vpop.permute.xlu0 %5551
  %5553 = vrot.lane.b32.xlu0 %v5412, 8
  %v5554 = vpop.permute.xlu0 %5553
  %5555 = vrot.lane.b32.xlu0 %v5420, 8
  %v5556 = vpop.permute.xlu0 %5555
  %5557 = vrot.lane.b32.xlu0 %v5428, 8
  %v5558 = vpop.permute.xlu0 %5557
  %5559 = vrot.lane.b32.xlu0 %v5436, 8
  %v5560 = vpop.permute.xlu0 %5559
  %5561 = vrot.lane.b32.xlu0 %v5444, 8
  %v5562 = vpop.permute.xlu0 %5561
  %5563 = vrot.lane.b32.xlu0 %v5452, 8
  %v5564 = vpop.permute.xlu0 %5563
  %5565 = vrot.lane.b32.xlu0 %v5460, 8
  %v5566 = vpop.permute.xlu0 %5565
  %5567 = vrot.lane.b32.xlu0 %v5468, 8
  %v5568 = vpop.permute.xlu0 %5567
  %5569 = vrot.lane.b32.xlu0 %v5476, 8
  %v5570 = vpop.permute.xlu0 %5569
  %5571 = vrot.lane.b32.xlu0 %v5484, 8
  %v5572 = vpop.permute.xlu0 %5571
  %5573 = vrot.lane.b32.xlu0 %v5492, 8
  %v5574 = vpop.permute.xlu0 %5573
  %5575 = vrot.lane.b32.xlu0 %v5500, 8
  %v5576 = vpop.permute.xlu0 %5575
  %5577 = vrot.lane.b32.xlu0 %v5508, 8
  %v5578 = vpop.permute.xlu0 %5577
  %5579 = vrot.lane.b32.xlu0 %v5516, 8
  %v5580 = vpop.permute.xlu0 %5579
  %v5613 = vunpack.c.l.b16 %v4937
  %v5614 = vunpack.c.l.b16 %v4938
  %v5615 = vunpack.c.l.b16 %v4939
  %v5616 = vunpack.c.l.b16 %v4940
  %v5617 = vunpack.c.l.b16 %v4941
  %v5618 = vunpack.c.l.b16 %v4942
  %v5619 = vunpack.c.l.b16 %v4943
  %v5620 = vunpack.c.l.b16 %v4944
  %v5621 = vunpack.c.l.b16 %v4945
  %v5622 = vunpack.c.l.b16 %v4946
  %v5623 = vunpack.c.l.b16 %v4947
  %v5624 = vunpack.c.l.b16 %v4948
  %v5625 = vunpack.c.l.b16 %v4949
  %v5626 = vunpack.c.l.b16 %v4950
  %v5627 = vunpack.c.l.b16 %v4951
  %v5628 = vunpack.c.l.b16 %v4952
  %v5629 = vunpack.c.l.b16 %v4955
  %v5630 = vunpack.c.l.b16 %v4956
  %v5631 = vunpack.c.l.b16 %v4957
  %v5632 = vunpack.c.l.b16 %v4958
  %v5633 = vunpack.c.l.b16 %v4959
  %v5634 = vunpack.c.l.b16 %v4960
  %v5635 = vunpack.c.l.b16 %v4961
  %v5636 = vunpack.c.l.b16 %v4962
  %v5637 = vunpack.c.l.b16 %v4963
  %v5638 = vunpack.c.l.b16 %v4964
  %v5639 = vunpack.c.l.b16 %v4965
  %v5640 = vunpack.c.l.b16 %v4966
  %v5641 = vunpack.c.l.b16 %v4967
  %v5642 = vunpack.c.l.b16 %v4968
  %v5643 = vunpack.c.l.b16 %v4969
  %v5644 = vunpack.c.l.b16 %v4970
  %v5645 = vpack.c.b16 %v5613, %v5613
  %v5646 = vpack.c.b16 %v5614, %v5614
  %v5647 = vpack.c.b16 %v5615, %v5615
  %v5648 = vpack.c.b16 %v5616, %v5616
  %v5649 = vpack.c.b16 %v5617, %v5617
  %v5650 = vpack.c.b16 %v5618, %v5618
  %v5651 = vpack.c.b16 %v5619, %v5619
  %v5652 = vpack.c.b16 %v5620, %v5620
  %v5653 = vpack.c.b16 %v5621, %v5621
  %v5654 = vpack.c.b16 %v5622, %v5622
  %v5655 = vpack.c.b16 %v5623, %v5623
  %v5656 = vpack.c.b16 %v5624, %v5624
  %v5657 = vpack.c.b16 %v5625, %v5625
  %v5658 = vpack.c.b16 %v5626, %v5626
  %v5659 = vpack.c.b16 %v5627, %v5627
  %v5660 = vpack.c.b16 %v5628, %v5628
  %v5661 = vpack.c.b16 %v5629, %v5629
  %v5662 = vpack.c.b16 %v5630, %v5630
  %v5663 = vpack.c.b16 %v5631, %v5631
  %v5664 = vpack.c.b16 %v5632, %v5632
  %v5665 = vpack.c.b16 %v5633, %v5633
  %v5666 = vpack.c.b16 %v5634, %v5634
  %v5667 = vpack.c.b16 %v5635, %v5635
  %v5668 = vpack.c.b16 %v5636, %v5636
  %v5669 = vpack.c.b16 %v5637, %v5637
  %v5670 = vpack.c.b16 %v5638, %v5638
  %v5671 = vpack.c.b16 %v5639, %v5639
  %v5672 = vpack.c.b16 %v5640, %v5640
  %v5673 = vpack.c.b16 %v5641, %v5641
  %v5674 = vpack.c.b16 %v5642, %v5642
  %v5675 = vpack.c.b16 %v5643, %v5643
  %v5676 = vpack.c.b16 %v5644, %v5644
  %v5677 = vrot.slane %v5229, 5
  %v5678 = vrot.slane %v5645, 5
  %v5679 = vsel %vm1484, %v5677, %v5678
  %v5680 = vrot.slane %v5230, 5
  %v5681 = vrot.slane %v5646, 5
  %v5682 = vsel %vm1484, %v5680, %v5681
  %v5683 = vrot.slane %v5231, 5
  %v5684 = vrot.slane %v5647, 5
  %v5685 = vsel %vm1484, %v5683, %v5684
  %v5686 = vrot.slane %v5232, 5
  %v5687 = vrot.slane %v5648, 5
  %v5688 = vsel %vm1484, %v5686, %v5687
  %v5689 = vrot.slane %v5233, 5
  %v5690 = vrot.slane %v5649, 5
  %v5691 = vsel %vm1484, %v5689, %v5690
  %v5692 = vrot.slane %v5234, 5
  %v5693 = vrot.slane %v5650, 5
  %v5694 = vsel %vm1484, %v5692, %v5693
  %v5695 = vrot.slane %v5235, 5
  %v5696 = vrot.slane %v5651, 5
  %v5697 = vsel %vm1484, %v5695, %v5696
  %v5698 = vrot.slane %v5236, 5
  %v5699 = vrot.slane %v5652, 5
  %v5700 = vsel %vm1484, %v5698, %v5699
  %v5701 = vrot.slane %v5237, 5
  %v5702 = vrot.slane %v5653, 5
  %v5703 = vsel %vm1484, %v5701, %v5702
  %v5704 = vrot.slane %v5238, 5
  %v5705 = vrot.slane %v5654, 5
  %v5706 = vsel %vm1484, %v5704, %v5705
  %v5707 = vrot.slane %v5239, 5
  %v5708 = vrot.slane %v5655, 5
  %v5709 = vsel %vm1484, %v5707, %v5708
  %v5710 = vrot.slane %v5240, 5
  %v5711 = vrot.slane %v5656, 5
  %v5712 = vsel %vm1484, %v5710, %v5711
  %v5713 = vrot.slane %v5241, 5
  %v5714 = vrot.slane %v5657, 5
  %v5715 = vsel %vm1484, %v5713, %v5714
  %v5716 = vrot.slane %v5242, 5
  %v5717 = vrot.slane %v5658, 5
  %v5718 = vsel %vm1484, %v5716, %v5717
  %v5719 = vrot.slane %v5243, 5
  %v5720 = vrot.slane %v5659, 5
  %v5721 = vsel %vm1484, %v5719, %v5720
  %v5722 = vrot.slane %v5244, 5
  %v5723 = vrot.slane %v5660, 5
  %v5724 = vsel %vm1484, %v5722, %v5723
  %v5725 = vrot.slane %v5245, 5
  %v5726 = vrot.slane %v5661, 5
  %v5727 = vsel %vm1484, %v5725, %v5726
  %v5728 = vrot.slane %v5246, 5
  %v5729 = vrot.slane %v5662, 5
  %v5730 = vsel %vm1484, %v5728, %v5729
  %v5731 = vrot.slane %v5247, 5
  %v5732 = vrot.slane %v5663, 5
  %v5733 = vsel %vm1484, %v5731, %v5732
  %v5734 = vrot.slane %v5248, 5
  %v5735 = vrot.slane %v5664, 5
  %v5736 = vsel %vm1484, %v5734, %v5735
  %v5737 = vrot.slane %v5249, 5
  %v5738 = vrot.slane %v5665, 5
  %v5739 = vsel %vm1484, %v5737, %v5738
  %v5740 = vrot.slane %v5250, 5
  %v5741 = vrot.slane %v5666, 5
  %v5742 = vsel %vm1484, %v5740, %v5741
  %v5743 = vrot.slane %v5251, 5
  %v5744 = vrot.slane %v5667, 5
  %v5745 = vsel %vm1484, %v5743, %v5744
  %v5746 = vrot.slane %v5252, 5
  %v5747 = vrot.slane %v5668, 5
  %v5748 = vsel %vm1484, %v5746, %v5747
  %v5749 = vrot.slane %v5253, 5
  %v5750 = vrot.slane %v5669, 5
  %v5751 = vsel %vm1484, %v5749, %v5750
  %v5752 = vrot.slane %v5254, 5
  %v5753 = vrot.slane %v5670, 5
  %v5754 = vsel %vm1484, %v5752, %v5753
  %v5755 = vrot.slane %v5255, 5
  %v5756 = vrot.slane %v5671, 5
  %v5757 = vsel %vm1484, %v5755, %v5756
  %v5758 = vrot.slane %v5256, 5
  %v5759 = vrot.slane %v5672, 5
  %v5760 = vsel %vm1484, %v5758, %v5759
  %v5761 = vrot.slane %v5257, 5
  %v5762 = vrot.slane %v5673, 5
  %v5763 = vsel %vm1484, %v5761, %v5762
  %v5764 = vrot.slane %v5258, 5
  %v5765 = vrot.slane %v5674, 5
  %v5766 = vsel %vm1484, %v5764, %v5765
  %v5767 = vrot.slane %v5259, 5
  %v5768 = vrot.slane %v5675, 5
  %v5769 = vsel %vm1484, %v5767, %v5768
  %v5770 = vrot.slane %v5260, 5
  %v5771 = vrot.slane %v5676, 5
  %v5772 = vsel %vm1484, %v5770, %v5771
  %5773 = vrot.lane.b32.xlu0 %v5677, 16
  %v5774 = vpop.permute.xlu0 %5773
  %5775 = vrot.lane.b32.xlu0 %v5679, 16
  %v5776 = vpop.permute.xlu0 %5775
  %5777 = vrot.lane.b32.xlu0 %v5680, 16
  %v5778 = vpop.permute.xlu0 %5777
  %5779 = vrot.lane.b32.xlu0 %v5682, 16
  %v5780 = vpop.permute.xlu0 %5779
  %5781 = vrot.lane.b32.xlu0 %v5683, 16
  %v5782 = vpop.permute.xlu0 %5781
  %5783 = vrot.lane.b32.xlu0 %v5685, 16
  %v5784 = vpop.permute.xlu0 %5783
  %5785 = vrot.lane.b32.xlu0 %v5686, 16
  %v5786 = vpop.permute.xlu0 %5785
  %5787 = vrot.lane.b32.xlu0 %v5688, 16
  %v5788 = vpop.permute.xlu0 %5787
  %5789 = vrot.lane.b32.xlu0 %v5689, 16
  %v5790 = vpop.permute.xlu0 %5789
  %5791 = vrot.lane.b32.xlu0 %v5691, 16
  %v5792 = vpop.permute.xlu0 %5791
  %5793 = vrot.lane.b32.xlu0 %v5692, 16
  %v5794 = vpop.permute.xlu0 %5793
  %5795 = vrot.lane.b32.xlu0 %v5694, 16
  %v5796 = vpop.permute.xlu0 %5795
  %5797 = vrot.lane.b32.xlu0 %v5695, 16
  %v5798 = vpop.permute.xlu0 %5797
  %5799 = vrot.lane.b32.xlu0 %v5697, 16
  %v5800 = vpop.permute.xlu0 %5799
  %5801 = vrot.lane.b32.xlu0 %v5698, 16
  %v5802 = vpop.permute.xlu0 %5801
  %5803 = vrot.lane.b32.xlu0 %v5700, 16
  %v5804 = vpop.permute.xlu0 %5803
  %5805 = vrot.lane.b32.xlu0 %v5701, 16
  %v5806 = vpop.permute.xlu0 %5805
  %5807 = vrot.lane.b32.xlu0 %v5703, 16
  %v5808 = vpop.permute.xlu0 %5807
  %5809 = vrot.lane.b32.xlu0 %v5704, 16
  %v5810 = vpop.permute.xlu0 %5809
  %5811 = vrot.lane.b32.xlu0 %v5706, 16
  %v5812 = vpop.permute.xlu0 %5811
  %5813 = vrot.lane.b32.xlu0 %v5707, 16
  %v5814 = vpop.permute.xlu0 %5813
  %5815 = vrot.lane.b32.xlu0 %v5709, 16
  %v5816 = vpop.permute.xlu0 %5815
  %5817 = vrot.lane.b32.xlu0 %v5710, 16
  %v5818 = vpop.permute.xlu0 %5817
  %5819 = vrot.lane.b32.xlu0 %v5712, 16
  %v5820 = vpop.permute.xlu0 %5819
  %5821 = vrot.lane.b32.xlu0 %v5713, 16
  %v5822 = vpop.permute.xlu0 %5821
  %5823 = vrot.lane.b32.xlu0 %v5715, 16
  %v5824 = vpop.permute.xlu0 %5823
  %5825 = vrot.lane.b32.xlu0 %v5716, 16
  %v5826 = vpop.permute.xlu0 %5825
  %5827 = vrot.lane.b32.xlu0 %v5718, 16
  %v5828 = vpop.permute.xlu0 %5827
  %5829 = vrot.lane.b32.xlu0 %v5719, 16
  %v5830 = vpop.permute.xlu0 %5829
  %5831 = vrot.lane.b32.xlu0 %v5721, 16
  %v5832 = vpop.permute.xlu0 %5831
  %5833 = vrot.lane.b32.xlu0 %v5722, 16
  %v5834 = vpop.permute.xlu0 %5833
  %5835 = vrot.lane.b32.xlu0 %v5724, 16
  %v5836 = vpop.permute.xlu0 %5835
  %5837 = vrot.lane.b32.xlu0 %v5725, 16
  %v5838 = vpop.permute.xlu0 %5837
  %5839 = vrot.lane.b32.xlu0 %v5727, 16
  %v5840 = vpop.permute.xlu0 %5839
  %5841 = vrot.lane.b32.xlu0 %v5728, 16
  %v5842 = vpop.permute.xlu0 %5841
  %5843 = vrot.lane.b32.xlu0 %v5730, 16
  %v5844 = vpop.permute.xlu0 %5843
  %5845 = vrot.lane.b32.xlu0 %v5731, 16
  %v5846 = vpop.permute.xlu0 %5845
  %5847 = vrot.lane.b32.xlu0 %v5733, 16
  %v5848 = vpop.permute.xlu0 %5847
  %5849 = vrot.lane.b32.xlu0 %v5734, 16
  %v5850 = vpop.permute.xlu0 %5849
  %5851 = vrot.lane.b32.xlu0 %v5736, 16
  %v5852 = vpop.permute.xlu0 %5851
  %5853 = vrot.lane.b32.xlu0 %v5737, 16
  %v5854 = vpop.permute.xlu0 %5853
  %5855 = vrot.lane.b32.xlu0 %v5739, 16
  %v5856 = vpop.permute.xlu0 %5855
  %5857 = vrot.lane.b32.xlu0 %v5740, 16
  %v5858 = vpop.permute.xlu0 %5857
  %5859 = vrot.lane.b32.xlu0 %v5742, 16
  %v5860 = vpop.permute.xlu0 %5859
  %5861 = vrot.lane.b32.xlu0 %v5743, 16
  %v5862 = vpop.permute.xlu0 %5861
  %5863 = vrot.lane.b32.xlu0 %v5745, 16
  %v5864 = vpop.permute.xlu0 %5863
  %5865 = vrot.lane.b32.xlu0 %v5746, 16
  %v5866 = vpop.permute.xlu0 %5865
  %5867 = vrot.lane.b32.xlu0 %v5748, 16
  %v5868 = vpop.permute.xlu0 %5867
  %5869 = vrot.lane.b32.xlu0 %v5749, 16
  %v5870 = vpop.permute.xlu0 %5869
  %5871 = vrot.lane.b32.xlu0 %v5751, 16
  %v5872 = vpop.permute.xlu0 %5871
  %5873 = vrot.lane.b32.xlu0 %v5752, 16
  %v5874 = vpop.permute.xlu0 %5873
  %5875 = vrot.lane.b32.xlu0 %v5754, 16
  %v5876 = vpop.permute.xlu0 %5875
  %5877 = vrot.lane.b32.xlu0 %v5755, 16
  %v5878 = vpop.permute.xlu0 %5877
  %5879 = vrot.lane.b32.xlu0 %v5757, 16
  %v5880 = vpop.permute.xlu0 %5879
  %5881 = vrot.lane.b32.xlu0 %v5758, 16
  %v5882 = vpop.permute.xlu0 %5881
  %5883 = vrot.lane.b32.xlu0 %v5760, 16
  %v5884 = vpop.permute.xlu0 %5883
  %5885 = vrot.lane.b32.xlu0 %v5761, 16
  %v5886 = vpop.permute.xlu0 %5885
  %5887 = vrot.lane.b32.xlu0 %v5763, 16
  %v5888 = vpop.permute.xlu0 %5887
  %5889 = vrot.lane.b32.xlu0 %v5764, 16
  %v5890 = vpop.permute.xlu0 %5889
  %5891 = vrot.lane.b32.xlu0 %v5766, 16
  %v5892 = vpop.permute.xlu0 %5891
  %5893 = vrot.lane.b32.xlu0 %v5767, 16
  %v5894 = vpop.permute.xlu0 %5893
  %5895 = vrot.lane.b32.xlu0 %v5769, 16
  %v5896 = vpop.permute.xlu0 %5895
  %5897 = vrot.lane.b32.xlu0 %v5770, 16
  %v5898 = vpop.permute.xlu0 %5897
  %5899 = vrot.lane.b32.xlu0 %v5772, 16
  %v5900 = vpop.permute.xlu0 %5899
  %v5907 = vunpack.c.l.b16 %v4877
  %v5908 = vunpack.c.l.b16 %v4878
  %v5909 = vunpack.c.l.b16 %v4879
  %v5910 = vunpack.c.l.b16 %v4931
  %v5911 = vunpack.c.l.b16 %v4932
  %v5912 = vunpack.c.l.b16 %v4933
  %v5913 = vpack.c.b16 %v5908, %v5907
  %v5914 = vpack.c.b16 %v5909, %v5909
  %v5915 = vpack.c.b16 %v5911, %v5910
  %v5916 = vpack.c.b16 %v5912, %v5912
  %5917 = vrot.lane.b32.xlu0 %v5167, 24
  %v5918 = vpop.permute.xlu0 %5917
  %5919 = vrot.lane.b32.xlu0 %v5168, 24
  %v5920 = vpop.permute.xlu0 %5919
  %5921 = vrot.lane.b32.xlu0 %v5169, 24
  %v5922 = vpop.permute.xlu0 %5921
  %5923 = vrot.lane.b32.xlu0 %v5170, 24
  %v5924 = vpop.permute.xlu0 %5923
  %5925 = vrot.lane.b32.xlu0 %v5171, 24
  %v5926 = vpop.permute.xlu0 %5925
  %5927 = vrot.lane.b32.xlu0 %v5172, 24
  %v5928 = vpop.permute.xlu0 %5927
  %5929 = vrot.lane.b32.xlu0 %v5173, 24
  %v5930 = vpop.permute.xlu0 %5929
  %5931 = vrot.lane.b32.xlu0 %v5174, 24
  %v5932 = vpop.permute.xlu0 %5931
  %5933 = vrot.lane.b32.xlu0 %v5175, 24
  %v5934 = vpop.permute.xlu0 %5933
  %5935 = vrot.lane.b32.xlu0 %v5176, 24
  %v5936 = vpop.permute.xlu0 %5935
  %5937 = vrot.lane.b32.xlu0 %v5177, 24
  %v5938 = vpop.permute.xlu0 %5937
  %5939 = vrot.lane.b32.xlu0 %v5178, 24
  %v5940 = vpop.permute.xlu0 %5939
  %5941 = vrot.lane.b32.xlu0 %v5179, 24
  %v5942 = vpop.permute.xlu0 %5941
  %5943 = vrot.lane.b32.xlu0 %v5180, 24
  %v5944 = vpop.permute.xlu0 %5943
  %5945 = vrot.lane.b32.xlu0 %v5181, 24
  %v5946 = vpop.permute.xlu0 %5945
  %5947 = vrot.lane.b32.xlu0 %v5182, 24
  %v5948 = vpop.permute.xlu0 %5947
  %5949 = vrot.lane.b32.xlu0 %v5183, 24
  %v5950 = vpop.permute.xlu0 %5949
  %5951 = vrot.lane.b32.xlu0 %v5184, 24
  %v5952 = vpop.permute.xlu0 %5951
  %5953 = vrot.lane.b32.xlu0 %v5185, 24
  %v5954 = vpop.permute.xlu0 %5953
  %5955 = vrot.lane.b32.xlu0 %v5186, 24
  %v5956 = vpop.permute.xlu0 %5955
  %5957 = vrot.lane.b32.xlu0 %v5187, 24
  %v5958 = vpop.permute.xlu0 %5957
  %5959 = vrot.lane.b32.xlu0 %v5188, 24
  %v5960 = vpop.permute.xlu0 %5959
  %5961 = vrot.lane.b32.xlu0 %v5189, 24
  %v5962 = vpop.permute.xlu0 %5961
  %5963 = vrot.lane.b32.xlu0 %v5190, 24
  %v5964 = vpop.permute.xlu0 %5963
  %5965 = vrot.lane.b32.xlu0 %v5191, 24
  %v5966 = vpop.permute.xlu0 %5965
  %5967 = vrot.lane.b32.xlu0 %v5192, 24
  %v5968 = vpop.permute.xlu0 %5967
  %5969 = vrot.lane.b32.xlu0 %v5193, 24
  %v5970 = vpop.permute.xlu0 %5969
  %5971 = vrot.lane.b32.xlu0 %v5194, 24
  %v5972 = vpop.permute.xlu0 %5971
  %5973 = vrot.lane.b32.xlu0 %v5195, 24
  %v5974 = vpop.permute.xlu0 %5973
  %5975 = vrot.lane.b32.xlu0 %v5196, 24
  %v5976 = vpop.permute.xlu0 %5975
  %5977 = vrot.lane.b32.xlu0 %v5913, 24
  %v5978 = vpop.permute.xlu0 %5977
  %5979 = vrot.lane.b32.xlu0 %v5914, 24
  %v5980 = vpop.permute.xlu0 %5979
  %5981 = vrot.lane.b32.xlu0 %v5199, 24
  %v5982 = vpop.permute.xlu0 %5981
  %5983 = vrot.lane.b32.xlu0 %v5200, 24
  %v5984 = vpop.permute.xlu0 %5983
  %5985 = vrot.lane.b32.xlu0 %v5201, 24
  %v5986 = vpop.permute.xlu0 %5985
  %5987 = vrot.lane.b32.xlu0 %v5202, 24
  %v5988 = vpop.permute.xlu0 %5987
  %5989 = vrot.lane.b32.xlu0 %v5203, 24
  %v5990 = vpop.permute.xlu0 %5989
  %5991 = vrot.lane.b32.xlu0 %v5204, 24
  %v5992 = vpop.permute.xlu0 %5991
  %5993 = vrot.lane.b32.xlu0 %v5205, 24
  %v5994 = vpop.permute.xlu0 %5993
  %5995 = vrot.lane.b32.xlu0 %v5206, 24
  %v5996 = vpop.permute.xlu0 %5995
  %5997 = vrot.lane.b32.xlu0 %v5207, 24
  %v5998 = vpop.permute.xlu0 %5997
  %5999 = vrot.lane.b32.xlu0 %v5208, 24
  %v6000 = vpop.permute.xlu0 %5999
  %6001 = vrot.lane.b32.xlu0 %v5209, 24
  %v6002 = vpop.permute.xlu0 %6001
  %6003 = vrot.lane.b32.xlu0 %v5210, 24
  %v6004 = vpop.permute.xlu0 %6003
  %6005 = vrot.lane.b32.xlu0 %v5211, 24
  %v6006 = vpop.permute.xlu0 %6005
  %6007 = vrot.lane.b32.xlu0 %v5212, 24
  %v6008 = vpop.permute.xlu0 %6007
  %6009 = vrot.lane.b32.xlu0 %v5213, 24
  %v6010 = vpop.permute.xlu0 %6009
  %6011 = vrot.lane.b32.xlu0 %v5214, 24
  %v6012 = vpop.permute.xlu0 %6011
  %6013 = vrot.lane.b32.xlu0 %v5215, 24
  %v6014 = vpop.permute.xlu0 %6013
  %6015 = vrot.lane.b32.xlu0 %v5216, 24
  %v6016 = vpop.permute.xlu0 %6015
  %6017 = vrot.lane.b32.xlu0 %v5217, 24
  %v6018 = vpop.permute.xlu0 %6017
  %6019 = vrot.lane.b32.xlu0 %v5218, 24
  %v6020 = vpop.permute.xlu0 %6019
  %6021 = vrot.lane.b32.xlu0 %v5219, 24
  %v6022 = vpop.permute.xlu0 %6021
  %6023 = vrot.lane.b32.xlu0 %v5220, 24
  %v6024 = vpop.permute.xlu0 %6023
  %6025 = vrot.lane.b32.xlu0 %v5221, 24
  %v6026 = vpop.permute.xlu0 %6025
  %6027 = vrot.lane.b32.xlu0 %v5222, 24
  %v6028 = vpop.permute.xlu0 %6027
  %6029 = vrot.lane.b32.xlu0 %v5223, 24
  %v6030 = vpop.permute.xlu0 %6029
  %6031 = vrot.lane.b32.xlu0 %v5224, 24
  %v6032 = vpop.permute.xlu0 %6031
  %6033 = vrot.lane.b32.xlu0 %v5225, 24
  %v6034 = vpop.permute.xlu0 %6033
  %6035 = vrot.lane.b32.xlu0 %v5226, 24
  %v6036 = vpop.permute.xlu0 %6035
  %6037 = vrot.lane.b32.xlu0 %v5227, 24
  %v6038 = vpop.permute.xlu0 %6037
  %6039 = vrot.lane.b32.xlu0 %v5228, 24
  %v6040 = vpop.permute.xlu0 %6039
  %6041 = vrot.lane.b32.xlu0 %v5915, 24
  %v6042 = vpop.permute.xlu0 %6041
  %6043 = vrot.lane.b32.xlu0 %v5916, 24
  %v6044 = vpop.permute.xlu0 %6043
  %v6045 = vpack.c.b16 %v5909, %v5908
  %v6046 = vpack.c.b16 %v5912, %v5911
  %v6048 = vshrl.u32 %v6045, 16
  %v6050 = vrot.slane %v6048, 4
  %v6051 = vshll.u32 %v6045, 16
  %v6053 = vrot.slane %v6051, 5
  %v6054 = vor.u32 %v6050, %v6053
  %v6056 = vshrl.u32 %v6046, 16
  %v6058 = vrot.slane %v6056, 4
  %v6059 = vshll.u32 %v6046, 16
  %v6061 = vrot.slane %v6059, 5
  %v6062 = vor.u32 %v6058, %v6061
  %6063 = vrot.lane.b32.xlu0 %v5276, 32
  %v6064 = vpop.permute.xlu0 %6063
  %6065 = vrot.lane.b32.xlu0 %v5284, 32
  %v6066 = vpop.permute.xlu0 %6065
  %6067 = vrot.lane.b32.xlu0 %v5292, 32
  %v6068 = vpop.permute.xlu0 %6067
  %6069 = vrot.lane.b32.xlu0 %v5300, 32
  %v6070 = vpop.permute.xlu0 %6069
  %6071 = vrot.lane.b32.xlu0 %v5308, 32
  %v6072 = vpop.permute.xlu0 %6071
  %6073 = vrot.lane.b32.xlu0 %v5316, 32
  %v6074 = vpop.permute.xlu0 %6073
  %6075 = vrot.lane.b32.xlu0 %v5324, 32
  %v6076 = vpop.permute.xlu0 %6075
  %6077 = vrot.lane.b32.xlu0 %v5332, 32
  %v6078 = vpop.permute.xlu0 %6077
  %6079 = vrot.lane.b32.xlu0 %v5340, 32
  %v6080 = vpop.permute.xlu0 %6079
  %6081 = vrot.lane.b32.xlu0 %v5348, 32
  %v6082 = vpop.permute.xlu0 %6081
  %6083 = vrot.lane.b32.xlu0 %v5356, 32
  %v6084 = vpop.permute.xlu0 %6083
  %6085 = vrot.lane.b32.xlu0 %v5364, 32
  %v6086 = vpop.permute.xlu0 %6085
  %6087 = vrot.lane.b32.xlu0 %v5372, 32
  %v6088 = vpop.permute.xlu0 %6087
  %6089 = vrot.lane.b32.xlu0 %v5380, 32
  %v6090 = vpop.permute.xlu0 %6089
  %6091 = vrot.lane.b32.xlu0 %v5388, 32
  %v6092 = vpop.permute.xlu0 %6091
  %6093 = vrot.lane.b32.xlu0 %v6054, 32
  %v6094 = vpop.permute.xlu0 %6093
  %6095 = vrot.lane.b32.xlu0 %v5404, 32
  %v6096 = vpop.permute.xlu0 %6095
  %6097 = vrot.lane.b32.xlu0 %v5412, 32
  %v6098 = vpop.permute.xlu0 %6097
  %6099 = vrot.lane.b32.xlu0 %v5420, 32
  %v6100 = vpop.permute.xlu0 %6099
  %6101 = vrot.lane.b32.xlu0 %v5428, 32
  %v6102 = vpop.permute.xlu0 %6101
  %6103 = vrot.lane.b32.xlu0 %v5436, 32
  %v6104 = vpop.permute.xlu0 %6103
  %6105 = vrot.lane.b32.xlu0 %v5444, 32
  %v6106 = vpop.permute.xlu0 %6105
  %6107 = vrot.lane.b32.xlu0 %v5452, 32
  %v6108 = vpop.permute.xlu0 %6107
  %6109 = vrot.lane.b32.xlu0 %v5460, 32
  %v6110 = vpop.permute.xlu0 %6109
  %6111 = vrot.lane.b32.xlu0 %v5468, 32
  %v6112 = vpop.permute.xlu0 %6111
  %6113 = vrot.lane.b32.xlu0 %v5476, 32
  %v6114 = vpop.permute.xlu0 %6113
  %6115 = vrot.lane.b32.xlu0 %v5484, 32
  %v6116 = vpop.permute.xlu0 %6115
  %6117 = vrot.lane.b32.xlu0 %v5492, 32
  %v6118 = vpop.permute.xlu0 %6117
  %6119 = vrot.lane.b32.xlu0 %v5500, 32
  %v6120 = vpop.permute.xlu0 %6119
  %6121 = vrot.lane.b32.xlu0 %v5508, 32
  %v6122 = vpop.permute.xlu0 %6121
  %6123 = vrot.lane.b32.xlu0 %v5516, 32
  %v6124 = vpop.permute.xlu0 %6123
  %6125 = vrot.lane.b32.xlu0 %v6062, 32
  %v6126 = vpop.permute.xlu0 %6125
  %v6129 = vunpack.c.l.b16 %v4953
  %v6130 = vunpack.c.l.b16 %v4971
  %v6131 = vpack.c.b16 %v6129, %v6129
  %v6132 = vpack.c.b16 %v6130, %v6130
  %v6133 = vrot.slane %v6045, 5
  %v6134 = vrot.slane %v6131, 5
  %v6135 = vsel %vm1484, %v6133, %v6134
  %v6136 = vrot.slane %v6046, 5
  %v6137 = vrot.slane %v6132, 5
  %v6138 = vsel %vm1484, %v6136, %v6137
  %6139 = vrot.lane.b32.xlu0 %v5680, 40
  %v6140 = vpop.permute.xlu0 %6139
  %6141 = vrot.lane.b32.xlu0 %v5682, 40
  %v6142 = vpop.permute.xlu0 %6141
  %6143 = vrot.lane.b32.xlu0 %v5683, 40
  %v6144 = vpop.permute.xlu0 %6143
  %6145 = vrot.lane.b32.xlu0 %v5685, 40
  %v6146 = vpop.permute.xlu0 %6145
  %6147 = vrot.lane.b32.xlu0 %v5686, 40
  %v6148 = vpop.permute.xlu0 %6147
  %6149 = vrot.lane.b32.xlu0 %v5688, 40
  %v6150 = vpop.permute.xlu0 %6149
  %6151 = vrot.lane.b32.xlu0 %v5689, 40
  %v6152 = vpop.permute.xlu0 %6151
  %6153 = vrot.lane.b32.xlu0 %v5691, 40
  %v6154 = vpop.permute.xlu0 %6153
  %6155 = vrot.lane.b32.xlu0 %v5692, 40
  %v6156 = vpop.permute.xlu0 %6155
  %6157 = vrot.lane.b32.xlu0 %v5694, 40
  %v6158 = vpop.permute.xlu0 %6157
  %6159 = vrot.lane.b32.xlu0 %v5695, 40
  %v6160 = vpop.permute.xlu0 %6159
  %6161 = vrot.lane.b32.xlu0 %v5697, 40
  %v6162 = vpop.permute.xlu0 %6161
  %6163 = vrot.lane.b32.xlu0 %v5698, 40
  %v6164 = vpop.permute.xlu0 %6163
  %6165 = vrot.lane.b32.xlu0 %v5700, 40
  %v6166 = vpop.permute.xlu0 %6165
  %6167 = vrot.lane.b32.xlu0 %v5701, 40
  %v6168 = vpop.permute.xlu0 %6167
  %6169 = vrot.lane.b32.xlu0 %v5703, 40
  %v6170 = vpop.permute.xlu0 %6169
  %6171 = vrot.lane.b32.xlu0 %v5704, 40
  %v6172 = vpop.permute.xlu0 %6171
  %6173 = vrot.lane.b32.xlu0 %v5706, 40
  %v6174 = vpop.permute.xlu0 %6173
  %6175 = vrot.lane.b32.xlu0 %v5707, 40
  %v6176 = vpop.permute.xlu0 %6175
  %6177 = vrot.lane.b32.xlu0 %v5709, 40
  %v6178 = vpop.permute.xlu0 %6177
  %6179 = vrot.lane.b32.xlu0 %v5710, 40
  %v6180 = vpop.permute.xlu0 %6179
  %6181 = vrot.lane.b32.xlu0 %v5712, 40
  %v6182 = vpop.permute.xlu0 %6181
  %6183 = vrot.lane.b32.xlu0 %v5713, 40
  %v6184 = vpop.permute.xlu0 %6183
  %6185 = vrot.lane.b32.xlu0 %v5715, 40
  %v6186 = vpop.permute.xlu0 %6185
  %6187 = vrot.lane.b32.xlu0 %v5716, 40
  %v6188 = vpop.permute.xlu0 %6187
  %6189 = vrot.lane.b32.xlu0 %v5718, 40
  %v6190 = vpop.permute.xlu0 %6189
  %6191 = vrot.lane.b32.xlu0 %v5719, 40
  %v6192 = vpop.permute.xlu0 %6191
  %6193 = vrot.lane.b32.xlu0 %v5721, 40
  %v6194 = vpop.permute.xlu0 %6193
  %6195 = vrot.lane.b32.xlu0 %v5722, 40
  %v6196 = vpop.permute.xlu0 %6195
  %6197 = vrot.lane.b32.xlu0 %v5724, 40
  %v6198 = vpop.permute.xlu0 %6197
  %6199 = vrot.lane.b32.xlu0 %v6133, 40
  %v6200 = vpop.permute.xlu0 %6199
  %6201 = vrot.lane.b32.xlu0 %v6135, 40
  %v6202 = vpop.permute.xlu0 %6201
  %6203 = vrot.lane.b32.xlu0 %v5728, 40
  %v6204 = vpop.permute.xlu0 %6203
  %6205 = vrot.lane.b32.xlu0 %v5730, 40
  %v6206 = vpop.permute.xlu0 %6205
  %6207 = vrot.lane.b32.xlu0 %v5731, 40
  %v6208 = vpop.permute.xlu0 %6207
  %6209 = vrot.lane.b32.xlu0 %v5733, 40
  %v6210 = vpop.permute.xlu0 %6209
  %6211 = vrot.lane.b32.xlu0 %v5734, 40
  %v6212 = vpop.permute.xlu0 %6211
  %6213 = vrot.lane.b32.xlu0 %v5736, 40
  %v6214 = vpop.permute.xlu0 %6213
  %6215 = vrot.lane.b32.xlu0 %v5737, 40
  %v6216 = vpop.permute.xlu0 %6215
  %6217 = vrot.lane.b32.xlu0 %v5739, 40
  %v6218 = vpop.permute.xlu0 %6217
  %6219 = vrot.lane.b32.xlu0 %v5740, 40
  %v6220 = vpop.permute.xlu0 %6219
  %6221 = vrot.lane.b32.xlu0 %v5742, 40
  %v6222 = vpop.permute.xlu0 %6221
  %6223 = vrot.lane.b32.xlu0 %v5743, 40
  %v6224 = vpop.permute.xlu0 %6223
  %6225 = vrot.lane.b32.xlu0 %v5745, 40
  %v6226 = vpop.permute.xlu0 %6225
  %6227 = vrot.lane.b32.xlu0 %v5746, 40
  %v6228 = vpop.permute.xlu0 %6227
  %6229 = vrot.lane.b32.xlu0 %v5748, 40
  %v6230 = vpop.permute.xlu0 %6229
  %6231 = vrot.lane.b32.xlu0 %v5749, 40
  %v6232 = vpop.permute.xlu0 %6231
  %6233 = vrot.lane.b32.xlu0 %v5751, 40
  %v6234 = vpop.permute.xlu0 %6233
  %6235 = vrot.lane.b32.xlu0 %v5752, 40
  %v6236 = vpop.permute.xlu0 %6235
  %6237 = vrot.lane.b32.xlu0 %v5754, 40
  %v6238 = vpop.permute.xlu0 %6237
  %6239 = vrot.lane.b32.xlu0 %v5755, 40
  %v6240 = vpop.permute.xlu0 %6239
  %6241 = vrot.lane.b32.xlu0 %v5757, 40
  %v6242 = vpop.permute.xlu0 %6241
  %6243 = vrot.lane.b32.xlu0 %v5758, 40
  %v6244 = vpop.permute.xlu0 %6243
  %6245 = vrot.lane.b32.xlu0 %v5760, 40
  %v6246 = vpop.permute.xlu0 %6245
  %6247 = vrot.lane.b32.xlu0 %v5761, 40
  %v6248 = vpop.permute.xlu0 %6247
  %6249 = vrot.lane.b32.xlu0 %v5763, 40
  %v6250 = vpop.permute.xlu0 %6249
  %6251 = vrot.lane.b32.xlu0 %v5764, 40
  %v6252 = vpop.permute.xlu0 %6251
  %6253 = vrot.lane.b32.xlu0 %v5766, 40
  %v6254 = vpop.permute.xlu0 %6253
  %6255 = vrot.lane.b32.xlu0 %v5767, 40
  %v6256 = vpop.permute.xlu0 %6255
  %6257 = vrot.lane.b32.xlu0 %v5769, 40
  %v6258 = vpop.permute.xlu0 %6257
  %6259 = vrot.lane.b32.xlu0 %v5770, 40
  %v6260 = vpop.permute.xlu0 %6259
  %6261 = vrot.lane.b32.xlu0 %v5772, 40
  %v6262 = vpop.permute.xlu0 %6261
  %6263 = vrot.lane.b32.xlu0 %v6136, 40
  %v6264 = vpop.permute.xlu0 %6263
  %6265 = vrot.lane.b32.xlu0 %v6138, 40
  %v6266 = vpop.permute.xlu0 %6265
  %v6273 = vunpack.c.l.b16 %v4880
  %v6274 = vunpack.c.l.b16 %v4881
  %v6275 = vunpack.c.l.b16 %v4882
  %v6276 = vunpack.c.l.b16 %v4934
  %v6277 = vunpack.c.l.b16 %v4935
  %v6278 = vunpack.c.l.b16 %v4936
  %v6279 = vpack.c.b16 %v6274, %v6273
  %v6280 = vpack.c.b16 %v6275, %v6275
  %v6281 = vpack.c.b16 %v6277, %v6276
  %v6282 = vpack.c.b16 %v6278, %v6278
  %6283 = vrot.lane.b32.xlu0 %v5169, 48
  %v6284 = vpop.permute.xlu0 %6283
  %6285 = vrot.lane.b32.xlu0 %v5170, 48
  %v6286 = vpop.permute.xlu0 %6285
  %6287 = vrot.lane.b32.xlu0 %v5171, 48
  %v6288 = vpop.permute.xlu0 %6287
  %6289 = vrot.lane.b32.xlu0 %v5172, 48
  %v6290 = vpop.permute.xlu0 %6289
  %6291 = vrot.lane.b32.xlu0 %v5173, 48
  %v6292 = vpop.permute.xlu0 %6291
  %6293 = vrot.lane.b32.xlu0 %v5174, 48
  %v6294 = vpop.permute.xlu0 %6293
  %6295 = vrot.lane.b32.xlu0 %v5175, 48
  %v6296 = vpop.permute.xlu0 %6295
  %6297 = vrot.lane.b32.xlu0 %v5176, 48
  %v6298 = vpop.permute.xlu0 %6297
  %6299 = vrot.lane.b32.xlu0 %v5177, 48
  %v6300 = vpop.permute.xlu0 %6299
  %6301 = vrot.lane.b32.xlu0 %v5178, 48
  %v6302 = vpop.permute.xlu0 %6301
  %6303 = vrot.lane.b32.xlu0 %v5179, 48
  %v6304 = vpop.permute.xlu0 %6303
  %6305 = vrot.lane.b32.xlu0 %v5180, 48
  %v6306 = vpop.permute.xlu0 %6305
  %6307 = vrot.lane.b32.xlu0 %v5181, 48
  %v6308 = vpop.permute.xlu0 %6307
  %6309 = vrot.lane.b32.xlu0 %v5182, 48
  %v6310 = vpop.permute.xlu0 %6309
  %6311 = vrot.lane.b32.xlu0 %v5183, 48
  %v6312 = vpop.permute.xlu0 %6311
  %6313 = vrot.lane.b32.xlu0 %v5184, 48
  %v6314 = vpop.permute.xlu0 %6313
  %6315 = vrot.lane.b32.xlu0 %v5185, 48
  %v6316 = vpop.permute.xlu0 %6315
  %6317 = vrot.lane.b32.xlu0 %v5186, 48
  %v6318 = vpop.permute.xlu0 %6317
  %6319 = vrot.lane.b32.xlu0 %v5187, 48
  %v6320 = vpop.permute.xlu0 %6319
  %6321 = vrot.lane.b32.xlu0 %v5188, 48
  %v6322 = vpop.permute.xlu0 %6321
  %6323 = vrot.lane.b32.xlu0 %v5189, 48
  %v6324 = vpop.permute.xlu0 %6323
  %6325 = vrot.lane.b32.xlu0 %v5190, 48
  %v6326 = vpop.permute.xlu0 %6325
  %6327 = vrot.lane.b32.xlu0 %v5191, 48
  %v6328 = vpop.permute.xlu0 %6327
  %6329 = vrot.lane.b32.xlu0 %v5192, 48
  %v6330 = vpop.permute.xlu0 %6329
  %6331 = vrot.lane.b32.xlu0 %v5193, 48
  %v6332 = vpop.permute.xlu0 %6331
  %6333 = vrot.lane.b32.xlu0 %v5194, 48
  %v6334 = vpop.permute.xlu0 %6333
  %6335 = vrot.lane.b32.xlu0 %v5195, 48
  %v6336 = vpop.permute.xlu0 %6335
  %6337 = vrot.lane.b32.xlu0 %v5196, 48
  %v6338 = vpop.permute.xlu0 %6337
  %6339 = vrot.lane.b32.xlu0 %v5913, 48
  %v6340 = vpop.permute.xlu0 %6339
  %6341 = vrot.lane.b32.xlu0 %v5914, 48
  %v6342 = vpop.permute.xlu0 %6341
  %6343 = vrot.lane.b32.xlu0 %v6279, 48
  %v6344 = vpop.permute.xlu0 %6343
  %6345 = vrot.lane.b32.xlu0 %v6280, 48
  %v6346 = vpop.permute.xlu0 %6345
  %6347 = vrot.lane.b32.xlu0 %v5201, 48
  %v6348 = vpop.permute.xlu0 %6347
  %6349 = vrot.lane.b32.xlu0 %v5202, 48
  %v6350 = vpop.permute.xlu0 %6349
  %6351 = vrot.lane.b32.xlu0 %v5203, 48
  %v6352 = vpop.permute.xlu0 %6351
  %6353 = vrot.lane.b32.xlu0 %v5204, 48
  %v6354 = vpop.permute.xlu0 %6353
  %6355 = vrot.lane.b32.xlu0 %v5205, 48
  %v6356 = vpop.permute.xlu0 %6355
  %6357 = vrot.lane.b32.xlu0 %v5206, 48
  %v6358 = vpop.permute.xlu0 %6357
  %6359 = vrot.lane.b32.xlu0 %v5207, 48
  %v6360 = vpop.permute.xlu0 %6359
  %6361 = vrot.lane.b32.xlu0 %v5208, 48
  %v6362 = vpop.permute.xlu0 %6361
  %6363 = vrot.lane.b32.xlu0 %v5209, 48
  %v6364 = vpop.permute.xlu0 %6363
  %6365 = vrot.lane.b32.xlu0 %v5210, 48
  %v6366 = vpop.permute.xlu0 %6365
  %6367 = vrot.lane.b32.xlu0 %v5211, 48
  %v6368 = vpop.permute.xlu0 %6367
  %6369 = vrot.lane.b32.xlu0 %v5212, 48
  %v6370 = vpop.permute.xlu0 %6369
  %6371 = vrot.lane.b32.xlu0 %v5213, 48
  %v6372 = vpop.permute.xlu0 %6371
  %6373 = vrot.lane.b32.xlu0 %v5214, 48
  %v6374 = vpop.permute.xlu0 %6373
  %6375 = vrot.lane.b32.xlu0 %v5215, 48
  %v6376 = vpop.permute.xlu0 %6375
  %6377 = vrot.lane.b32.xlu0 %v5216, 48
  %v6378 = vpop.permute.xlu0 %6377
  %6379 = vrot.lane.b32.xlu0 %v5217, 48
  %v6380 = vpop.permute.xlu0 %6379
  %6381 = vrot.lane.b32.xlu0 %v5218, 48
  %v6382 = vpop.permute.xlu0 %6381
  %6383 = vrot.lane.b32.xlu0 %v5219, 48
  %v6384 = vpop.permute.xlu0 %6383
  %6385 = vrot.lane.b32.xlu0 %v5220, 48
  %v6386 = vpop.permute.xlu0 %6385
  %6387 = vrot.lane.b32.xlu0 %v5221, 48
  %v6388 = vpop.permute.xlu0 %6387
  %6389 = vrot.lane.b32.xlu0 %v5222, 48
  %v6390 = vpop.permute.xlu0 %6389
  %6391 = vrot.lane.b32.xlu0 %v5223, 48
  %v6392 = vpop.permute.xlu0 %6391
  %6393 = vrot.lane.b32.xlu0 %v5224, 48
  %v6394 = vpop.permute.xlu0 %6393
  %6395 = vrot.lane.b32.xlu0 %v5225, 48
  %v6396 = vpop.permute.xlu0 %6395
  %6397 = vrot.lane.b32.xlu0 %v5226, 48
  %v6398 = vpop.permute.xlu0 %6397
  %6399 = vrot.lane.b32.xlu0 %v5227, 48
  %v6400 = vpop.permute.xlu0 %6399
  %6401 = vrot.lane.b32.xlu0 %v5228, 48
  %v6402 = vpop.permute.xlu0 %6401
  %6403 = vrot.lane.b32.xlu0 %v5915, 48
  %v6404 = vpop.permute.xlu0 %6403
  %6405 = vrot.lane.b32.xlu0 %v5916, 48
  %v6406 = vpop.permute.xlu0 %6405
  %6407 = vrot.lane.b32.xlu0 %v6281, 48
  %v6408 = vpop.permute.xlu0 %6407
  %6409 = vrot.lane.b32.xlu0 %v6282, 48
  %v6410 = vpop.permute.xlu0 %6409
  %v6411 = vpack.c.b16 %v6275, %v6274
  %v6412 = vpack.c.b16 %v6278, %v6277
  %v6414 = vshrl.u32 %v6411, 16
  %v6416 = vrot.slane %v6414, 4
  %v6417 = vshll.u32 %v6411, 16
  %v6419 = vrot.slane %v6417, 5
  %v6420 = vor.u32 %v6416, %v6419
  %v6422 = vshrl.u32 %v6412, 16
  %v6424 = vrot.slane %v6422, 4
  %v6425 = vshll.u32 %v6412, 16
  %v6427 = vrot.slane %v6425, 5
  %v6428 = vor.u32 %v6424, %v6427
  %6429 = vrot.lane.b32.xlu0 %v5284, 56
  %v6430 = vpop.permute.xlu0 %6429
  %6431 = vrot.lane.b32.xlu0 %v5292, 56
  %v6432 = vpop.permute.xlu0 %6431
  %6433 = vrot.lane.b32.xlu0 %v5300, 56
  %v6434 = vpop.permute.xlu0 %6433
  %6435 = vrot.lane.b32.xlu0 %v5308, 56
  %v6436 = vpop.permute.xlu0 %6435
  %6437 = vrot.lane.b32.xlu0 %v5316, 56
  %v6438 = vpop.permute.xlu0 %6437
  %6439 = vrot.lane.b32.xlu0 %v5324, 56
  %v6440 = vpop.permute.xlu0 %6439
  %6441 = vrot.lane.b32.xlu0 %v5332, 56
  %v6442 = vpop.permute.xlu0 %6441
  %6443 = vrot.lane.b32.xlu0 %v5340, 56
  %v6444 = vpop.permute.xlu0 %6443
  %6445 = vrot.lane.b32.xlu0 %v5348, 56
  %v6446 = vpop.permute.xlu0 %6445
  %6447 = vrot.lane.b32.xlu0 %v5356, 56
  %v6448 = vpop.permute.xlu0 %6447
  %6449 = vrot.lane.b32.xlu0 %v5364, 56
  %v6450 = vpop.permute.xlu0 %6449
  %6451 = vrot.lane.b32.xlu0 %v5372, 56
  %v6452 = vpop.permute.xlu0 %6451
  %6453 = vrot.lane.b32.xlu0 %v5380, 56
  %v6454 = vpop.permute.xlu0 %6453
  %6455 = vrot.lane.b32.xlu0 %v5388, 56
  %v6456 = vpop.permute.xlu0 %6455
  %6457 = vrot.lane.b32.xlu0 %v6054, 56
  %v6458 = vpop.permute.xlu0 %6457
  %6459 = vrot.lane.b32.xlu0 %v6420, 56
  %v6460 = vpop.permute.xlu0 %6459
  %6461 = vrot.lane.b32.xlu0 %v5412, 56
  %v6462 = vpop.permute.xlu0 %6461
  %6463 = vrot.lane.b32.xlu0 %v5420, 56
  %v6464 = vpop.permute.xlu0 %6463
  %6465 = vrot.lane.b32.xlu0 %v5428, 56
  %v6466 = vpop.permute.xlu0 %6465
  %6467 = vrot.lane.b32.xlu0 %v5436, 56
  %v6468 = vpop.permute.xlu0 %6467
  %6469 = vrot.lane.b32.xlu0 %v5444, 56
  %v6470 = vpop.permute.xlu0 %6469
  %6471 = vrot.lane.b32.xlu0 %v5452, 56
  %v6472 = vpop.permute.xlu0 %6471
  %6473 = vrot.lane.b32.xlu0 %v5460, 56
  %v6474 = vpop.permute.xlu0 %6473
  %6475 = vrot.lane.b32.xlu0 %v5468, 56
  %v6476 = vpop.permute.xlu0 %6475
  %6477 = vrot.lane.b32.xlu0 %v5476, 56
  %v6478 = vpop.permute.xlu0 %6477
  %6479 = vrot.lane.b32.xlu0 %v5484, 56
  %v6480 = vpop.permute.xlu0 %6479
  %6481 = vrot.lane.b32.xlu0 %v5492, 56
  %v6482 = vpop.permute.xlu0 %6481
  %6483 = vrot.lane.b32.xlu0 %v5500, 56
  %v6484 = vpop.permute.xlu0 %6483
  %6485 = vrot.lane.b32.xlu0 %v5508, 56
  %v6486 = vpop.permute.xlu0 %6485
  %6487 = vrot.lane.b32.xlu0 %v5516, 56
  %v6488 = vpop.permute.xlu0 %6487
  %6489 = vrot.lane.b32.xlu0 %v6062, 56
  %v6490 = vpop.permute.xlu0 %6489
  %6491 = vrot.lane.b32.xlu0 %v6428, 56
  %v6492 = vpop.permute.xlu0 %6491
  %v6495 = vunpack.c.l.b16 %v4954
  %v6496 = vunpack.c.l.b16 %v4972
  %v6497 = vpack.c.b16 %v6495, %v6495
  %v6498 = vpack.c.b16 %v6496, %v6496
  %v6499 = vrot.slane %v6411, 5
  %v6500 = vrot.slane %v6497, 5
  %v6501 = vsel %vm1484, %v6499, %v6500
  %v6502 = vrot.slane %v6412, 5
  %v6503 = vrot.slane %v6498, 5
  %v6504 = vsel %vm1484, %v6502, %v6503
  %6505 = vrot.lane.b32.xlu0 %v5683, 64
  %v6506 = vpop.permute.xlu0 %6505
  %6507 = vrot.lane.b32.xlu0 %v5685, 64
  %v6508 = vpop.permute.xlu0 %6507
  %6509 = vrot.lane.b32.xlu0 %v5686, 64
  %v6510 = vpop.permute.xlu0 %6509
  %6511 = vrot.lane.b32.xlu0 %v5688, 64
  %v6512 = vpop.permute.xlu0 %6511
  %6513 = vrot.lane.b32.xlu0 %v5689, 64
  %v6514 = vpop.permute.xlu0 %6513
  %6515 = vrot.lane.b32.xlu0 %v5691, 64
  %v6516 = vpop.permute.xlu0 %6515
  %6517 = vrot.lane.b32.xlu0 %v5692, 64
  %v6518 = vpop.permute.xlu0 %6517
  %6519 = vrot.lane.b32.xlu0 %v5694, 64
  %v6520 = vpop.permute.xlu0 %6519
  %6521 = vrot.lane.b32.xlu0 %v5695, 64
  %v6522 = vpop.permute.xlu0 %6521
  %6523 = vrot.lane.b32.xlu0 %v5697, 64
  %v6524 = vpop.permute.xlu0 %6523
  %6525 = vrot.lane.b32.xlu0 %v5698, 64
  %v6526 = vpop.permute.xlu0 %6525
  %6527 = vrot.lane.b32.xlu0 %v5700, 64
  %v6528 = vpop.permute.xlu0 %6527
  %6529 = vrot.lane.b32.xlu0 %v5701, 64
  %v6530 = vpop.permute.xlu0 %6529
  %6531 = vrot.lane.b32.xlu0 %v5703, 64
  %v6532 = vpop.permute.xlu0 %6531
  %6533 = vrot.lane.b32.xlu0 %v5704, 64
  %v6534 = vpop.permute.xlu0 %6533
  %6535 = vrot.lane.b32.xlu0 %v5706, 64
  %v6536 = vpop.permute.xlu0 %6535
  %6537 = vrot.lane.b32.xlu0 %v5707, 64
  %v6538 = vpop.permute.xlu0 %6537
  %6539 = vrot.lane.b32.xlu0 %v5709, 64
  %v6540 = vpop.permute.xlu0 %6539
  %6541 = vrot.lane.b32.xlu0 %v5710, 64
  %v6542 = vpop.permute.xlu0 %6541
  %6543 = vrot.lane.b32.xlu0 %v5712, 64
  %v6544 = vpop.permute.xlu0 %6543
  %6545 = vrot.lane.b32.xlu0 %v5713, 64
  %v6546 = vpop.permute.xlu0 %6545
  %6547 = vrot.lane.b32.xlu0 %v5715, 64
  %v6548 = vpop.permute.xlu0 %6547
  %6549 = vrot.lane.b32.xlu0 %v5716, 64
  %v6550 = vpop.permute.xlu0 %6549
  %6551 = vrot.lane.b32.xlu0 %v5718, 64
  %v6552 = vpop.permute.xlu0 %6551
  %6553 = vrot.lane.b32.xlu0 %v5719, 64
  %v6554 = vpop.permute.xlu0 %6553
  %6555 = vrot.lane.b32.xlu0 %v5721, 64
  %v6556 = vpop.permute.xlu0 %6555
  %6557 = vrot.lane.b32.xlu0 %v5722, 64
  %v6558 = vpop.permute.xlu0 %6557
  %6559 = vrot.lane.b32.xlu0 %v5724, 64
  %v6560 = vpop.permute.xlu0 %6559
  %6561 = vrot.lane.b32.xlu0 %v6133, 64
  %v6562 = vpop.permute.xlu0 %6561
  %6563 = vrot.lane.b32.xlu0 %v6135, 64
  %v6564 = vpop.permute.xlu0 %6563
  %6565 = vrot.lane.b32.xlu0 %v6499, 64
  %v6566 = vpop.permute.xlu0 %6565
  %6567 = vrot.lane.b32.xlu0 %v6501, 64
  %v6568 = vpop.permute.xlu0 %6567
  %6569 = vrot.lane.b32.xlu0 %v5731, 64
  %v6570 = vpop.permute.xlu0 %6569
  %6571 = vrot.lane.b32.xlu0 %v5733, 64
  %v6572 = vpop.permute.xlu0 %6571
  %6573 = vrot.lane.b32.xlu0 %v5734, 64
  %v6574 = vpop.permute.xlu0 %6573
  %6575 = vrot.lane.b32.xlu0 %v5736, 64
  %v6576 = vpop.permute.xlu0 %6575
  %6577 = vrot.lane.b32.xlu0 %v5737, 64
  %v6578 = vpop.permute.xlu0 %6577
  %6579 = vrot.lane.b32.xlu0 %v5739, 64
  %v6580 = vpop.permute.xlu0 %6579
  %6581 = vrot.lane.b32.xlu0 %v5740, 64
  %v6582 = vpop.permute.xlu0 %6581
  %6583 = vrot.lane.b32.xlu0 %v5742, 64
  %v6584 = vpop.permute.xlu0 %6583
  %6585 = vrot.lane.b32.xlu0 %v5743, 64
  %v6586 = vpop.permute.xlu0 %6585
  %6587 = vrot.lane.b32.xlu0 %v5745, 64
  %v6588 = vpop.permute.xlu0 %6587
  %6589 = vrot.lane.b32.xlu0 %v5746, 64
  %v6590 = vpop.permute.xlu0 %6589
  %6591 = vrot.lane.b32.xlu0 %v5748, 64
  %v6592 = vpop.permute.xlu0 %6591
  %6593 = vrot.lane.b32.xlu0 %v5749, 64
  %v6594 = vpop.permute.xlu0 %6593
  %6595 = vrot.lane.b32.xlu0 %v5751, 64
  %v6596 = vpop.permute.xlu0 %6595
  %6597 = vrot.lane.b32.xlu0 %v5752, 64
  %v6598 = vpop.permute.xlu0 %6597
  %6599 = vrot.lane.b32.xlu0 %v5754, 64
  %v6600 = vpop.permute.xlu0 %6599
  %6601 = vrot.lane.b32.xlu0 %v5755, 64
  %v6602 = vpop.permute.xlu0 %6601
  %6603 = vrot.lane.b32.xlu0 %v5757, 64
  %v6604 = vpop.permute.xlu0 %6603
  %6605 = vrot.lane.b32.xlu0 %v5758, 64
  %v6606 = vpop.permute.xlu0 %6605
  %6607 = vrot.lane.b32.xlu0 %v5760, 64
  %v6608 = vpop.permute.xlu0 %6607
  %6609 = vrot.lane.b32.xlu0 %v5761, 64
  %v6610 = vpop.permute.xlu0 %6609
  %6611 = vrot.lane.b32.xlu0 %v5763, 64
  %v6612 = vpop.permute.xlu0 %6611
  %6613 = vrot.lane.b32.xlu0 %v5764, 64
  %v6614 = vpop.permute.xlu0 %6613
  %6615 = vrot.lane.b32.xlu0 %v5766, 64
  %v6616 = vpop.permute.xlu0 %6615
  %6617 = vrot.lane.b32.xlu0 %v5767, 64
  %v6618 = vpop.permute.xlu0 %6617
  %6619 = vrot.lane.b32.xlu0 %v5769, 64
  %v6620 = vpop.permute.xlu0 %6619
  %6621 = vrot.lane.b32.xlu0 %v5770, 64
  %v6622 = vpop.permute.xlu0 %6621
  %6623 = vrot.lane.b32.xlu0 %v5772, 64
  %v6624 = vpop.permute.xlu0 %6623
  %6625 = vrot.lane.b32.xlu0 %v6136, 64
  %v6626 = vpop.permute.xlu0 %6625
  %6627 = vrot.lane.b32.xlu0 %v6138, 64
  %v6628 = vpop.permute.xlu0 %6627
  %6629 = vrot.lane.b32.xlu0 %v6502, 64
  %v6630 = vpop.permute.xlu0 %6629
  %6631 = vrot.lane.b32.xlu0 %v6504, 64
  %v6632 = vpop.permute.xlu0 %6631
  %v6635 = vsel %vm2602, %v5165, %v5518
  %v6637 = vsel %vm2602, %v5166, %v5518
  %v6640 = vsel %vm2602, %v5167, %v5520
  %v6642 = vsel %vm2602, %v5168, %v5520
  %v6645 = vsel %vm2602, %v5169, %v5522
  %v6647 = vsel %vm2602, %v5170, %v5522
  %v6650 = vsel %vm2602, %v5171, %v5524
  %v6652 = vsel %vm2602, %v5172, %v5524
  %v6655 = vsel %vm2602, %v5173, %v5526
  %v6657 = vsel %vm2602, %v5174, %v5526
  %v6660 = vsel %vm2602, %v5175, %v5528
  %v6662 = vsel %vm2602, %v5176, %v5528
  %v6665 = vsel %vm2602, %v5177, %v5530
  %v6667 = vsel %vm2602, %v5178, %v5530
  %v6670 = vsel %vm2602, %v5179, %v5532
  %v6672 = vsel %vm2602, %v5180, %v5532
  %v6675 = vsel %vm2602, %v5181, %v5534
  %v6677 = vsel %vm2602, %v5182, %v5534
  %v6680 = vsel %vm2602, %v5183, %v5536
  %v6682 = vsel %vm2602, %v5184, %v5536
  %v6685 = vsel %vm2602, %v5185, %v5538
  %v6687 = vsel %vm2602, %v5186, %v5538
  %v6690 = vsel %vm2602, %v5187, %v5540
  %v6692 = vsel %vm2602, %v5188, %v5540
  %v6695 = vsel %vm2602, %v5189, %v5542
  %v6697 = vsel %vm2602, %v5190, %v5542
  %v6700 = vsel %vm2602, %v5191, %v5544
  %v6702 = vsel %vm2602, %v5192, %v5544
  %v6705 = vsel %vm2602, %v5193, %v5546
  %v6707 = vsel %vm2602, %v5194, %v5546
  %v6710 = vsel %vm2602, %v5195, %v5548
  %v6712 = vsel %vm2602, %v5196, %v5548
  %v6715 = vsel %vm2602, %v5197, %v5550
  %v6717 = vsel %vm2602, %v5198, %v5550
  %v6720 = vsel %vm2602, %v5199, %v5552
  %v6722 = vsel %vm2602, %v5200, %v5552
  %v6725 = vsel %vm2602, %v5201, %v5554
  %v6727 = vsel %vm2602, %v5202, %v5554
  %v6730 = vsel %vm2602, %v5203, %v5556
  %v6732 = vsel %vm2602, %v5204, %v5556
  %v6735 = vsel %vm2602, %v5205, %v5558
  %v6737 = vsel %vm2602, %v5206, %v5558
  %v6740 = vsel %vm2602, %v5207, %v5560
  %v6742 = vsel %vm2602, %v5208, %v5560
  %v6745 = vsel %vm2602, %v5209, %v5562
  %v6747 = vsel %vm2602, %v5210, %v5562
  %v6750 = vsel %vm2602, %v5211, %v5564
  %v6752 = vsel %vm2602, %v5212, %v5564
  %v6755 = vsel %vm2602, %v5213, %v5566
  %v6757 = vsel %vm2602, %v5214, %v5566
  %v6760 = vsel %vm2602, %v5215, %v5568
  %v6762 = vsel %vm2602, %v5216, %v5568
  %v6765 = vsel %vm2602, %v5217, %v5570
  %v6767 = vsel %vm2602, %v5218, %v5570
  %v6770 = vsel %vm2602, %v5219, %v5572
  %v6772 = vsel %vm2602, %v5220, %v5572
  %v6775 = vsel %vm2602, %v5221, %v5574
  %v6777 = vsel %vm2602, %v5222, %v5574
  %v6780 = vsel %vm2602, %v5223, %v5576
  %v6782 = vsel %vm2602, %v5224, %v5576
  %v6785 = vsel %vm2602, %v5225, %v5578
  %v6787 = vsel %vm2602, %v5226, %v5578
  %v6790 = vsel %vm2602, %v5227, %v5580
  %v6792 = vsel %vm2602, %v5228, %v5580
  %v6794 = vsel %vm2860, %v6635, %v5774
  %v6796 = vsel %vm2860, %v6637, %v5776
  %v6798 = vsel %vm2860, %v6640, %v5778
  %v6800 = vsel %vm2860, %v6642, %v5780
  %v6802 = vsel %vm2860, %v6645, %v5782
  %v6804 = vsel %vm2860, %v6647, %v5784
  %v6806 = vsel %vm2860, %v6650, %v5786
  %v6808 = vsel %vm2860, %v6652, %v5788
  %v6810 = vsel %vm2860, %v6655, %v5790
  %v6812 = vsel %vm2860, %v6657, %v5792
  %v6814 = vsel %vm2860, %v6660, %v5794
  %v6816 = vsel %vm2860, %v6662, %v5796
  %v6818 = vsel %vm2860, %v6665, %v5798
  %v6820 = vsel %vm2860, %v6667, %v5800
  %v6822 = vsel %vm2860, %v6670, %v5802
  %v6824 = vsel %vm2860, %v6672, %v5804
  %v6826 = vsel %vm2860, %v6675, %v5806
  %v6828 = vsel %vm2860, %v6677, %v5808
  %v6830 = vsel %vm2860, %v6680, %v5810
  %v6832 = vsel %vm2860, %v6682, %v5812
  %v6834 = vsel %vm2860, %v6685, %v5814
  %v6836 = vsel %vm2860, %v6687, %v5816
  %v6838 = vsel %vm2860, %v6690, %v5818
  %v6840 = vsel %vm2860, %v6692, %v5820
  %v6842 = vsel %vm2860, %v6695, %v5822
  %v6844 = vsel %vm2860, %v6697, %v5824
  %v6846 = vsel %vm2860, %v6700, %v5826
  %v6848 = vsel %vm2860, %v6702, %v5828
  %v6850 = vsel %vm2860, %v6705, %v5830
  %v6852 = vsel %vm2860, %v6707, %v5832
  %v6854 = vsel %vm2860, %v6710, %v5834
  %v6856 = vsel %vm2860, %v6712, %v5836
  %v6858 = vsel %vm2860, %v6715, %v5838
  %v6860 = vsel %vm2860, %v6717, %v5840
  %v6862 = vsel %vm2860, %v6720, %v5842
  %v6864 = vsel %vm2860, %v6722, %v5844
  %v6866 = vsel %vm2860, %v6725, %v5846
  %v6868 = vsel %vm2860, %v6727, %v5848
  %v6870 = vsel %vm2860, %v6730, %v5850
  %v6872 = vsel %vm2860, %v6732, %v5852
  %v6874 = vsel %vm2860, %v6735, %v5854
  %v6876 = vsel %vm2860, %v6737, %v5856
  %v6878 = vsel %vm2860, %v6740, %v5858
  %v6880 = vsel %vm2860, %v6742, %v5860
  %v6882 = vsel %vm2860, %v6745, %v5862
  %v6884 = vsel %vm2860, %v6747, %v5864
  %v6886 = vsel %vm2860, %v6750, %v5866
  %v6888 = vsel %vm2860, %v6752, %v5868
  %v6890 = vsel %vm2860, %v6755, %v5870
  %v6892 = vsel %vm2860, %v6757, %v5872
  %v6894 = vsel %vm2860, %v6760, %v5874
  %v6896 = vsel %vm2860, %v6762, %v5876
  %v6898 = vsel %vm2860, %v6765, %v5878
  %v6900 = vsel %vm2860, %v6767, %v5880
  %v6902 = vsel %vm2860, %v6770, %v5882
  %v6904 = vsel %vm2860, %v6772, %v5884
  %v6906 = vsel %vm2860, %v6775, %v5886
  %v6908 = vsel %vm2860, %v6777, %v5888
  %v6910 = vsel %vm2860, %v6780, %v5890
  %v6912 = vsel %vm2860, %v6782, %v5892
  %v6914 = vsel %vm2860, %v6785, %v5894
  %v6916 = vsel %vm2860, %v6787, %v5896
  %v6918 = vsel %vm2860, %v6790, %v5898
  %v6920 = vsel %vm2860, %v6792, %v5900
  %v6922 = vsel %vm3086, %v6794, %v5918
  %v6924 = vsel %vm3086, %v6796, %v5920
  %v6926 = vsel %vm3086, %v6798, %v5922
  %v6928 = vsel %vm3086, %v6800, %v5924
  %v6930 = vsel %vm3086, %v6802, %v5926
  %v6932 = vsel %vm3086, %v6804, %v5928
  %v6934 = vsel %vm3086, %v6806, %v5930
  %v6936 = vsel %vm3086, %v6808, %v5932
  %v6938 = vsel %vm3086, %v6810, %v5934
  %v6940 = vsel %vm3086, %v6812, %v5936
  %v6942 = vsel %vm3086, %v6814, %v5938
  %v6944 = vsel %vm3086, %v6816, %v5940
  %v6946 = vsel %vm3086, %v6818, %v5942
  %v6948 = vsel %vm3086, %v6820, %v5944
  %v6950 = vsel %vm3086, %v6822, %v5946
  %v6952 = vsel %vm3086, %v6824, %v5948
  %v6954 = vsel %vm3086, %v6826, %v5950
  %v6956 = vsel %vm3086, %v6828, %v5952
  %v6958 = vsel %vm3086, %v6830, %v5954
  %v6960 = vsel %vm3086, %v6832, %v5956
  %v6962 = vsel %vm3086, %v6834, %v5958
  %v6964 = vsel %vm3086, %v6836, %v5960
  %v6966 = vsel %vm3086, %v6838, %v5962
  %v6968 = vsel %vm3086, %v6840, %v5964
  %v6970 = vsel %vm3086, %v6842, %v5966
  %v6972 = vsel %vm3086, %v6844, %v5968
  %v6974 = vsel %vm3086, %v6846, %v5970
  %v6976 = vsel %vm3086, %v6848, %v5972
  %v6978 = vsel %vm3086, %v6850, %v5974
  %v6980 = vsel %vm3086, %v6852, %v5976
  %v6982 = vsel %vm3086, %v6854, %v5978
  %v6984 = vsel %vm3086, %v6856, %v5980
  %v6986 = vsel %vm3086, %v6858, %v5982
  %v6988 = vsel %vm3086, %v6860, %v5984
  %v6990 = vsel %vm3086, %v6862, %v5986
  %v6992 = vsel %vm3086, %v6864, %v5988
  %v6994 = vsel %vm3086, %v6866, %v5990
  %v6996 = vsel %vm3086, %v6868, %v5992
  %v6998 = vsel %vm3086, %v6870, %v5994
  %v7000 = vsel %vm3086, %v6872, %v5996
  %v7002 = vsel %vm3086, %v6874, %v5998
  %v7004 = vsel %vm3086, %v6876, %v6000
  %v7006 = vsel %vm3086, %v6878, %v6002
  %v7008 = vsel %vm3086, %v6880, %v6004
  %v7010 = vsel %vm3086, %v6882, %v6006
  %v7012 = vsel %vm3086, %v6884, %v6008
  %v7014 = vsel %vm3086, %v6886, %v6010
  %v7016 = vsel %vm3086, %v6888, %v6012
  %v7018 = vsel %vm3086, %v6890, %v6014
  %v7020 = vsel %vm3086, %v6892, %v6016
  %v7022 = vsel %vm3086, %v6894, %v6018
  %v7024 = vsel %vm3086, %v6896, %v6020
  %v7026 = vsel %vm3086, %v6898, %v6022
  %v7028 = vsel %vm3086, %v6900, %v6024
  %v7030 = vsel %vm3086, %v6902, %v6026
  %v7032 = vsel %vm3086, %v6904, %v6028
  %v7034 = vsel %vm3086, %v6906, %v6030
  %v7036 = vsel %vm3086, %v6908, %v6032
  %v7038 = vsel %vm3086, %v6910, %v6034
  %v7040 = vsel %vm3086, %v6912, %v6036
  %v7042 = vsel %vm3086, %v6914, %v6038
  %v7044 = vsel %vm3086, %v6916, %v6040
  %v7046 = vsel %vm3086, %v6918, %v6042
  %v7048 = vsel %vm3086, %v6920, %v6044
  %v7050 = vsel %vm3312, %v6922, %v6064
  %v7051 = vsel %vm3312, %v6924, %v6064
  %v7053 = vsel %vm3312, %v6926, %v6066
  %v7054 = vsel %vm3312, %v6928, %v6066
  %v7056 = vsel %vm3312, %v6930, %v6068
  %v7057 = vsel %vm3312, %v6932, %v6068
  %v7059 = vsel %vm3312, %v6934, %v6070
  %v7060 = vsel %vm3312, %v6936, %v6070
  %v7062 = vsel %vm3312, %v6938, %v6072
  %v7063 = vsel %vm3312, %v6940, %v6072
  %v7065 = vsel %vm3312, %v6942, %v6074
  %v7066 = vsel %vm3312, %v6944, %v6074
  %v7068 = vsel %vm3312, %v6946, %v6076
  %v7069 = vsel %vm3312, %v6948, %v6076
  %v7071 = vsel %vm3312, %v6950, %v6078
  %v7072 = vsel %vm3312, %v6952, %v6078
  %v7074 = vsel %vm3312, %v6954, %v6080
  %v7075 = vsel %vm3312, %v6956, %v6080
  %v7077 = vsel %vm3312, %v6958, %v6082
  %v7078 = vsel %vm3312, %v6960, %v6082
  %v7080 = vsel %vm3312, %v6962, %v6084
  %v7081 = vsel %vm3312, %v6964, %v6084
  %v7083 = vsel %vm3312, %v6966, %v6086
  %v7084 = vsel %vm3312, %v6968, %v6086
  %v7086 = vsel %vm3312, %v6970, %v6088
  %v7087 = vsel %vm3312, %v6972, %v6088
  %v7089 = vsel %vm3312, %v6974, %v6090
  %v7090 = vsel %vm3312, %v6976, %v6090
  %v7092 = vsel %vm3312, %v6978, %v6092
  %v7093 = vsel %vm3312, %v6980, %v6092
  %v7095 = vsel %vm3312, %v6982, %v6094
  %v7096 = vsel %vm3312, %v6984, %v6094
  %v7098 = vsel %vm3312, %v6986, %v6096
  %v7099 = vsel %vm3312, %v6988, %v6096
  %v7101 = vsel %vm3312, %v6990, %v6098
  %v7102 = vsel %vm3312, %v6992, %v6098
  %v7104 = vsel %vm3312, %v6994, %v6100
  %v7105 = vsel %vm3312, %v6996, %v6100
  %v7107 = vsel %vm3312, %v6998, %v6102
  %v7108 = vsel %vm3312, %v7000, %v6102
  %v7110 = vsel %vm3312, %v7002, %v6104
  %v7111 = vsel %vm3312, %v7004, %v6104
  %v7113 = vsel %vm3312, %v7006, %v6106
  %v7114 = vsel %vm3312, %v7008, %v6106
  %v7116 = vsel %vm3312, %v7010, %v6108
  %v7117 = vsel %vm3312, %v7012, %v6108
  %v7119 = vsel %vm3312, %v7014, %v6110
  %v7120 = vsel %vm3312, %v7016, %v6110
  %v7122 = vsel %vm3312, %v7018, %v6112
  %v7123 = vsel %vm3312, %v7020, %v6112
  %v7125 = vsel %vm3312, %v7022, %v6114
  %v7126 = vsel %vm3312, %v7024, %v6114
  %v7128 = vsel %vm3312, %v7026, %v6116
  %v7129 = vsel %vm3312, %v7028, %v6116
  %v7131 = vsel %vm3312, %v7030, %v6118
  %v7132 = vsel %vm3312, %v7032, %v6118
  %v7134 = vsel %vm3312, %v7034, %v6120
  %v7135 = vsel %vm3312, %v7036, %v6120
  %v7137 = vsel %vm3312, %v7038, %v6122
  %v7138 = vsel %vm3312, %v7040, %v6122
  %v7140 = vsel %vm3312, %v7042, %v6124
  %v7141 = vsel %vm3312, %v7044, %v6124
  %v7143 = vsel %vm3312, %v7046, %v6126
  %v7144 = vsel %vm3312, %v7048, %v6126
  %vm7145 = vcmask 326656
  %v7147 = vsel %vm7145, %v7050, %v6140
  %v7149 = vsel %vm7145, %v7051, %v6142
  %v7151 = vsel %vm7145, %v7053, %v6144
  %v7153 = vsel %vm7145, %v7054, %v6146
  %v7155 = vsel %vm7145, %v7056, %v6148
  %v7157 = vsel %vm7145, %v7057, %v6150
  %v7159 = vsel %vm7145, %v7059, %v6152
  %v7161 = vsel %vm7145, %v7060, %v6154
  %v7163 = vsel %vm7145, %v7062, %v6156
  %v7165 = vsel %vm7145, %v7063, %v6158
  %v7167 = vsel %vm7145, %v7065, %v6160
  %v7169 = vsel %vm7145, %v7066, %v6162
  %v7171 = vsel %vm7145, %v7068, %v6164
  %v7173 = vsel %vm7145, %v7069, %v6166
  %v7175 = vsel %vm7145, %v7071, %v6168
  %v7177 = vsel %vm7145, %v7072, %v6170
  %v7179 = vsel %vm7145, %v7074, %v6172
  %v7181 = vsel %vm7145, %v7075, %v6174
  %v7183 = vsel %vm7145, %v7077, %v6176
  %v7185 = vsel %vm7145, %v7078, %v6178
  %v7187 = vsel %vm7145, %v7080, %v6180
  %v7189 = vsel %vm7145, %v7081, %v6182
  %v7191 = vsel %vm7145, %v7083, %v6184
  %v7193 = vsel %vm7145, %v7084, %v6186
  %v7195 = vsel %vm7145, %v7086, %v6188
  %v7197 = vsel %vm7145, %v7087, %v6190
  %v7199 = vsel %vm7145, %v7089, %v6192
  %v7201 = vsel %vm7145, %v7090, %v6194
  %v7203 = vsel %vm7145, %v7092, %v6196
  %v7205 = vsel %vm7145, %v7093, %v6198
  %v7207 = vsel %vm7145, %v7095, %v6200
  %v7209 = vsel %vm7145, %v7096, %v6202
  %v7211 = vsel %vm7145, %v7098, %v6204
  %v7213 = vsel %vm7145, %v7099, %v6206
  %v7215 = vsel %vm7145, %v7101, %v6208
  %v7217 = vsel %vm7145, %v7102, %v6210
  %v7219 = vsel %vm7145, %v7104, %v6212
  %v7221 = vsel %vm7145, %v7105, %v6214
  %v7223 = vsel %vm7145, %v7107, %v6216
  %v7225 = vsel %vm7145, %v7108, %v6218
  %v7227 = vsel %vm7145, %v7110, %v6220
  %v7229 = vsel %vm7145, %v7111, %v6222
  %v7231 = vsel %vm7145, %v7113, %v6224
  %v7233 = vsel %vm7145, %v7114, %v6226
  %v7235 = vsel %vm7145, %v7116, %v6228
  %v7237 = vsel %vm7145, %v7117, %v6230
  %v7239 = vsel %vm7145, %v7119, %v6232
  %v7241 = vsel %vm7145, %v7120, %v6234
  %v7243 = vsel %vm7145, %v7122, %v6236
  %v7245 = vsel %vm7145, %v7123, %v6238
  %v7247 = vsel %vm7145, %v7125, %v6240
  %v7249 = vsel %vm7145, %v7126, %v6242
  %v7251 = vsel %vm7145, %v7128, %v6244
  %v7253 = vsel %vm7145, %v7129, %v6246
  %v7255 = vsel %vm7145, %v7131, %v6248
  %v7257 = vsel %vm7145, %v7132, %v6250
  %v7259 = vsel %vm7145, %v7134, %v6252
  %v7261 = vsel %vm7145, %v7135, %v6254
  %v7263 = vsel %vm7145, %v7137, %v6256
  %v7265 = vsel %vm7145, %v7138, %v6258
  %v7267 = vsel %vm7145, %v7140, %v6260
  %v7269 = vsel %vm7145, %v7141, %v6262
  %v7271 = vsel %vm7145, %v7143, %v6264
  %v7273 = vsel %vm7145, %v7144, %v6266
  %vm7274 = vcmask 392192
  %v7276 = vsel %vm7274, %v7147, %v6284
  %v7278 = vsel %vm7274, %v7149, %v6286
  %v7280 = vsel %vm7274, %v7151, %v6288
  %v7282 = vsel %vm7274, %v7153, %v6290
  %v7284 = vsel %vm7274, %v7155, %v6292
  %v7286 = vsel %vm7274, %v7157, %v6294
  %v7288 = vsel %vm7274, %v7159, %v6296
  %v7290 = vsel %vm7274, %v7161, %v6298
  %v7292 = vsel %vm7274, %v7163, %v6300
  %v7294 = vsel %vm7274, %v7165, %v6302
  %v7296 = vsel %vm7274, %v7167, %v6304
  %v7298 = vsel %vm7274, %v7169, %v6306
  %v7300 = vsel %vm7274, %v7171, %v6308
  %v7302 = vsel %vm7274, %v7173, %v6310
  %v7304 = vsel %vm7274, %v7175, %v6312
  %v7306 = vsel %vm7274, %v7177, %v6314
  %v7308 = vsel %vm7274, %v7179, %v6316
  %v7310 = vsel %vm7274, %v7181, %v6318
  %v7312 = vsel %vm7274, %v7183, %v6320
  %v7314 = vsel %vm7274, %v7185, %v6322
  %v7316 = vsel %vm7274, %v7187, %v6324
  %v7318 = vsel %vm7274, %v7189, %v6326
  %v7320 = vsel %vm7274, %v7191, %v6328
  %v7322 = vsel %vm7274, %v7193, %v6330
  %v7324 = vsel %vm7274, %v7195, %v6332
  %v7326 = vsel %vm7274, %v7197, %v6334
  %v7328 = vsel %vm7274, %v7199, %v6336
  %v7330 = vsel %vm7274, %v7201, %v6338
  %v7332 = vsel %vm7274, %v7203, %v6340
  %v7334 = vsel %vm7274, %v7205, %v6342
  %v7336 = vsel %vm7274, %v7207, %v6344
  %v7338 = vsel %vm7274, %v7209, %v6346
  %v7340 = vsel %vm7274, %v7211, %v6348
  %v7342 = vsel %vm7274, %v7213, %v6350
  %v7344 = vsel %vm7274, %v7215, %v6352
  %v7346 = vsel %vm7274, %v7217, %v6354
  %v7348 = vsel %vm7274, %v7219, %v6356
  %v7350 = vsel %vm7274, %v7221, %v6358
  %v7352 = vsel %vm7274, %v7223, %v6360
  %v7354 = vsel %vm7274, %v7225, %v6362
  %v7356 = vsel %vm7274, %v7227, %v6364
  %v7358 = vsel %vm7274, %v7229, %v6366
  %v7360 = vsel %vm7274, %v7231, %v6368
  %v7362 = vsel %vm7274, %v7233, %v6370
  %v7364 = vsel %vm7274, %v7235, %v6372
  %v7366 = vsel %vm7274, %v7237, %v6374
  %v7368 = vsel %vm7274, %v7239, %v6376
  %v7370 = vsel %vm7274, %v7241, %v6378
  %v7372 = vsel %vm7274, %v7243, %v6380
  %v7374 = vsel %vm7274, %v7245, %v6382
  %v7376 = vsel %vm7274, %v7247, %v6384
  %v7378 = vsel %vm7274, %v7249, %v6386
  %v7380 = vsel %vm7274, %v7251, %v6388
  %v7382 = vsel %vm7274, %v7253, %v6390
  %v7384 = vsel %vm7274, %v7255, %v6392
  %v7386 = vsel %vm7274, %v7257, %v6394
  %v7388 = vsel %vm7274, %v7259, %v6396
  %v7390 = vsel %vm7274, %v7261, %v6398
  %v7392 = vsel %vm7274, %v7263, %v6400
  %v7394 = vsel %vm7274, %v7265, %v6402
  %v7396 = vsel %vm7274, %v7267, %v6404
  %v7398 = vsel %vm7274, %v7269, %v6406
  %v7400 = vsel %vm7274, %v7271, %v6408
  %v7402 = vsel %vm7274, %v7273, %v6410
  %vm7403 = vcmask 457728
  %v7405 = vsel %vm7403, %v7276, %v6430
  %v7406 = vsel %vm7403, %v7278, %v6430
  %v7408 = vsel %vm7403, %v7280, %v6432
  %v7409 = vsel %vm7403, %v7282, %v6432
  %v7411 = vsel %vm7403, %v7284, %v6434
  %v7412 = vsel %vm7403, %v7286, %v6434
  %v7414 = vsel %vm7403, %v7288, %v6436
  %v7415 = vsel %vm7403, %v7290, %v6436
  %v7417 = vsel %vm7403, %v7292, %v6438
  %v7418 = vsel %vm7403, %v7294, %v6438
  %v7420 = vsel %vm7403, %v7296, %v6440
  %v7421 = vsel %vm7403, %v7298, %v6440
  %v7423 = vsel %vm7403, %v7300, %v6442
  %v7424 = vsel %vm7403, %v7302, %v6442
  %v7426 = vsel %vm7403, %v7304, %v6444
  %v7427 = vsel %vm7403, %v7306, %v6444
  %v7429 = vsel %vm7403, %v7308, %v6446
  %v7430 = vsel %vm7403, %v7310, %v6446
  %v7432 = vsel %vm7403, %v7312, %v6448
  %v7433 = vsel %vm7403, %v7314, %v6448
  %v7435 = vsel %vm7403, %v7316, %v6450
  %v7436 = vsel %vm7403, %v7318, %v6450
  %v7438 = vsel %vm7403, %v7320, %v6452
  %v7439 = vsel %vm7403, %v7322, %v6452
  %v7441 = vsel %vm7403, %v7324, %v6454
  %v7442 = vsel %vm7403, %v7326, %v6454
  %v7444 = vsel %vm7403, %v7328, %v6456
  %v7445 = vsel %vm7403, %v7330, %v6456
  %v7447 = vsel %vm7403, %v7332, %v6458
  %v7448 = vsel %vm7403, %v7334, %v6458
  %v7450 = vsel %vm7403, %v7336, %v6460
  %v7451 = vsel %vm7403, %v7338, %v6460
  %v7453 = vsel %vm7403, %v7340, %v6462
  %v7454 = vsel %vm7403, %v7342, %v6462
  %v7456 = vsel %vm7403, %v7344, %v6464
  %v7457 = vsel %vm7403, %v7346, %v6464
  %v7459 = vsel %vm7403, %v7348, %v6466
  %v7460 = vsel %vm7403, %v7350, %v6466
  %v7462 = vsel %vm7403, %v7352, %v6468
  %v7463 = vsel %vm7403, %v7354, %v6468
  %v7465 = vsel %vm7403, %v7356, %v6470
  %v7466 = vsel %vm7403, %v7358, %v6470
  %v7468 = vsel %vm7403, %v7360, %v6472
  %v7469 = vsel %vm7403, %v7362, %v6472
  %v7471 = vsel %vm7403, %v7364, %v6474
  %v7472 = vsel %vm7403, %v7366, %v6474
  %v7474 = vsel %vm7403, %v7368, %v6476
  %v7475 = vsel %vm7403, %v7370, %v6476
  %v7477 = vsel %vm7403, %v7372, %v6478
  %v7478 = vsel %vm7403, %v7374, %v6478
  %v7480 = vsel %vm7403, %v7376, %v6480
  %v7481 = vsel %vm7403, %v7378, %v6480
  %v7483 = vsel %vm7403, %v7380, %v6482
  %v7484 = vsel %vm7403, %v7382, %v6482
  %v7486 = vsel %vm7403, %v7384, %v6484
  %v7487 = vsel %vm7403, %v7386, %v6484
  %v7489 = vsel %vm7403, %v7388, %v6486
  %v7490 = vsel %vm7403, %v7390, %v6486
  %v7492 = vsel %vm7403, %v7392, %v6488
  %v7493 = vsel %vm7403, %v7394, %v6488
  %v7495 = vsel %vm7403, %v7396, %v6490
  %v7496 = vsel %vm7403, %v7398, %v6490
  %v7498 = vsel %vm7403, %v7400, %v6492
  %v7499 = vsel %vm7403, %v7402, %v6492
  %vm7500 = vcmask 523264
  %v7502 = vsel %vm7500, %v7405, %v6506
  %v7504 = vsel %vm7500, %v7406, %v6508
  %v7506 = vsel %vm7500, %v7408, %v6510
  %v7508 = vsel %vm7500, %v7409, %v6512
  %v7510 = vsel %vm7500, %v7411, %v6514
  %v7512 = vsel %vm7500, %v7412, %v6516
  %v7514 = vsel %vm7500, %v7414, %v6518
  %v7516 = vsel %vm7500, %v7415, %v6520
  %v7518 = vsel %vm7500, %v7417, %v6522
  %v7520 = vsel %vm7500, %v7418, %v6524
  %v7522 = vsel %vm7500, %v7420, %v6526
  %v7524 = vsel %vm7500, %v7421, %v6528
  %v7526 = vsel %vm7500, %v7423, %v6530
  %v7528 = vsel %vm7500, %v7424, %v6532
  %v7530 = vsel %vm7500, %v7426, %v6534
  %v7532 = vsel %vm7500, %v7427, %v6536
  %v7534 = vsel %vm7500, %v7429, %v6538
  %v7536 = vsel %vm7500, %v7430, %v6540
  %v7538 = vsel %vm7500, %v7432, %v6542
  %v7540 = vsel %vm7500, %v7433, %v6544
  %v7542 = vsel %vm7500, %v7435, %v6546
  %v7544 = vsel %vm7500, %v7436, %v6548
  %v7546 = vsel %vm7500, %v7438, %v6550
  %v7548 = vsel %vm7500, %v7439, %v6552
  %v7550 = vsel %vm7500, %v7441, %v6554
  %v7552 = vsel %vm7500, %v7442, %v6556
  %v7554 = vsel %vm7500, %v7444, %v6558
  %v7556 = vsel %vm7500, %v7445, %v6560
  %v7558 = vsel %vm7500, %v7447, %v6562
  %v7560 = vsel %vm7500, %v7448, %v6564
  %v7562 = vsel %vm7500, %v7450, %v6566
  %v7564 = vsel %vm7500, %v7451, %v6568
  %v7566 = vsel %vm7500, %v7453, %v6570
  %v7568 = vsel %vm7500, %v7454, %v6572
  %v7570 = vsel %vm7500, %v7456, %v6574
  %v7572 = vsel %vm7500, %v7457, %v6576
  %v7574 = vsel %vm7500, %v7459, %v6578
  %v7576 = vsel %vm7500, %v7460, %v6580
  %v7578 = vsel %vm7500, %v7462, %v6582
  %v7580 = vsel %vm7500, %v7463, %v6584
  %v7582 = vsel %vm7500, %v7465, %v6586
  %v7584 = vsel %vm7500, %v7466, %v6588
  %v7586 = vsel %vm7500, %v7468, %v6590
  %v7588 = vsel %vm7500, %v7469, %v6592
  %v7590 = vsel %vm7500, %v7471, %v6594
  %v7592 = vsel %vm7500, %v7472, %v6596
  %v7594 = vsel %vm7500, %v7474, %v6598
  %v7596 = vsel %vm7500, %v7475, %v6600
  %v7598 = vsel %vm7500, %v7477, %v6602
  %v7600 = vsel %vm7500, %v7478, %v6604
  %v7602 = vsel %vm7500, %v7480, %v6606
  %v7604 = vsel %vm7500, %v7481, %v6608
  %v7606 = vsel %vm7500, %v7483, %v6610
  %v7608 = vsel %vm7500, %v7484, %v6612
  %v7610 = vsel %vm7500, %v7486, %v6614
  %v7612 = vsel %vm7500, %v7487, %v6616
  %v7614 = vsel %vm7500, %v7489, %v6618
  %v7616 = vsel %vm7500, %v7490, %v6620
  %v7618 = vsel %vm7500, %v7492, %v6622
  %v7620 = vsel %vm7500, %v7493, %v6624
  %v7622 = vsel %vm7500, %v7495, %v6626
  %v7624 = vsel %vm7500, %v7496, %v6628
  %v7626 = vsel %vm7500, %v7498, %v6630
  %v7628 = vsel %vm7500, %v7499, %v6632
  %vm7629 = vcmask 588800
  %v7630 = vsel %vm7629, %v7502, 0
  %v7631 = vsel %vm7629, %v7504, 0
  %v7632 = vsel %vm7629, %v7506, 0
  %v7633 = vsel %vm7629, %v7508, 0
  %v7634 = vsel %vm7629, %v7510, 0
  %v7635 = vsel %vm7629, %v7512, 0
  %v7636 = vsel %vm7629, %v7514, 0
  %v7637 = vsel %vm7629, %v7516, 0
  %v7638 = vsel %vm7629, %v7518, 0
  %v7639 = vsel %vm7629, %v7520, 0
  %v7640 = vsel %vm7629, %v7522, 0
  %v7641 = vsel %vm7629, %v7524, 0
  %v7642 = vsel %vm7629, %v7526, 0
  %v7643 = vsel %vm7629, %v7528, 0
  %v7644 = vsel %vm7629, %v7530, 0
  %v7645 = vsel %vm7629, %v7532, 0
  %v7646 = vsel %vm7629, %v7534, 0
  %v7647 = vsel %vm7629, %v7536, 0
  %v7648 = vsel %vm7629, %v7538, 0
  %v7649 = vsel %vm7629, %v7540, 0
  %v7650 = vsel %vm7629, %v7542, 0
  %v7651 = vsel %vm7629, %v7544, 0
  %v7652 = vsel %vm7629, %v7546, 0
  %v7653 = vsel %vm7629, %v7548, 0
  %v7654 = vsel %vm7629, %v7550, 0
  %v7655 = vsel %vm7629, %v7552, 0
  %v7656 = vsel %vm7629, %v7554, 0
  %v7657 = vsel %vm7629, %v7556, 0
  %v7658 = vsel %vm7629, %v7558, 0
  %v7659 = vsel %vm7629, %v7560, 0
  %v7660 = vsel %vm7629, %v7562, 0
  %v7661 = vsel %vm7629, %v7564, 0
  %v7662 = vsel %vm7629, %v7566, 0
  %v7663 = vsel %vm7629, %v7568, 0
  %v7664 = vsel %vm7629, %v7570, 0
  %v7665 = vsel %vm7629, %v7572, 0
  %v7666 = vsel %vm7629, %v7574, 0
  %v7667 = vsel %vm7629, %v7576, 0
  %v7668 = vsel %vm7629, %v7578, 0
  %v7669 = vsel %vm7629, %v7580, 0
  %v7670 = vsel %vm7629, %v7582, 0
  %v7671 = vsel %vm7629, %v7584, 0
  %v7672 = vsel %vm7629, %v7586, 0
  %v7673 = vsel %vm7629, %v7588, 0
  %v7674 = vsel %vm7629, %v7590, 0
  %v7675 = vsel %vm7629, %v7592, 0
  %v7676 = vsel %vm7629, %v7594, 0
  %v7677 = vsel %vm7629, %v7596, 0
  %v7678 = vsel %vm7629, %v7598, 0
  %v7679 = vsel %vm7629, %v7600, 0
  %v7680 = vsel %vm7629, %v7602, 0
  %v7681 = vsel %vm7629, %v7604, 0
  %v7682 = vsel %vm7629, %v7606, 0
  %v7683 = vsel %vm7629, %v7608, 0
  %v7684 = vsel %vm7629, %v7610, 0
  %v7685 = vsel %vm7629, %v7612, 0
  %v7686 = vsel %vm7629, %v7614, 0
  %v7687 = vsel %vm7629, %v7616, 0
  %v7688 = vsel %vm7629, %v7618, 0
  %v7689 = vsel %vm7629, %v7620, 0
  %v7690 = vsel %vm7629, %v7622, 0
  %v7691 = vsel %vm7629, %v7624, 0
  %v7692 = vsel %vm7629, %v7626, 0
  %v7693 = vsel %vm7629, %v7628, 0
  %v7694 = vshrl.u32 %v7630, 16
  %v7696 = vrot.slane %v7694, 3
  %v7697 = vshll.u32 %v7630, 16
  %v7699 = vrot.slane %v7697, 4
  %v7700 = vor.u32 %v7696, %v7699
  %v7701 = vshrl.u32 %v7631, 16
  %v7703 = vrot.slane %v7701, 3
  %v7704 = vshll.u32 %v7631, 16
  %v7706 = vrot.slane %v7704, 4
  %v7707 = vor.u32 %v7703, %v7706
  %v7708 = vsel %vm3507, %v7700, %v7707
  %v7709 = vshrl.u32 %v7632, 16
  %v7711 = vrot.slane %v7709, 3
  %v7712 = vshll.u32 %v7632, 16
  %v7714 = vrot.slane %v7712, 4
  %v7715 = vor.u32 %v7711, %v7714
  %v7716 = vshrl.u32 %v7633, 16
  %v7718 = vrot.slane %v7716, 3
  %v7719 = vshll.u32 %v7633, 16
  %v7721 = vrot.slane %v7719, 4
  %v7722 = vor.u32 %v7718, %v7721
  %v7723 = vsel %vm3507, %v7715, %v7722
  %v7724 = vshrl.u32 %v7634, 16
  %v7726 = vrot.slane %v7724, 3
  %v7727 = vshll.u32 %v7634, 16
  %v7729 = vrot.slane %v7727, 4
  %v7730 = vor.u32 %v7726, %v7729
  %v7731 = vshrl.u32 %v7635, 16
  %v7733 = vrot.slane %v7731, 3
  %v7734 = vshll.u32 %v7635, 16
  %v7736 = vrot.slane %v7734, 4
  %v7737 = vor.u32 %v7733, %v7736
  %v7738 = vsel %vm3507, %v7730, %v7737
  %v7739 = vshrl.u32 %v7636, 16
  %v7741 = vrot.slane %v7739, 3
  %v7742 = vshll.u32 %v7636, 16
  %v7744 = vrot.slane %v7742, 4
  %v7745 = vor.u32 %v7741, %v7744
  %v7746 = vshrl.u32 %v7637, 16
  %v7748 = vrot.slane %v7746, 3
  %v7749 = vshll.u32 %v7637, 16
  %v7751 = vrot.slane %v7749, 4
  %v7752 = vor.u32 %v7748, %v7751
  %v7753 = vsel %vm3507, %v7745, %v7752
  %v7754 = vshrl.u32 %v7638, 16
  %v7756 = vrot.slane %v7754, 3
  %v7757 = vshll.u32 %v7638, 16
  %v7759 = vrot.slane %v7757, 4
  %v7760 = vor.u32 %v7756, %v7759
  %v7761 = vshrl.u32 %v7639, 16
  %v7763 = vrot.slane %v7761, 3
  %v7764 = vshll.u32 %v7639, 16
  %v7766 = vrot.slane %v7764, 4
  %v7767 = vor.u32 %v7763, %v7766
  %v7768 = vsel %vm3507, %v7760, %v7767
  %v7769 = vshrl.u32 %v7640, 16
  %v7771 = vrot.slane %v7769, 3
  %v7772 = vshll.u32 %v7640, 16
  %v7774 = vrot.slane %v7772, 4
  %v7775 = vor.u32 %v7771, %v7774
  %v7776 = vshrl.u32 %v7641, 16
  %v7778 = vrot.slane %v7776, 3
  %v7779 = vshll.u32 %v7641, 16
  %v7781 = vrot.slane %v7779, 4
  %v7782 = vor.u32 %v7778, %v7781
  %v7783 = vsel %vm3507, %v7775, %v7782
  %v7784 = vshrl.u32 %v7642, 16
  %v7786 = vrot.slane %v7784, 3
  %v7787 = vshll.u32 %v7642, 16
  %v7789 = vrot.slane %v7787, 4
  %v7790 = vor.u32 %v7786, %v7789
  %v7791 = vshrl.u32 %v7643, 16
  %v7793 = vrot.slane %v7791, 3
  %v7794 = vshll.u32 %v7643, 16
  %v7796 = vrot.slane %v7794, 4
  %v7797 = vor.u32 %v7793, %v7796
  %v7798 = vsel %vm3507, %v7790, %v7797
  %v7799 = vshrl.u32 %v7644, 16
  %v7801 = vrot.slane %v7799, 3
  %v7802 = vshll.u32 %v7644, 16
  %v7804 = vrot.slane %v7802, 4
  %v7805 = vor.u32 %v7801, %v7804
  %v7806 = vshrl.u32 %v7645, 16
  %v7808 = vrot.slane %v7806, 3
  %v7809 = vshll.u32 %v7645, 16
  %v7811 = vrot.slane %v7809, 4
  %v7812 = vor.u32 %v7808, %v7811
  %v7813 = vsel %vm3507, %v7805, %v7812
  %v7814 = vshrl.u32 %v7646, 16
  %v7816 = vrot.slane %v7814, 3
  %v7817 = vshll.u32 %v7646, 16
  %v7819 = vrot.slane %v7817, 4
  %v7820 = vor.u32 %v7816, %v7819
  %v7821 = vshrl.u32 %v7647, 16
  %v7823 = vrot.slane %v7821, 3
  %v7824 = vshll.u32 %v7647, 16
  %v7826 = vrot.slane %v7824, 4
  %v7827 = vor.u32 %v7823, %v7826
  %v7828 = vsel %vm3507, %v7820, %v7827
  %v7829 = vshrl.u32 %v7648, 16
  %v7831 = vrot.slane %v7829, 3
  %v7832 = vshll.u32 %v7648, 16
  %v7834 = vrot.slane %v7832, 4
  %v7835 = vor.u32 %v7831, %v7834
  %v7836 = vshrl.u32 %v7649, 16
  %v7838 = vrot.slane %v7836, 3
  %v7839 = vshll.u32 %v7649, 16
  %v7841 = vrot.slane %v7839, 4
  %v7842 = vor.u32 %v7838, %v7841
  %v7843 = vsel %vm3507, %v7835, %v7842
  %v7844 = vshrl.u32 %v7650, 16
  %v7846 = vrot.slane %v7844, 3
  %v7847 = vshll.u32 %v7650, 16
  %v7849 = vrot.slane %v7847, 4
  %v7850 = vor.u32 %v7846, %v7849
  %v7851 = vshrl.u32 %v7651, 16
  %v7853 = vrot.slane %v7851, 3
  %v7854 = vshll.u32 %v7651, 16
  %v7856 = vrot.slane %v7854, 4
  %v7857 = vor.u32 %v7853, %v7856
  %v7858 = vsel %vm3507, %v7850, %v7857
  %v7859 = vshrl.u32 %v7652, 16
  %v7861 = vrot.slane %v7859, 3
  %v7862 = vshll.u32 %v7652, 16
  %v7864 = vrot.slane %v7862, 4
  %v7865 = vor.u32 %v7861, %v7864
  %v7866 = vshrl.u32 %v7653, 16
  %v7868 = vrot.slane %v7866, 3
  %v7869 = vshll.u32 %v7653, 16
  %v7871 = vrot.slane %v7869, 4
  %v7872 = vor.u32 %v7868, %v7871
  %v7873 = vsel %vm3507, %v7865, %v7872
  %v7874 = vshrl.u32 %v7654, 16
  %v7876 = vrot.slane %v7874, 3
  %v7877 = vshll.u32 %v7654, 16
  %v7879 = vrot.slane %v7877, 4
  %v7880 = vor.u32 %v7876, %v7879
  %v7881 = vshrl.u32 %v7655, 16
  %v7883 = vrot.slane %v7881, 3
  %v7884 = vshll.u32 %v7655, 16
  %v7886 = vrot.slane %v7884, 4
  %v7887 = vor.u32 %v7883, %v7886
  %v7888 = vsel %vm3507, %v7880, %v7887
  %v7889 = vshrl.u32 %v7656, 16
  %v7891 = vrot.slane %v7889, 3
  %v7892 = vshll.u32 %v7656, 16
  %v7894 = vrot.slane %v7892, 4
  %v7895 = vor.u32 %v7891, %v7894
  %v7896 = vshrl.u32 %v7657, 16
  %v7898 = vrot.slane %v7896, 3
  %v7899 = vshll.u32 %v7657, 16
  %v7901 = vrot.slane %v7899, 4
  %v7902 = vor.u32 %v7898, %v7901
  %v7903 = vsel %vm3507, %v7895, %v7902
  %v7904 = vshrl.u32 %v7658, 16
  %v7906 = vrot.slane %v7904, 3
  %v7907 = vshll.u32 %v7658, 16
  %v7909 = vrot.slane %v7907, 4
  %v7910 = vor.u32 %v7906, %v7909
  %v7911 = vshrl.u32 %v7659, 16
  %v7913 = vrot.slane %v7911, 3
  %v7914 = vshll.u32 %v7659, 16
  %v7916 = vrot.slane %v7914, 4
  %v7917 = vor.u32 %v7913, %v7916
  %v7918 = vsel %vm3507, %v7910, %v7917
  %v7919 = vshrl.u32 %v7660, 16
  %v7921 = vrot.slane %v7919, 3
  %v7922 = vshll.u32 %v7660, 16
  %v7924 = vrot.slane %v7922, 4
  %v7925 = vor.u32 %v7921, %v7924
  %v7926 = vshrl.u32 %v7661, 16
  %v7928 = vrot.slane %v7926, 3
  %v7929 = vshll.u32 %v7661, 16
  %v7931 = vrot.slane %v7929, 4
  %v7932 = vor.u32 %v7928, %v7931
  %v7933 = vsel %vm3507, %v7925, %v7932
  %v7934 = vshrl.u32 %v7662, 16
  %v7936 = vrot.slane %v7934, 3
  %v7937 = vshll.u32 %v7662, 16
  %v7939 = vrot.slane %v7937, 4
  %v7940 = vor.u32 %v7936, %v7939
  %v7941 = vshrl.u32 %v7663, 16
  %v7943 = vrot.slane %v7941, 3
  %v7944 = vshll.u32 %v7663, 16
  %v7946 = vrot.slane %v7944, 4
  %v7947 = vor.u32 %v7943, %v7946
  %v7948 = vsel %vm3507, %v7940, %v7947
  %v7949 = vshrl.u32 %v7664, 16
  %v7951 = vrot.slane %v7949, 3
  %v7952 = vshll.u32 %v7664, 16
  %v7954 = vrot.slane %v7952, 4
  %v7955 = vor.u32 %v7951, %v7954
  %v7956 = vshrl.u32 %v7665, 16
  %v7958 = vrot.slane %v7956, 3
  %v7959 = vshll.u32 %v7665, 16
  %v7961 = vrot.slane %v7959, 4
  %v7962 = vor.u32 %v7958, %v7961
  %v7963 = vsel %vm3507, %v7955, %v7962
  %v7964 = vshrl.u32 %v7666, 16
  %v7966 = vrot.slane %v7964, 3
  %v7967 = vshll.u32 %v7666, 16
  %v7969 = vrot.slane %v7967, 4
  %v7970 = vor.u32 %v7966, %v7969
  %v7971 = vshrl.u32 %v7667, 16
  %v7973 = vrot.slane %v7971, 3
  %v7974 = vshll.u32 %v7667, 16
  %v7976 = vrot.slane %v7974, 4
  %v7977 = vor.u32 %v7973, %v7976
  %v7978 = vsel %vm3507, %v7970, %v7977
  %v7979 = vshrl.u32 %v7668, 16
  %v7981 = vrot.slane %v7979, 3
  %v7982 = vshll.u32 %v7668, 16
  %v7984 = vrot.slane %v7982, 4
  %v7985 = vor.u32 %v7981, %v7984
  %v7986 = vshrl.u32 %v7669, 16
  %v7988 = vrot.slane %v7986, 3
  %v7989 = vshll.u32 %v7669, 16
  %v7991 = vrot.slane %v7989, 4
  %v7992 = vor.u32 %v7988, %v7991
  %v7993 = vsel %vm3507, %v7985, %v7992
  %v7994 = vshrl.u32 %v7670, 16
  %v7996 = vrot.slane %v7994, 3
  %v7997 = vshll.u32 %v7670, 16
  %v7999 = vrot.slane %v7997, 4
  %v8000 = vor.u32 %v7996, %v7999
  %v8001 = vshrl.u32 %v7671, 16
  %v8003 = vrot.slane %v8001, 3
  %v8004 = vshll.u32 %v7671, 16
  %v8006 = vrot.slane %v8004, 4
  %v8007 = vor.u32 %v8003, %v8006
  %v8008 = vsel %vm3507, %v8000, %v8007
  %v8009 = vshrl.u32 %v7672, 16
  %v8011 = vrot.slane %v8009, 3
  %v8012 = vshll.u32 %v7672, 16
  %v8014 = vrot.slane %v8012, 4
  %v8015 = vor.u32 %v8011, %v8014
  %v8016 = vshrl.u32 %v7673, 16
  %v8018 = vrot.slane %v8016, 3
  %v8019 = vshll.u32 %v7673, 16
  %v8021 = vrot.slane %v8019, 4
  %v8022 = vor.u32 %v8018, %v8021
  %v8023 = vsel %vm3507, %v8015, %v8022
  %v8024 = vshrl.u32 %v7674, 16
  %v8026 = vrot.slane %v8024, 3
  %v8027 = vshll.u32 %v7674, 16
  %v8029 = vrot.slane %v8027, 4
  %v8030 = vor.u32 %v8026, %v8029
  %v8031 = vshrl.u32 %v7675, 16
  %v8033 = vrot.slane %v8031, 3
  %v8034 = vshll.u32 %v7675, 16
  %v8036 = vrot.slane %v8034, 4
  %v8037 = vor.u32 %v8033, %v8036
  %v8038 = vsel %vm3507, %v8030, %v8037
  %v8039 = vshrl.u32 %v7676, 16
  %v8041 = vrot.slane %v8039, 3
  %v8042 = vshll.u32 %v7676, 16
  %v8044 = vrot.slane %v8042, 4
  %v8045 = vor.u32 %v8041, %v8044
  %v8046 = vshrl.u32 %v7677, 16
  %v8048 = vrot.slane %v8046, 3
  %v8049 = vshll.u32 %v7677, 16
  %v8051 = vrot.slane %v8049, 4
  %v8052 = vor.u32 %v8048, %v8051
  %v8053 = vsel %vm3507, %v8045, %v8052
  %v8054 = vshrl.u32 %v7678, 16
  %v8056 = vrot.slane %v8054, 3
  %v8057 = vshll.u32 %v7678, 16
  %v8059 = vrot.slane %v8057, 4
  %v8060 = vor.u32 %v8056, %v8059
  %v8061 = vshrl.u32 %v7679, 16
  %v8063 = vrot.slane %v8061, 3
  %v8064 = vshll.u32 %v7679, 16
  %v8066 = vrot.slane %v8064, 4
  %v8067 = vor.u32 %v8063, %v8066
  %v8068 = vsel %vm3507, %v8060, %v8067
  %v8069 = vshrl.u32 %v7680, 16
  %v8071 = vrot.slane %v8069, 3
  %v8072 = vshll.u32 %v7680, 16
  %v8074 = vrot.slane %v8072, 4
  %v8075 = vor.u32 %v8071, %v8074
  %v8076 = vshrl.u32 %v7681, 16
  %v8078 = vrot.slane %v8076, 3
  %v8079 = vshll.u32 %v7681, 16
  %v8081 = vrot.slane %v8079, 4
  %v8082 = vor.u32 %v8078, %v8081
  %v8083 = vsel %vm3507, %v8075, %v8082
  %v8084 = vshrl.u32 %v7682, 16
  %v8086 = vrot.slane %v8084, 3
  %v8087 = vshll.u32 %v7682, 16
  %v8089 = vrot.slane %v8087, 4
  %v8090 = vor.u32 %v8086, %v8089
  %v8091 = vshrl.u32 %v7683, 16
  %v8093 = vrot.slane %v8091, 3
  %v8094 = vshll.u32 %v7683, 16
  %v8096 = vrot.slane %v8094, 4
  %v8097 = vor.u32 %v8093, %v8096
  %v8098 = vsel %vm3507, %v8090, %v8097
  %v8099 = vshrl.u32 %v7684, 16
  %v8101 = vrot.slane %v8099, 3
  %v8102 = vshll.u32 %v7684, 16
  %v8104 = vrot.slane %v8102, 4
  %v8105 = vor.u32 %v8101, %v8104
  %v8106 = vshrl.u32 %v7685, 16
  %v8108 = vrot.slane %v8106, 3
  %v8109 = vshll.u32 %v7685, 16
  %v8111 = vrot.slane %v8109, 4
  %v8112 = vor.u32 %v8108, %v8111
  %v8113 = vsel %vm3507, %v8105, %v8112
  %v8114 = vshrl.u32 %v7686, 16
  %v8116 = vrot.slane %v8114, 3
  %v8117 = vshll.u32 %v7686, 16
  %v8119 = vrot.slane %v8117, 4
  %v8120 = vor.u32 %v8116, %v8119
  %v8121 = vshrl.u32 %v7687, 16
  %v8123 = vrot.slane %v8121, 3
  %v8124 = vshll.u32 %v7687, 16
  %v8126 = vrot.slane %v8124, 4
  %v8127 = vor.u32 %v8123, %v8126
  %v8128 = vsel %vm3507, %v8120, %v8127
  %v8129 = vshrl.u32 %v7688, 16
  %v8131 = vrot.slane %v8129, 3
  %v8132 = vshll.u32 %v7688, 16
  %v8134 = vrot.slane %v8132, 4
  %v8135 = vor.u32 %v8131, %v8134
  %v8136 = vshrl.u32 %v7689, 16
  %v8138 = vrot.slane %v8136, 3
  %v8139 = vshll.u32 %v7689, 16
  %v8141 = vrot.slane %v8139, 4
  %v8142 = vor.u32 %v8138, %v8141
  %v8143 = vsel %vm3507, %v8135, %v8142
  %v8144 = vshrl.u32 %v7690, 16
  %v8146 = vrot.slane %v8144, 3
  %v8147 = vshll.u32 %v7690, 16
  %v8149 = vrot.slane %v8147, 4
  %v8150 = vor.u32 %v8146, %v8149
  %v8151 = vshrl.u32 %v7691, 16
  %v8153 = vrot.slane %v8151, 3
  %v8154 = vshll.u32 %v7691, 16
  %v8156 = vrot.slane %v8154, 4
  %v8157 = vor.u32 %v8153, %v8156
  %v8158 = vsel %vm3507, %v8150, %v8157
  %v8159 = vshrl.u32 %v7692, 16
  %v8161 = vrot.slane %v8159, 3
  %v8162 = vshll.u32 %v7692, 16
  %v8164 = vrot.slane %v8162, 4
  %v8165 = vor.u32 %v8161, %v8164
  %v8166 = vshrl.u32 %v7693, 16
  %v8168 = vrot.slane %v8166, 3
  %v8169 = vshll.u32 %v7693, 16
  %v8171 = vrot.slane %v8169, 4
  %v8172 = vor.u32 %v8168, %v8171
  %v8173 = vsel %vm3507, %v8165, %v8172
  %s8206 = scalar_lea.vmem %s1, 64
  %v8207 = vld [vmem:[%s8206] sm:$0xf]
  %v8208 = vld [vmem:[%s8206 + $0x4] sm:$0xf]
  %v8209 = vld [vmem:[%s8206 + $0x8] sm:$0xf]
  %v8210 = vld [vmem:[%s8206 + $0xc] sm:$0xf]
  %v8211 = vld [vmem:[%s8206 + $0x10] sm:$0xf]
  %v8212 = vld [vmem:[%s8206 + $0x14] sm:$0xf]
  %v8213 = vld [vmem:[%s8206 + $0x18] sm:$0xf]
  %v8214 = vld [vmem:[%s8206 + $0x1c] sm:$0xf]
  %v8215 = vld [vmem:[%s8206 + $0x20] sm:$0xf]
  %v8216 = vld [vmem:[%s8206 + $0x24] sm:$0xf]
  %v8217 = vld [vmem:[%s8206 + $0x28] sm:$0xf]
  %v8218 = vld [vmem:[%s8206 + $0x2c] sm:$0xf]
  %v8219 = vld [vmem:[%s8206 + $0x30] sm:$0xf]
  %v8220 = vld [vmem:[%s8206 + $0x34] sm:$0xf]
  %v8221 = vld [vmem:[%s8206 + $0x38] sm:$0xf]
  %v8222 = vld [vmem:[%s8206 + $0x3c] sm:$0xf]
  %v8239 = vunpack.c.l.b16 %v8207
  %v8240 = vunpack.c.l.b16 %v8208
  %v8241 = vunpack.c.l.b16 %v8209
  %v8242 = vunpack.c.l.b16 %v8210
  %v8243 = vunpack.c.l.b16 %v8211
  %v8244 = vunpack.c.l.b16 %v8212
  %v8245 = vunpack.c.l.b16 %v8213
  %v8246 = vunpack.c.l.b16 %v8214
  %v8247 = vunpack.c.l.b16 %v8215
  %v8248 = vunpack.c.l.b16 %v8216
  %v8249 = vunpack.c.l.b16 %v8217
  %v8250 = vunpack.c.l.b16 %v8218
  %v8251 = vunpack.c.l.b16 %v8219
  %v8252 = vunpack.c.l.b16 %v8220
  %v8253 = vunpack.c.l.b16 %v8221
  %v8254 = vunpack.c.l.b16 %v8222
  %v8255 = vpack.c.b16 %v8240, %v8239
  %v8256 = vpack.c.b16 %v8242, %v8241
  %v8257 = vpack.c.b16 %v8244, %v8243
  %v8258 = vpack.c.b16 %v8246, %v8245
  %v8259 = vpack.c.b16 %v8248, %v8247
  %v8260 = vpack.c.b16 %v8250, %v8249
  %v8261 = vpack.c.b16 %v8252, %v8251
  %v8262 = vpack.c.b16 %v8254, %v8253
  %8271 = vmatprep.subr.bf16.mxu0 0
  %8272 = vmatpush1.bf16.msra.mxu0 %v8255
  %8273 = vmatprep.subr.bf16.mxu0 0
  %8274 = vmatpush1.bf16.msra.mxu0 %v8256
  %8275 = vmatprep.subr.bf16.mxu0 0
  %8276 = vmatpush1.bf16.msra.mxu0 %v8257
  %8277 = vmatprep.subr.bf16.mxu0 0
  %8278 = vmatpush1.bf16.msra.mxu0 %v8258
  %8279 = vmatprep.subr.bf16.mxu0 0
  %8280 = vmatpush1.bf16.msra.mxu0 %v8259
  %8281 = vmatprep.subr.bf16.mxu0 0
  %8282 = vmatpush1.bf16.msra.mxu0 %v8260
  %8283 = vmatprep.subr.bf16.mxu0 0
  %8284 = vmatpush1.bf16.msra.mxu0 %v8261
  %8285 = vmatprep.subr.bf16.mxu0 0
  %8286 = vmatpush1.bf16.msra.mxu0 %v8262
  %8287 = vmatprep.subr.bf16.mxu0 0
  %8288 = vmatpush1.bf16.msra.mxu0 0
  %8289 = vmatprep.subr.bf16.mxu0 0
  %8290 = vmatpush1.bf16.msra.mxu0 0
  %8291 = vmatprep.subr.bf16.mxu0 0
  %8292 = vmatpush1.bf16.msra.mxu0 0
  %8293 = vmatprep.subr.bf16.mxu0 0
  %8294 = vmatpush1.bf16.msra.mxu0 0
  %8295 = vmatprep.subr.bf16.mxu0 0
  %8296 = vmatpush1.bf16.msra.mxu0 0
  %8297 = vmatprep.subr.bf16.mxu0 0
  %8298 = vmatpush1.bf16.msra.mxu0 0
  %8299 = vmatprep.subr.bf16.mxu0 0
  %8300 = vmatpush1.bf16.msra.mxu0 0
  %8301 = vmatprep.subr.bf16.mxu0 0
  %8302 = vmatpush1.bf16.msra.mxu0 0
  %8303 = vmatprep.mubr.bf16.mxu0 0
  %8304 = vmatmul.mubr.bf16.gmra.mrb[0].mxu0 %v7708
  %v8305 = vpop.f32.mrb[0].mxu0
  %v8306 = vadd.f32 0.0, %v8305
  %v8307 = vpop.f32.mrb[0].mxu0
  %v8308 = vpop.f32.mrb[0].mxu0
  %v8309 = vadd.f32 0.0, %v8308
  %v8310 = vpop.f32.mrb[0].mxu0
  %8311 = vmatprep.mubr.bf16.mxu0 0
  %8312 = vmatmul.mubr.bf16.gmra.mrb[0].mxu0 %v7723
  %v8313 = vpop.f32.mrb[0].mxu0
  %v8314 = vadd.f32 0.0, %v8313
  %v8315 = vpop.f32.mrb[0].mxu0
  %v8316 = vpop.f32.mrb[0].mxu0
  %v8317 = vadd.f32 0.0, %v8316
  %v8318 = vpop.f32.mrb[0].mxu0
  %8319 = vmatprep.mubr.bf16.mxu0 0
  %8320 = vmatmul.mubr.bf16.gmra.mrb[0].mxu0 %v7738
  %v8321 = vpop.f32.mrb[0].mxu0
  %v8322 = vadd.f32 0.0, %v8321
  %v8323 = vpop.f32.mrb[0].mxu0
  %v8324 = vpop.f32.mrb[0].mxu0
  %v8325 = vadd.f32 0.0, %v8324
  %v8326 = vpop.f32.mrb[0].mxu0
  %8327 = vmatprep.mubr.bf16.mxu0 0
  %8328 = vmatmul.mubr.bf16.gmra.mrb[0].mxu0 %v7753
  %v8329 = vpop.f32.mrb[0].mxu0
  %v8330 = vadd.f32 0.0, %v8329
  %v8331 = vpop.f32.mrb[0].mxu0
  %v8332 = vpop.f32.mrb[0].mxu0
  %v8333 = vadd.f32 0.0, %v8332
  %v8334 = vpop.f32.mrb[0].mxu0
  %8335 = vmatprep.mubr.bf16.mxu0 0
  %8336 = vmatmul.mubr.bf16.gmra.mrb[0].mxu0 %v7768
  %v8337 = vpop.f32.mrb[0].mxu0
  %v8338 = vadd.f32 0.0, %v8337
  %v8339 = vpop.f32.mrb[0].mxu0
  %v8340 = vpop.f32.mrb[0].mxu0
  %v8341 = vadd.f32 0.0, %v8340
  %v8342 = vpop.f32.mrb[0].mxu0
  %8343 = vmatprep.mubr.bf16.mxu0 0
  %8344 = vmatmul.mubr.bf16.gmra.mrb[0].mxu0 %v7783
  %v8345 = vpop.f32.mrb[0].mxu0
  %v8346 = vadd.f32 0.0, %v8345
  %v8347 = vpop.f32.mrb[0].mxu0
  %v8348 = vpop.f32.mrb[0].mxu0
  %v8349 = vadd.f32 0.0, %v8348
  %v8350 = vpop.f32.mrb[0].mxu0
  %8351 = vmatprep.mubr.bf16.mxu0 0
  %8352 = vmatmul.mubr.bf16.gmra.mrb[0].mxu0 %v7798
  %v8353 = vpop.f32.mrb[0].mxu0
  %v8354 = vadd.f32 0.0, %v8353
  %v8355 = vpop.f32.mrb[0].mxu0
  %v8356 = vpop.f32.mrb[0].mxu0
  %v8357 = vadd.f32 0.0, %v8356
  %v8358 = vpop.f32.mrb[0].mxu0
  %8359 = vmatprep.mubr.bf16.mxu0 0
  %8360 = vmatmul.mubr.bf16.gmra.mrb[0].mxu0 %v7813
  %v8361 = vpop.f32.mrb[0].mxu0
  %v8362 = vadd.f32 0.0, %v8361
  %v8363 = vpop.f32.mrb[0].mxu0
  %v8364 = vpop.f32.mrb[0].mxu0
  %v8365 = vadd.f32 0.0, %v8364
  %v8366 = vpop.f32.mrb[0].mxu0
  %8367 = vmatprep.mubr.bf16.mxu0 0
  %8368 = vmatmul.mubr.bf16.gmra.mrb[0].mxu0 %v7828
  %v8369 = vpop.f32.mrb[0].mxu0
  %v8370 = vadd.f32 0.0, %v8369
  %v8371 = vpop.f32.mrb[0].mxu0
  %v8372 = vpop.f32.mrb[0].mxu0
  %v8373 = vadd.f32 0.0, %v8372
  %v8374 = vpop.f32.mrb[0].mxu0
  %8375 = vmatprep.mubr.bf16.mxu0 0
  %8376 = vmatmul.mubr.bf16.gmra.mrb[0].mxu0 %v7843
  %v8377 = vpop.f32.mrb[0].mxu0
  %v8378 = vadd.f32 0.0, %v8377
  %v8379 = vpop.f32.mrb[0].mxu0
  %v8380 = vpop.f32.mrb[0].mxu0
  %v8381 = vadd.f32 0.0, %v8380
  %v8382 = vpop.f32.mrb[0].mxu0
  %8383 = vmatprep.mubr.bf16.mxu0 0
  %8384 = vmatmul.mubr.bf16.gmra.mrb[0].mxu0 %v7858
  %v8385 = vpop.f32.mrb[0].mxu0
  %v8386 = vadd.f32 0.0, %v8385
  %v8387 = vpop.f32.mrb[0].mxu0
  %v8388 = vpop.f32.mrb[0].mxu0
  %v8389 = vadd.f32 0.0, %v8388
  %v8390 = vpop.f32.mrb[0].mxu0
  %8391 = vmatprep.mubr.bf16.mxu0 0
  %8392 = vmatmul.mubr.bf16.gmra.mrb[0].mxu0 %v7873
  %v8393 = vpop.f32.mrb[0].mxu0
  %v8394 = vadd.f32 0.0, %v8393
  %v8395 = vpop.f32.mrb[0].mxu0
  %v8396 = vpop.f32.mrb[0].mxu0
  %v8397 = vadd.f32 0.0, %v8396
  %v8398 = vpop.f32.mrb[0].mxu0
  %8399 = vmatprep.mubr.bf16.mxu0 0
  %8400 = vmatmul.mubr.bf16.gmra.mrb[0].mxu0 %v7888
  %v8401 = vpop.f32.mrb[0].mxu0
  %v8402 = vadd.f32 0.0, %v8401
  %v8403 = vpop.f32.mrb[0].mxu0
  %v8404 = vpop.f32.mrb[0].mxu0
  %v8405 = vadd.f32 0.0, %v8404
  %v8406 = vpop.f32.mrb[0].mxu0
  %8407 = vmatprep.mubr.bf16.mxu0 0
  %8408 = vmatmul.mubr.bf16.gmra.mrb[0].mxu0 %v7903
  %v8409 = vpop.f32.mrb[0].mxu0
  %v8410 = vadd.f32 0.0, %v8409
  %v8411 = vpop.f32.mrb[0].mxu0
  %v8412 = vpop.f32.mrb[0].mxu0
  %v8413 = vadd.f32 0.0, %v8412
  %v8414 = vpop.f32.mrb[0].mxu0
  %8415 = vmatprep.mubr.bf16.mxu0 0
  %8416 = vmatmul.mubr.bf16.gmra.mrb[0].mxu0 %v7918
  %v8417 = vpop.f32.mrb[0].mxu0
  %v8418 = vadd.f32 0.0, %v8417
  %v8419 = vpop.f32.mrb[0].mxu0
  %v8420 = vpop.f32.mrb[0].mxu0
  %v8421 = vadd.f32 0.0, %v8420
  %v8422 = vpop.f32.mrb[0].mxu0
  %8423 = vmatprep.mubr.bf16.mxu0 0
  %8424 = vmatmul.mubr.bf16.gmra.mrb[0].mxu0 %v7933
  %v8425 = vpop.f32.mrb[0].mxu0
  %v8426 = vadd.f32 0.0, %v8425
  %v8427 = vpop.f32.mrb[0].mxu0
  %v8428 = vpop.f32.mrb[0].mxu0
  %v8429 = vadd.f32 0.0, %v8428
  %v8430 = vpop.f32.mrb[0].mxu0
  %8431 = vmatprep.mubr.bf16.mxu0 0
  %8432 = vmatmul.mubr.bf16.gmra.mrb[0].mxu0 %v7948
  %v8433 = vpop.f32.mrb[0].mxu0
  %v8434 = vadd.f32 0.0, %v8433
  %v8435 = vpop.f32.mrb[0].mxu0
  %v8436 = vpop.f32.mrb[0].mxu0
  %v8437 = vadd.f32 0.0, %v8436
  %v8438 = vpop.f32.mrb[0].mxu0
  %8439 = vmatprep.mubr.bf16.mxu0 0
  %8440 = vmatmul.mubr.bf16.gmra.mrb[0].mxu0 %v7963
  %v8441 = vpop.f32.mrb[0].mxu0
  %v8442 = vadd.f32 0.0, %v8441
  %v8443 = vpop.f32.mrb[0].mxu0
  %v8444 = vpop.f32.mrb[0].mxu0
  %v8445 = vadd.f32 0.0, %v8444
  %v8446 = vpop.f32.mrb[0].mxu0
  %8447 = vmatprep.mubr.bf16.mxu0 0
  %8448 = vmatmul.mubr.bf16.gmra.mrb[0].mxu0 %v7978
  %v8449 = vpop.f32.mrb[0].mxu0
  %v8450 = vadd.f32 0.0, %v8449
  %v8451 = vpop.f32.mrb[0].mxu0
  %v8452 = vpop.f32.mrb[0].mxu0
  %v8453 = vadd.f32 0.0, %v8452
  %v8454 = vpop.f32.mrb[0].mxu0
  %8455 = vmatprep.mubr.bf16.mxu0 0
  %8456 = vmatmul.mubr.bf16.gmra.mrb[0].mxu0 %v7993
  %v8457 = vpop.f32.mrb[0].mxu0
  %v8458 = vadd.f32 0.0, %v8457
  %v8459 = vpop.f32.mrb[0].mxu0
  %v8460 = vpop.f32.mrb[0].mxu0
  %v8461 = vadd.f32 0.0, %v8460
  %v8462 = vpop.f32.mrb[0].mxu0
  %8463 = vmatprep.mubr.bf16.mxu0 0
  %8464 = vmatmul.mubr.bf16.gmra.mrb[0].mxu0 %v8008
  %v8465 = vpop.f32.mrb[0].mxu0
  %v8466 = vadd.f32 0.0, %v8465
  %v8467 = vpop.f32.mrb[0].mxu0
  %v8468 = vpop.f32.mrb[0].mxu0
  %v8469 = vadd.f32 0.0, %v8468
  %v8470 = vpop.f32.mrb[0].mxu0
  %8471 = vmatprep.mubr.bf16.mxu0 0
  %8472 = vmatmul.mubr.bf16.gmra.mrb[0].mxu0 %v8023
  %v8473 = vpop.f32.mrb[0].mxu0
  %v8474 = vadd.f32 0.0, %v8473
  %v8475 = vpop.f32.mrb[0].mxu0
  %v8476 = vpop.f32.mrb[0].mxu0
  %v8477 = vadd.f32 0.0, %v8476
  %v8478 = vpop.f32.mrb[0].mxu0
  %8479 = vmatprep.mubr.bf16.mxu0 0
  %8480 = vmatmul.mubr.bf16.gmra.mrb[0].mxu0 %v8038
  %v8481 = vpop.f32.mrb[0].mxu0
  %v8482 = vadd.f32 0.0, %v8481
  %v8483 = vpop.f32.mrb[0].mxu0
  %v8484 = vpop.f32.mrb[0].mxu0
  %v8485 = vadd.f32 0.0, %v8484
  %v8486 = vpop.f32.mrb[0].mxu0
  %8487 = vmatprep.mubr.bf16.mxu0 0
  %8488 = vmatmul.mubr.bf16.gmra.mrb[0].mxu0 %v8053
  %v8489 = vpop.f32.mrb[0].mxu0
  %v8490 = vadd.f32 0.0, %v8489
  %v8491 = vpop.f32.mrb[0].mxu0
  %v8492 = vpop.f32.mrb[0].mxu0
  %v8493 = vadd.f32 0.0, %v8492
  %v8494 = vpop.f32.mrb[0].mxu0
  %8495 = vmatprep.mubr.bf16.mxu0 0
  %8496 = vmatmul.mubr.bf16.gmra.mrb[0].mxu0 %v8068
  %v8497 = vpop.f32.mrb[0].mxu0
  %v8498 = vadd.f32 0.0, %v8497
  %v8499 = vpop.f32.mrb[0].mxu0
  %v8500 = vpop.f32.mrb[0].mxu0
  %v8501 = vadd.f32 0.0, %v8500
  %v8502 = vpop.f32.mrb[0].mxu0
  %8503 = vmatprep.mubr.bf16.mxu0 0
  %8504 = vmatmul.mubr.bf16.gmra.mrb[0].mxu0 %v8083
  %v8505 = vpop.f32.mrb[0].mxu0
  %v8506 = vadd.f32 0.0, %v8505
  %v8507 = vpop.f32.mrb[0].mxu0
  %v8508 = vpop.f32.mrb[0].mxu0
  %v8509 = vadd.f32 0.0, %v8508
  %v8510 = vpop.f32.mrb[0].mxu0
  %8511 = vmatprep.mubr.bf16.mxu0 0
  %8512 = vmatmul.mubr.bf16.gmra.mrb[0].mxu0 %v8098
  %v8513 = vpop.f32.mrb[0].mxu0
  %v8514 = vadd.f32 0.0, %v8513
  %v8515 = vpop.f32.mrb[0].mxu0
  %v8516 = vpop.f32.mrb[0].mxu0
  %v8517 = vadd.f32 0.0, %v8516
  %v8518 = vpop.f32.mrb[0].mxu0
  %8519 = vmatprep.mubr.bf16.mxu0 0
  %8520 = vmatmul.mubr.bf16.gmra.mrb[0].mxu0 %v8113
  %v8521 = vpop.f32.mrb[0].mxu0
  %v8522 = vadd.f32 0.0, %v8521
  %v8523 = vpop.f32.mrb[0].mxu0
  %v8524 = vpop.f32.mrb[0].mxu0
  %v8525 = vadd.f32 0.0, %v8524
  %v8526 = vpop.f32.mrb[0].mxu0
  %8527 = vmatprep.mubr.bf16.mxu0 0
  %8528 = vmatmul.mubr.bf16.gmra.mrb[0].mxu0 %v8128
  %v8529 = vpop.f32.mrb[0].mxu0
  %v8530 = vadd.f32 0.0, %v8529
  %v8531 = vpop.f32.mrb[0].mxu0
  %v8532 = vpop.f32.mrb[0].mxu0
  %v8533 = vadd.f32 0.0, %v8532
  %v8534 = vpop.f32.mrb[0].mxu0
  %8535 = vmatprep.mubr.bf16.mxu0 0
  %8536 = vmatmul.mubr.bf16.gmra.mrb[0].mxu0 %v8143
  %v8537 = vpop.f32.mrb[0].mxu0
  %v8538 = vadd.f32 0.0, %v8537
  %v8539 = vpop.f32.mrb[0].mxu0
  %v8540 = vpop.f32.mrb[0].mxu0
  %v8541 = vadd.f32 0.0, %v8540
  %v8542 = vpop.f32.mrb[0].mxu0
  %8543 = vmatprep.mubr.bf16.mxu0 0
  %8544 = vmatmul.mubr.bf16.gmra.mrb[0].mxu0 %v8158
  %v8545 = vpop.f32.mrb[0].mxu0
  %v8546 = vadd.f32 0.0, %v8545
  %v8547 = vpop.f32.mrb[0].mxu0
  %v8548 = vpop.f32.mrb[0].mxu0
  %v8549 = vadd.f32 0.0, %v8548
  %v8550 = vpop.f32.mrb[0].mxu0
  %8551 = vmatprep.mubr.bf16.mxu0 0
  %8552 = vmatmul.mubr.bf16.gmra.mrb[0].mxu0 %v8173
  %v8553 = vpop.f32.mrb[0].mxu0
  %v8554 = vadd.f32 0.0, %v8553
  %v8555 = vpop.f32.mrb[0].mxu0
  %v8556 = vpop.f32.mrb[0].mxu0
  %v8557 = vadd.f32 0.0, %v8556
  %v8558 = vpop.f32.mrb[0].mxu0
  %8559 = vdwg.mxu0
  %s8560 = scalar_lea.vmem %s2, 1
  %v8561 = vld [vmem:[%s8560] sm:$0x1]
  %v8563 = vlaneseq
  %v8564 = vshrl.u32 %v8563, 7
  %v8565 = vsub.s32 0, %v8564
  %v8566 = vrot.slane %v8561, %v8565
  %v8568 = vadd.f32 %v8306, %v8566
  %v8569 = vadd.f32 %v8309, %v8566
  %v8570 = vadd.f32 %v8314, %v8566
  %v8571 = vadd.f32 %v8317, %v8566
  %v8572 = vadd.f32 %v8322, %v8566
  %v8573 = vadd.f32 %v8325, %v8566
  %v8574 = vadd.f32 %v8330, %v8566
  %v8575 = vadd.f32 %v8333, %v8566
  %v8576 = vadd.f32 %v8338, %v8566
  %v8577 = vadd.f32 %v8341, %v8566
  %v8578 = vadd.f32 %v8346, %v8566
  %v8579 = vadd.f32 %v8349, %v8566
  %v8580 = vadd.f32 %v8354, %v8566
  %v8581 = vadd.f32 %v8357, %v8566
  %v8582 = vadd.f32 %v8362, %v8566
  %v8583 = vadd.f32 %v8365, %v8566
  %v8584 = vadd.f32 %v8370, %v8566
  %v8585 = vadd.f32 %v8373, %v8566
  %v8586 = vadd.f32 %v8378, %v8566
  %v8587 = vadd.f32 %v8381, %v8566
  %v8588 = vadd.f32 %v8386, %v8566
  %v8589 = vadd.f32 %v8389, %v8566
  %v8590 = vadd.f32 %v8394, %v8566
  %v8591 = vadd.f32 %v8397, %v8566
  %v8592 = vadd.f32 %v8402, %v8566
  %v8593 = vadd.f32 %v8405, %v8566
  %v8594 = vadd.f32 %v8410, %v8566
  %v8595 = vadd.f32 %v8413, %v8566
  %v8596 = vadd.f32 %v8418, %v8566
  %v8597 = vadd.f32 %v8421, %v8566
  %v8598 = vadd.f32 %v8426, %v8566
  %v8599 = vadd.f32 %v8429, %v8566
  %v8600 = vadd.f32 %v8434, %v8566
  %v8601 = vadd.f32 %v8437, %v8566
  %v8602 = vadd.f32 %v8442, %v8566
  %v8603 = vadd.f32 %v8445, %v8566
  %v8604 = vadd.f32 %v8450, %v8566
  %v8605 = vadd.f32 %v8453, %v8566
  %v8606 = vadd.f32 %v8458, %v8566
  %v8607 = vadd.f32 %v8461, %v8566
  %v8608 = vadd.f32 %v8466, %v8566
  %v8609 = vadd.f32 %v8469, %v8566
  %v8610 = vadd.f32 %v8474, %v8566
  %v8611 = vadd.f32 %v8477, %v8566
  %v8612 = vadd.f32 %v8482, %v8566
  %v8613 = vadd.f32 %v8485, %v8566
  %v8614 = vadd.f32 %v8490, %v8566
  %v8615 = vadd.f32 %v8493, %v8566
  %v8616 = vadd.f32 %v8498, %v8566
  %v8617 = vadd.f32 %v8501, %v8566
  %v8618 = vadd.f32 %v8506, %v8566
  %v8619 = vadd.f32 %v8509, %v8566
  %v8620 = vadd.f32 %v8514, %v8566
  %v8621 = vadd.f32 %v8517, %v8566
  %v8622 = vadd.f32 %v8522, %v8566
  %v8623 = vadd.f32 %v8525, %v8566
  %v8624 = vadd.f32 %v8530, %v8566
  %v8625 = vadd.f32 %v8533, %v8566
  %v8626 = vadd.f32 %v8538, %v8566
  %v8627 = vadd.f32 %v8541, %v8566
  %v8628 = vadd.f32 %v8546, %v8566
  %v8629 = vadd.f32 %v8549, %v8566
  %v8630 = vadd.f32 %v8554, %v8566
  %v8631 = vadd.f32 %v8557, %v8566
  %v8632 = vmax.f32 %v8568, 0.0
  %v8633 = vmax.f32 %v8569, 0.0
  %v8634 = vmax.f32 %v8570, 0.0
  %v8635 = vmax.f32 %v8571, 0.0
  %v8636 = vmax.f32 %v8572, 0.0
  %v8637 = vmax.f32 %v8573, 0.0
  %v8638 = vmax.f32 %v8574, 0.0
  %v8639 = vmax.f32 %v8575, 0.0
  %v8640 = vmax.f32 %v8576, 0.0
  %v8641 = vmax.f32 %v8577, 0.0
  %v8642 = vmax.f32 %v8578, 0.0
  %v8643 = vmax.f32 %v8579, 0.0
  %v8644 = vmax.f32 %v8580, 0.0
  %v8645 = vmax.f32 %v8581, 0.0
  %v8646 = vmax.f32 %v8582, 0.0
  %v8647 = vmax.f32 %v8583, 0.0
  %v8648 = vmax.f32 %v8584, 0.0
  %v8649 = vmax.f32 %v8585, 0.0
  %v8650 = vmax.f32 %v8586, 0.0
  %v8651 = vmax.f32 %v8587, 0.0
  %v8652 = vmax.f32 %v8588, 0.0
  %v8653 = vmax.f32 %v8589, 0.0
  %v8654 = vmax.f32 %v8590, 0.0
  %v8655 = vmax.f32 %v8591, 0.0
  %v8656 = vmax.f32 %v8592, 0.0
  %v8657 = vmax.f32 %v8593, 0.0
  %v8658 = vmax.f32 %v8594, 0.0
  %v8659 = vmax.f32 %v8595, 0.0
  %v8660 = vmax.f32 %v8596, 0.0
  %v8661 = vmax.f32 %v8597, 0.0
  %v8662 = vmax.f32 %v8598, 0.0
  %v8663 = vmax.f32 %v8599, 0.0
  %v8664 = vmax.f32 %v8600, 0.0
  %v8665 = vmax.f32 %v8601, 0.0
  %v8666 = vmax.f32 %v8602, 0.0
  %v8667 = vmax.f32 %v8603, 0.0
  %v8668 = vmax.f32 %v8604, 0.0
  %v8669 = vmax.f32 %v8605, 0.0
  %v8670 = vmax.f32 %v8606, 0.0
  %v8671 = vmax.f32 %v8607, 0.0
  %v8672 = vmax.f32 %v8608, 0.0
  %v8673 = vmax.f32 %v8609, 0.0
  %v8674 = vmax.f32 %v8610, 0.0
  %v8675 = vmax.f32 %v8611, 0.0
  %v8676 = vmax.f32 %v8612, 0.0
  %v8677 = vmax.f32 %v8613, 0.0
  %v8678 = vmax.f32 %v8614, 0.0
  %v8679 = vmax.f32 %v8615, 0.0
  %v8680 = vmax.f32 %v8616, 0.0
  %v8681 = vmax.f32 %v8617, 0.0
  %v8682 = vmax.f32 %v8618, 0.0
  %v8683 = vmax.f32 %v8619, 0.0
  %v8684 = vmax.f32 %v8620, 0.0
  %v8685 = vmax.f32 %v8621, 0.0
  %v8686 = vmax.f32 %v8622, 0.0
  %v8687 = vmax.f32 %v8623, 0.0
  %v8688 = vmax.f32 %v8624, 0.0
  %v8689 = vmax.f32 %v8625, 0.0
  %v8690 = vmax.f32 %v8626, 0.0
  %v8691 = vmax.f32 %v8627, 0.0
  %v8692 = vmax.f32 %v8628, 0.0
  %v8693 = vmax.f32 %v8629, 0.0
  %v8694 = vmax.f32 %v8630, 0.0
  %v8695 = vmax.f32 %v8631, 0.0
  %v8696 = vpack.c.bf16 %v8633, %v8632
  %v8697 = vpack.c.bf16 %v8635, %v8634
  %v8698 = vpack.c.bf16 %v8637, %v8636
  %v8699 = vpack.c.bf16 %v8639, %v8638
  %v8700 = vpack.c.bf16 %v8641, %v8640
  %v8701 = vpack.c.bf16 %v8643, %v8642
  %v8702 = vpack.c.bf16 %v8645, %v8644
  %v8703 = vpack.c.bf16 %v8647, %v8646
  %v8704 = vpack.c.bf16 %v8649, %v8648
  %v8705 = vpack.c.bf16 %v8651, %v8650
  %v8706 = vpack.c.bf16 %v8653, %v8652
  %v8707 = vpack.c.bf16 %v8655, %v8654
  %v8708 = vpack.c.bf16 %v8657, %v8656
  %v8709 = vpack.c.bf16 %v8659, %v8658
  %v8710 = vpack.c.bf16 %v8661, %v8660
  %v8711 = vpack.c.bf16 %v8663, %v8662
  %v8712 = vpack.c.bf16 %v8665, %v8664
  %v8713 = vpack.c.bf16 %v8667, %v8666
  %v8714 = vpack.c.bf16 %v8669, %v8668
  %v8715 = vpack.c.bf16 %v8671, %v8670
  %v8716 = vpack.c.bf16 %v8673, %v8672
  %v8717 = vpack.c.bf16 %v8675, %v8674
  %v8718 = vpack.c.bf16 %v8677, %v8676
  %v8719 = vpack.c.bf16 %v8679, %v8678
  %v8720 = vpack.c.bf16 %v8681, %v8680
  %v8721 = vpack.c.bf16 %v8683, %v8682
  %v8722 = vpack.c.bf16 %v8685, %v8684
  %v8723 = vpack.c.bf16 %v8687, %v8686
  %v8724 = vpack.c.bf16 %v8689, %v8688
  %v8725 = vpack.c.bf16 %v8691, %v8690
  %v8726 = vpack.c.bf16 %v8693, %v8692
  %v8727 = vpack.c.bf16 %v8695, %v8694
  %v8760 = vunpack.c.l.b16 %v8696
  %v8761 = vunpack.c.h.b16 %v8696
  %v8762 = vunpack.c.l.b16 %v8697
  %v8763 = vunpack.c.h.b16 %v8697
  %v8764 = vunpack.c.l.b16 %v8698
  %v8765 = vunpack.c.h.b16 %v8698
  %v8766 = vunpack.c.l.b16 %v8699
  %v8767 = vunpack.c.h.b16 %v8699
  %v8768 = vunpack.c.l.b16 %v8700
  %v8769 = vunpack.c.h.b16 %v8700
  %v8770 = vunpack.c.l.b16 %v8701
  %v8771 = vunpack.c.h.b16 %v8701
  %v8772 = vunpack.c.l.b16 %v8702
  %v8773 = vunpack.c.h.b16 %v8702
  %v8774 = vunpack.c.l.b16 %v8703
  %v8775 = vunpack.c.h.b16 %v8703
  %v8776 = vunpack.c.l.b16 %v8704
  %v8777 = vunpack.c.h.b16 %v8704
  %v8778 = vunpack.c.l.b16 %v8705
  %v8779 = vunpack.c.h.b16 %v8705
  %v8780 = vunpack.c.l.b16 %v8706
  %v8781 = vunpack.c.h.b16 %v8706
  %v8782 = vunpack.c.l.b16 %v8707
  %v8783 = vunpack.c.h.b16 %v8707
  %v8784 = vunpack.c.l.b16 %v8708
  %v8785 = vunpack.c.h.b16 %v8708
  %v8786 = vunpack.c.l.b16 %v8709
  %v8787 = vunpack.c.h.b16 %v8709
  %v8788 = vunpack.c.l.b16 %v8710
  %v8789 = vunpack.c.h.b16 %v8710
  %v8790 = vunpack.c.l.b16 %v8711
  %v8791 = vunpack.c.h.b16 %v8711
  %v8792 = vunpack.c.l.b16 %v8712
  %v8793 = vunpack.c.h.b16 %v8712
  %v8794 = vunpack.c.l.b16 %v8713
  %v8795 = vunpack.c.h.b16 %v8713
  %v8796 = vunpack.c.l.b16 %v8714
  %v8797 = vunpack.c.h.b16 %v8714
  %v8798 = vunpack.c.l.b16 %v8715
  %v8799 = vunpack.c.h.b16 %v8715
  %v8800 = vunpack.c.l.b16 %v8716
  %v8801 = vunpack.c.h.b16 %v8716
  %v8802 = vunpack.c.l.b16 %v8717
  %v8803 = vunpack.c.h.b16 %v8717
  %v8804 = vunpack.c.l.b16 %v8718
  %v8805 = vunpack.c.h.b16 %v8718
  %v8806 = vunpack.c.l.b16 %v8719
  %v8807 = vunpack.c.h.b16 %v8719
  %v8808 = vunpack.c.l.b16 %v8720
  %v8809 = vunpack.c.h.b16 %v8720
  %v8810 = vunpack.c.l.b16 %v8721
  %v8811 = vunpack.c.h.b16 %v8721
  %v8812 = vunpack.c.l.b16 %v8722
  %v8813 = vunpack.c.h.b16 %v8722
  %v8814 = vunpack.c.l.b16 %v8723
  %v8815 = vunpack.c.h.b16 %v8723
  %v8816 = vunpack.c.l.b16 %v8724
  %v8817 = vunpack.c.h.b16 %v8724
  %v8818 = vunpack.c.l.b16 %v8725
  %v8819 = vunpack.c.h.b16 %v8725
  %v8820 = vunpack.c.l.b16 %v8726
  %v8821 = vunpack.c.h.b16 %v8726
  %v8822 = vunpack.c.l.b16 %v8727
  %v8823 = vunpack.c.h.b16 %v8727
  %v8824 = vpack.c.b16 %v8760, %v8760
  %v8825 = vpack.c.b16 %v8761, %v8761
  %v8826 = vpack.c.b16 %v8762, %v8762
  %v8827 = vpack.c.b16 %v8763, %v8763
  %v8828 = vpack.c.b16 %v8764, %v8764
  %v8829 = vpack.c.b16 %v8765, %v8765
  %v8830 = vpack.c.b16 %v8766, %v8766
  %v8831 = vpack.c.b16 %v8767, %v8767
  %v8832 = vpack.c.b16 %v8768, %v8768
  %v8833 = vpack.c.b16 %v8769, %v8769
  %v8834 = vpack.c.b16 %v8770, %v8770
  %v8835 = vpack.c.b16 %v8771, %v8771
  %v8836 = vpack.c.b16 %v8772, %v8772
  %v8837 = vpack.c.b16 %v8773, %v8773
  %v8838 = vpack.c.b16 %v8774, %v8774
  %v8839 = vpack.c.b16 %v8775, %v8775
  %v8840 = vpack.c.b16 %v8776, %v8776
  %v8841 = vpack.c.b16 %v8777, %v8777
  %v8842 = vpack.c.b16 %v8778, %v8778
  %v8843 = vpack.c.b16 %v8779, %v8779
  %v8844 = vpack.c.b16 %v8780, %v8780
  %v8845 = vpack.c.b16 %v8781, %v8781
  %v8846 = vpack.c.b16 %v8782, %v8782
  %v8847 = vpack.c.b16 %v8783, %v8783
  %v8848 = vpack.c.b16 %v8784, %v8784
  %v8849 = vpack.c.b16 %v8785, %v8785
  %v8850 = vpack.c.b16 %v8786, %v8786
  %v8851 = vpack.c.b16 %v8787, %v8787
  %v8852 = vpack.c.b16 %v8788, %v8788
  %v8853 = vpack.c.b16 %v8789, %v8789
  %v8854 = vpack.c.b16 %v8790, %v8790
  %v8855 = vpack.c.b16 %v8791, %v8791
  %v8856 = vpack.c.b16 %v8792, %v8792
  %v8857 = vpack.c.b16 %v8793, %v8793
  %v8858 = vpack.c.b16 %v8794, %v8794
  %v8859 = vpack.c.b16 %v8795, %v8795
  %v8860 = vpack.c.b16 %v8796, %v8796
  %v8861 = vpack.c.b16 %v8797, %v8797
  %v8862 = vpack.c.b16 %v8798, %v8798
  %v8863 = vpack.c.b16 %v8799, %v8799
  %v8864 = vpack.c.b16 %v8800, %v8800
  %v8865 = vpack.c.b16 %v8801, %v8801
  %v8866 = vpack.c.b16 %v8802, %v8802
  %v8867 = vpack.c.b16 %v8803, %v8803
  %v8868 = vpack.c.b16 %v8804, %v8804
  %v8869 = vpack.c.b16 %v8805, %v8805
  %v8870 = vpack.c.b16 %v8806, %v8806
  %v8871 = vpack.c.b16 %v8807, %v8807
  %v8872 = vpack.c.b16 %v8808, %v8808
  %v8873 = vpack.c.b16 %v8809, %v8809
  %v8874 = vpack.c.b16 %v8810, %v8810
  %v8875 = vpack.c.b16 %v8811, %v8811
  %v8876 = vpack.c.b16 %v8812, %v8812
  %v8877 = vpack.c.b16 %v8813, %v8813
  %v8878 = vpack.c.b16 %v8814, %v8814
  %v8879 = vpack.c.b16 %v8815, %v8815
  %v8880 = vpack.c.b16 %v8816, %v8816
  %v8881 = vpack.c.b16 %v8817, %v8817
  %v8882 = vpack.c.b16 %v8818, %v8818
  %v8883 = vpack.c.b16 %v8819, %v8819
  %v8884 = vpack.c.b16 %v8820, %v8820
  %v8885 = vpack.c.b16 %v8821, %v8821
  %v8886 = vpack.c.b16 %v8822, %v8822
  %v8887 = vpack.c.b16 %v8823, %v8823
  %8952 = vst.msk [vmem:[%s570 + $0x8] sm:$0xf] %vm15, %v8824
  %8953 = vst.msk [vmem:[%s570 + $0xc] sm:$0xf] %vm15, %v8825
  %8954 = vst.msk [vmem:[%s570 + $0x1c] sm:$0xf] %vm15, %v8826
  %8955 = vst.msk [vmem:[%s570 + $0x20] sm:$0xf] %vm15, %v8827
  %8956 = vst.msk [vmem:[%s570 + $0x30] sm:$0xf] %vm15, %v8828
  %8957 = vst.msk [vmem:[%s570 + $0x34] sm:$0xf] %vm15, %v8829
  %8958 = vst.msk [vmem:[%s570 + $0x44] sm:$0xf] %vm15, %v8830
  %8959 = vst.msk [vmem:[%s570 + $0x48] sm:$0xf] %vm15, %v8831
  %8960 = vst.msk [vmem:[%s570 + $0x58] sm:$0xf] %vm15, %v8832
  %8961 = vst.msk [vmem:[%s570 + $0x5c] sm:$0xf] %vm15, %v8833
  %8962 = vst.msk [vmem:[%s570 + $0x6c] sm:$0xf] %vm15, %v8834
  %8963 = vst.msk [vmem:[%s570 + $0x70] sm:$0xf] %vm15, %v8835
  %8964 = vst.msk [vmem:[%s570 + $0x80] sm:$0xf] %vm15, %v8836
  %8965 = vst.msk [vmem:[%s570 + $0x84] sm:$0xf] %vm15, %v8837
  %8966 = vst.msk [vmem:[%s570 + $0x94] sm:$0xf] %vm15, %v8838
  %8967 = vst.msk [vmem:[%s570 + $0x98] sm:$0xf] %vm15, %v8839
  %8968 = vst.msk [vmem:[%s570 + $0xa8] sm:$0xf] %vm15, %v8840
  %8969 = vst.msk [vmem:[%s570 + $0xac] sm:$0xf] %vm15, %v8841
  %8970 = vst.msk [vmem:[%s570 + $0xbc] sm:$0xf] %vm15, %v8842
  %8971 = vst.msk [vmem:[%s570 + $0xc0] sm:$0xf] %vm15, %v8843
  %8972 = vst.msk [vmem:[%s570 + $0xd0] sm:$0xf] %vm15, %v8844
  %8973 = vst.msk [vmem:[%s570 + $0xd4] sm:$0xf] %vm15, %v8845
  %8974 = vst.msk [vmem:[%s570 + $0xe4] sm:$0xf] %vm15, %v8846
  %8975 = vst.msk [vmem:[%s570 + $0xe8] sm:$0xf] %vm15, %v8847
  %8976 = vst.msk [vmem:[%s570 + $0xf8] sm:$0xf] %vm15, %v8848
  %8977 = vst.msk [vmem:[%s570 + $0xfc] sm:$0xf] %vm15, %v8849
  %8978 = vst.msk [vmem:[%s570 + $0x10c] sm:$0xf] %vm15, %v8850
  %8979 = vst.msk [vmem:[%s570 + $0x110] sm:$0xf] %vm15, %v8851
  %8980 = vst.msk [vmem:[%s570 + $0x120] sm:$0xf] %vm15, %v8852
  %8981 = vst.msk [vmem:[%s570 + $0x124] sm:$0xf] %vm15, %v8853
  %8982 = vst.msk [vmem:[%s570 + $0x134] sm:$0xf] %vm15, %v8854
  %8983 = vst.msk [vmem:[%s570 + $0x138] sm:$0xf] %vm15, %v8855
  %8984 = vst.msk [vmem:[%s570 + $0x170] sm:$0xf] %vm15, %v8856
  %8985 = vst.msk [vmem:[%s570 + $0x174] sm:$0xf] %vm15, %v8857
  %8986 = vst.msk [vmem:[%s570 + $0x184] sm:$0xf] %vm15, %v8858
  %8987 = vst.msk [vmem:[%s570 + $0x188] sm:$0xf] %vm15, %v8859
  %8988 = vst.msk [vmem:[%s570 + $0x198] sm:$0xf] %vm15, %v8860
  %8989 = vst.msk [vmem:[%s570 + $0x19c] sm:$0xf] %vm15, %v8861
  %8990 = vst.msk [vmem:[%s570 + $0x1ac] sm:$0xf] %vm15, %v8862
  %8991 = vst.msk [vmem:[%s570 + $0x1b0] sm:$0xf] %vm15, %v8863
  %8992 = vst.msk [vmem:[%s570 + $0x1c0] sm:$0xf] %vm15, %v8864
  %8993 = vst.msk [vmem:[%s570 + $0x1c4] sm:$0xf] %vm15, %v8865
  %8994 = vst.msk [vmem:[%s570 + $0x1d4] sm:$0xf] %vm15, %v8866
  %8995 = vst.msk [vmem:[%s570 + $0x1d8] sm:$0xf] %vm15, %v8867
  %8996 = vst.msk [vmem:[%s570 + $0x1e8] sm:$0xf] %vm15, %v8868
  %8997 = vst.msk [vmem:[%s570 + $0x1ec] sm:$0xf] %vm15, %v8869
  %8998 = vst.msk [vmem:[%s570 + $0x1fc] sm:$0xf] %vm15, %v8870
  %8999 = vst.msk [vmem:[%s570 + $0x200] sm:$0xf] %vm15, %v8871
  %9000 = vst.msk [vmem:[%s570 + $0x210] sm:$0xf] %vm15, %v8872
  %9001 = vst.msk [vmem:[%s570 + $0x214] sm:$0xf] %vm15, %v8873
  %9002 = vst.msk [vmem:[%s570 + $0x224] sm:$0xf] %vm15, %v8874
  %9003 = vst.msk [vmem:[%s570 + $0x228] sm:$0xf] %vm15, %v8875
  %9004 = vst.msk [vmem:[%s570 + $0x238] sm:$0xf] %vm15, %v8876
  %9005 = vst.msk [vmem:[%s570 + $0x23c] sm:$0xf] %vm15, %v8877
  %9006 = vst.msk [vmem:[%s570 + $0x24c] sm:$0xf] %vm15, %v8878
  %9007 = vst.msk [vmem:[%s570 + $0x250] sm:$0xf] %vm15, %v8879
  %9008 = vst.msk [vmem:[%s570 + $0x260] sm:$0xf] %vm15, %v8880
  %9009 = vst.msk [vmem:[%s570 + $0x264] sm:$0xf] %vm15, %v8881
  %9010 = vst.msk [vmem:[%s570 + $0x274] sm:$0xf] %vm15, %v8882
  %9011 = vst.msk [vmem:[%s570 + $0x278] sm:$0xf] %vm15, %v8883
  %9012 = vst.msk [vmem:[%s570 + $0x288] sm:$0xf] %vm15, %v8884
  %9013 = vst.msk [vmem:[%s570 + $0x28c] sm:$0xf] %vm15, %v8885
  %9014 = vst.msk [vmem:[%s570 + $0x29c] sm:$0xf] %vm15, %v8886
  %9015 = vst.msk [vmem:[%s570 + $0x2a0] sm:$0xf] %vm15, %v8887
  %v9016 = vld [vmem:[#allocation2 + $0x4] sm:$0x8]
  %v9017 = vld [vmem:[#allocation2 + $0x8] sm:$0xf]
  %v9018 = vld [vmem:[#allocation2 + $0xc] sm:$0xf]
  %v9019 = vld [vmem:[#allocation2 + $0x18] sm:$0x8]
  %v9020 = vld [vmem:[#allocation2 + $0x1c] sm:$0xf]
  %v9021 = vld [vmem:[#allocation2 + $0x20] sm:$0xf]
  %v9022 = vld [vmem:[#allocation2 + $0x2c] sm:$0x8]
  %v9023 = vld [vmem:[#allocation2 + $0x30] sm:$0xf]
  %v9024 = vld [vmem:[#allocation2 + $0x34] sm:$0xf]
  %v9025 = vld [vmem:[#allocation2 + $0x40] sm:$0x8]
  %v9026 = vld [vmem:[#allocation2 + $0x44] sm:$0xf]
  %v9027 = vld [vmem:[#allocation2 + $0x48] sm:$0xf]
  %v9028 = vld [vmem:[#allocation2 + $0x54] sm:$0x8]
  %v9029 = vld [vmem:[#allocation2 + $0x58] sm:$0xf]
  %v9030 = vld [vmem:[#allocation2 + $0x5c] sm:$0xf]
  %v9031 = vld [vmem:[#allocation2 + $0x68] sm:$0x8]
  %v9032 = vld [vmem:[#allocation2 + $0x6c] sm:$0xf]
  %v9033 = vld [vmem:[#allocation2 + $0x70] sm:$0xf]
  %v9034 = vld [vmem:[#allocation2 + $0x7c] sm:$0x8]
  %v9035 = vld [vmem:[#allocation2 + $0x80] sm:$0xf]
  %v9036 = vld [vmem:[#allocation2 + $0x84] sm:$0xf]
  %v9037 = vld [vmem:[#allocation2 + $0x90] sm:$0x8]
  %v9038 = vld [vmem:[#allocation2 + $0x94] sm:$0xf]
  %v9039 = vld [vmem:[#allocation2 + $0x98] sm:$0xf]
  %v9040 = vld [vmem:[#allocation2 + $0xa4] sm:$0x8]
  %v9041 = vld [vmem:[#allocation2 + $0xa8] sm:$0xf]
  %v9042 = vld [vmem:[#allocation2 + $0xac] sm:$0xf]
  %v9043 = vld [vmem:[#allocation2 + $0xb8] sm:$0x8]
  %v9044 = vld [vmem:[#allocation2 + $0xbc] sm:$0xf]
  %v9045 = vld [vmem:[#allocation2 + $0xc0] sm:$0xf]
  %v9046 = vld [vmem:[#allocation2 + $0xcc] sm:$0x8]
  %v9047 = vld [vmem:[#allocation2 + $0xd0] sm:$0xf]
  %v9048 = vld [vmem:[#allocation2 + $0xd4] sm:$0xf]
  %v9049 = vld [vmem:[#allocation2 + $0xe0] sm:$0x8]
  %v9050 = vld [vmem:[#allocation2 + $0xe4] sm:$0xf]
  %v9051 = vld [vmem:[#allocation2 + $0xe8] sm:$0xf]
  %v9052 = vld [vmem:[#allocation2 + $0xf4] sm:$0x8]
  %v9053 = vld [vmem:[#allocation2 + $0xf8] sm:$0xf]
  %v9054 = vld [vmem:[#allocation2 + $0xfc] sm:$0xf]
  %v9055 = vld [vmem:[#allocation2 + $0x108] sm:$0x8]
  %v9056 = vld [vmem:[#allocation2 + $0x10c] sm:$0xf]
  %v9057 = vld [vmem:[#allocation2 + $0x110] sm:$0xf]
  %v9058 = vld [vmem:[#allocation2 + $0x11c] sm:$0x8]
  %v9059 = vld [vmem:[#allocation2 + $0x120] sm:$0xf]
  %v9060 = vld [vmem:[#allocation2 + $0x124] sm:$0xf]
  %v9061 = vld [vmem:[#allocation2 + $0x130] sm:$0x8]
  %v9062 = vld [vmem:[#allocation2 + $0x134] sm:$0xf]
  %v9063 = vld [vmem:[#allocation2 + $0x138] sm:$0xf]
  %v9064 = vld [vmem:[#allocation2 + $0x144] sm:$0x8]
  %v9065 = vld [vmem:[#allocation2 + $0x148] sm:$0xf]
  %v9066 = vld [vmem:[#allocation2 + $0x14c] sm:$0xf]
  %v9067 = vld [vmem:[#allocation2 + $0x158] sm:$0x8]
  %v9068 = vld [vmem:[#allocation2 + $0x15c] sm:$0xf]
  %v9069 = vld [vmem:[#allocation2 + $0x160] sm:$0xf]
  %v9070 = vld [vmem:[#allocation2 + $0x16c] sm:$0x8]
  %v9071 = vld [vmem:[#allocation2 + $0x170] sm:$0xf]
  %v9072 = vld [vmem:[#allocation2 + $0x174] sm:$0xf]
  %v9073 = vld [vmem:[#allocation2 + $0x180] sm:$0x8]
  %v9074 = vld [vmem:[#allocation2 + $0x184] sm:$0xf]
  %v9075 = vld [vmem:[#allocation2 + $0x188] sm:$0xf]
  %v9076 = vld [vmem:[#allocation2 + $0x194] sm:$0x8]
  %v9077 = vld [vmem:[#allocation2 + $0x198] sm:$0xf]
  %v9078 = vld [vmem:[#allocation2 + $0x19c] sm:$0xf]
  %v9079 = vld [vmem:[#allocation2 + $0x1a8] sm:$0x8]
  %v9080 = vld [vmem:[#allocation2 + $0x1ac] sm:$0xf]
  %v9081 = vld [vmem:[#allocation2 + $0x1b0] sm:$0xf]
  %v9082 = vld [vmem:[#allocation2 + $0x1bc] sm:$0x8]
  %v9083 = vld [vmem:[#allocation2 + $0x1c0] sm:$0xf]
  %v9084 = vld [vmem:[#allocation2 + $0x1c4] sm:$0xf]
  %v9085 = vld [vmem:[#allocation2 + $0x1d0] sm:$0x8]
  %v9086 = vld [vmem:[#allocation2 + $0x1d4] sm:$0xf]
  %v9087 = vld [vmem:[#allocation2 + $0x1d8] sm:$0xf]
  %v9088 = vld [vmem:[#allocation2 + $0x1e4] sm:$0x8]
  %v9089 = vld [vmem:[#allocation2 + $0x1e8] sm:$0xf]
  %v9090 = vld [vmem:[#allocation2 + $0x1ec] sm:$0xf]
  %v9091 = vld [vmem:[#allocation2 + $0x1f8] sm:$0x8]
  %v9092 = vld [vmem:[#allocation2 + $0x1fc] sm:$0xf]
  %v9093 = vld [vmem:[#allocation2 + $0x200] sm:$0xf]
  %v9094 = vld [vmem:[#allocation2 + $0x20c] sm:$0x8]
  %v9095 = vld [vmem:[#allocation2 + $0x210] sm:$0xf]
  %v9096 = vld [vmem:[#allocation2 + $0x214] sm:$0xf]
  %v9097 = vld [vmem:[#allocation2 + $0x220] sm:$0x8]
  %v9098 = vld [vmem:[#allocation2 + $0x224] sm:$0xf]
  %v9099 = vld [vmem:[#allocation2 + $0x228] sm:$0xf]
  %v9100 = vld [vmem:[#allocation2 + $0x234] sm:$0x8]
  %v9101 = vld [vmem:[#allocation2 + $0x238] sm:$0xf]
  %v9102 = vld [vmem:[#allocation2 + $0x23c] sm:$0xf]
  %v9103 = vld [vmem:[#allocation2 + $0x248] sm:$0x8]
  %v9104 = vld [vmem:[#allocation2 + $0x24c] sm:$0xf]
  %v9105 = vld [vmem:[#allocation2 + $0x250] sm:$0xf]
  %v9106 = vld [vmem:[#allocation2 + $0x25c] sm:$0x8]
  %v9107 = vld [vmem:[#allocation2 + $0x260] sm:$0xf]
  %v9108 = vld [vmem:[#allocation2 + $0x264] sm:$0xf]
  %v9109 = vld [vmem:[#allocation2 + $0x270] sm:$0x8]
  %v9110 = vld [vmem:[#allocation2 + $0x274] sm:$0xf]
  %v9111 = vld [vmem:[#allocation2 + $0x278] sm:$0xf]
  %v9112 = vld [vmem:[#allocation2 + $0x284] sm:$0x8]
  %v9113 = vld [vmem:[#allocation2 + $0x288] sm:$0xf]
  %v9114 = vld [vmem:[#allocation2 + $0x28c] sm:$0xf]
  %v9115 = vld [vmem:[#allocation2 + $0x298] sm:$0x8]
  %v9116 = vld [vmem:[#allocation2 + $0x29c] sm:$0xf]
  %v9117 = vld [vmem:[#allocation2 + $0x2a0] sm:$0xf]
  %v9118 = vld [vmem:[#allocation2 + $0x2ac] sm:$0x8]
  %v9119 = vld [vmem:[#allocation2 + $0x2b0] sm:$0xf]
  %v9120 = vld [vmem:[#allocation2 + $0x2b4] sm:$0xf]
  %v9121 = vld [vmem:[#allocation2 + $0x2c0] sm:$0x8]
  %v9122 = vld [vmem:[#allocation2 + $0x2c4] sm:$0xf]
  %v9123 = vld [vmem:[#allocation2 + $0x2c8] sm:$0xf]
  %v9124 = vld [vmem:[#allocation2 + $0x10] sm:$0x1]
  %v9125 = vld [vmem:[#allocation2 + $0x24] sm:$0x1]
  %v9126 = vld [vmem:[#allocation2 + $0x38] sm:$0x1]
  %v9127 = vld [vmem:[#allocation2 + $0x4c] sm:$0x1]
  %v9128 = vld [vmem:[#allocation2 + $0x60] sm:$0x1]
  %v9129 = vld [vmem:[#allocation2 + $0x74] sm:$0x1]
  %v9130 = vld [vmem:[#allocation2 + $0x88] sm:$0x1]
  %v9131 = vld [vmem:[#allocation2 + $0x9c] sm:$0x1]
  %v9132 = vld [vmem:[#allocation2 + $0xb0] sm:$0x1]
  %v9133 = vld [vmem:[#allocation2 + $0xc4] sm:$0x1]
  %v9134 = vld [vmem:[#allocation2 + $0xd8] sm:$0x1]
  %v9135 = vld [vmem:[#allocation2 + $0xec] sm:$0x1]
  %v9136 = vld [vmem:[#allocation2 + $0x100] sm:$0x1]
  %v9137 = vld [vmem:[#allocation2 + $0x114] sm:$0x1]
  %v9138 = vld [vmem:[#allocation2 + $0x128] sm:$0x1]
  %v9139 = vld [vmem:[#allocation2 + $0x13c] sm:$0x1]
  %v9140 = vld [vmem:[#allocation2 + $0x150] sm:$0x1]
  %v9141 = vld [vmem:[#allocation2 + $0x164] sm:$0x1]
  %v9142 = vld [vmem:[#allocation2 + $0x178] sm:$0x1]
  %v9143 = vld [vmem:[#allocation2 + $0x18c] sm:$0x1]
  %v9144 = vld [vmem:[#allocation2 + $0x1a0] sm:$0x1]
  %v9145 = vld [vmem:[#allocation2 + $0x1b4] sm:$0x1]
  %v9146 = vld [vmem:[#allocation2 + $0x1c8] sm:$0x1]
  %v9147 = vld [vmem:[#allocation2 + $0x1dc] sm:$0x1]
  %v9148 = vld [vmem:[#allocation2 + $0x1f0] sm:$0x1]
  %v9149 = vld [vmem:[#allocation2 + $0x204] sm:$0x1]
  %v9150 = vld [vmem:[#allocation2 + $0x218] sm:$0x1]
  %v9151 = vld [vmem:[#allocation2 + $0x22c] sm:$0x1]
  %v9152 = vld [vmem:[#allocation2 + $0x240] sm:$0x1]
  %v9153 = vld [vmem:[#allocation2 + $0x254] sm:$0x1]
  %v9154 = vld [vmem:[#allocation2 + $0x268] sm:$0x1]
  %v9155 = vld [vmem:[#allocation2 + $0x27c] sm:$0x1]
  %v9156 = vld [vmem:[#allocation2 + $0x290] sm:$0x1]
  %v9157 = vld [vmem:[#allocation2 + $0x2a4] sm:$0x1]
  %v9158 = vld [vmem:[#allocation2 + $0x2b8] sm:$0x1]
  %v9159 = vld [vmem:[#allocation2 + $0x2cc] sm:$0x1]
  %v9256 = vunpack.c.l.b16 %v9016
  %v9257 = vunpack.c.l.b16 %v9017
  %v9258 = vunpack.c.l.b16 %v9018
  %v9259 = vunpack.c.l.b16 %v9019
  %v9260 = vunpack.c.l.b16 %v9020
  %v9261 = vunpack.c.l.b16 %v9021
  %v9262 = vunpack.c.l.b16 %v9022
  %v9263 = vunpack.c.l.b16 %v9023
  %v9264 = vunpack.c.l.b16 %v9024
  %v9265 = vunpack.c.l.b16 %v9025
  %v9266 = vunpack.c.l.b16 %v9026
  %v9267 = vunpack.c.l.b16 %v9027
  %v9268 = vunpack.c.l.b16 %v9028
  %v9269 = vunpack.c.l.b16 %v9029
  %v9270 = vunpack.c.l.b16 %v9030
  %v9271 = vunpack.c.l.b16 %v9031
  %v9272 = vunpack.c.l.b16 %v9032
  %v9273 = vunpack.c.l.b16 %v9033
  %v9274 = vunpack.c.l.b16 %v9034
  %v9275 = vunpack.c.l.b16 %v9035
  %v9276 = vunpack.c.l.b16 %v9036
  %v9277 = vunpack.c.l.b16 %v9037
  %v9278 = vunpack.c.l.b16 %v9038
  %v9279 = vunpack.c.l.b16 %v9039
  %v9280 = vunpack.c.l.b16 %v9040
  %v9281 = vunpack.c.l.b16 %v9041
  %v9282 = vunpack.c.l.b16 %v9042
  %v9283 = vunpack.c.l.b16 %v9043
  %v9284 = vunpack.c.l.b16 %v9044
  %v9285 = vunpack.c.l.b16 %v9045
  %v9286 = vunpack.c.l.b16 %v9046
  %v9287 = vunpack.c.l.b16 %v9047
  %v9288 = vunpack.c.l.b16 %v9048
  %v9289 = vunpack.c.l.b16 %v9049
  %v9290 = vunpack.c.l.b16 %v9050
  %v9291 = vunpack.c.l.b16 %v9051
  %v9292 = vunpack.c.l.b16 %v9052
  %v9293 = vunpack.c.l.b16 %v9053
  %v9294 = vunpack.c.l.b16 %v9054
  %v9295 = vunpack.c.l.b16 %v9055
  %v9296 = vunpack.c.l.b16 %v9056
  %v9297 = vunpack.c.l.b16 %v9057
  %v9298 = vunpack.c.l.b16 %v9058
  %v9299 = vunpack.c.l.b16 %v9059
  %v9300 = vunpack.c.l.b16 %v9060
  %v9301 = vunpack.c.l.b16 %v9061
  %v9302 = vunpack.c.l.b16 %v9062
  %v9303 = vunpack.c.l.b16 %v9063
  %v9304 = vunpack.c.l.b16 %v9070
  %v9305 = vunpack.c.l.b16 %v9071
  %v9306 = vunpack.c.l.b16 %v9072
  %v9307 = vunpack.c.l.b16 %v9073
  %v9308 = vunpack.c.l.b16 %v9074
  %v9309 = vunpack.c.l.b16 %v9075
  %v9310 = vunpack.c.l.b16 %v9076
  %v9311 = vunpack.c.l.b16 %v9077
  %v9312 = vunpack.c.l.b16 %v9078
  %v9313 = vunpack.c.l.b16 %v9079
  %v9314 = vunpack.c.l.b16 %v9080
  %v9315 = vunpack.c.l.b16 %v9081
  %v9316 = vunpack.c.l.b16 %v9082
  %v9317 = vunpack.c.l.b16 %v9083
  %v9318 = vunpack.c.l.b16 %v9084
  %v9319 = vunpack.c.l.b16 %v9085
  %v9320 = vunpack.c.l.b16 %v9086
  %v9321 = vunpack.c.l.b16 %v9087
  %v9322 = vunpack.c.l.b16 %v9088
  %v9323 = vunpack.c.l.b16 %v9089
  %v9324 = vunpack.c.l.b16 %v9090
  %v9325 = vunpack.c.l.b16 %v9091
  %v9326 = vunpack.c.l.b16 %v9092
  %v9327 = vunpack.c.l.b16 %v9093
  %v9328 = vunpack.c.l.b16 %v9094
  %v9329 = vunpack.c.l.b16 %v9095
  %v9330 = vunpack.c.l.b16 %v9096
  %v9331 = vunpack.c.l.b16 %v9097
  %v9332 = vunpack.c.l.b16 %v9098
  %v9333 = vunpack.c.l.b16 %v9099
  %v9334 = vunpack.c.l.b16 %v9100
  %v9335 = vunpack.c.l.b16 %v9101
  %v9336 = vunpack.c.l.b16 %v9102
  %v9337 = vunpack.c.l.b16 %v9103
  %v9338 = vunpack.c.l.b16 %v9104
  %v9339 = vunpack.c.l.b16 %v9105
  %v9340 = vunpack.c.l.b16 %v9106
  %v9341 = vunpack.c.l.b16 %v9107
  %v9342 = vunpack.c.l.b16 %v9108
  %v9343 = vunpack.c.l.b16 %v9109
  %v9344 = vunpack.c.l.b16 %v9110
  %v9345 = vunpack.c.l.b16 %v9111
  %v9346 = vunpack.c.l.b16 %v9112
  %v9347 = vunpack.c.l.b16 %v9113
  %v9348 = vunpack.c.l.b16 %v9114
  %v9349 = vunpack.c.l.b16 %v9115
  %v9350 = vunpack.c.l.b16 %v9116
  %v9351 = vunpack.c.l.b16 %v9117
  %v9352 = vpack.c.b16 %v9257, %v9256
  %v9353 = vpack.c.b16 %v9258, %v9258
  %v9354 = vpack.c.b16 %v9260, %v9259
  %v9355 = vpack.c.b16 %v9261, %v9261
  %v9356 = vpack.c.b16 %v9263, %v9262
  %v9357 = vpack.c.b16 %v9264, %v9264
  %v9358 = vpack.c.b16 %v9266, %v9265
  %v9359 = vpack.c.b16 %v9267, %v9267
  %v9360 = vpack.c.b16 %v9269, %v9268
  %v9361 = vpack.c.b16 %v9270, %v9270
  %v9362 = vpack.c.b16 %v9272, %v9271
  %v9363 = vpack.c.b16 %v9273, %v9273
  %v9364 = vpack.c.b16 %v9275, %v9274
  %v9365 = vpack.c.b16 %v9276, %v9276
  %v9366 = vpack.c.b16 %v9278, %v9277
  %v9367 = vpack.c.b16 %v9279, %v9279
  %v9368 = vpack.c.b16 %v9281, %v9280
  %v9369 = vpack.c.b16 %v9282, %v9282
  %v9370 = vpack.c.b16 %v9284, %v9283
  %v9371 = vpack.c.b16 %v9285, %v9285
  %v9372 = vpack.c.b16 %v9287, %v9286
  %v9373 = vpack.c.b16 %v9288, %v9288
  %v9374 = vpack.c.b16 %v9290, %v9289
  %v9375 = vpack.c.b16 %v9291, %v9291
  %v9376 = vpack.c.b16 %v9293, %v9292
  %v9377 = vpack.c.b16 %v9294, %v9294
  %v9378 = vpack.c.b16 %v9296, %v9295
  %v9379 = vpack.c.b16 %v9297, %v9297
  %v9380 = vpack.c.b16 %v9299, %v9298
  %v9381 = vpack.c.b16 %v9300, %v9300
  %v9382 = vpack.c.b16 %v9302, %v9301
  %v9383 = vpack.c.b16 %v9303, %v9303
  %v9384 = vpack.c.b16 %v9305, %v9304
  %v9385 = vpack.c.b16 %v9306, %v9306
  %v9386 = vpack.c.b16 %v9308, %v9307
  %v9387 = vpack.c.b16 %v9309, %v9309
  %v9388 = vpack.c.b16 %v9311, %v9310
  %v9389 = vpack.c.b16 %v9312, %v9312
  %v9390 = vpack.c.b16 %v9314, %v9313
  %v9391 = vpack.c.b16 %v9315, %v9315
  %v9392 = vpack.c.b16 %v9317, %v9316
  %v9393 = vpack.c.b16 %v9318, %v9318
  %v9394 = vpack.c.b16 %v9320, %v9319
  %v9395 = vpack.c.b16 %v9321, %v9321
  %v9396 = vpack.c.b16 %v9323, %v9322
  %v9397 = vpack.c.b16 %v9324, %v9324
  %v9398 = vpack.c.b16 %v9326, %v9325
  %v9399 = vpack.c.b16 %v9327, %v9327
  %v9400 = vpack.c.b16 %v9329, %v9328
  %v9401 = vpack.c.b16 %v9330, %v9330
  %v9402 = vpack.c.b16 %v9332, %v9331
  %v9403 = vpack.c.b16 %v9333, %v9333
  %v9404 = vpack.c.b16 %v9335, %v9334
  %v9405 = vpack.c.b16 %v9336, %v9336
  %v9406 = vpack.c.b16 %v9338, %v9337
  %v9407 = vpack.c.b16 %v9339, %v9339
  %v9408 = vpack.c.b16 %v9341, %v9340
  %v9409 = vpack.c.b16 %v9342, %v9342
  %v9410 = vpack.c.b16 %v9344, %v9343
  %v9411 = vpack.c.b16 %v9345, %v9345
  %v9412 = vpack.c.b16 %v9347, %v9346
  %v9413 = vpack.c.b16 %v9348, %v9348
  %v9414 = vpack.c.b16 %v9350, %v9349
  %v9415 = vpack.c.b16 %v9351, %v9351
  %v9416 = vpack.c.b16 %v9258, %v9257
  %v9417 = vpack.c.b16 %v9261, %v9260
  %v9418 = vpack.c.b16 %v9264, %v9263
  %v9419 = vpack.c.b16 %v9267, %v9266
  %v9420 = vpack.c.b16 %v9270, %v9269
  %v9421 = vpack.c.b16 %v9273, %v9272
  %v9422 = vpack.c.b16 %v9276, %v9275
  %v9423 = vpack.c.b16 %v9279, %v9278
  %v9424 = vpack.c.b16 %v9282, %v9281
  %v9425 = vpack.c.b16 %v9285, %v9284
  %v9426 = vpack.c.b16 %v9288, %v9287
  %v9427 = vpack.c.b16 %v9291, %v9290
  %v9428 = vpack.c.b16 %v9294, %v9293
  %v9429 = vpack.c.b16 %v9297, %v9296
  %v9430 = vpack.c.b16 %v9300, %v9299
  %v9431 = vpack.c.b16 %v9303, %v9302
  %v9432 = vpack.c.b16 %v9306, %v9305
  %v9433 = vpack.c.b16 %v9309, %v9308
  %v9434 = vpack.c.b16 %v9312, %v9311
  %v9435 = vpack.c.b16 %v9315, %v9314
  %v9436 = vpack.c.b16 %v9318, %v9317
  %v9437 = vpack.c.b16 %v9321, %v9320
  %v9438 = vpack.c.b16 %v9324, %v9323
  %v9439 = vpack.c.b16 %v9327, %v9326
  %v9440 = vpack.c.b16 %v9330, %v9329
  %v9441 = vpack.c.b16 %v9333, %v9332
  %v9442 = vpack.c.b16 %v9336, %v9335
  %v9443 = vpack.c.b16 %v9339, %v9338
  %v9444 = vpack.c.b16 %v9342, %v9341
  %v9445 = vpack.c.b16 %v9345, %v9344
  %v9446 = vpack.c.b16 %v9348, %v9347
  %v9447 = vpack.c.b16 %v9351, %v9350
  %v9449 = vshrl.u32 %v9416, 16
  %v9451 = vrot.slane %v9449, 4
  %v9452 = vshll.u32 %v9416, 16
  %v9454 = vrot.slane %v9452, 5
  %v9455 = vor.u32 %v9451, %v9454
  %v9457 = vshrl.u32 %v9417, 16
  %v9459 = vrot.slane %v9457, 4
  %v9460 = vshll.u32 %v9417, 16
  %v9462 = vrot.slane %v9460, 5
  %v9463 = vor.u32 %v9459, %v9462
  %v9465 = vshrl.u32 %v9418, 16
  %v9467 = vrot.slane %v9465, 4
  %v9468 = vshll.u32 %v9418, 16
  %v9470 = vrot.slane %v9468, 5
  %v9471 = vor.u32 %v9467, %v9470
  %v9473 = vshrl.u32 %v9419, 16
  %v9475 = vrot.slane %v9473, 4
  %v9476 = vshll.u32 %v9419, 16
  %v9478 = vrot.slane %v9476, 5
  %v9479 = vor.u32 %v9475, %v9478
  %v9481 = vshrl.u32 %v9420, 16
  %v9483 = vrot.slane %v9481, 4
  %v9484 = vshll.u32 %v9420, 16
  %v9486 = vrot.slane %v9484, 5
  %v9487 = vor.u32 %v9483, %v9486
  %v9489 = vshrl.u32 %v9421, 16
  %v9491 = vrot.slane %v9489, 4
  %v9492 = vshll.u32 %v9421, 16
  %v9494 = vrot.slane %v9492, 5
  %v9495 = vor.u32 %v9491, %v9494
  %v9497 = vshrl.u32 %v9422, 16
  %v9499 = vrot.slane %v9497, 4
  %v9500 = vshll.u32 %v9422, 16
  %v9502 = vrot.slane %v9500, 5
  %v9503 = vor.u32 %v9499, %v9502
  %v9505 = vshrl.u32 %v9423, 16
  %v9507 = vrot.slane %v9505, 4
  %v9508 = vshll.u32 %v9423, 16
  %v9510 = vrot.slane %v9508, 5
  %v9511 = vor.u32 %v9507, %v9510
  %v9513 = vshrl.u32 %v9424, 16
  %v9515 = vrot.slane %v9513, 4
  %v9516 = vshll.u32 %v9424, 16
  %v9518 = vrot.slane %v9516, 5
  %v9519 = vor.u32 %v9515, %v9518
  %v9521 = vshrl.u32 %v9425, 16
  %v9523 = vrot.slane %v9521, 4
  %v9524 = vshll.u32 %v9425, 16
  %v9526 = vrot.slane %v9524, 5
  %v9527 = vor.u32 %v9523, %v9526
  %v9529 = vshrl.u32 %v9426, 16
  %v9531 = vrot.slane %v9529, 4
  %v9532 = vshll.u32 %v9426, 16
  %v9534 = vrot.slane %v9532, 5
  %v9535 = vor.u32 %v9531, %v9534
  %v9537 = vshrl.u32 %v9427, 16
  %v9539 = vrot.slane %v9537, 4
  %v9540 = vshll.u32 %v9427, 16
  %v9542 = vrot.slane %v9540, 5
  %v9543 = vor.u32 %v9539, %v9542
  %v9545 = vshrl.u32 %v9428, 16
  %v9547 = vrot.slane %v9545, 4
  %v9548 = vshll.u32 %v9428, 16
  %v9550 = vrot.slane %v9548, 5
  %v9551 = vor.u32 %v9547, %v9550
  %v9553 = vshrl.u32 %v9429, 16
  %v9555 = vrot.slane %v9553, 4
  %v9556 = vshll.u32 %v9429, 16
  %v9558 = vrot.slane %v9556, 5
  %v9559 = vor.u32 %v9555, %v9558
  %v9561 = vshrl.u32 %v9430, 16
  %v9563 = vrot.slane %v9561, 4
  %v9564 = vshll.u32 %v9430, 16
  %v9566 = vrot.slane %v9564, 5
  %v9567 = vor.u32 %v9563, %v9566
  %v9569 = vshrl.u32 %v9431, 16
  %v9571 = vrot.slane %v9569, 4
  %v9572 = vshll.u32 %v9431, 16
  %v9574 = vrot.slane %v9572, 5
  %v9575 = vor.u32 %v9571, %v9574
  %v9577 = vshrl.u32 %v9432, 16
  %v9579 = vrot.slane %v9577, 4
  %v9580 = vshll.u32 %v9432, 16
  %v9582 = vrot.slane %v9580, 5
  %v9583 = vor.u32 %v9579, %v9582
  %v9585 = vshrl.u32 %v9433, 16
  %v9587 = vrot.slane %v9585, 4
  %v9588 = vshll.u32 %v9433, 16
  %v9590 = vrot.slane %v9588, 5
  %v9591 = vor.u32 %v9587, %v9590
  %v9593 = vshrl.u32 %v9434, 16
  %v9595 = vrot.slane %v9593, 4
  %v9596 = vshll.u32 %v9434, 16
  %v9598 = vrot.slane %v9596, 5
  %v9599 = vor.u32 %v9595, %v9598
  %v9601 = vshrl.u32 %v9435, 16
  %v9603 = vrot.slane %v9601, 4
  %v9604 = vshll.u32 %v9435, 16
  %v9606 = vrot.slane %v9604, 5
  %v9607 = vor.u32 %v9603, %v9606
  %v9609 = vshrl.u32 %v9436, 16
  %v9611 = vrot.slane %v9609, 4
  %v9612 = vshll.u32 %v9436, 16
  %v9614 = vrot.slane %v9612, 5
  %v9615 = vor.u32 %v9611, %v9614
  %v9617 = vshrl.u32 %v9437, 16
  %v9619 = vrot.slane %v9617, 4
  %v9620 = vshll.u32 %v9437, 16
  %v9622 = vrot.slane %v9620, 5
  %v9623 = vor.u32 %v9619, %v9622
  %v9625 = vshrl.u32 %v9438, 16
  %v9627 = vrot.slane %v9625, 4
  %v9628 = vshll.u32 %v9438, 16
  %v9630 = vrot.slane %v9628, 5
  %v9631 = vor.u32 %v9627, %v9630
  %v9633 = vshrl.u32 %v9439, 16
  %v9635 = vrot.slane %v9633, 4
  %v9636 = vshll.u32 %v9439, 16
  %v9638 = vrot.slane %v9636, 5
  %v9639 = vor.u32 %v9635, %v9638
  %v9641 = vshrl.u32 %v9440, 16
  %v9643 = vrot.slane %v9641, 4
  %v9644 = vshll.u32 %v9440, 16
  %v9646 = vrot.slane %v9644, 5
  %v9647 = vor.u32 %v9643, %v9646
  %v9649 = vshrl.u32 %v9441, 16
  %v9651 = vrot.slane %v9649, 4
  %v9652 = vshll.u32 %v9441, 16
  %v9654 = vrot.slane %v9652, 5
  %v9655 = vor.u32 %v9651, %v9654
  %v9657 = vshrl.u32 %v9442, 16
  %v9659 = vrot.slane %v9657, 4
  %v9660 = vshll.u32 %v9442, 16
  %v9662 = vrot.slane %v9660, 5
  %v9663 = vor.u32 %v9659, %v9662
  %v9665 = vshrl.u32 %v9443, 16
  %v9667 = vrot.slane %v9665, 4
  %v9668 = vshll.u32 %v9443, 16
  %v9670 = vrot.slane %v9668, 5
  %v9671 = vor.u32 %v9667, %v9670
  %v9673 = vshrl.u32 %v9444, 16
  %v9675 = vrot.slane %v9673, 4
  %v9676 = vshll.u32 %v9444, 16
  %v9678 = vrot.slane %v9676, 5
  %v9679 = vor.u32 %v9675, %v9678
  %v9681 = vshrl.u32 %v9445, 16
  %v9683 = vrot.slane %v9681, 4
  %v9684 = vshll.u32 %v9445, 16
  %v9686 = vrot.slane %v9684, 5
  %v9687 = vor.u32 %v9683, %v9686
  %v9689 = vshrl.u32 %v9446, 16
  %v9691 = vrot.slane %v9689, 4
  %v9692 = vshll.u32 %v9446, 16
  %v9694 = vrot.slane %v9692, 5
  %v9695 = vor.u32 %v9691, %v9694
  %v9697 = vshrl.u32 %v9447, 16
  %v9699 = vrot.slane %v9697, 4
  %v9700 = vshll.u32 %v9447, 16
  %v9702 = vrot.slane %v9700, 5
  %v9703 = vor.u32 %v9699, %v9702
  %9704 = vrot.lane.b32.xlu0 %v9455, 8
  %v9705 = vpop.permute.xlu0 %9704
  %9706 = vrot.lane.b32.xlu0 %v9463, 8
  %v9707 = vpop.permute.xlu0 %9706
  %9708 = vrot.lane.b32.xlu0 %v9471, 8
  %v9709 = vpop.permute.xlu0 %9708
  %9710 = vrot.lane.b32.xlu0 %v9479, 8
  %v9711 = vpop.permute.xlu0 %9710
  %9712 = vrot.lane.b32.xlu0 %v9487, 8
  %v9713 = vpop.permute.xlu0 %9712
  %9714 = vrot.lane.b32.xlu0 %v9495, 8
  %v9715 = vpop.permute.xlu0 %9714
  %9716 = vrot.lane.b32.xlu0 %v9503, 8
  %v9717 = vpop.permute.xlu0 %9716
  %9718 = vrot.lane.b32.xlu0 %v9511, 8
  %v9719 = vpop.permute.xlu0 %9718
  %9720 = vrot.lane.b32.xlu0 %v9519, 8
  %v9721 = vpop.permute.xlu0 %9720
  %9722 = vrot.lane.b32.xlu0 %v9527, 8
  %v9723 = vpop.permute.xlu0 %9722
  %9724 = vrot.lane.b32.xlu0 %v9535, 8
  %v9725 = vpop.permute.xlu0 %9724
  %9726 = vrot.lane.b32.xlu0 %v9543, 8
  %v9727 = vpop.permute.xlu0 %9726
  %9728 = vrot.lane.b32.xlu0 %v9551, 8
  %v9729 = vpop.permute.xlu0 %9728
  %9730 = vrot.lane.b32.xlu0 %v9559, 8
  %v9731 = vpop.permute.xlu0 %9730
  %9732 = vrot.lane.b32.xlu0 %v9567, 8
  %v9733 = vpop.permute.xlu0 %9732
  %9734 = vrot.lane.b32.xlu0 %v9575, 8
  %v9735 = vpop.permute.xlu0 %9734
  %9736 = vrot.lane.b32.xlu0 %v9583, 8
  %v9737 = vpop.permute.xlu0 %9736
  %9738 = vrot.lane.b32.xlu0 %v9591, 8
  %v9739 = vpop.permute.xlu0 %9738
  %9740 = vrot.lane.b32.xlu0 %v9599, 8
  %v9741 = vpop.permute.xlu0 %9740
  %9742 = vrot.lane.b32.xlu0 %v9607, 8
  %v9743 = vpop.permute.xlu0 %9742
  %9744 = vrot.lane.b32.xlu0 %v9615, 8
  %v9745 = vpop.permute.xlu0 %9744
  %9746 = vrot.lane.b32.xlu0 %v9623, 8
  %v9747 = vpop.permute.xlu0 %9746
  %9748 = vrot.lane.b32.xlu0 %v9631, 8
  %v9749 = vpop.permute.xlu0 %9748
  %9750 = vrot.lane.b32.xlu0 %v9639, 8
  %v9751 = vpop.permute.xlu0 %9750
  %9752 = vrot.lane.b32.xlu0 %v9647, 8
  %v9753 = vpop.permute.xlu0 %9752
  %9754 = vrot.lane.b32.xlu0 %v9655, 8
  %v9755 = vpop.permute.xlu0 %9754
  %9756 = vrot.lane.b32.xlu0 %v9663, 8
  %v9757 = vpop.permute.xlu0 %9756
  %9758 = vrot.lane.b32.xlu0 %v9671, 8
  %v9759 = vpop.permute.xlu0 %9758
  %9760 = vrot.lane.b32.xlu0 %v9679, 8
  %v9761 = vpop.permute.xlu0 %9760
  %9762 = vrot.lane.b32.xlu0 %v9687, 8
  %v9763 = vpop.permute.xlu0 %9762
  %9764 = vrot.lane.b32.xlu0 %v9695, 8
  %v9765 = vpop.permute.xlu0 %9764
  %9766 = vrot.lane.b32.xlu0 %v9703, 8
  %v9767 = vpop.permute.xlu0 %9766
  %v9800 = vunpack.c.l.b16 %v9124
  %v9801 = vunpack.c.l.b16 %v9125
  %v9802 = vunpack.c.l.b16 %v9126
  %v9803 = vunpack.c.l.b16 %v9127
  %v9804 = vunpack.c.l.b16 %v9128
  %v9805 = vunpack.c.l.b16 %v9129
  %v9806 = vunpack.c.l.b16 %v9130
  %v9807 = vunpack.c.l.b16 %v9131
  %v9808 = vunpack.c.l.b16 %v9132
  %v9809 = vunpack.c.l.b16 %v9133
  %v9810 = vunpack.c.l.b16 %v9134
  %v9811 = vunpack.c.l.b16 %v9135
  %v9812 = vunpack.c.l.b16 %v9136
  %v9813 = vunpack.c.l.b16 %v9137
  %v9814 = vunpack.c.l.b16 %v9138
  %v9815 = vunpack.c.l.b16 %v9139
  %v9816 = vunpack.c.l.b16 %v9142
  %v9817 = vunpack.c.l.b16 %v9143
  %v9818 = vunpack.c.l.b16 %v9144
  %v9819 = vunpack.c.l.b16 %v9145
  %v9820 = vunpack.c.l.b16 %v9146
  %v9821 = vunpack.c.l.b16 %v9147
  %v9822 = vunpack.c.l.b16 %v9148
  %v9823 = vunpack.c.l.b16 %v9149
  %v9824 = vunpack.c.l.b16 %v9150
  %v9825 = vunpack.c.l.b16 %v9151
  %v9826 = vunpack.c.l.b16 %v9152
  %v9827 = vunpack.c.l.b16 %v9153
  %v9828 = vunpack.c.l.b16 %v9154
  %v9829 = vunpack.c.l.b16 %v9155
  %v9830 = vunpack.c.l.b16 %v9156
  %v9831 = vunpack.c.l.b16 %v9157
  %v9832 = vpack.c.b16 %v9800, %v9800
  %v9833 = vpack.c.b16 %v9801, %v9801
  %v9834 = vpack.c.b16 %v9802, %v9802
  %v9835 = vpack.c.b16 %v9803, %v9803
  %v9836 = vpack.c.b16 %v9804, %v9804
  %v9837 = vpack.c.b16 %v9805, %v9805
  %v9838 = vpack.c.b16 %v9806, %v9806
  %v9839 = vpack.c.b16 %v9807, %v9807
  %v9840 = vpack.c.b16 %v9808, %v9808
  %v9841 = vpack.c.b16 %v9809, %v9809
  %v9842 = vpack.c.b16 %v9810, %v9810
  %v9843 = vpack.c.b16 %v9811, %v9811
  %v9844 = vpack.c.b16 %v9812, %v9812
  %v9845 = vpack.c.b16 %v9813, %v9813
  %v9846 = vpack.c.b16 %v9814, %v9814
  %v9847 = vpack.c.b16 %v9815, %v9815
  %v9848 = vpack.c.b16 %v9816, %v9816
  %v9849 = vpack.c.b16 %v9817, %v9817
  %v9850 = vpack.c.b16 %v9818, %v9818
  %v9851 = vpack.c.b16 %v9819, %v9819
  %v9852 = vpack.c.b16 %v9820, %v9820
  %v9853 = vpack.c.b16 %v9821, %v9821
  %v9854 = vpack.c.b16 %v9822, %v9822
  %v9855 = vpack.c.b16 %v9823, %v9823
  %v9856 = vpack.c.b16 %v9824, %v9824
  %v9857 = vpack.c.b16 %v9825, %v9825
  %v9858 = vpack.c.b16 %v9826, %v9826
  %v9859 = vpack.c.b16 %v9827, %v9827
  %v9860 = vpack.c.b16 %v9828, %v9828
  %v9861 = vpack.c.b16 %v9829, %v9829
  %v9862 = vpack.c.b16 %v9830, %v9830
  %v9863 = vpack.c.b16 %v9831, %v9831
  %v9864 = vrot.slane %v9416, 5
  %v9865 = vrot.slane %v9832, 5
  %v9866 = vsel %vm1484, %v9864, %v9865
  %v9867 = vrot.slane %v9417, 5
  %v9868 = vrot.slane %v9833, 5
  %v9869 = vsel %vm1484, %v9867, %v9868
  %v9870 = vrot.slane %v9418, 5
  %v9871 = vrot.slane %v9834, 5
  %v9872 = vsel %vm1484, %v9870, %v9871
  %v9873 = vrot.slane %v9419, 5
  %v9874 = vrot.slane %v9835, 5
  %v9875 = vsel %vm1484, %v9873, %v9874
  %v9876 = vrot.slane %v9420, 5
  %v9877 = vrot.slane %v9836, 5
  %v9878 = vsel %vm1484, %v9876, %v9877
  %v9879 = vrot.slane %v9421, 5
  %v9880 = vrot.slane %v9837, 5
  %v9881 = vsel %vm1484, %v9879, %v9880
  %v9882 = vrot.slane %v9422, 5
  %v9883 = vrot.slane %v9838, 5
  %v9884 = vsel %vm1484, %v9882, %v9883
  %v9885 = vrot.slane %v9423, 5
  %v9886 = vrot.slane %v9839, 5
  %v9887 = vsel %vm1484, %v9885, %v9886
  %v9888 = vrot.slane %v9424, 5
  %v9889 = vrot.slane %v9840, 5
  %v9890 = vsel %vm1484, %v9888, %v9889
  %v9891 = vrot.slane %v9425, 5
  %v9892 = vrot.slane %v9841, 5
  %v9893 = vsel %vm1484, %v9891, %v9892
  %v9894 = vrot.slane %v9426, 5
  %v9895 = vrot.slane %v9842, 5
  %v9896 = vsel %vm1484, %v9894, %v9895
  %v9897 = vrot.slane %v9427, 5
  %v9898 = vrot.slane %v9843, 5
  %v9899 = vsel %vm1484, %v9897, %v9898
  %v9900 = vrot.slane %v9428, 5
  %v9901 = vrot.slane %v9844, 5
  %v9902 = vsel %vm1484, %v9900, %v9901
  %v9903 = vrot.slane %v9429, 5
  %v9904 = vrot.slane %v9845, 5
  %v9905 = vsel %vm1484, %v9903, %v9904
  %v9906 = vrot.slane %v9430, 5
  %v9907 = vrot.slane %v9846, 5
  %v9908 = vsel %vm1484, %v9906, %v9907
  %v9909 = vrot.slane %v9431, 5
  %v9910 = vrot.slane %v9847, 5
  %v9911 = vsel %vm1484, %v9909, %v9910
  %v9912 = vrot.slane %v9432, 5
  %v9913 = vrot.slane %v9848, 5
  %v9914 = vsel %vm1484, %v9912, %v9913
  %v9915 = vrot.slane %v9433, 5
  %v9916 = vrot.slane %v9849, 5
  %v9917 = vsel %vm1484, %v9915, %v9916
  %v9918 = vrot.slane %v9434, 5
  %v9919 = vrot.slane %v9850, 5
  %v9920 = vsel %vm1484, %v9918, %v9919
  %v9921 = vrot.slane %v9435, 5
  %v9922 = vrot.slane %v9851, 5
  %v9923 = vsel %vm1484, %v9921, %v9922
  %v9924 = vrot.slane %v9436, 5
  %v9925 = vrot.slane %v9852, 5
  %v9926 = vsel %vm1484, %v9924, %v9925
  %v9927 = vrot.slane %v9437, 5
  %v9928 = vrot.slane %v9853, 5
  %v9929 = vsel %vm1484, %v9927, %v9928
  %v9930 = vrot.slane %v9438, 5
  %v9931 = vrot.slane %v9854, 5
  %v9932 = vsel %vm1484, %v9930, %v9931
  %v9933 = vrot.slane %v9439, 5
  %v9934 = vrot.slane %v9855, 5
  %v9935 = vsel %vm1484, %v9933, %v9934
  %v9936 = vrot.slane %v9440, 5
  %v9937 = vrot.slane %v9856, 5
  %v9938 = vsel %vm1484, %v9936, %v9937
  %v9939 = vrot.slane %v9441, 5
  %v9940 = vrot.slane %v9857, 5
  %v9941 = vsel %vm1484, %v9939, %v9940
  %v9942 = vrot.slane %v9442, 5
  %v9943 = vrot.slane %v9858, 5
  %v9944 = vsel %vm1484, %v9942, %v9943
  %v9945 = vrot.slane %v9443, 5
  %v9946 = vrot.slane %v9859, 5
  %v9947 = vsel %vm1484, %v9945, %v9946
  %v9948 = vrot.slane %v9444, 5
  %v9949 = vrot.slane %v9860, 5
  %v9950 = vsel %vm1484, %v9948, %v9949
  %v9951 = vrot.slane %v9445, 5
  %v9952 = vrot.slane %v9861, 5
  %v9953 = vsel %vm1484, %v9951, %v9952
  %v9954 = vrot.slane %v9446, 5
  %v9955 = vrot.slane %v9862, 5
  %v9956 = vsel %vm1484, %v9954, %v9955
  %v9957 = vrot.slane %v9447, 5
  %v9958 = vrot.slane %v9863, 5
  %v9959 = vsel %vm1484, %v9957, %v9958
  %9960 = vrot.lane.b32.xlu0 %v9864, 16
  %v9961 = vpop.permute.xlu0 %9960
  %9962 = vrot.lane.b32.xlu0 %v9866, 16
  %v9963 = vpop.permute.xlu0 %9962
  %9964 = vrot.lane.b32.xlu0 %v9867, 16
  %v9965 = vpop.permute.xlu0 %9964
  %9966 = vrot.lane.b32.xlu0 %v9869, 16
  %v9967 = vpop.permute.xlu0 %9966
  %9968 = vrot.lane.b32.xlu0 %v9870, 16
  %v9969 = vpop.permute.xlu0 %9968
  %9970 = vrot.lane.b32.xlu0 %v9872, 16
  %v9971 = vpop.permute.xlu0 %9970
  %9972 = vrot.lane.b32.xlu0 %v9873, 16
  %v9973 = vpop.permute.xlu0 %9972
  %9974 = vrot.lane.b32.xlu0 %v9875, 16
  %v9975 = vpop.permute.xlu0 %9974
  %9976 = vrot.lane.b32.xlu0 %v9876, 16
  %v9977 = vpop.permute.xlu0 %9976
  %9978 = vrot.lane.b32.xlu0 %v9878, 16
  %v9979 = vpop.permute.xlu0 %9978
  %9980 = vrot.lane.b32.xlu0 %v9879, 16
  %v9981 = vpop.permute.xlu0 %9980
  %9982 = vrot.lane.b32.xlu0 %v9881, 16
  %v9983 = vpop.permute.xlu0 %9982
  %9984 = vrot.lane.b32.xlu0 %v9882, 16
  %v9985 = vpop.permute.xlu0 %9984
  %9986 = vrot.lane.b32.xlu0 %v9884, 16
  %v9987 = vpop.permute.xlu0 %9986
  %9988 = vrot.lane.b32.xlu0 %v9885, 16
  %v9989 = vpop.permute.xlu0 %9988
  %9990 = vrot.lane.b32.xlu0 %v9887, 16
  %v9991 = vpop.permute.xlu0 %9990
  %9992 = vrot.lane.b32.xlu0 %v9888, 16
  %v9993 = vpop.permute.xlu0 %9992
  %9994 = vrot.lane.b32.xlu0 %v9890, 16
  %v9995 = vpop.permute.xlu0 %9994
  %9996 = vrot.lane.b32.xlu0 %v9891, 16
  %v9997 = vpop.permute.xlu0 %9996
  %9998 = vrot.lane.b32.xlu0 %v9893, 16
  %v9999 = vpop.permute.xlu0 %9998
  %10000 = vrot.lane.b32.xlu0 %v9894, 16
  %v10001 = vpop.permute.xlu0 %10000
  %10002 = vrot.lane.b32.xlu0 %v9896, 16
  %v10003 = vpop.permute.xlu0 %10002
  %10004 = vrot.lane.b32.xlu0 %v9897, 16
  %v10005 = vpop.permute.xlu0 %10004
  %10006 = vrot.lane.b32.xlu0 %v9899, 16
  %v10007 = vpop.permute.xlu0 %10006
  %10008 = vrot.lane.b32.xlu0 %v9900, 16
  %v10009 = vpop.permute.xlu0 %10008
  %10010 = vrot.lane.b32.xlu0 %v9902, 16
  %v10011 = vpop.permute.xlu0 %10010
  %10012 = vrot.lane.b32.xlu0 %v9903, 16
  %v10013 = vpop.permute.xlu0 %10012
  %10014 = vrot.lane.b32.xlu0 %v9905, 16
  %v10015 = vpop.permute.xlu0 %10014
  %10016 = vrot.lane.b32.xlu0 %v9906, 16
  %v10017 = vpop.permute.xlu0 %10016
  %10018 = vrot.lane.b32.xlu0 %v9908, 16
  %v10019 = vpop.permute.xlu0 %10018
  %10020 = vrot.lane.b32.xlu0 %v9909, 16
  %v10021 = vpop.permute.xlu0 %10020
  %10022 = vrot.lane.b32.xlu0 %v9911, 16
  %v10023 = vpop.permute.xlu0 %10022
  %10024 = vrot.lane.b32.xlu0 %v9912, 16
  %v10025 = vpop.permute.xlu0 %10024
  %10026 = vrot.lane.b32.xlu0 %v9914, 16
  %v10027 = vpop.permute.xlu0 %10026
  %10028 = vrot.lane.b32.xlu0 %v9915, 16
  %v10029 = vpop.permute.xlu0 %10028
  %10030 = vrot.lane.b32.xlu0 %v9917, 16
  %v10031 = vpop.permute.xlu0 %10030
  %10032 = vrot.lane.b32.xlu0 %v9918, 16
  %v10033 = vpop.permute.xlu0 %10032
  %10034 = vrot.lane.b32.xlu0 %v9920, 16
  %v10035 = vpop.permute.xlu0 %10034
  %10036 = vrot.lane.b32.xlu0 %v9921, 16
  %v10037 = vpop.permute.xlu0 %10036
  %10038 = vrot.lane.b32.xlu0 %v9923, 16
  %v10039 = vpop.permute.xlu0 %10038
  %10040 = vrot.lane.b32.xlu0 %v9924, 16
  %v10041 = vpop.permute.xlu0 %10040
  %10042 = vrot.lane.b32.xlu0 %v9926, 16
  %v10043 = vpop.permute.xlu0 %10042
  %10044 = vrot.lane.b32.xlu0 %v9927, 16
  %v10045 = vpop.permute.xlu0 %10044
  %10046 = vrot.lane.b32.xlu0 %v9929, 16
  %v10047 = vpop.permute.xlu0 %10046
  %10048 = vrot.lane.b32.xlu0 %v9930, 16
  %v10049 = vpop.permute.xlu0 %10048
  %10050 = vrot.lane.b32.xlu0 %v9932, 16
  %v10051 = vpop.permute.xlu0 %10050
  %10052 = vrot.lane.b32.xlu0 %v9933, 16
  %v10053 = vpop.permute.xlu0 %10052
  %10054 = vrot.lane.b32.xlu0 %v9935, 16
  %v10055 = vpop.permute.xlu0 %10054
  %10056 = vrot.lane.b32.xlu0 %v9936, 16
  %v10057 = vpop.permute.xlu0 %10056
  %10058 = vrot.lane.b32.xlu0 %v9938, 16
  %v10059 = vpop.permute.xlu0 %10058
  %10060 = vrot.lane.b32.xlu0 %v9939, 16
  %v10061 = vpop.permute.xlu0 %10060
  %10062 = vrot.lane.b32.xlu0 %v9941, 16
  %v10063 = vpop.permute.xlu0 %10062
  %10064 = vrot.lane.b32.xlu0 %v9942, 16
  %v10065 = vpop.permute.xlu0 %10064
  %10066 = vrot.lane.b32.xlu0 %v9944, 16
  %v10067 = vpop.permute.xlu0 %10066
  %10068 = vrot.lane.b32.xlu0 %v9945, 16
  %v10069 = vpop.permute.xlu0 %10068
  %10070 = vrot.lane.b32.xlu0 %v9947, 16
  %v10071 = vpop.permute.xlu0 %10070
  %10072 = vrot.lane.b32.xlu0 %v9948, 16
  %v10073 = vpop.permute.xlu0 %10072
  %10074 = vrot.lane.b32.xlu0 %v9950, 16
  %v10075 = vpop.permute.xlu0 %10074
  %10076 = vrot.lane.b32.xlu0 %v9951, 16
  %v10077 = vpop.permute.xlu0 %10076
  %10078 = vrot.lane.b32.xlu0 %v9953, 16
  %v10079 = vpop.permute.xlu0 %10078
  %10080 = vrot.lane.b32.xlu0 %v9954, 16
  %v10081 = vpop.permute.xlu0 %10080
  %10082 = vrot.lane.b32.xlu0 %v9956, 16
  %v10083 = vpop.permute.xlu0 %10082
  %10084 = vrot.lane.b32.xlu0 %v9957, 16
  %v10085 = vpop.permute.xlu0 %10084
  %10086 = vrot.lane.b32.xlu0 %v9959, 16
  %v10087 = vpop.permute.xlu0 %10086
  %v10094 = vunpack.c.l.b16 %v9064
  %v10095 = vunpack.c.l.b16 %v9065
  %v10096 = vunpack.c.l.b16 %v9066
  %v10097 = vunpack.c.l.b16 %v9118
  %v10098 = vunpack.c.l.b16 %v9119
  %v10099 = vunpack.c.l.b16 %v9120
  %v10100 = vpack.c.b16 %v10095, %v10094
  %v10101 = vpack.c.b16 %v10096, %v10096
  %v10102 = vpack.c.b16 %v10098, %v10097
  %v10103 = vpack.c.b16 %v10099, %v10099
  %10104 = vrot.lane.b32.xlu0 %v9354, 24
  %v10105 = vpop.permute.xlu0 %10104
  %10106 = vrot.lane.b32.xlu0 %v9355, 24
  %v10107 = vpop.permute.xlu0 %10106
  %10108 = vrot.lane.b32.xlu0 %v9356, 24
  %v10109 = vpop.permute.xlu0 %10108
  %10110 = vrot.lane.b32.xlu0 %v9357, 24
  %v10111 = vpop.permute.xlu0 %10110
  %10112 = vrot.lane.b32.xlu0 %v9358, 24
  %v10113 = vpop.permute.xlu0 %10112
  %10114 = vrot.lane.b32.xlu0 %v9359, 24
  %v10115 = vpop.permute.xlu0 %10114
  %10116 = vrot.lane.b32.xlu0 %v9360, 24
  %v10117 = vpop.permute.xlu0 %10116
  %10118 = vrot.lane.b32.xlu0 %v9361, 24
  %v10119 = vpop.permute.xlu0 %10118
  %10120 = vrot.lane.b32.xlu0 %v9362, 24
  %v10121 = vpop.permute.xlu0 %10120
  %10122 = vrot.lane.b32.xlu0 %v9363, 24
  %v10123 = vpop.permute.xlu0 %10122
  %10124 = vrot.lane.b32.xlu0 %v9364, 24
  %v10125 = vpop.permute.xlu0 %10124
  %10126 = vrot.lane.b32.xlu0 %v9365, 24
  %v10127 = vpop.permute.xlu0 %10126
  %10128 = vrot.lane.b32.xlu0 %v9366, 24
  %v10129 = vpop.permute.xlu0 %10128
  %10130 = vrot.lane.b32.xlu0 %v9367, 24
  %v10131 = vpop.permute.xlu0 %10130
  %10132 = vrot.lane.b32.xlu0 %v9368, 24
  %v10133 = vpop.permute.xlu0 %10132
  %10134 = vrot.lane.b32.xlu0 %v9369, 24
  %v10135 = vpop.permute.xlu0 %10134
  %10136 = vrot.lane.b32.xlu0 %v9370, 24
  %v10137 = vpop.permute.xlu0 %10136
  %10138 = vrot.lane.b32.xlu0 %v9371, 24
  %v10139 = vpop.permute.xlu0 %10138
  %10140 = vrot.lane.b32.xlu0 %v9372, 24
  %v10141 = vpop.permute.xlu0 %10140
  %10142 = vrot.lane.b32.xlu0 %v9373, 24
  %v10143 = vpop.permute.xlu0 %10142
  %10144 = vrot.lane.b32.xlu0 %v9374, 24
  %v10145 = vpop.permute.xlu0 %10144
  %10146 = vrot.lane.b32.xlu0 %v9375, 24
  %v10147 = vpop.permute.xlu0 %10146
  %10148 = vrot.lane.b32.xlu0 %v9376, 24
  %v10149 = vpop.permute.xlu0 %10148
  %10150 = vrot.lane.b32.xlu0 %v9377, 24
  %v10151 = vpop.permute.xlu0 %10150
  %10152 = vrot.lane.b32.xlu0 %v9378, 24
  %v10153 = vpop.permute.xlu0 %10152
  %10154 = vrot.lane.b32.xlu0 %v9379, 24
  %v10155 = vpop.permute.xlu0 %10154
  %10156 = vrot.lane.b32.xlu0 %v9380, 24
  %v10157 = vpop.permute.xlu0 %10156
  %10158 = vrot.lane.b32.xlu0 %v9381, 24
  %v10159 = vpop.permute.xlu0 %10158
  %10160 = vrot.lane.b32.xlu0 %v9382, 24
  %v10161 = vpop.permute.xlu0 %10160
  %10162 = vrot.lane.b32.xlu0 %v9383, 24
  %v10163 = vpop.permute.xlu0 %10162
  %10164 = vrot.lane.b32.xlu0 %v10100, 24
  %v10165 = vpop.permute.xlu0 %10164
  %10166 = vrot.lane.b32.xlu0 %v10101, 24
  %v10167 = vpop.permute.xlu0 %10166
  %10168 = vrot.lane.b32.xlu0 %v9386, 24
  %v10169 = vpop.permute.xlu0 %10168
  %10170 = vrot.lane.b32.xlu0 %v9387, 24
  %v10171 = vpop.permute.xlu0 %10170
  %10172 = vrot.lane.b32.xlu0 %v9388, 24
  %v10173 = vpop.permute.xlu0 %10172
  %10174 = vrot.lane.b32.xlu0 %v9389, 24
  %v10175 = vpop.permute.xlu0 %10174
  %10176 = vrot.lane.b32.xlu0 %v9390, 24
  %v10177 = vpop.permute.xlu0 %10176
  %10178 = vrot.lane.b32.xlu0 %v9391, 24
  %v10179 = vpop.permute.xlu0 %10178
  %10180 = vrot.lane.b32.xlu0 %v9392, 24
  %v10181 = vpop.permute.xlu0 %10180
  %10182 = vrot.lane.b32.xlu0 %v9393, 24
  %v10183 = vpop.permute.xlu0 %10182
  %10184 = vrot.lane.b32.xlu0 %v9394, 24
  %v10185 = vpop.permute.xlu0 %10184
  %10186 = vrot.lane.b32.xlu0 %v9395, 24
  %v10187 = vpop.permute.xlu0 %10186
  %10188 = vrot.lane.b32.xlu0 %v9396, 24
  %v10189 = vpop.permute.xlu0 %10188
  %10190 = vrot.lane.b32.xlu0 %v9397, 24
  %v10191 = vpop.permute.xlu0 %10190
  %10192 = vrot.lane.b32.xlu0 %v9398, 24
  %v10193 = vpop.permute.xlu0 %10192
  %10194 = vrot.lane.b32.xlu0 %v9399, 24
  %v10195 = vpop.permute.xlu0 %10194
  %10196 = vrot.lane.b32.xlu0 %v9400, 24
  %v10197 = vpop.permute.xlu0 %10196
  %10198 = vrot.lane.b32.xlu0 %v9401, 24
  %v10199 = vpop.permute.xlu0 %10198
  %10200 = vrot.lane.b32.xlu0 %v9402, 24
  %v10201 = vpop.permute.xlu0 %10200
  %10202 = vrot.lane.b32.xlu0 %v9403, 24
  %v10203 = vpop.permute.xlu0 %10202
  %10204 = vrot.lane.b32.xlu0 %v9404, 24
  %v10205 = vpop.permute.xlu0 %10204
  %10206 = vrot.lane.b32.xlu0 %v9405, 24
  %v10207 = vpop.permute.xlu0 %10206
  %10208 = vrot.lane.b32.xlu0 %v9406, 24
  %v10209 = vpop.permute.xlu0 %10208
  %10210 = vrot.lane.b32.xlu0 %v9407, 24
  %v10211 = vpop.permute.xlu0 %10210
  %10212 = vrot.lane.b32.xlu0 %v9408, 24
  %v10213 = vpop.permute.xlu0 %10212
  %10214 = vrot.lane.b32.xlu0 %v9409, 24
  %v10215 = vpop.permute.xlu0 %10214
  %10216 = vrot.lane.b32.xlu0 %v9410, 24
  %v10217 = vpop.permute.xlu0 %10216
  %10218 = vrot.lane.b32.xlu0 %v9411, 24
  %v10219 = vpop.permute.xlu0 %10218
  %10220 = vrot.lane.b32.xlu0 %v9412, 24
  %v10221 = vpop.permute.xlu0 %10220
  %10222 = vrot.lane.b32.xlu0 %v9413, 24
  %v10223 = vpop.permute.xlu0 %10222
  %10224 = vrot.lane.b32.xlu0 %v9414, 24
  %v10225 = vpop.permute.xlu0 %10224
  %10226 = vrot.lane.b32.xlu0 %v9415, 24
  %v10227 = vpop.permute.xlu0 %10226
  %10228 = vrot.lane.b32.xlu0 %v10102, 24
  %v10229 = vpop.permute.xlu0 %10228
  %10230 = vrot.lane.b32.xlu0 %v10103, 24
  %v10231 = vpop.permute.xlu0 %10230
  %v10232 = vpack.c.b16 %v10096, %v10095
  %v10233 = vpack.c.b16 %v10099, %v10098
  %v10235 = vshrl.u32 %v10232, 16
  %v10237 = vrot.slane %v10235, 4
  %v10238 = vshll.u32 %v10232, 16
  %v10240 = vrot.slane %v10238, 5
  %v10241 = vor.u32 %v10237, %v10240
  %v10243 = vshrl.u32 %v10233, 16
  %v10245 = vrot.slane %v10243, 4
  %v10246 = vshll.u32 %v10233, 16
  %v10248 = vrot.slane %v10246, 5
  %v10249 = vor.u32 %v10245, %v10248
  %10250 = vrot.lane.b32.xlu0 %v9463, 32
  %v10251 = vpop.permute.xlu0 %10250
  %10252 = vrot.lane.b32.xlu0 %v9471, 32
  %v10253 = vpop.permute.xlu0 %10252
  %10254 = vrot.lane.b32.xlu0 %v9479, 32
  %v10255 = vpop.permute.xlu0 %10254
  %10256 = vrot.lane.b32.xlu0 %v9487, 32
  %v10257 = vpop.permute.xlu0 %10256
  %10258 = vrot.lane.b32.xlu0 %v9495, 32
  %v10259 = vpop.permute.xlu0 %10258
  %10260 = vrot.lane.b32.xlu0 %v9503, 32
  %v10261 = vpop.permute.xlu0 %10260
  %10262 = vrot.lane.b32.xlu0 %v9511, 32
  %v10263 = vpop.permute.xlu0 %10262
  %10264 = vrot.lane.b32.xlu0 %v9519, 32
  %v10265 = vpop.permute.xlu0 %10264
  %10266 = vrot.lane.b32.xlu0 %v9527, 32
  %v10267 = vpop.permute.xlu0 %10266
  %10268 = vrot.lane.b32.xlu0 %v9535, 32
  %v10269 = vpop.permute.xlu0 %10268
  %10270 = vrot.lane.b32.xlu0 %v9543, 32
  %v10271 = vpop.permute.xlu0 %10270
  %10272 = vrot.lane.b32.xlu0 %v9551, 32
  %v10273 = vpop.permute.xlu0 %10272
  %10274 = vrot.lane.b32.xlu0 %v9559, 32
  %v10275 = vpop.permute.xlu0 %10274
  %10276 = vrot.lane.b32.xlu0 %v9567, 32
  %v10277 = vpop.permute.xlu0 %10276
  %10278 = vrot.lane.b32.xlu0 %v9575, 32
  %v10279 = vpop.permute.xlu0 %10278
  %10280 = vrot.lane.b32.xlu0 %v10241, 32
  %v10281 = vpop.permute.xlu0 %10280
  %10282 = vrot.lane.b32.xlu0 %v9591, 32
  %v10283 = vpop.permute.xlu0 %10282
  %10284 = vrot.lane.b32.xlu0 %v9599, 32
  %v10285 = vpop.permute.xlu0 %10284
  %10286 = vrot.lane.b32.xlu0 %v9607, 32
  %v10287 = vpop.permute.xlu0 %10286
  %10288 = vrot.lane.b32.xlu0 %v9615, 32
  %v10289 = vpop.permute.xlu0 %10288
  %10290 = vrot.lane.b32.xlu0 %v9623, 32
  %v10291 = vpop.permute.xlu0 %10290
  %10292 = vrot.lane.b32.xlu0 %v9631, 32
  %v10293 = vpop.permute.xlu0 %10292
  %10294 = vrot.lane.b32.xlu0 %v9639, 32
  %v10295 = vpop.permute.xlu0 %10294
  %10296 = vrot.lane.b32.xlu0 %v9647, 32
  %v10297 = vpop.permute.xlu0 %10296
  %10298 = vrot.lane.b32.xlu0 %v9655, 32
  %v10299 = vpop.permute.xlu0 %10298
  %10300 = vrot.lane.b32.xlu0 %v9663, 32
  %v10301 = vpop.permute.xlu0 %10300
  %10302 = vrot.lane.b32.xlu0 %v9671, 32
  %v10303 = vpop.permute.xlu0 %10302
  %10304 = vrot.lane.b32.xlu0 %v9679, 32
  %v10305 = vpop.permute.xlu0 %10304
  %10306 = vrot.lane.b32.xlu0 %v9687, 32
  %v10307 = vpop.permute.xlu0 %10306
  %10308 = vrot.lane.b32.xlu0 %v9695, 32
  %v10309 = vpop.permute.xlu0 %10308
  %10310 = vrot.lane.b32.xlu0 %v9703, 32
  %v10311 = vpop.permute.xlu0 %10310
  %10312 = vrot.lane.b32.xlu0 %v10249, 32
  %v10313 = vpop.permute.xlu0 %10312
  %v10316 = vunpack.c.l.b16 %v9140
  %v10317 = vunpack.c.l.b16 %v9158
  %v10318 = vpack.c.b16 %v10316, %v10316
  %v10319 = vpack.c.b16 %v10317, %v10317
  %v10320 = vrot.slane %v10232, 5
  %v10321 = vrot.slane %v10318, 5
  %v10322 = vsel %vm1484, %v10320, %v10321
  %v10323 = vrot.slane %v10233, 5
  %v10324 = vrot.slane %v10319, 5
  %v10325 = vsel %vm1484, %v10323, %v10324
  %10326 = vrot.lane.b32.xlu0 %v9867, 40
  %v10327 = vpop.permute.xlu0 %10326
  %10328 = vrot.lane.b32.xlu0 %v9869, 40
  %v10329 = vpop.permute.xlu0 %10328
  %10330 = vrot.lane.b32.xlu0 %v9870, 40
  %v10331 = vpop.permute.xlu0 %10330
  %10332 = vrot.lane.b32.xlu0 %v9872, 40
  %v10333 = vpop.permute.xlu0 %10332
  %10334 = vrot.lane.b32.xlu0 %v9873, 40
  %v10335 = vpop.permute.xlu0 %10334
  %10336 = vrot.lane.b32.xlu0 %v9875, 40
  %v10337 = vpop.permute.xlu0 %10336
  %10338 = vrot.lane.b32.xlu0 %v9876, 40
  %v10339 = vpop.permute.xlu0 %10338
  %10340 = vrot.lane.b32.xlu0 %v9878, 40
  %v10341 = vpop.permute.xlu0 %10340
  %10342 = vrot.lane.b32.xlu0 %v9879, 40
  %v10343 = vpop.permute.xlu0 %10342
  %10344 = vrot.lane.b32.xlu0 %v9881, 40
  %v10345 = vpop.permute.xlu0 %10344
  %10346 = vrot.lane.b32.xlu0 %v9882, 40
  %v10347 = vpop.permute.xlu0 %10346
  %10348 = vrot.lane.b32.xlu0 %v9884, 40
  %v10349 = vpop.permute.xlu0 %10348
  %10350 = vrot.lane.b32.xlu0 %v9885, 40
  %v10351 = vpop.permute.xlu0 %10350
  %10352 = vrot.lane.b32.xlu0 %v9887, 40
  %v10353 = vpop.permute.xlu0 %10352
  %10354 = vrot.lane.b32.xlu0 %v9888, 40
  %v10355 = vpop.permute.xlu0 %10354
  %10356 = vrot.lane.b32.xlu0 %v9890, 40
  %v10357 = vpop.permute.xlu0 %10356
  %10358 = vrot.lane.b32.xlu0 %v9891, 40
  %v10359 = vpop.permute.xlu0 %10358
  %10360 = vrot.lane.b32.xlu0 %v9893, 40
  %v10361 = vpop.permute.xlu0 %10360
  %10362 = vrot.lane.b32.xlu0 %v9894, 40
  %v10363 = vpop.permute.xlu0 %10362
  %10364 = vrot.lane.b32.xlu0 %v9896, 40
  %v10365 = vpop.permute.xlu0 %10364
  %10366 = vrot.lane.b32.xlu0 %v9897, 40
  %v10367 = vpop.permute.xlu0 %10366
  %10368 = vrot.lane.b32.xlu0 %v9899, 40
  %v10369 = vpop.permute.xlu0 %10368
  %10370 = vrot.lane.b32.xlu0 %v9900, 40
  %v10371 = vpop.permute.xlu0 %10370
  %10372 = vrot.lane.b32.xlu0 %v9902, 40
  %v10373 = vpop.permute.xlu0 %10372
  %10374 = vrot.lane.b32.xlu0 %v9903, 40
  %v10375 = vpop.permute.xlu0 %10374
  %10376 = vrot.lane.b32.xlu0 %v9905, 40
  %v10377 = vpop.permute.xlu0 %10376
  %10378 = vrot.lane.b32.xlu0 %v9906, 40
  %v10379 = vpop.permute.xlu0 %10378
  %10380 = vrot.lane.b32.xlu0 %v9908, 40
  %v10381 = vpop.permute.xlu0 %10380
  %10382 = vrot.lane.b32.xlu0 %v9909, 40
  %v10383 = vpop.permute.xlu0 %10382
  %10384 = vrot.lane.b32.xlu0 %v9911, 40
  %v10385 = vpop.permute.xlu0 %10384
  %10386 = vrot.lane.b32.xlu0 %v10320, 40
  %v10387 = vpop.permute.xlu0 %10386
  %10388 = vrot.lane.b32.xlu0 %v10322, 40
  %v10389 = vpop.permute.xlu0 %10388
  %10390 = vrot.lane.b32.xlu0 %v9915, 40
  %v10391 = vpop.permute.xlu0 %10390
  %10392 = vrot.lane.b32.xlu0 %v9917, 40
  %v10393 = vpop.permute.xlu0 %10392
  %10394 = vrot.lane.b32.xlu0 %v9918, 40
  %v10395 = vpop.permute.xlu0 %10394
  %10396 = vrot.lane.b32.xlu0 %v9920, 40
  %v10397 = vpop.permute.xlu0 %10396
  %10398 = vrot.lane.b32.xlu0 %v9921, 40
  %v10399 = vpop.permute.xlu0 %10398
  %10400 = vrot.lane.b32.xlu0 %v9923, 40
  %v10401 = vpop.permute.xlu0 %10400
  %10402 = vrot.lane.b32.xlu0 %v9924, 40
  %v10403 = vpop.permute.xlu0 %10402
  %10404 = vrot.lane.b32.xlu0 %v9926, 40
  %v10405 = vpop.permute.xlu0 %10404
  %10406 = vrot.lane.b32.xlu0 %v9927, 40
  %v10407 = vpop.permute.xlu0 %10406
  %10408 = vrot.lane.b32.xlu0 %v9929, 40
  %v10409 = vpop.permute.xlu0 %10408
  %10410 = vrot.lane.b32.xlu0 %v9930, 40
  %v10411 = vpop.permute.xlu0 %10410
  %10412 = vrot.lane.b32.xlu0 %v9932, 40
  %v10413 = vpop.permute.xlu0 %10412
  %10414 = vrot.lane.b32.xlu0 %v9933, 40
  %v10415 = vpop.permute.xlu0 %10414
  %10416 = vrot.lane.b32.xlu0 %v9935, 40
  %v10417 = vpop.permute.xlu0 %10416
  %10418 = vrot.lane.b32.xlu0 %v9936, 40
  %v10419 = vpop.permute.xlu0 %10418
  %10420 = vrot.lane.b32.xlu0 %v9938, 40
  %v10421 = vpop.permute.xlu0 %10420
  %10422 = vrot.lane.b32.xlu0 %v9939, 40
  %v10423 = vpop.permute.xlu0 %10422
  %10424 = vrot.lane.b32.xlu0 %v9941, 40
  %v10425 = vpop.permute.xlu0 %10424
  %10426 = vrot.lane.b32.xlu0 %v9942, 40
  %v10427 = vpop.permute.xlu0 %10426
  %10428 = vrot.lane.b32.xlu0 %v9944, 40
  %v10429 = vpop.permute.xlu0 %10428
  %10430 = vrot.lane.b32.xlu0 %v9945, 40
  %v10431 = vpop.permute.xlu0 %10430
  %10432 = vrot.lane.b32.xlu0 %v9947, 40
  %v10433 = vpop.permute.xlu0 %10432
  %10434 = vrot.lane.b32.xlu0 %v9948, 40
  %v10435 = vpop.permute.xlu0 %10434
  %10436 = vrot.lane.b32.xlu0 %v9950, 40
  %v10437 = vpop.permute.xlu0 %10436
  %10438 = vrot.lane.b32.xlu0 %v9951, 40
  %v10439 = vpop.permute.xlu0 %10438
  %10440 = vrot.lane.b32.xlu0 %v9953, 40
  %v10441 = vpop.permute.xlu0 %10440
  %10442 = vrot.lane.b32.xlu0 %v9954, 40
  %v10443 = vpop.permute.xlu0 %10442
  %10444 = vrot.lane.b32.xlu0 %v9956, 40
  %v10445 = vpop.permute.xlu0 %10444
  %10446 = vrot.lane.b32.xlu0 %v9957, 40
  %v10447 = vpop.permute.xlu0 %10446
  %10448 = vrot.lane.b32.xlu0 %v9959, 40
  %v10449 = vpop.permute.xlu0 %10448
  %10450 = vrot.lane.b32.xlu0 %v10323, 40
  %v10451 = vpop.permute.xlu0 %10450
  %10452 = vrot.lane.b32.xlu0 %v10325, 40
  %v10453 = vpop.permute.xlu0 %10452
  %v10460 = vunpack.c.l.b16 %v9067
  %v10461 = vunpack.c.l.b16 %v9068
  %v10462 = vunpack.c.l.b16 %v9069
  %v10463 = vunpack.c.l.b16 %v9121
  %v10464 = vunpack.c.l.b16 %v9122
  %v10465 = vunpack.c.l.b16 %v9123
  %v10466 = vpack.c.b16 %v10461, %v10460
  %v10467 = vpack.c.b16 %v10462, %v10462
  %v10468 = vpack.c.b16 %v10464, %v10463
  %v10469 = vpack.c.b16 %v10465, %v10465
  %10470 = vrot.lane.b32.xlu0 %v9356, 48
  %v10471 = vpop.permute.xlu0 %10470
  %10472 = vrot.lane.b32.xlu0 %v9357, 48
  %v10473 = vpop.permute.xlu0 %10472
  %10474 = vrot.lane.b32.xlu0 %v9358, 48
  %v10475 = vpop.permute.xlu0 %10474
  %10476 = vrot.lane.b32.xlu0 %v9359, 48
  %v10477 = vpop.permute.xlu0 %10476
  %10478 = vrot.lane.b32.xlu0 %v9360, 48
  %v10479 = vpop.permute.xlu0 %10478
  %10480 = vrot.lane.b32.xlu0 %v9361, 48
  %v10481 = vpop.permute.xlu0 %10480
  %10482 = vrot.lane.b32.xlu0 %v9362, 48
  %v10483 = vpop.permute.xlu0 %10482
  %10484 = vrot.lane.b32.xlu0 %v9363, 48
  %v10485 = vpop.permute.xlu0 %10484
  %10486 = vrot.lane.b32.xlu0 %v9364, 48
  %v10487 = vpop.permute.xlu0 %10486
  %10488 = vrot.lane.b32.xlu0 %v9365, 48
  %v10489 = vpop.permute.xlu0 %10488
  %10490 = vrot.lane.b32.xlu0 %v9366, 48
  %v10491 = vpop.permute.xlu0 %10490
  %10492 = vrot.lane.b32.xlu0 %v9367, 48
  %v10493 = vpop.permute.xlu0 %10492
  %10494 = vrot.lane.b32.xlu0 %v9368, 48
  %v10495 = vpop.permute.xlu0 %10494
  %10496 = vrot.lane.b32.xlu0 %v9369, 48
  %v10497 = vpop.permute.xlu0 %10496
  %10498 = vrot.lane.b32.xlu0 %v9370, 48
  %v10499 = vpop.permute.xlu0 %10498
  %10500 = vrot.lane.b32.xlu0 %v9371, 48
  %v10501 = vpop.permute.xlu0 %10500
  %10502 = vrot.lane.b32.xlu0 %v9372, 48
  %v10503 = vpop.permute.xlu0 %10502
  %10504 = vrot.lane.b32.xlu0 %v9373, 48
  %v10505 = vpop.permute.xlu0 %10504
  %10506 = vrot.lane.b32.xlu0 %v9374, 48
  %v10507 = vpop.permute.xlu0 %10506
  %10508 = vrot.lane.b32.xlu0 %v9375, 48
  %v10509 = vpop.permute.xlu0 %10508
  %10510 = vrot.lane.b32.xlu0 %v9376, 48
  %v10511 = vpop.permute.xlu0 %10510
  %10512 = vrot.lane.b32.xlu0 %v9377, 48
  %v10513 = vpop.permute.xlu0 %10512
  %10514 = vrot.lane.b32.xlu0 %v9378, 48
  %v10515 = vpop.permute.xlu0 %10514
  %10516 = vrot.lane.b32.xlu0 %v9379, 48
  %v10517 = vpop.permute.xlu0 %10516
  %10518 = vrot.lane.b32.xlu0 %v9380, 48
  %v10519 = vpop.permute.xlu0 %10518
  %10520 = vrot.lane.b32.xlu0 %v9381, 48
  %v10521 = vpop.permute.xlu0 %10520
  %10522 = vrot.lane.b32.xlu0 %v9382, 48
  %v10523 = vpop.permute.xlu0 %10522
  %10524 = vrot.lane.b32.xlu0 %v9383, 48
  %v10525 = vpop.permute.xlu0 %10524
  %10526 = vrot.lane.b32.xlu0 %v10100, 48
  %v10527 = vpop.permute.xlu0 %10526
  %10528 = vrot.lane.b32.xlu0 %v10101, 48
  %v10529 = vpop.permute.xlu0 %10528
  %10530 = vrot.lane.b32.xlu0 %v10466, 48
  %v10531 = vpop.permute.xlu0 %10530
  %10532 = vrot.lane.b32.xlu0 %v10467, 48
  %v10533 = vpop.permute.xlu0 %10532
  %10534 = vrot.lane.b32.xlu0 %v9388, 48
  %v10535 = vpop.permute.xlu0 %10534
  %10536 = vrot.lane.b32.xlu0 %v9389, 48
  %v10537 = vpop.permute.xlu0 %10536
  %10538 = vrot.lane.b32.xlu0 %v9390, 48
  %v10539 = vpop.permute.xlu0 %10538
  %10540 = vrot.lane.b32.xlu0 %v9391, 48
  %v10541 = vpop.permute.xlu0 %10540
  %10542 = vrot.lane.b32.xlu0 %v9392, 48
  %v10543 = vpop.permute.xlu0 %10542
  %10544 = vrot.lane.b32.xlu0 %v9393, 48
  %v10545 = vpop.permute.xlu0 %10544
  %10546 = vrot.lane.b32.xlu0 %v9394, 48
  %v10547 = vpop.permute.xlu0 %10546
  %10548 = vrot.lane.b32.xlu0 %v9395, 48
  %v10549 = vpop.permute.xlu0 %10548
  %10550 = vrot.lane.b32.xlu0 %v9396, 48
  %v10551 = vpop.permute.xlu0 %10550
  %10552 = vrot.lane.b32.xlu0 %v9397, 48
  %v10553 = vpop.permute.xlu0 %10552
  %10554 = vrot.lane.b32.xlu0 %v9398, 48
  %v10555 = vpop.permute.xlu0 %10554
  %10556 = vrot.lane.b32.xlu0 %v9399, 48
  %v10557 = vpop.permute.xlu0 %10556
  %10558 = vrot.lane.b32.xlu0 %v9400, 48
  %v10559 = vpop.permute.xlu0 %10558
  %10560 = vrot.lane.b32.xlu0 %v9401, 48
  %v10561 = vpop.permute.xlu0 %10560
  %10562 = vrot.lane.b32.xlu0 %v9402, 48
  %v10563 = vpop.permute.xlu0 %10562
  %10564 = vrot.lane.b32.xlu0 %v9403, 48
  %v10565 = vpop.permute.xlu0 %10564
  %10566 = vrot.lane.b32.xlu0 %v9404, 48
  %v10567 = vpop.permute.xlu0 %10566
  %10568 = vrot.lane.b32.xlu0 %v9405, 48
  %v10569 = vpop.permute.xlu0 %10568
  %10570 = vrot.lane.b32.xlu0 %v9406, 48
  %v10571 = vpop.permute.xlu0 %10570
  %10572 = vrot.lane.b32.xlu0 %v9407, 48
  %v10573 = vpop.permute.xlu0 %10572
  %10574 = vrot.lane.b32.xlu0 %v9408, 48
  %v10575 = vpop.permute.xlu0 %10574
  %10576 = vrot.lane.b32.xlu0 %v9409, 48
  %v10577 = vpop.permute.xlu0 %10576
  %10578 = vrot.lane.b32.xlu0 %v9410, 48
  %v10579 = vpop.permute.xlu0 %10578
  %10580 = vrot.lane.b32.xlu0 %v9411, 48
  %v10581 = vpop.permute.xlu0 %10580
  %10582 = vrot.lane.b32.xlu0 %v9412, 48
  %v10583 = vpop.permute.xlu0 %10582
  %10584 = vrot.lane.b32.xlu0 %v9413, 48
  %v10585 = vpop.permute.xlu0 %10584
  %10586 = vrot.lane.b32.xlu0 %v9414, 48
  %v10587 = vpop.permute.xlu0 %10586
  %10588 = vrot.lane.b32.xlu0 %v9415, 48
  %v10589 = vpop.permute.xlu0 %10588
  %10590 = vrot.lane.b32.xlu0 %v10102, 48
  %v10591 = vpop.permute.xlu0 %10590
  %10592 = vrot.lane.b32.xlu0 %v10103, 48
  %v10593 = vpop.permute.xlu0 %10592
  %10594 = vrot.lane.b32.xlu0 %v10468, 48
  %v10595 = vpop.permute.xlu0 %10594
  %10596 = vrot.lane.b32.xlu0 %v10469, 48
  %v10597 = vpop.permute.xlu0 %10596
  %v10598 = vpack.c.b16 %v10462, %v10461
  %v10599 = vpack.c.b16 %v10465, %v10464
  %v10601 = vshrl.u32 %v10598, 16
  %v10603 = vrot.slane %v10601, 4
  %v10604 = vshll.u32 %v10598, 16
  %v10606 = vrot.slane %v10604, 5
  %v10607 = vor.u32 %v10603, %v10606
  %v10609 = vshrl.u32 %v10599, 16
  %v10611 = vrot.slane %v10609, 4
  %v10612 = vshll.u32 %v10599, 16
  %v10614 = vrot.slane %v10612, 5
  %v10615 = vor.u32 %v10611, %v10614
  %10616 = vrot.lane.b32.xlu0 %v9471, 56
  %v10617 = vpop.permute.xlu0 %10616
  %10618 = vrot.lane.b32.xlu0 %v9479, 56
  %v10619 = vpop.permute.xlu0 %10618
  %10620 = vrot.lane.b32.xlu0 %v9487, 56
  %v10621 = vpop.permute.xlu0 %10620
  %10622 = vrot.lane.b32.xlu0 %v9495, 56
  %v10623 = vpop.permute.xlu0 %10622
  %10624 = vrot.lane.b32.xlu0 %v9503, 56
  %v10625 = vpop.permute.xlu0 %10624
  %10626 = vrot.lane.b32.xlu0 %v9511, 56
  %v10627 = vpop.permute.xlu0 %10626
  %10628 = vrot.lane.b32.xlu0 %v9519, 56
  %v10629 = vpop.permute.xlu0 %10628
  %10630 = vrot.lane.b32.xlu0 %v9527, 56
  %v10631 = vpop.permute.xlu0 %10630
  %10632 = vrot.lane.b32.xlu0 %v9535, 56
  %v10633 = vpop.permute.xlu0 %10632
  %10634 = vrot.lane.b32.xlu0 %v9543, 56
  %v10635 = vpop.permute.xlu0 %10634
  %10636 = vrot.lane.b32.xlu0 %v9551, 56
  %v10637 = vpop.permute.xlu0 %10636
  %10638 = vrot.lane.b32.xlu0 %v9559, 56
  %v10639 = vpop.permute.xlu0 %10638
  %10640 = vrot.lane.b32.xlu0 %v9567, 56
  %v10641 = vpop.permute.xlu0 %10640
  %10642 = vrot.lane.b32.xlu0 %v9575, 56
  %v10643 = vpop.permute.xlu0 %10642
  %10644 = vrot.lane.b32.xlu0 %v10241, 56
  %v10645 = vpop.permute.xlu0 %10644
  %10646 = vrot.lane.b32.xlu0 %v10607, 56
  %v10647 = vpop.permute.xlu0 %10646
  %10648 = vrot.lane.b32.xlu0 %v9599, 56
  %v10649 = vpop.permute.xlu0 %10648
  %10650 = vrot.lane.b32.xlu0 %v9607, 56
  %v10651 = vpop.permute.xlu0 %10650
  %10652 = vrot.lane.b32.xlu0 %v9615, 56
  %v10653 = vpop.permute.xlu0 %10652
  %10654 = vrot.lane.b32.xlu0 %v9623, 56
  %v10655 = vpop.permute.xlu0 %10654
  %10656 = vrot.lane.b32.xlu0 %v9631, 56
  %v10657 = vpop.permute.xlu0 %10656
  %10658 = vrot.lane.b32.xlu0 %v9639, 56
  %v10659 = vpop.permute.xlu0 %10658
  %10660 = vrot.lane.b32.xlu0 %v9647, 56
  %v10661 = vpop.permute.xlu0 %10660
  %10662 = vrot.lane.b32.xlu0 %v9655, 56
  %v10663 = vpop.permute.xlu0 %10662
  %10664 = vrot.lane.b32.xlu0 %v9663, 56
  %v10665 = vpop.permute.xlu0 %10664
  %10666 = vrot.lane.b32.xlu0 %v9671, 56
  %v10667 = vpop.permute.xlu0 %10666
  %10668 = vrot.lane.b32.xlu0 %v9679, 56
  %v10669 = vpop.permute.xlu0 %10668
  %10670 = vrot.lane.b32.xlu0 %v9687, 56
  %v10671 = vpop.permute.xlu0 %10670
  %10672 = vrot.lane.b32.xlu0 %v9695, 56
  %v10673 = vpop.permute.xlu0 %10672
  %10674 = vrot.lane.b32.xlu0 %v9703, 56
  %v10675 = vpop.permute.xlu0 %10674
  %10676 = vrot.lane.b32.xlu0 %v10249, 56
  %v10677 = vpop.permute.xlu0 %10676
  %10678 = vrot.lane.b32.xlu0 %v10615, 56
  %v10679 = vpop.permute.xlu0 %10678
  %v10682 = vunpack.c.l.b16 %v9141
  %v10683 = vunpack.c.l.b16 %v9159
  %v10684 = vpack.c.b16 %v10682, %v10682
  %v10685 = vpack.c.b16 %v10683, %v10683
  %v10686 = vrot.slane %v10598, 5
  %v10687 = vrot.slane %v10684, 5
  %v10688 = vsel %vm1484, %v10686, %v10687
  %v10689 = vrot.slane %v10599, 5
  %v10690 = vrot.slane %v10685, 5
  %v10691 = vsel %vm1484, %v10689, %v10690
  %10692 = vrot.lane.b32.xlu0 %v9870, 64
  %v10693 = vpop.permute.xlu0 %10692
  %10694 = vrot.lane.b32.xlu0 %v9872, 64
  %v10695 = vpop.permute.xlu0 %10694
  %10696 = vrot.lane.b32.xlu0 %v9873, 64
  %v10697 = vpop.permute.xlu0 %10696
  %10698 = vrot.lane.b32.xlu0 %v9875, 64
  %v10699 = vpop.permute.xlu0 %10698
  %10700 = vrot.lane.b32.xlu0 %v9876, 64
  %v10701 = vpop.permute.xlu0 %10700
  %10702 = vrot.lane.b32.xlu0 %v9878, 64
  %v10703 = vpop.permute.xlu0 %10702
  %10704 = vrot.lane.b32.xlu0 %v9879, 64
  %v10705 = vpop.permute.xlu0 %10704
  %10706 = vrot.lane.b32.xlu0 %v9881, 64
  %v10707 = vpop.permute.xlu0 %10706
  %10708 = vrot.lane.b32.xlu0 %v9882, 64
  %v10709 = vpop.permute.xlu0 %10708
  %10710 = vrot.lane.b32.xlu0 %v9884, 64
  %v10711 = vpop.permute.xlu0 %10710
  %10712 = vrot.lane.b32.xlu0 %v9885, 64
  %v10713 = vpop.permute.xlu0 %10712
  %10714 = vrot.lane.b32.xlu0 %v9887, 64
  %v10715 = vpop.permute.xlu0 %10714
  %10716 = vrot.lane.b32.xlu0 %v9888, 64
  %v10717 = vpop.permute.xlu0 %10716
  %10718 = vrot.lane.b32.xlu0 %v9890, 64
  %v10719 = vpop.permute.xlu0 %10718
  %10720 = vrot.lane.b32.xlu0 %v9891, 64
  %v10721 = vpop.permute.xlu0 %10720
  %10722 = vrot.lane.b32.xlu0 %v9893, 64
  %v10723 = vpop.permute.xlu0 %10722
  %10724 = vrot.lane.b32.xlu0 %v9894, 64
  %v10725 = vpop.permute.xlu0 %10724
  %10726 = vrot.lane.b32.xlu0 %v9896, 64
  %v10727 = vpop.permute.xlu0 %10726
  %10728 = vrot.lane.b32.xlu0 %v9897, 64
  %v10729 = vpop.permute.xlu0 %10728
  %10730 = vrot.lane.b32.xlu0 %v9899, 64
  %v10731 = vpop.permute.xlu0 %10730
  %10732 = vrot.lane.b32.xlu0 %v9900, 64
  %v10733 = vpop.permute.xlu0 %10732
  %10734 = vrot.lane.b32.xlu0 %v9902, 64
  %v10735 = vpop.permute.xlu0 %10734
  %10736 = vrot.lane.b32.xlu0 %v9903, 64
  %v10737 = vpop.permute.xlu0 %10736
  %10738 = vrot.lane.b32.xlu0 %v9905, 64
  %v10739 = vpop.permute.xlu0 %10738
  %10740 = vrot.lane.b32.xlu0 %v9906, 64
  %v10741 = vpop.permute.xlu0 %10740
  %10742 = vrot.lane.b32.xlu0 %v9908, 64
  %v10743 = vpop.permute.xlu0 %10742
  %10744 = vrot.lane.b32.xlu0 %v9909, 64
  %v10745 = vpop.permute.xlu0 %10744
  %10746 = vrot.lane.b32.xlu0 %v9911, 64
  %v10747 = vpop.permute.xlu0 %10746
  %10748 = vrot.lane.b32.xlu0 %v10320, 64
  %v10749 = vpop.permute.xlu0 %10748
  %10750 = vrot.lane.b32.xlu0 %v10322, 64
  %v10751 = vpop.permute.xlu0 %10750
  %10752 = vrot.lane.b32.xlu0 %v10686, 64
  %v10753 = vpop.permute.xlu0 %10752
  %10754 = vrot.lane.b32.xlu0 %v10688, 64
  %v10755 = vpop.permute.xlu0 %10754
  %10756 = vrot.lane.b32.xlu0 %v9918, 64
  %v10757 = vpop.permute.xlu0 %10756
  %10758 = vrot.lane.b32.xlu0 %v9920, 64
  %v10759 = vpop.permute.xlu0 %10758
  %10760 = vrot.lane.b32.xlu0 %v9921, 64
  %v10761 = vpop.permute.xlu0 %10760
  %10762 = vrot.lane.b32.xlu0 %v9923, 64
  %v10763 = vpop.permute.xlu0 %10762
  %10764 = vrot.lane.b32.xlu0 %v9924, 64
  %v10765 = vpop.permute.xlu0 %10764
  %10766 = vrot.lane.b32.xlu0 %v9926, 64
  %v10767 = vpop.permute.xlu0 %10766
  %10768 = vrot.lane.b32.xlu0 %v9927, 64
  %v10769 = vpop.permute.xlu0 %10768
  %10770 = vrot.lane.b32.xlu0 %v9929, 64
  %v10771 = vpop.permute.xlu0 %10770
  %10772 = vrot.lane.b32.xlu0 %v9930, 64
  %v10773 = vpop.permute.xlu0 %10772
  %10774 = vrot.lane.b32.xlu0 %v9932, 64
  %v10775 = vpop.permute.xlu0 %10774
  %10776 = vrot.lane.b32.xlu0 %v9933, 64
  %v10777 = vpop.permute.xlu0 %10776
  %10778 = vrot.lane.b32.xlu0 %v9935, 64
  %v10779 = vpop.permute.xlu0 %10778
  %10780 = vrot.lane.b32.xlu0 %v9936, 64
  %v10781 = vpop.permute.xlu0 %10780
  %10782 = vrot.lane.b32.xlu0 %v9938, 64
  %v10783 = vpop.permute.xlu0 %10782
  %10784 = vrot.lane.b32.xlu0 %v9939, 64
  %v10785 = vpop.permute.xlu0 %10784
  %10786 = vrot.lane.b32.xlu0 %v9941, 64
  %v10787 = vpop.permute.xlu0 %10786
  %10788 = vrot.lane.b32.xlu0 %v9942, 64
  %v10789 = vpop.permute.xlu0 %10788
  %10790 = vrot.lane.b32.xlu0 %v9944, 64
  %v10791 = vpop.permute.xlu0 %10790
  %10792 = vrot.lane.b32.xlu0 %v9945, 64
  %v10793 = vpop.permute.xlu0 %10792
  %10794 = vrot.lane.b32.xlu0 %v9947, 64
  %v10795 = vpop.permute.xlu0 %10794
  %10796 = vrot.lane.b32.xlu0 %v9948, 64
  %v10797 = vpop.permute.xlu0 %10796
  %10798 = vrot.lane.b32.xlu0 %v9950, 64
  %v10799 = vpop.permute.xlu0 %10798
  %10800 = vrot.lane.b32.xlu0 %v9951, 64
  %v10801 = vpop.permute.xlu0 %10800
  %10802 = vrot.lane.b32.xlu0 %v9953, 64
  %v10803 = vpop.permute.xlu0 %10802
  %10804 = vrot.lane.b32.xlu0 %v9954, 64
  %v10805 = vpop.permute.xlu0 %10804
  %10806 = vrot.lane.b32.xlu0 %v9956, 64
  %v10807 = vpop.permute.xlu0 %10806
  %10808 = vrot.lane.b32.xlu0 %v9957, 64
  %v10809 = vpop.permute.xlu0 %10808
  %10810 = vrot.lane.b32.xlu0 %v9959, 64
  %v10811 = vpop.permute.xlu0 %10810
  %10812 = vrot.lane.b32.xlu0 %v10323, 64
  %v10813 = vpop.permute.xlu0 %10812
  %10814 = vrot.lane.b32.xlu0 %v10325, 64
  %v10815 = vpop.permute.xlu0 %10814
  %10816 = vrot.lane.b32.xlu0 %v10689, 64
  %v10817 = vpop.permute.xlu0 %10816
  %10818 = vrot.lane.b32.xlu0 %v10691, 64
  %v10819 = vpop.permute.xlu0 %10818
  %v10822 = vsel %vm2602, %v9352, %v9705
  %v10824 = vsel %vm2602, %v9353, %v9705
  %v10827 = vsel %vm2602, %v9354, %v9707
  %v10829 = vsel %vm2602, %v9355, %v9707
  %v10832 = vsel %vm2602, %v9356, %v9709
  %v10834 = vsel %vm2602, %v9357, %v9709
  %v10837 = vsel %vm2602, %v9358, %v9711
  %v10839 = vsel %vm2602, %v9359, %v9711
  %v10842 = vsel %vm2602, %v9360, %v9713
  %v10844 = vsel %vm2602, %v9361, %v9713
  %v10847 = vsel %vm2602, %v9362, %v9715
  %v10849 = vsel %vm2602, %v9363, %v9715
  %v10852 = vsel %vm2602, %v9364, %v9717
  %v10854 = vsel %vm2602, %v9365, %v9717
  %v10857 = vsel %vm2602, %v9366, %v9719
  %v10859 = vsel %vm2602, %v9367, %v9719
  %v10862 = vsel %vm2602, %v9368, %v9721
  %v10864 = vsel %vm2602, %v9369, %v9721
  %v10867 = vsel %vm2602, %v9370, %v9723
  %v10869 = vsel %vm2602, %v9371, %v9723
  %v10872 = vsel %vm2602, %v9372, %v9725
  %v10874 = vsel %vm2602, %v9373, %v9725
  %v10877 = vsel %vm2602, %v9374, %v9727
  %v10879 = vsel %vm2602, %v9375, %v9727
  %v10882 = vsel %vm2602, %v9376, %v9729
  %v10884 = vsel %vm2602, %v9377, %v9729
  %v10887 = vsel %vm2602, %v9378, %v9731
  %v10889 = vsel %vm2602, %v9379, %v9731
  %v10892 = vsel %vm2602, %v9380, %v9733
  %v10894 = vsel %vm2602, %v9381, %v9733
  %v10897 = vsel %vm2602, %v9382, %v9735
  %v10899 = vsel %vm2602, %v9383, %v9735
  %v10902 = vsel %vm2602, %v9384, %v9737
  %v10904 = vsel %vm2602, %v9385, %v9737
  %v10907 = vsel %vm2602, %v9386, %v9739
  %v10909 = vsel %vm2602, %v9387, %v9739
  %v10912 = vsel %vm2602, %v9388, %v9741
  %v10914 = vsel %vm2602, %v9389, %v9741
  %v10917 = vsel %vm2602, %v9390, %v9743
  %v10919 = vsel %vm2602, %v9391, %v9743
  %v10922 = vsel %vm2602, %v9392, %v9745
  %v10924 = vsel %vm2602, %v9393, %v9745
  %v10927 = vsel %vm2602, %v9394, %v9747
  %v10929 = vsel %vm2602, %v9395, %v9747
  %v10932 = vsel %vm2602, %v9396, %v9749
  %v10934 = vsel %vm2602, %v9397, %v9749
  %v10937 = vsel %vm2602, %v9398, %v9751
  %v10939 = vsel %vm2602, %v9399, %v9751
  %v10942 = vsel %vm2602, %v9400, %v9753
  %v10944 = vsel %vm2602, %v9401, %v9753
  %v10947 = vsel %vm2602, %v9402, %v9755
  %v10949 = vsel %vm2602, %v9403, %v9755
  %v10952 = vsel %vm2602, %v9404, %v9757
  %v10954 = vsel %vm2602, %v9405, %v9757
  %v10957 = vsel %vm2602, %v9406, %v9759
  %v10959 = vsel %vm2602, %v9407, %v9759
  %v10962 = vsel %vm2602, %v9408, %v9761
  %v10964 = vsel %vm2602, %v9409, %v9761
  %v10967 = vsel %vm2602, %v9410, %v9763
  %v10969 = vsel %vm2602, %v9411, %v9763
  %v10972 = vsel %vm2602, %v9412, %v9765
  %v10974 = vsel %vm2602, %v9413, %v9765
  %v10977 = vsel %vm2602, %v9414, %v9767
  %v10979 = vsel %vm2602, %v9415, %v9767
  %v10981 = vsel %vm2860, %v10822, %v9961
  %v10983 = vsel %vm2860, %v10824, %v9963
  %v10985 = vsel %vm2860, %v10827, %v9965
  %v10987 = vsel %vm2860, %v10829, %v9967
  %v10989 = vsel %vm2860, %v10832, %v9969
  %v10991 = vsel %vm2860, %v10834, %v9971
  %v10993 = vsel %vm2860, %v10837, %v9973
  %v10995 = vsel %vm2860, %v10839, %v9975
  %v10997 = vsel %vm2860, %v10842, %v9977
  %v10999 = vsel %vm2860, %v10844, %v9979
  %v11001 = vsel %vm2860, %v10847, %v9981
  %v11003 = vsel %vm2860, %v10849, %v9983
  %v11005 = vsel %vm2860, %v10852, %v9985
  %v11007 = vsel %vm2860, %v10854, %v9987
  %v11009 = vsel %vm2860, %v10857, %v9989
  %v11011 = vsel %vm2860, %v10859, %v9991
  %v11013 = vsel %vm2860, %v10862, %v9993
  %v11015 = vsel %vm2860, %v10864, %v9995
  %v11017 = vsel %vm2860, %v10867, %v9997
  %v11019 = vsel %vm2860, %v10869, %v9999
  %v11021 = vsel %vm2860, %v10872, %v10001
  %v11023 = vsel %vm2860, %v10874, %v10003
  %v11025 = vsel %vm2860, %v10877, %v10005
  %v11027 = vsel %vm2860, %v10879, %v10007
  %v11029 = vsel %vm2860, %v10882, %v10009
  %v11031 = vsel %vm2860, %v10884, %v10011
  %v11033 = vsel %vm2860, %v10887, %v10013
  %v11035 = vsel %vm2860, %v10889, %v10015
  %v11037 = vsel %vm2860, %v10892, %v10017
  %v11039 = vsel %vm2860, %v10894, %v10019
  %v11041 = vsel %vm2860, %v10897, %v10021
  %v11043 = vsel %vm2860, %v10899, %v10023
  %v11045 = vsel %vm2860, %v10902, %v10025
  %v11047 = vsel %vm2860, %v10904, %v10027
  %v11049 = vsel %vm2860, %v10907, %v10029
  %v11051 = vsel %vm2860, %v10909, %v10031
  %v11053 = vsel %vm2860, %v10912, %v10033
  %v11055 = vsel %vm2860, %v10914, %v10035
  %v11057 = vsel %vm2860, %v10917, %v10037
  %v11059 = vsel %vm2860, %v10919, %v10039
  %v11061 = vsel %vm2860, %v10922, %v10041
  %v11063 = vsel %vm2860, %v10924, %v10043
  %v11065 = vsel %vm2860, %v10927, %v10045
  %v11067 = vsel %vm2860, %v10929, %v10047
  %v11069 = vsel %vm2860, %v10932, %v10049
  %v11071 = vsel %vm2860, %v10934, %v10051
  %v11073 = vsel %vm2860, %v10937, %v10053
  %v11075 = vsel %vm2860, %v10939, %v10055
  %v11077 = vsel %vm2860, %v10942, %v10057
  %v11079 = vsel %vm2860, %v10944, %v10059
  %v11081 = vsel %vm2860, %v10947, %v10061
  %v11083 = vsel %vm2860, %v10949, %v10063
  %v11085 = vsel %vm2860, %v10952, %v10065
  %v11087 = vsel %vm2860, %v10954, %v10067
  %v11089 = vsel %vm2860, %v10957, %v10069
  %v11091 = vsel %vm2860, %v10959, %v10071
  %v11093 = vsel %vm2860, %v10962, %v10073
  %v11095 = vsel %vm2860, %v10964, %v10075
  %v11097 = vsel %vm2860, %v10967, %v10077
  %v11099 = vsel %vm2860, %v10969, %v10079
  %v11101 = vsel %vm2860, %v10972, %v10081
  %v11103 = vsel %vm2860, %v10974, %v10083
  %v11105 = vsel %vm2860, %v10977, %v10085
  %v11107 = vsel %vm2860, %v10979, %v10087
  %v11109 = vsel %vm3086, %v10981, %v10105
  %v11111 = vsel %vm3086, %v10983, %v10107
  %v11113 = vsel %vm3086, %v10985, %v10109
  %v11115 = vsel %vm3086, %v10987, %v10111
  %v11117 = vsel %vm3086, %v10989, %v10113
  %v11119 = vsel %vm3086, %v10991, %v10115
  %v11121 = vsel %vm3086, %v10993, %v10117
  %v11123 = vsel %vm3086, %v10995, %v10119
  %v11125 = vsel %vm3086, %v10997, %v10121
  %v11127 = vsel %vm3086, %v10999, %v10123
  %v11129 = vsel %vm3086, %v11001, %v10125
  %v11131 = vsel %vm3086, %v11003, %v10127
  %v11133 = vsel %vm3086, %v11005, %v10129
  %v11135 = vsel %vm3086, %v11007, %v10131
  %v11137 = vsel %vm3086, %v11009, %v10133
  %v11139 = vsel %vm3086, %v11011, %v10135
  %v11141 = vsel %vm3086, %v11013, %v10137
  %v11143 = vsel %vm3086, %v11015, %v10139
  %v11145 = vsel %vm3086, %v11017, %v10141
  %v11147 = vsel %vm3086, %v11019, %v10143
  %v11149 = vsel %vm3086, %v11021, %v10145
  %v11151 = vsel %vm3086, %v11023, %v10147
  %v11153 = vsel %vm3086, %v11025, %v10149
  %v11155 = vsel %vm3086, %v11027, %v10151
  %v11157 = vsel %vm3086, %v11029, %v10153
  %v11159 = vsel %vm3086, %v11031, %v10155
  %v11161 = vsel %vm3086, %v11033, %v10157
  %v11163 = vsel %vm3086, %v11035, %v10159
  %v11165 = vsel %vm3086, %v11037, %v10161
  %v11167 = vsel %vm3086, %v11039, %v10163
  %v11169 = vsel %vm3086, %v11041, %v10165
  %v11171 = vsel %vm3086, %v11043, %v10167
  %v11173 = vsel %vm3086, %v11045, %v10169
  %v11175 = vsel %vm3086, %v11047, %v10171
  %v11177 = vsel %vm3086, %v11049, %v10173
  %v11179 = vsel %vm3086, %v11051, %v10175
  %v11181 = vsel %vm3086, %v11053, %v10177
  %v11183 = vsel %vm3086, %v11055, %v10179
  %v11185 = vsel %vm3086, %v11057, %v10181
  %v11187 = vsel %vm3086, %v11059, %v10183
  %v11189 = vsel %vm3086, %v11061, %v10185
  %v11191 = vsel %vm3086, %v11063, %v10187
  %v11193 = vsel %vm3086, %v11065, %v10189
  %v11195 = vsel %vm3086, %v11067, %v10191
  %v11197 = vsel %vm3086, %v11069, %v10193
  %v11199 = vsel %vm3086, %v11071, %v10195
  %v11201 = vsel %vm3086, %v11073, %v10197
  %v11203 = vsel %vm3086, %v11075, %v10199
  %v11205 = vsel %vm3086, %v11077, %v10201
  %v11207 = vsel %vm3086, %v11079, %v10203
  %v11209 = vsel %vm3086, %v11081, %v10205
  %v11211 = vsel %vm3086, %v11083, %v10207
  %v11213 = vsel %vm3086, %v11085, %v10209
  %v11215 = vsel %vm3086, %v11087, %v10211
  %v11217 = vsel %vm3086, %v11089, %v10213
  %v11219 = vsel %vm3086, %v11091, %v10215
  %v11221 = vsel %vm3086, %v11093, %v10217
  %v11223 = vsel %vm3086, %v11095, %v10219
  %v11225 = vsel %vm3086, %v11097, %v10221
  %v11227 = vsel %vm3086, %v11099, %v10223
  %v11229 = vsel %vm3086, %v11101, %v10225
  %v11231 = vsel %vm3086, %v11103, %v10227
  %v11233 = vsel %vm3086, %v11105, %v10229
  %v11235 = vsel %vm3086, %v11107, %v10231
  %v11237 = vsel %vm3312, %v11109, %v10251
  %v11238 = vsel %vm3312, %v11111, %v10251
  %v11240 = vsel %vm3312, %v11113, %v10253
  %v11241 = vsel %vm3312, %v11115, %v10253
  %v11243 = vsel %vm3312, %v11117, %v10255
  %v11244 = vsel %vm3312, %v11119, %v10255
  %v11246 = vsel %vm3312, %v11121, %v10257
  %v11247 = vsel %vm3312, %v11123, %v10257
  %v11249 = vsel %vm3312, %v11125, %v10259
  %v11250 = vsel %vm3312, %v11127, %v10259
  %v11252 = vsel %vm3312, %v11129, %v10261
  %v11253 = vsel %vm3312, %v11131, %v10261
  %v11255 = vsel %vm3312, %v11133, %v10263
  %v11256 = vsel %vm3312, %v11135, %v10263
  %v11258 = vsel %vm3312, %v11137, %v10265
  %v11259 = vsel %vm3312, %v11139, %v10265
  %v11261 = vsel %vm3312, %v11141, %v10267
  %v11262 = vsel %vm3312, %v11143, %v10267
  %v11264 = vsel %vm3312, %v11145, %v10269
  %v11265 = vsel %vm3312, %v11147, %v10269
  %v11267 = vsel %vm3312, %v11149, %v10271
  %v11268 = vsel %vm3312, %v11151, %v10271
  %v11270 = vsel %vm3312, %v11153, %v10273
  %v11271 = vsel %vm3312, %v11155, %v10273
  %v11273 = vsel %vm3312, %v11157, %v10275
  %v11274 = vsel %vm3312, %v11159, %v10275
  %v11276 = vsel %vm3312, %v11161, %v10277
  %v11277 = vsel %vm3312, %v11163, %v10277
  %v11279 = vsel %vm3312, %v11165, %v10279
  %v11280 = vsel %vm3312, %v11167, %v10279
  %v11282 = vsel %vm3312, %v11169, %v10281
  %v11283 = vsel %vm3312, %v11171, %v10281
  %v11285 = vsel %vm3312, %v11173, %v10283
  %v11286 = vsel %vm3312, %v11175, %v10283
  %v11288 = vsel %vm3312, %v11177, %v10285
  %v11289 = vsel %vm3312, %v11179, %v10285
  %v11291 = vsel %vm3312, %v11181, %v10287
  %v11292 = vsel %vm3312, %v11183, %v10287
  %v11294 = vsel %vm3312, %v11185, %v10289
  %v11295 = vsel %vm3312, %v11187, %v10289
  %v11297 = vsel %vm3312, %v11189, %v10291
  %v11298 = vsel %vm3312, %v11191, %v10291
  %v11300 = vsel %vm3312, %v11193, %v10293
  %v11301 = vsel %vm3312, %v11195, %v10293
  %v11303 = vsel %vm3312, %v11197, %v10295
  %v11304 = vsel %vm3312, %v11199, %v10295
  %v11306 = vsel %vm3312, %v11201, %v10297
  %v11307 = vsel %vm3312, %v11203, %v10297
  %v11309 = vsel %vm3312, %v11205, %v10299
  %v11310 = vsel %vm3312, %v11207, %v10299
  %v11312 = vsel %vm3312, %v11209, %v10301
  %v11313 = vsel %vm3312, %v11211, %v10301
  %v11315 = vsel %vm3312, %v11213, %v10303
  %v11316 = vsel %vm3312, %v11215, %v10303
  %v11318 = vsel %vm3312, %v11217, %v10305
  %v11319 = vsel %vm3312, %v11219, %v10305
  %v11321 = vsel %vm3312, %v11221, %v10307
  %v11322 = vsel %vm3312, %v11223, %v10307
  %v11324 = vsel %vm3312, %v11225, %v10309
  %v11325 = vsel %vm3312, %v11227, %v10309
  %v11327 = vsel %vm3312, %v11229, %v10311
  %v11328 = vsel %vm3312, %v11231, %v10311
  %v11330 = vsel %vm3312, %v11233, %v10313
  %v11331 = vsel %vm3312, %v11235, %v10313
  %v11333 = vsel %vm7145, %v11237, %v10327
  %v11335 = vsel %vm7145, %v11238, %v10329
  %v11337 = vsel %vm7145, %v11240, %v10331
  %v11339 = vsel %vm7145, %v11241, %v10333
  %v11341 = vsel %vm7145, %v11243, %v10335
  %v11343 = vsel %vm7145, %v11244, %v10337
  %v11345 = vsel %vm7145, %v11246, %v10339
  %v11347 = vsel %vm7145, %v11247, %v10341
  %v11349 = vsel %vm7145, %v11249, %v10343
  %v11351 = vsel %vm7145, %v11250, %v10345
  %v11353 = vsel %vm7145, %v11252, %v10347
  %v11355 = vsel %vm7145, %v11253, %v10349
  %v11357 = vsel %vm7145, %v11255, %v10351
  %v11359 = vsel %vm7145, %v11256, %v10353
  %v11361 = vsel %vm7145, %v11258, %v10355
  %v11363 = vsel %vm7145, %v11259, %v10357
  %v11365 = vsel %vm7145, %v11261, %v10359
  %v11367 = vsel %vm7145, %v11262, %v10361
  %v11369 = vsel %vm7145, %v11264, %v10363
  %v11371 = vsel %vm7145, %v11265, %v10365
  %v11373 = vsel %vm7145, %v11267, %v10367
  %v11375 = vsel %vm7145, %v11268, %v10369
  %v11377 = vsel %vm7145, %v11270, %v10371
  %v11379 = vsel %vm7145, %v11271, %v10373
  %v11381 = vsel %vm7145, %v11273, %v10375
  %v11383 = vsel %vm7145, %v11274, %v10377
  %v11385 = vsel %vm7145, %v11276, %v10379
  %v11387 = vsel %vm7145, %v11277, %v10381
  %v11389 = vsel %vm7145, %v11279, %v10383
  %v11391 = vsel %vm7145, %v11280, %v10385
  %v11393 = vsel %vm7145, %v11282, %v10387
  %v11395 = vsel %vm7145, %v11283, %v10389
  %v11397 = vsel %vm7145, %v11285, %v10391
  %v11399 = vsel %vm7145, %v11286, %v10393
  %v11401 = vsel %vm7145, %v11288, %v10395
  %v11403 = vsel %vm7145, %v11289, %v10397
  %v11405 = vsel %vm7145, %v11291, %v10399
  %v11407 = vsel %vm7145, %v11292, %v10401
  %v11409 = vsel %vm7145, %v11294, %v10403
  %v11411 = vsel %vm7145, %v11295, %v10405
  %v11413 = vsel %vm7145, %v11297, %v10407
  %v11415 = vsel %vm7145, %v11298, %v10409
  %v11417 = vsel %vm7145, %v11300, %v10411
  %v11419 = vsel %vm7145, %v11301, %v10413
  %v11421 = vsel %vm7145, %v11303, %v10415
  %v11423 = vsel %vm7145, %v11304, %v10417
  %v11425 = vsel %vm7145, %v11306, %v10419
  %v11427 = vsel %vm7145, %v11307, %v10421
  %v11429 = vsel %vm7145, %v11309, %v10423
  %v11431 = vsel %vm7145, %v11310, %v10425
  %v11433 = vsel %vm7145, %v11312, %v10427
  %v11435 = vsel %vm7145, %v11313, %v10429
  %v11437 = vsel %vm7145, %v11315, %v10431
  %v11439 = vsel %vm7145, %v11316, %v10433
  %v11441 = vsel %vm7145, %v11318, %v10435
  %v11443 = vsel %vm7145, %v11319, %v10437
  %v11445 = vsel %vm7145, %v11321, %v10439
  %v11447 = vsel %vm7145, %v11322, %v10441
  %v11449 = vsel %vm7145, %v11324, %v10443
  %v11451 = vsel %vm7145, %v11325, %v10445
  %v11453 = vsel %vm7145, %v11327, %v10447
  %v11455 = vsel %vm7145, %v11328, %v10449
  %v11457 = vsel %vm7145, %v11330, %v10451
  %v11459 = vsel %vm7145, %v11331, %v10453
  %v11461 = vsel %vm7274, %v11333, %v10471
  %v11463 = vsel %vm7274, %v11335, %v10473
  %v11465 = vsel %vm7274, %v11337, %v10475
  %v11467 = vsel %vm7274, %v11339, %v10477
  %v11469 = vsel %vm7274, %v11341, %v10479
  %v11471 = vsel %vm7274, %v11343, %v10481
  %v11473 = vsel %vm7274, %v11345, %v10483
  %v11475 = vsel %vm7274, %v11347, %v10485
  %v11477 = vsel %vm7274, %v11349, %v10487
  %v11479 = vsel %vm7274, %v11351, %v10489
  %v11481 = vsel %vm7274, %v11353, %v10491
  %v11483 = vsel %vm7274, %v11355, %v10493
  %v11485 = vsel %vm7274, %v11357, %v10495
  %v11487 = vsel %vm7274, %v11359, %v10497
  %v11489 = vsel %vm7274, %v11361, %v10499
  %v11491 = vsel %vm7274, %v11363, %v10501
  %v11493 = vsel %vm7274, %v11365, %v10503
  %v11495 = vsel %vm7274, %v11367, %v10505
  %v11497 = vsel %vm7274, %v11369, %v10507
  %v11499 = vsel %vm7274, %v11371, %v10509
  %v11501 = vsel %vm7274, %v11373, %v10511
  %v11503 = vsel %vm7274, %v11375, %v10513
  %v11505 = vsel %vm7274, %v11377, %v10515
  %v11507 = vsel %vm7274, %v11379, %v10517
  %v11509 = vsel %vm7274, %v11381, %v10519
  %v11511 = vsel %vm7274, %v11383, %v10521
  %v11513 = vsel %vm7274, %v11385, %v10523
  %v11515 = vsel %vm7274, %v11387, %v10525
  %v11517 = vsel %vm7274, %v11389, %v10527
  %v11519 = vsel %vm7274, %v11391, %v10529
  %v11521 = vsel %vm7274, %v11393, %v10531
  %v11523 = vsel %vm7274, %v11395, %v10533
  %v11525 = vsel %vm7274, %v11397, %v10535
  %v11527 = vsel %vm7274, %v11399, %v10537
  %v11529 = vsel %vm7274, %v11401, %v10539
  %v11531 = vsel %vm7274, %v11403, %v10541
  %v11533 = vsel %vm7274, %v11405, %v10543
  %v11535 = vsel %vm7274, %v11407, %v10545
  %v11537 = vsel %vm7274, %v11409, %v10547
  %v11539 = vsel %vm7274, %v11411, %v10549
  %v11541 = vsel %vm7274, %v11413, %v10551
  %v11543 = vsel %vm7274, %v11415, %v10553
  %v11545 = vsel %vm7274, %v11417, %v10555
  %v11547 = vsel %vm7274, %v11419, %v10557
  %v11549 = vsel %vm7274, %v11421, %v10559
  %v11551 = vsel %vm7274, %v11423, %v10561
  %v11553 = vsel %vm7274, %v11425, %v10563
  %v11555 = vsel %vm7274, %v11427, %v10565
  %v11557 = vsel %vm7274, %v11429, %v10567
  %v11559 = vsel %vm7274, %v11431, %v10569
  %v11561 = vsel %vm7274, %v11433, %v10571
  %v11563 = vsel %vm7274, %v11435, %v10573
  %v11565 = vsel %vm7274, %v11437, %v10575
  %v11567 = vsel %vm7274, %v11439, %v10577
  %v11569 = vsel %vm7274, %v11441, %v10579
  %v11571 = vsel %vm7274, %v11443, %v10581
  %v11573 = vsel %vm7274, %v11445, %v10583
  %v11575 = vsel %vm7274, %v11447, %v10585
  %v11577 = vsel %vm7274, %v11449, %v10587
  %v11579 = vsel %vm7274, %v11451, %v10589
  %v11581 = vsel %vm7274, %v11453, %v10591
  %v11583 = vsel %vm7274, %v11455, %v10593
  %v11585 = vsel %vm7274, %v11457, %v10595
  %v11587 = vsel %vm7274, %v11459, %v10597
  %v11589 = vsel %vm7403, %v11461, %v10617
  %v11590 = vsel %vm7403, %v11463, %v10617
  %v11592 = vsel %vm7403, %v11465, %v10619
  %v11593 = vsel %vm7403, %v11467, %v10619
  %v11595 = vsel %vm7403, %v11469, %v10621
  %v11596 = vsel %vm7403, %v11471, %v10621
  %v11598 = vsel %vm7403, %v11473, %v10623
  %v11599 = vsel %vm7403, %v11475, %v10623
  %v11601 = vsel %vm7403, %v11477, %v10625
  %v11602 = vsel %vm7403, %v11479, %v10625
  %v11604 = vsel %vm7403, %v11481, %v10627
  %v11605 = vsel %vm7403, %v11483, %v10627
  %v11607 = vsel %vm7403, %v11485, %v10629
  %v11608 = vsel %vm7403, %v11487, %v10629
  %v11610 = vsel %vm7403, %v11489, %v10631
  %v11611 = vsel %vm7403, %v11491, %v10631
  %v11613 = vsel %vm7403, %v11493, %v10633
  %v11614 = vsel %vm7403, %v11495, %v10633
  %v11616 = vsel %vm7403, %v11497, %v10635
  %v11617 = vsel %vm7403, %v11499, %v10635
  %v11619 = vsel %vm7403, %v11501, %v10637
  %v11620 = vsel %vm7403, %v11503, %v10637
  %v11622 = vsel %vm7403, %v11505, %v10639
  %v11623 = vsel %vm7403, %v11507, %v10639
  %v11625 = vsel %vm7403, %v11509, %v10641
  %v11626 = vsel %vm7403, %v11511, %v10641
  %v11628 = vsel %vm7403, %v11513, %v10643
  %v11629 = vsel %vm7403, %v11515, %v10643
  %v11631 = vsel %vm7403, %v11517, %v10645
  %v11632 = vsel %vm7403, %v11519, %v10645
  %v11634 = vsel %vm7403, %v11521, %v10647
  %v11635 = vsel %vm7403, %v11523, %v10647
  %v11637 = vsel %vm7403, %v11525, %v10649
  %v11638 = vsel %vm7403, %v11527, %v10649
  %v11640 = vsel %vm7403, %v11529, %v10651
  %v11641 = vsel %vm7403, %v11531, %v10651
  %v11643 = vsel %vm7403, %v11533, %v10653
  %v11644 = vsel %vm7403, %v11535, %v10653
  %v11646 = vsel %vm7403, %v11537, %v10655
  %v11647 = vsel %vm7403, %v11539, %v10655
  %v11649 = vsel %vm7403, %v11541, %v10657
  %v11650 = vsel %vm7403, %v11543, %v10657
  %v11652 = vsel %vm7403, %v11545, %v10659
  %v11653 = vsel %vm7403, %v11547, %v10659
  %v11655 = vsel %vm7403, %v11549, %v10661
  %v11656 = vsel %vm7403, %v11551, %v10661
  %v11658 = vsel %vm7403, %v11553, %v10663
  %v11659 = vsel %vm7403, %v11555, %v10663
  %v11661 = vsel %vm7403, %v11557, %v10665
  %v11662 = vsel %vm7403, %v11559, %v10665
  %v11664 = vsel %vm7403, %v11561, %v10667
  %v11665 = vsel %vm7403, %v11563, %v10667
  %v11667 = vsel %vm7403, %v11565, %v10669
  %v11668 = vsel %vm7403, %v11567, %v10669
  %v11670 = vsel %vm7403, %v11569, %v10671
  %v11671 = vsel %vm7403, %v11571, %v10671
  %v11673 = vsel %vm7403, %v11573, %v10673
  %v11674 = vsel %vm7403, %v11575, %v10673
  %v11676 = vsel %vm7403, %v11577, %v10675
  %v11677 = vsel %vm7403, %v11579, %v10675
  %v11679 = vsel %vm7403, %v11581, %v10677
  %v11680 = vsel %vm7403, %v11583, %v10677
  %v11682 = vsel %vm7403, %v11585, %v10679
  %v11683 = vsel %vm7403, %v11587, %v10679
  %v11685 = vsel %vm7500, %v11589, %v10693
  %v11687 = vsel %vm7500, %v11590, %v10695
  %v11689 = vsel %vm7500, %v11592, %v10697
  %v11691 = vsel %vm7500, %v11593, %v10699
  %v11693 = vsel %vm7500, %v11595, %v10701
  %v11695 = vsel %vm7500, %v11596, %v10703
  %v11697 = vsel %vm7500, %v11598, %v10705
  %v11699 = vsel %vm7500, %v11599, %v10707
  %v11701 = vsel %vm7500, %v11601, %v10709
  %v11703 = vsel %vm7500, %v11602, %v10711
  %v11705 = vsel %vm7500, %v11604, %v10713
  %v11707 = vsel %vm7500, %v11605, %v10715
  %v11709 = vsel %vm7500, %v11607, %v10717
  %v11711 = vsel %vm7500, %v11608, %v10719
  %v11713 = vsel %vm7500, %v11610, %v10721
  %v11715 = vsel %vm7500, %v11611, %v10723
  %v11717 = vsel %vm7500, %v11613, %v10725
  %v11719 = vsel %vm7500, %v11614, %v10727
  %v11721 = vsel %vm7500, %v11616, %v10729
  %v11723 = vsel %vm7500, %v11617, %v10731
  %v11725 = vsel %vm7500, %v11619, %v10733
  %v11727 = vsel %vm7500, %v11620, %v10735
  %v11729 = vsel %vm7500, %v11622, %v10737
  %v11731 = vsel %vm7500, %v11623, %v10739
  %v11733 = vsel %vm7500, %v11625, %v10741
  %v11735 = vsel %vm7500, %v11626, %v10743
  %v11737 = vsel %vm7500, %v11628, %v10745
  %v11739 = vsel %vm7500, %v11629, %v10747
  %v11741 = vsel %vm7500, %v11631, %v10749
  %v11743 = vsel %vm7500, %v11632, %v10751
  %v11745 = vsel %vm7500, %v11634, %v10753
  %v11747 = vsel %vm7500, %v11635, %v10755
  %v11749 = vsel %vm7500, %v11637, %v10757
  %v11751 = vsel %vm7500, %v11638, %v10759
  %v11753 = vsel %vm7500, %v11640, %v10761
  %v11755 = vsel %vm7500, %v11641, %v10763
  %v11757 = vsel %vm7500, %v11643, %v10765
  %v11759 = vsel %vm7500, %v11644, %v10767
  %v11761 = vsel %vm7500, %v11646, %v10769
  %v11763 = vsel %vm7500, %v11647, %v10771
  %v11765 = vsel %vm7500, %v11649, %v10773
  %v11767 = vsel %vm7500, %v11650, %v10775
  %v11769 = vsel %vm7500, %v11652, %v10777
  %v11771 = vsel %vm7500, %v11653, %v10779
  %v11773 = vsel %vm7500, %v11655, %v10781
  %v11775 = vsel %vm7500, %v11656, %v10783
  %v11777 = vsel %vm7500, %v11658, %v10785
  %v11779 = vsel %vm7500, %v11659, %v10787
  %v11781 = vsel %vm7500, %v11661, %v10789
  %v11783 = vsel %vm7500, %v11662, %v10791
  %v11785 = vsel %vm7500, %v11664, %v10793
  %v11787 = vsel %vm7500, %v11665, %v10795
  %v11789 = vsel %vm7500, %v11667, %v10797
  %v11791 = vsel %vm7500, %v11668, %v10799
  %v11793 = vsel %vm7500, %v11670, %v10801
  %v11795 = vsel %vm7500, %v11671, %v10803
  %v11797 = vsel %vm7500, %v11673, %v10805
  %v11799 = vsel %vm7500, %v11674, %v10807
  %v11801 = vsel %vm7500, %v11676, %v10809
  %v11803 = vsel %vm7500, %v11677, %v10811
  %v11805 = vsel %vm7500, %v11679, %v10813
  %v11807 = vsel %vm7500, %v11680, %v10815
  %v11809 = vsel %vm7500, %v11682, %v10817
  %v11811 = vsel %vm7500, %v11683, %v10819
  %v11812 = vsel %vm7629, %v11685, 0
  %v11813 = vsel %vm7629, %v11687, 0
  %v11814 = vsel %vm7629, %v11689, 0
  %v11815 = vsel %vm7629, %v11691, 0
  %v11816 = vsel %vm7629, %v11693, 0
  %v11817 = vsel %vm7629, %v11695, 0
  %v11818 = vsel %vm7629, %v11697, 0
  %v11819 = vsel %vm7629, %v11699, 0
  %v11820 = vsel %vm7629, %v11701, 0
  %v11821 = vsel %vm7629, %v11703, 0
  %v11822 = vsel %vm7629, %v11705, 0
  %v11823 = vsel %vm7629, %v11707, 0
  %v11824 = vsel %vm7629, %v11709, 0
  %v11825 = vsel %vm7629, %v11711, 0
  %v11826 = vsel %vm7629, %v11713, 0
  %v11827 = vsel %vm7629, %v11715, 0
  %v11828 = vsel %vm7629, %v11717, 0
  %v11829 = vsel %vm7629, %v11719, 0
  %v11830 = vsel %vm7629, %v11721, 0
  %v11831 = vsel %vm7629, %v11723, 0
  %v11832 = vsel %vm7629, %v11725, 0
  %v11833 = vsel %vm7629, %v11727, 0
  %v11834 = vsel %vm7629, %v11729, 0
  %v11835 = vsel %vm7629, %v11731, 0
  %v11836 = vsel %vm7629, %v11733, 0
  %v11837 = vsel %vm7629, %v11735, 0
  %v11838 = vsel %vm7629, %v11737, 0
  %v11839 = vsel %vm7629, %v11739, 0
  %v11840 = vsel %vm7629, %v11741, 0
  %v11841 = vsel %vm7629, %v11743, 0
  %v11842 = vsel %vm7629, %v11745, 0
  %v11843 = vsel %vm7629, %v11747, 0
  %v11844 = vsel %vm7629, %v11749, 0
  %v11845 = vsel %vm7629, %v11751, 0
  %v11846 = vsel %vm7629, %v11753, 0
  %v11847 = vsel %vm7629, %v11755, 0
  %v11848 = vsel %vm7629, %v11757, 0
  %v11849 = vsel %vm7629, %v11759, 0
  %v11850 = vsel %vm7629, %v11761, 0
  %v11851 = vsel %vm7629, %v11763, 0
  %v11852 = vsel %vm7629, %v11765, 0
  %v11853 = vsel %vm7629, %v11767, 0
  %v11854 = vsel %vm7629, %v11769, 0
  %v11855 = vsel %vm7629, %v11771, 0
  %v11856 = vsel %vm7629, %v11773, 0
  %v11857 = vsel %vm7629, %v11775, 0
  %v11858 = vsel %vm7629, %v11777, 0
  %v11859 = vsel %vm7629, %v11779, 0
  %v11860 = vsel %vm7629, %v11781, 0
  %v11861 = vsel %vm7629, %v11783, 0
  %v11862 = vsel %vm7629, %v11785, 0
  %v11863 = vsel %vm7629, %v11787, 0
  %v11864 = vsel %vm7629, %v11789, 0
  %v11865 = vsel %vm7629, %v11791, 0
  %v11866 = vsel %vm7629, %v11793, 0
  %v11867 = vsel %vm7629, %v11795, 0
  %v11868 = vsel %vm7629, %v11797, 0
  %v11869 = vsel %vm7629, %v11799, 0
  %v11870 = vsel %vm7629, %v11801, 0
  %v11871 = vsel %vm7629, %v11803, 0
  %v11872 = vsel %vm7629, %v11805, 0
  %v11873 = vsel %vm7629, %v11807, 0
  %v11874 = vsel %vm7629, %v11809, 0
  %v11875 = vsel %vm7629, %v11811, 0
  %v11876 = vshrl.u32 %v11812, 16
  %v11878 = vrot.slane %v11876, 3
  %v11879 = vshll.u32 %v11812, 16
  %v11881 = vrot.slane %v11879, 4
  %v11882 = vor.u32 %v11878, %v11881
  %v11883 = vshrl.u32 %v11813, 16
  %v11885 = vrot.slane %v11883, 3
  %v11886 = vshll.u32 %v11813, 16
  %v11888 = vrot.slane %v11886, 4
  %v11889 = vor.u32 %v11885, %v11888
  %v11890 = vsel %vm3507, %v11882, %v11889
  %v11891 = vshrl.u32 %v11814, 16
  %v11893 = vrot.slane %v11891, 3
  %v11894 = vshll.u32 %v11814, 16
  %v11896 = vrot.slane %v11894, 4
  %v11897 = vor.u32 %v11893, %v11896
  %v11898 = vshrl.u32 %v11815, 16
  %v11900 = vrot.slane %v11898, 3
  %v11901 = vshll.u32 %v11815, 16
  %v11903 = vrot.slane %v11901, 4
  %v11904 = vor.u32 %v11900, %v11903
  %v11905 = vsel %vm3507, %v11897, %v11904
  %v11906 = vshrl.u32 %v11816, 16
  %v11908 = vrot.slane %v11906, 3
  %v11909 = vshll.u32 %v11816, 16
  %v11911 = vrot.slane %v11909, 4
  %v11912 = vor.u32 %v11908, %v11911
  %v11913 = vshrl.u32 %v11817, 16
  %v11915 = vrot.slane %v11913, 3
  %v11916 = vshll.u32 %v11817, 16
  %v11918 = vrot.slane %v11916, 4
  %v11919 = vor.u32 %v11915, %v11918
  %v11920 = vsel %vm3507, %v11912, %v11919
  %v11921 = vshrl.u32 %v11818, 16
  %v11923 = vrot.slane %v11921, 3
  %v11924 = vshll.u32 %v11818, 16
  %v11926 = vrot.slane %v11924, 4
  %v11927 = vor.u32 %v11923, %v11926
  %v11928 = vshrl.u32 %v11819, 16
  %v11930 = vrot.slane %v11928, 3
  %v11931 = vshll.u32 %v11819, 16
  %v11933 = vrot.slane %v11931, 4
  %v11934 = vor.u32 %v11930, %v11933
  %v11935 = vsel %vm3507, %v11927, %v11934
  %v11936 = vshrl.u32 %v11820, 16
  %v11938 = vrot.slane %v11936, 3
  %v11939 = vshll.u32 %v11820, 16
  %v11941 = vrot.slane %v11939, 4
  %v11942 = vor.u32 %v11938, %v11941
  %v11943 = vshrl.u32 %v11821, 16
  %v11945 = vrot.slane %v11943, 3
  %v11946 = vshll.u32 %v11821, 16
  %v11948 = vrot.slane %v11946, 4
  %v11949 = vor.u32 %v11945, %v11948
  %v11950 = vsel %vm3507, %v11942, %v11949
  %v11951 = vshrl.u32 %v11822, 16
  %v11953 = vrot.slane %v11951, 3
  %v11954 = vshll.u32 %v11822, 16
  %v11956 = vrot.slane %v11954, 4
  %v11957 = vor.u32 %v11953, %v11956
  %v11958 = vshrl.u32 %v11823, 16
  %v11960 = vrot.slane %v11958, 3
  %v11961 = vshll.u32 %v11823, 16
  %v11963 = vrot.slane %v11961, 4
  %v11964 = vor.u32 %v11960, %v11963
  %v11965 = vsel %vm3507, %v11957, %v11964
  %v11966 = vshrl.u32 %v11824, 16
  %v11968 = vrot.slane %v11966, 3
  %v11969 = vshll.u32 %v11824, 16
  %v11971 = vrot.slane %v11969, 4
  %v11972 = vor.u32 %v11968, %v11971
  %v11973 = vshrl.u32 %v11825, 16
  %v11975 = vrot.slane %v11973, 3
  %v11976 = vshll.u32 %v11825, 16
  %v11978 = vrot.slane %v11976, 4
  %v11979 = vor.u32 %v11975, %v11978
  %v11980 = vsel %vm3507, %v11972, %v11979
  %v11981 = vshrl.u32 %v11826, 16
  %v11983 = vrot.slane %v11981, 3
  %v11984 = vshll.u32 %v11826, 16
  %v11986 = vrot.slane %v11984, 4
  %v11987 = vor.u32 %v11983, %v11986
  %v11988 = vshrl.u32 %v11827, 16
  %v11990 = vrot.slane %v11988, 3
  %v11991 = vshll.u32 %v11827, 16
  %v11993 = vrot.slane %v11991, 4
  %v11994 = vor.u32 %v11990, %v11993
  %v11995 = vsel %vm3507, %v11987, %v11994
  %v11996 = vshrl.u32 %v11828, 16
  %v11998 = vrot.slane %v11996, 3
  %v11999 = vshll.u32 %v11828, 16
  %v12001 = vrot.slane %v11999, 4
  %v12002 = vor.u32 %v11998, %v12001
  %v12003 = vshrl.u32 %v11829, 16
  %v12005 = vrot.slane %v12003, 3
  %v12006 = vshll.u32 %v11829, 16
  %v12008 = vrot.slane %v12006, 4
  %v12009 = vor.u32 %v12005, %v12008
  %v12010 = vsel %vm3507, %v12002, %v12009
  %v12011 = vshrl.u32 %v11830, 16
  %v12013 = vrot.slane %v12011, 3
  %v12014 = vshll.u32 %v11830, 16
  %v12016 = vrot.slane %v12014, 4
  %v12017 = vor.u32 %v12013, %v12016
  %v12018 = vshrl.u32 %v11831, 16
  %v12020 = vrot.slane %v12018, 3
  %v12021 = vshll.u32 %v11831, 16
  %v12023 = vrot.slane %v12021, 4
  %v12024 = vor.u32 %v12020, %v12023
  %v12025 = vsel %vm3507, %v12017, %v12024
  %v12026 = vshrl.u32 %v11832, 16
  %v12028 = vrot.slane %v12026, 3
  %v12029 = vshll.u32 %v11832, 16
  %v12031 = vrot.slane %v12029, 4
  %v12032 = vor.u32 %v12028, %v12031
  %v12033 = vshrl.u32 %v11833, 16
  %v12035 = vrot.slane %v12033, 3
  %v12036 = vshll.u32 %v11833, 16
  %v12038 = vrot.slane %v12036, 4
  %v12039 = vor.u32 %v12035, %v12038
  %v12040 = vsel %vm3507, %v12032, %v12039
  %v12041 = vshrl.u32 %v11834, 16
  %v12043 = vrot.slane %v12041, 3
  %v12044 = vshll.u32 %v11834, 16
  %v12046 = vrot.slane %v12044, 4
  %v12047 = vor.u32 %v12043, %v12046
  %v12048 = vshrl.u32 %v11835, 16
  %v12050 = vrot.slane %v12048, 3
  %v12051 = vshll.u32 %v11835, 16
  %v12053 = vrot.slane %v12051, 4
  %v12054 = vor.u32 %v12050, %v12053
  %v12055 = vsel %vm3507, %v12047, %v12054
  %v12056 = vshrl.u32 %v11836, 16
  %v12058 = vrot.slane %v12056, 3
  %v12059 = vshll.u32 %v11836, 16
  %v12061 = vrot.slane %v12059, 4
  %v12062 = vor.u32 %v12058, %v12061
  %v12063 = vshrl.u32 %v11837, 16
  %v12065 = vrot.slane %v12063, 3
  %v12066 = vshll.u32 %v11837, 16
  %v12068 = vrot.slane %v12066, 4
  %v12069 = vor.u32 %v12065, %v12068
  %v12070 = vsel %vm3507, %v12062, %v12069
  %v12071 = vshrl.u32 %v11838, 16
  %v12073 = vrot.slane %v12071, 3
  %v12074 = vshll.u32 %v11838, 16
  %v12076 = vrot.slane %v12074, 4
  %v12077 = vor.u32 %v12073, %v12076
  %v12078 = vshrl.u32 %v11839, 16
  %v12080 = vrot.slane %v12078, 3
  %v12081 = vshll.u32 %v11839, 16
  %v12083 = vrot.slane %v12081, 4
  %v12084 = vor.u32 %v12080, %v12083
  %v12085 = vsel %vm3507, %v12077, %v12084
  %v12086 = vshrl.u32 %v11840, 16
  %v12088 = vrot.slane %v12086, 3
  %v12089 = vshll.u32 %v11840, 16
  %v12091 = vrot.slane %v12089, 4
  %v12092 = vor.u32 %v12088, %v12091
  %v12093 = vshrl.u32 %v11841, 16
  %v12095 = vrot.slane %v12093, 3
  %v12096 = vshll.u32 %v11841, 16
  %v12098 = vrot.slane %v12096, 4
  %v12099 = vor.u32 %v12095, %v12098
  %v12100 = vsel %vm3507, %v12092, %v12099
  %v12101 = vshrl.u32 %v11842, 16
  %v12103 = vrot.slane %v12101, 3
  %v12104 = vshll.u32 %v11842, 16
  %v12106 = vrot.slane %v12104, 4
  %v12107 = vor.u32 %v12103, %v12106
  %v12108 = vshrl.u32 %v11843, 16
  %v12110 = vrot.slane %v12108, 3
  %v12111 = vshll.u32 %v11843, 16
  %v12113 = vrot.slane %v12111, 4
  %v12114 = vor.u32 %v12110, %v12113
  %v12115 = vsel %vm3507, %v12107, %v12114
  %v12116 = vshrl.u32 %v11844, 16
  %v12118 = vrot.slane %v12116, 3
  %v12119 = vshll.u32 %v11844, 16
  %v12121 = vrot.slane %v12119, 4
  %v12122 = vor.u32 %v12118, %v12121
  %v12123 = vshrl.u32 %v11845, 16
  %v12125 = vrot.slane %v12123, 3
  %v12126 = vshll.u32 %v11845, 16
  %v12128 = vrot.slane %v12126, 4
  %v12129 = vor.u32 %v12125, %v12128
  %v12130 = vsel %vm3507, %v12122, %v12129
  %v12131 = vshrl.u32 %v11846, 16
  %v12133 = vrot.slane %v12131, 3
  %v12134 = vshll.u32 %v11846, 16
  %v12136 = vrot.slane %v12134, 4
  %v12137 = vor.u32 %v12133, %v12136
  %v12138 = vshrl.u32 %v11847, 16
  %v12140 = vrot.slane %v12138, 3
  %v12141 = vshll.u32 %v11847, 16
  %v12143 = vrot.slane %v12141, 4
  %v12144 = vor.u32 %v12140, %v12143
  %v12145 = vsel %vm3507, %v12137, %v12144
  %v12146 = vshrl.u32 %v11848, 16
  %v12148 = vrot.slane %v12146, 3
  %v12149 = vshll.u32 %v11848, 16
  %v12151 = vrot.slane %v12149, 4
  %v12152 = vor.u32 %v12148, %v12151
  %v12153 = vshrl.u32 %v11849, 16
  %v12155 = vrot.slane %v12153, 3
  %v12156 = vshll.u32 %v11849, 16
  %v12158 = vrot.slane %v12156, 4
  %v12159 = vor.u32 %v12155, %v12158
  %v12160 = vsel %vm3507, %v12152, %v12159
  %v12161 = vshrl.u32 %v11850, 16
  %v12163 = vrot.slane %v12161, 3
  %v12164 = vshll.u32 %v11850, 16
  %v12166 = vrot.slane %v12164, 4
  %v12167 = vor.u32 %v12163, %v12166
  %v12168 = vshrl.u32 %v11851, 16
  %v12170 = vrot.slane %v12168, 3
  %v12171 = vshll.u32 %v11851, 16
  %v12173 = vrot.slane %v12171, 4
  %v12174 = vor.u32 %v12170, %v12173
  %v12175 = vsel %vm3507, %v12167, %v12174
  %v12176 = vshrl.u32 %v11852, 16
  %v12178 = vrot.slane %v12176, 3
  %v12179 = vshll.u32 %v11852, 16
  %v12181 = vrot.slane %v12179, 4
  %v12182 = vor.u32 %v12178, %v12181
  %v12183 = vshrl.u32 %v11853, 16
  %v12185 = vrot.slane %v12183, 3
  %v12186 = vshll.u32 %v11853, 16
  %v12188 = vrot.slane %v12186, 4
  %v12189 = vor.u32 %v12185, %v12188
  %v12190 = vsel %vm3507, %v12182, %v12189
  %v12191 = vshrl.u32 %v11854, 16
  %v12193 = vrot.slane %v12191, 3
  %v12194 = vshll.u32 %v11854, 16
  %v12196 = vrot.slane %v12194, 4
  %v12197 = vor.u32 %v12193, %v12196
  %v12198 = vshrl.u32 %v11855, 16
  %v12200 = vrot.slane %v12198, 3
  %v12201 = vshll.u32 %v11855, 16
  %v12203 = vrot.slane %v12201, 4
  %v12204 = vor.u32 %v12200, %v12203
  %v12205 = vsel %vm3507, %v12197, %v12204
  %v12206 = vshrl.u32 %v11856, 16
  %v12208 = vrot.slane %v12206, 3
  %v12209 = vshll.u32 %v11856, 16
  %v12211 = vrot.slane %v12209, 4
  %v12212 = vor.u32 %v12208, %v12211
  %v12213 = vshrl.u32 %v11857, 16
  %v12215 = vrot.slane %v12213, 3
  %v12216 = vshll.u32 %v11857, 16
  %v12218 = vrot.slane %v12216, 4
  %v12219 = vor.u32 %v12215, %v12218
  %v12220 = vsel %vm3507, %v12212, %v12219
  %v12221 = vshrl.u32 %v11858, 16
  %v12223 = vrot.slane %v12221, 3
  %v12224 = vshll.u32 %v11858, 16
  %v12226 = vrot.slane %v12224, 4
  %v12227 = vor.u32 %v12223, %v12226
  %v12228 = vshrl.u32 %v11859, 16
  %v12230 = vrot.slane %v12228, 3
  %v12231 = vshll.u32 %v11859, 16
  %v12233 = vrot.slane %v12231, 4
  %v12234 = vor.u32 %v12230, %v12233
  %v12235 = vsel %vm3507, %v12227, %v12234
  %v12236 = vshrl.u32 %v11860, 16
  %v12238 = vrot.slane %v12236, 3
  %v12239 = vshll.u32 %v11860, 16
  %v12241 = vrot.slane %v12239, 4
  %v12242 = vor.u32 %v12238, %v12241
  %v12243 = vshrl.u32 %v11861, 16
  %v12245 = vrot.slane %v12243, 3
  %v12246 = vshll.u32 %v11861, 16
  %v12248 = vrot.slane %v12246, 4
  %v12249 = vor.u32 %v12245, %v12248
  %v12250 = vsel %vm3507, %v12242, %v12249
  %v12251 = vshrl.u32 %v11862, 16
  %v12253 = vrot.slane %v12251, 3
  %v12254 = vshll.u32 %v11862, 16
  %v12256 = vrot.slane %v12254, 4
  %v12257 = vor.u32 %v12253, %v12256
  %v12258 = vshrl.u32 %v11863, 16
  %v12260 = vrot.slane %v12258, 3
  %v12261 = vshll.u32 %v11863, 16
  %v12263 = vrot.slane %v12261, 4
  %v12264 = vor.u32 %v12260, %v12263
  %v12265 = vsel %vm3507, %v12257, %v12264
  %v12266 = vshrl.u32 %v11864, 16
  %v12268 = vrot.slane %v12266, 3
  %v12269 = vshll.u32 %v11864, 16
  %v12271 = vrot.slane %v12269, 4
  %v12272 = vor.u32 %v12268, %v12271
  %v12273 = vshrl.u32 %v11865, 16
  %v12275 = vrot.slane %v12273, 3
  %v12276 = vshll.u32 %v11865, 16
  %v12278 = vrot.slane %v12276, 4
  %v12279 = vor.u32 %v12275, %v12278
  %v12280 = vsel %vm3507, %v12272, %v12279
  %v12281 = vshrl.u32 %v11866, 16
  %v12283 = vrot.slane %v12281, 3
  %v12284 = vshll.u32 %v11866, 16
  %v12286 = vrot.slane %v12284, 4
  %v12287 = vor.u32 %v12283, %v12286
  %v12288 = vshrl.u32 %v11867, 16
  %v12290 = vrot.slane %v12288, 3
  %v12291 = vshll.u32 %v11867, 16
  %v12293 = vrot.slane %v12291, 4
  %v12294 = vor.u32 %v12290, %v12293
  %v12295 = vsel %vm3507, %v12287, %v12294
  %v12296 = vshrl.u32 %v11868, 16
  %v12298 = vrot.slane %v12296, 3
  %v12299 = vshll.u32 %v11868, 16
  %v12301 = vrot.slane %v12299, 4
  %v12302 = vor.u32 %v12298, %v12301
  %v12303 = vshrl.u32 %v11869, 16
  %v12305 = vrot.slane %v12303, 3
  %v12306 = vshll.u32 %v11869, 16
  %v12308 = vrot.slane %v12306, 4
  %v12309 = vor.u32 %v12305, %v12308
  %v12310 = vsel %vm3507, %v12302, %v12309
  %v12311 = vshrl.u32 %v11870, 16
  %v12313 = vrot.slane %v12311, 3
  %v12314 = vshll.u32 %v11870, 16
  %v12316 = vrot.slane %v12314, 4
  %v12317 = vor.u32 %v12313, %v12316
  %v12318 = vshrl.u32 %v11871, 16
  %v12320 = vrot.slane %v12318, 3
  %v12321 = vshll.u32 %v11871, 16
  %v12323 = vrot.slane %v12321, 4
  %v12324 = vor.u32 %v12320, %v12323
  %v12325 = vsel %vm3507, %v12317, %v12324
  %v12326 = vshrl.u32 %v11872, 16
  %v12328 = vrot.slane %v12326, 3
  %v12329 = vshll.u32 %v11872, 16
  %v12331 = vrot.slane %v12329, 4
  %v12332 = vor.u32 %v12328, %v12331
  %v12333 = vshrl.u32 %v11873, 16
  %v12335 = vrot.slane %v12333, 3
  %v12336 = vshll.u32 %v11873, 16
  %v12338 = vrot.slane %v12336, 4
  %v12339 = vor.u32 %v12335, %v12338
  %v12340 = vsel %vm3507, %v12332, %v12339
  %v12341 = vshrl.u32 %v11874, 16
  %v12343 = vrot.slane %v12341, 3
  %v12344 = vshll.u32 %v11874, 16
  %v12346 = vrot.slane %v12344, 4
  %v12347 = vor.u32 %v12343, %v12346
  %v12348 = vshrl.u32 %v11875, 16
  %v12350 = vrot.slane %v12348, 3
  %v12351 = vshll.u32 %v11875, 16
  %v12353 = vrot.slane %v12351, 4
  %v12354 = vor.u32 %v12350, %v12353
  %v12355 = vsel %vm3507, %v12347, %v12354
  %s12388 = scalar_lea.vmem %s1, 128
  %v12389 = vld [vmem:[%s12388] sm:$0xf]
  %v12390 = vld [vmem:[%s12388 + $0x4] sm:$0xf]
  %v12391 = vld [vmem:[%s12388 + $0x8] sm:$0xf]
  %v12392 = vld [vmem:[%s12388 + $0xc] sm:$0xf]
  %v12393 = vld [vmem:[%s12388 + $0x10] sm:$0xf]
  %v12394 = vld [vmem:[%s12388 + $0x14] sm:$0xf]
  %v12395 = vld [vmem:[%s12388 + $0x18] sm:$0xf]
  %v12396 = vld [vmem:[%s12388 + $0x1c] sm:$0xf]
  %v12397 = vld [vmem:[%s12388 + $0x20] sm:$0xf]
  %v12398 = vld [vmem:[%s12388 + $0x24] sm:$0xf]
  %v12399 = vld [vmem:[%s12388 + $0x28] sm:$0xf]
  %v12400 = vld [vmem:[%s12388 + $0x2c] sm:$0xf]
  %v12401 = vld [vmem:[%s12388 + $0x30] sm:$0xf]
  %v12402 = vld [vmem:[%s12388 + $0x34] sm:$0xf]
  %v12403 = vld [vmem:[%s12388 + $0x38] sm:$0xf]
  %v12404 = vld [vmem:[%s12388 + $0x3c] sm:$0xf]
  %s12405 = scalar_lea.vmem %s2, 2
  %v12406 = vld [vmem:[%s12405] sm:$0x1]
  %v12408 = vlaneseq
  %v12409 = vshrl.u32 %v12408, 7
  %v12410 = vsub.s32 0, %v12409
  %v12411 = vrot.slane %v12406, %v12410
  %v12429 = vunpack.c.l.b16 %v12389
  %v12430 = vunpack.c.l.b16 %v12390
  %v12431 = vunpack.c.l.b16 %v12391
  %v12432 = vunpack.c.l.b16 %v12392
  %v12433 = vunpack.c.l.b16 %v12393
  %v12434 = vunpack.c.l.b16 %v12394
  %v12435 = vunpack.c.l.b16 %v12395
  %v12436 = vunpack.c.l.b16 %v12396
  %v12437 = vunpack.c.l.b16 %v12397
  %v12438 = vunpack.c.l.b16 %v12398
  %v12439 = vunpack.c.l.b16 %v12399
  %v12440 = vunpack.c.l.b16 %v12400
  %v12441 = vunpack.c.l.b16 %v12401
  %v12442 = vunpack.c.l.b16 %v12402
  %v12443 = vunpack.c.l.b16 %v12403
  %v12444 = vunpack.c.l.b16 %v12404
  %v12445 = vpack.c.b16 %v12430, %v12429
  %v12446 = vpack.c.b16 %v12432, %v12431
  %v12447 = vpack.c.b16 %v12434, %v12433
  %v12448 = vpack.c.b16 %v12436, %v12435
  %v12449 = vpack.c.b16 %v12438, %v12437
  %v12450 = vpack.c.b16 %v12440, %v12439
  %v12451 = vpack.c.b16 %v12442, %v12441
  %v12452 = vpack.c.b16 %v12444, %v12443
  %12461 = vmatprep.subr.bf16.mxu0 0
  %12462 = vmatpush1.bf16.msra.mxu0 %v12445
  %12463 = vmatprep.subr.bf16.mxu0 0
  %12464 = vmatpush1.bf16.msra.mxu0 %v12446
  %12465 = vmatprep.subr.bf16.mxu0 0
  %12466 = vmatpush1.bf16.msra.mxu0 %v12447
  %12467 = vmatprep.subr.bf16.mxu0 0
  %12468 = vmatpush1.bf16.msra.mxu0 %v12448
  %12469 = vmatprep.subr.bf16.mxu0 0
  %12470 = vmatpush1.bf16.msra.mxu0 %v12449
  %12471 = vmatprep.subr.bf16.mxu0 0
  %12472 = vmatpush1.bf16.msra.mxu0 %v12450
  %12473 = vmatprep.subr.bf16.mxu0 0
  %12474 = vmatpush1.bf16.msra.mxu0 %v12451
  %12475 = vmatprep.subr.bf16.mxu0 0
  %12476 = vmatpush1.bf16.msra.mxu0 %v12452
  %12477 = vmatprep.subr.bf16.mxu0 0
  %12478 = vmatpush1.bf16.msra.mxu0 0
  %12479 = vmatprep.subr.bf16.mxu0 0
  %12480 = vmatpush1.bf16.msra.mxu0 0
  %12481 = vmatprep.subr.bf16.mxu0 0
  %12482 = vmatpush1.bf16.msra.mxu0 0
  %12483 = vmatprep.subr.bf16.mxu0 0
  %12484 = vmatpush1.bf16.msra.mxu0 0
  %12485 = vmatprep.subr.bf16.mxu0 0
  %12486 = vmatpush1.bf16.msra.mxu0 0
  %12487 = vmatprep.subr.bf16.mxu0 0
  %12488 = vmatpush1.bf16.msra.mxu0 0
  %12489 = vmatprep.subr.bf16.mxu0 0
  %12490 = vmatpush1.bf16.msra.mxu0 0
  %12491 = vmatprep.subr.bf16.mxu0 0
  %12492 = vmatpush1.bf16.msra.mxu0 0
  %12493 = vmatprep.mubr.bf16.mxu0 0
  %12494 = vmatmul.mubr.bf16.gmra.mrb[0].mxu0 %v11890
  %v12495 = vpop.f32.mrb[0].mxu0
  %v12496 = vadd.f32 %v12411, %v12495
  %v12497 = vpop.f32.mrb[0].mxu0
  %v12498 = vpop.f32.mrb[0].mxu0
  %v12499 = vadd.f32 %v12411, %v12498
  %v12500 = vpop.f32.mrb[0].mxu0
  %12501 = vmatprep.mubr.bf16.mxu0 0
  %12502 = vmatmul.mubr.bf16.gmra.mrb[0].mxu0 %v11905
  %v12503 = vpop.f32.mrb[0].mxu0
  %v12504 = vadd.f32 %v12411, %v12503
  %v12505 = vpop.f32.mrb[0].mxu0
  %v12506 = vpop.f32.mrb[0].mxu0
  %v12507 = vadd.f32 %v12411, %v12506
  %v12508 = vpop.f32.mrb[0].mxu0
  %12509 = vmatprep.mubr.bf16.mxu0 0
  %12510 = vmatmul.mubr.bf16.gmra.mrb[0].mxu0 %v11920
  %v12511 = vpop.f32.mrb[0].mxu0
  %v12512 = vadd.f32 %v12411, %v12511
  %v12513 = vpop.f32.mrb[0].mxu0
  %v12514 = vpop.f32.mrb[0].mxu0
  %v12515 = vadd.f32 %v12411, %v12514
  %v12516 = vpop.f32.mrb[0].mxu0
  %12517 = vmatprep.mubr.bf16.mxu0 0
  %12518 = vmatmul.mubr.bf16.gmra.mrb[0].mxu0 %v11935
  %v12519 = vpop.f32.mrb[0].mxu0
  %v12520 = vadd.f32 %v12411, %v12519
  %v12521 = vpop.f32.mrb[0].mxu0
  %v12522 = vpop.f32.mrb[0].mxu0
  %v12523 = vadd.f32 %v12411, %v12522
  %v12524 = vpop.f32.mrb[0].mxu0
  %12525 = vmatprep.mubr.bf16.mxu0 0
  %12526 = vmatmul.mubr.bf16.gmra.mrb[0].mxu0 %v11950
  %v12527 = vpop.f32.mrb[0].mxu0
  %v12528 = vadd.f32 %v12411, %v12527
  %v12529 = vpop.f32.mrb[0].mxu0
  %v12530 = vpop.f32.mrb[0].mxu0
  %v12531 = vadd.f32 %v12411, %v12530
  %v12532 = vpop.f32.mrb[0].mxu0
  %12533 = vmatprep.mubr.bf16.mxu0 0
  %12534 = vmatmul.mubr.bf16.gmra.mrb[0].mxu0 %v11965
  %v12535 = vpop.f32.mrb[0].mxu0
  %v12536 = vadd.f32 %v12411, %v12535
  %v12537 = vpop.f32.mrb[0].mxu0
  %v12538 = vpop.f32.mrb[0].mxu0
  %v12539 = vadd.f32 %v12411, %v12538
  %v12540 = vpop.f32.mrb[0].mxu0
  %12541 = vmatprep.mubr.bf16.mxu0 0
  %12542 = vmatmul.mubr.bf16.gmra.mrb[0].mxu0 %v11980
  %v12543 = vpop.f32.mrb[0].mxu0
  %v12544 = vadd.f32 %v12411, %v12543
  %v12545 = vpop.f32.mrb[0].mxu0
  %v12546 = vpop.f32.mrb[0].mxu0
  %v12547 = vadd.f32 %v12411, %v12546
  %v12548 = vpop.f32.mrb[0].mxu0
  %12549 = vmatprep.mubr.bf16.mxu0 0
  %12550 = vmatmul.mubr.bf16.gmra.mrb[0].mxu0 %v11995
  %v12551 = vpop.f32.mrb[0].mxu0
  %v12552 = vadd.f32 %v12411, %v12551
  %v12553 = vpop.f32.mrb[0].mxu0
  %v12554 = vpop.f32.mrb[0].mxu0
  %v12555 = vadd.f32 %v12411, %v12554
  %v12556 = vpop.f32.mrb[0].mxu0
  %12557 = vmatprep.mubr.bf16.mxu0 0
  %12558 = vmatmul.mubr.bf16.gmra.mrb[0].mxu0 %v12010
  %v12559 = vpop.f32.mrb[0].mxu0
  %v12560 = vadd.f32 %v12411, %v12559
  %v12561 = vpop.f32.mrb[0].mxu0
  %v12562 = vpop.f32.mrb[0].mxu0
  %v12563 = vadd.f32 %v12411, %v12562
  %v12564 = vpop.f32.mrb[0].mxu0
  %12565 = vmatprep.mubr.bf16.mxu0 0
  %12566 = vmatmul.mubr.bf16.gmra.mrb[0].mxu0 %v12025
  %v12567 = vpop.f32.mrb[0].mxu0
  %v12568 = vadd.f32 %v12411, %v12567
  %v12569 = vpop.f32.mrb[0].mxu0
  %v12570 = vpop.f32.mrb[0].mxu0
  %v12571 = vadd.f32 %v12411, %v12570
  %v12572 = vpop.f32.mrb[0].mxu0
  %12573 = vmatprep.mubr.bf16.mxu0 0
  %12574 = vmatmul.mubr.bf16.gmra.mrb[0].mxu0 %v12040
  %v12575 = vpop.f32.mrb[0].mxu0
  %v12576 = vadd.f32 %v12411, %v12575
  %v12577 = vpop.f32.mrb[0].mxu0
  %v12578 = vpop.f32.mrb[0].mxu0
  %v12579 = vadd.f32 %v12411, %v12578
  %v12580 = vpop.f32.mrb[0].mxu0
  %12581 = vmatprep.mubr.bf16.mxu0 0
  %12582 = vmatmul.mubr.bf16.gmra.mrb[0].mxu0 %v12055
  %v12583 = vpop.f32.mrb[0].mxu0
  %v12584 = vadd.f32 %v12411, %v12583
  %v12585 = vpop.f32.mrb[0].mxu0
  %v12586 = vpop.f32.mrb[0].mxu0
  %v12587 = vadd.f32 %v12411, %v12586
  %v12588 = vpop.f32.mrb[0].mxu0
  %12589 = vmatprep.mubr.bf16.mxu0 0
  %12590 = vmatmul.mubr.bf16.gmra.mrb[0].mxu0 %v12070
  %v12591 = vpop.f32.mrb[0].mxu0
  %v12592 = vadd.f32 %v12411, %v12591
  %v12593 = vpop.f32.mrb[0].mxu0
  %v12594 = vpop.f32.mrb[0].mxu0
  %v12595 = vadd.f32 %v12411, %v12594
  %v12596 = vpop.f32.mrb[0].mxu0
  %12597 = vmatprep.mubr.bf16.mxu0 0
  %12598 = vmatmul.mubr.bf16.gmra.mrb[0].mxu0 %v12085
  %v12599 = vpop.f32.mrb[0].mxu0
  %v12600 = vadd.f32 %v12411, %v12599
  %v12601 = vpop.f32.mrb[0].mxu0
  %v12602 = vpop.f32.mrb[0].mxu0
  %v12603 = vadd.f32 %v12411, %v12602
  %v12604 = vpop.f32.mrb[0].mxu0
  %12605 = vmatprep.mubr.bf16.mxu0 0
  %12606 = vmatmul.mubr.bf16.gmra.mrb[0].mxu0 %v12100
  %v12607 = vpop.f32.mrb[0].mxu0
  %v12608 = vadd.f32 %v12411, %v12607
  %v12609 = vpop.f32.mrb[0].mxu0
  %v12610 = vpop.f32.mrb[0].mxu0
  %v12611 = vadd.f32 %v12411, %v12610
  %v12612 = vpop.f32.mrb[0].mxu0
  %12613 = vmatprep.mubr.bf16.mxu0 0
  %12614 = vmatmul.mubr.bf16.gmra.mrb[0].mxu0 %v12115
  %v12615 = vpop.f32.mrb[0].mxu0
  %v12616 = vadd.f32 %v12411, %v12615
  %v12617 = vpop.f32.mrb[0].mxu0
  %v12618 = vpop.f32.mrb[0].mxu0
  %v12619 = vadd.f32 %v12411, %v12618
  %v12620 = vpop.f32.mrb[0].mxu0
  %12621 = vmatprep.mubr.bf16.mxu0 0
  %12622 = vmatmul.mubr.bf16.gmra.mrb[0].mxu0 %v12130
  %v12623 = vpop.f32.mrb[0].mxu0
  %v12624 = vadd.f32 %v12411, %v12623
  %v12625 = vpop.f32.mrb[0].mxu0
  %v12626 = vpop.f32.mrb[0].mxu0
  %v12627 = vadd.f32 %v12411, %v12626
  %v12628 = vpop.f32.mrb[0].mxu0
  %12629 = vmatprep.mubr.bf16.mxu0 0
  %12630 = vmatmul.mubr.bf16.gmra.mrb[0].mxu0 %v12145
  %v12631 = vpop.f32.mrb[0].mxu0
  %v12632 = vadd.f32 %v12411, %v12631
  %v12633 = vpop.f32.mrb[0].mxu0
  %v12634 = vpop.f32.mrb[0].mxu0
  %v12635 = vadd.f32 %v12411, %v12634
  %v12636 = vpop.f32.mrb[0].mxu0
  %12637 = vmatprep.mubr.bf16.mxu0 0
  %12638 = vmatmul.mubr.bf16.gmra.mrb[0].mxu0 %v12160
  %v12639 = vpop.f32.mrb[0].mxu0
  %v12640 = vadd.f32 %v12411, %v12639
  %v12641 = vpop.f32.mrb[0].mxu0
  %v12642 = vpop.f32.mrb[0].mxu0
  %v12643 = vadd.f32 %v12411, %v12642
  %v12644 = vpop.f32.mrb[0].mxu0
  %12645 = vmatprep.mubr.bf16.mxu0 0
  %12646 = vmatmul.mubr.bf16.gmra.mrb[0].mxu0 %v12175
  %v12647 = vpop.f32.mrb[0].mxu0
  %v12648 = vadd.f32 %v12411, %v12647
  %v12649 = vpop.f32.mrb[0].mxu0
  %v12650 = vpop.f32.mrb[0].mxu0
  %v12651 = vadd.f32 %v12411, %v12650
  %v12652 = vpop.f32.mrb[0].mxu0
  %12653 = vmatprep.mubr.bf16.mxu0 0
  %12654 = vmatmul.mubr.bf16.gmra.mrb[0].mxu0 %v12190
  %v12655 = vpop.f32.mrb[0].mxu0
  %v12656 = vadd.f32 %v12411, %v12655
  %v12657 = vpop.f32.mrb[0].mxu0
  %v12658 = vpop.f32.mrb[0].mxu0
  %v12659 = vadd.f32 %v12411, %v12658
  %v12660 = vpop.f32.mrb[0].mxu0
  %12661 = vmatprep.mubr.bf16.mxu0 0
  %12662 = vmatmul.mubr.bf16.gmra.mrb[0].mxu0 %v12205
  %v12663 = vpop.f32.mrb[0].mxu0
  %v12664 = vadd.f32 %v12411, %v12663
  %v12665 = vpop.f32.mrb[0].mxu0
  %v12666 = vpop.f32.mrb[0].mxu0
  %v12667 = vadd.f32 %v12411, %v12666
  %v12668 = vpop.f32.mrb[0].mxu0
  %12669 = vmatprep.mubr.bf16.mxu0 0
  %12670 = vmatmul.mubr.bf16.gmra.mrb[0].mxu0 %v12220
  %v12671 = vpop.f32.mrb[0].mxu0
  %v12672 = vadd.f32 %v12411, %v12671
  %v12673 = vpop.f32.mrb[0].mxu0
  %v12674 = vpop.f32.mrb[0].mxu0
  %v12675 = vadd.f32 %v12411, %v12674
  %v12676 = vpop.f32.mrb[0].mxu0
  %12677 = vmatprep.mubr.bf16.mxu0 0
  %12678 = vmatmul.mubr.bf16.gmra.mrb[0].mxu0 %v12235
  %v12679 = vpop.f32.mrb[0].mxu0
  %v12680 = vadd.f32 %v12411, %v12679
  %v12681 = vpop.f32.mrb[0].mxu0
  %v12682 = vpop.f32.mrb[0].mxu0
  %v12683 = vadd.f32 %v12411, %v12682
  %v12684 = vpop.f32.mrb[0].mxu0
  %12685 = vmatprep.mubr.bf16.mxu0 0
  %12686 = vmatmul.mubr.bf16.gmra.mrb[0].mxu0 %v12250
  %v12687 = vpop.f32.mrb[0].mxu0
  %v12688 = vadd.f32 %v12411, %v12687
  %v12689 = vpop.f32.mrb[0].mxu0
  %v12690 = vpop.f32.mrb[0].mxu0
  %v12691 = vadd.f32 %v12411, %v12690
  %v12692 = vpop.f32.mrb[0].mxu0
  %12693 = vmatprep.mubr.bf16.mxu0 0
  %12694 = vmatmul.mubr.bf16.gmra.mrb[0].mxu0 %v12265
  %v12695 = vpop.f32.mrb[0].mxu0
  %v12696 = vadd.f32 %v12411, %v12695
  %v12697 = vpop.f32.mrb[0].mxu0
  %v12698 = vpop.f32.mrb[0].mxu0
  %v12699 = vadd.f32 %v12411, %v12698
  %v12700 = vpop.f32.mrb[0].mxu0
  %12701 = vmatprep.mubr.bf16.mxu0 0
  %12702 = vmatmul.mubr.bf16.gmra.mrb[0].mxu0 %v12280
  %v12703 = vpop.f32.mrb[0].mxu0
  %v12704 = vadd.f32 %v12411, %v12703
  %v12705 = vpop.f32.mrb[0].mxu0
  %v12706 = vpop.f32.mrb[0].mxu0
  %v12707 = vadd.f32 %v12411, %v12706
  %v12708 = vpop.f32.mrb[0].mxu0
  %12709 = vmatprep.mubr.bf16.mxu0 0
  %12710 = vmatmul.mubr.bf16.gmra.mrb[0].mxu0 %v12295
  %v12711 = vpop.f32.mrb[0].mxu0
  %v12712 = vadd.f32 %v12411, %v12711
  %v12713 = vpop.f32.mrb[0].mxu0
  %v12714 = vpop.f32.mrb[0].mxu0
  %v12715 = vadd.f32 %v12411, %v12714
  %v12716 = vpop.f32.mrb[0].mxu0
  %12717 = vmatprep.mubr.bf16.mxu0 0
  %12718 = vmatmul.mubr.bf16.gmra.mrb[0].mxu0 %v12310
  %v12719 = vpop.f32.mrb[0].mxu0
  %v12720 = vadd.f32 %v12411, %v12719
  %v12721 = vpop.f32.mrb[0].mxu0
  %v12722 = vpop.f32.mrb[0].mxu0
  %v12723 = vadd.f32 %v12411, %v12722
  %v12724 = vpop.f32.mrb[0].mxu0
  %12725 = vmatprep.mubr.bf16.mxu0 0
  %12726 = vmatmul.mubr.bf16.gmra.mrb[0].mxu0 %v12325
  %v12727 = vpop.f32.mrb[0].mxu0
  %v12728 = vadd.f32 %v12411, %v12727
  %v12729 = vpop.f32.mrb[0].mxu0
  %v12730 = vpop.f32.mrb[0].mxu0
  %v12731 = vadd.f32 %v12411, %v12730
  %v12732 = vpop.f32.mrb[0].mxu0
  %12733 = vmatprep.mubr.bf16.mxu0 0
  %12734 = vmatmul.mubr.bf16.gmra.mrb[0].mxu0 %v12340
  %v12735 = vpop.f32.mrb[0].mxu0
  %v12736 = vadd.f32 %v12411, %v12735
  %v12737 = vpop.f32.mrb[0].mxu0
  %v12738 = vpop.f32.mrb[0].mxu0
  %v12739 = vadd.f32 %v12411, %v12738
  %v12740 = vpop.f32.mrb[0].mxu0
  %12741 = vmatprep.mubr.bf16.mxu0 0
  %12742 = vmatmul.mubr.bf16.gmra.mrb[0].mxu0 %v12355
  %v12743 = vpop.f32.mrb[0].mxu0
  %v12744 = vadd.f32 %v12411, %v12743
  %v12745 = vpop.f32.mrb[0].mxu0
  %v12746 = vpop.f32.mrb[0].mxu0
  %v12747 = vadd.f32 %v12411, %v12746
  %v12748 = vpop.f32.mrb[0].mxu0
  %12749 = vdwg.mxu0
  %v12750 = vmax.f32 %v12496, 0.0
  %v12751 = vmax.f32 %v12499, 0.0
  %v12752 = vmax.f32 %v12504, 0.0
  %v12753 = vmax.f32 %v12507, 0.0
  %v12754 = vmax.f32 %v12512, 0.0
  %v12755 = vmax.f32 %v12515, 0.0
  %v12756 = vmax.f32 %v12520, 0.0
  %v12757 = vmax.f32 %v12523, 0.0
  %v12758 = vmax.f32 %v12528, 0.0
  %v12759 = vmax.f32 %v12531, 0.0
  %v12760 = vmax.f32 %v12536, 0.0
  %v12761 = vmax.f32 %v12539, 0.0
  %v12762 = vmax.f32 %v12544, 0.0
  %v12763 = vmax.f32 %v12547, 0.0
  %v12764 = vmax.f32 %v12552, 0.0
  %v12765 = vmax.f32 %v12555, 0.0
  %v12766 = vmax.f32 %v12560, 0.0
  %v12767 = vmax.f32 %v12563, 0.0
  %v12768 = vmax.f32 %v12568, 0.0
  %v12769 = vmax.f32 %v12571, 0.0
  %v12770 = vmax.f32 %v12576, 0.0
  %v12771 = vmax.f32 %v12579, 0.0
  %v12772 = vmax.f32 %v12584, 0.0
  %v12773 = vmax.f32 %v12587, 0.0
  %v12774 = vmax.f32 %v12592, 0.0
  %v12775 = vmax.f32 %v12595, 0.0
  %v12776 = vmax.f32 %v12600, 0.0
  %v12777 = vmax.f32 %v12603, 0.0
  %v12778 = vmax.f32 %v12608, 0.0
  %v12779 = vmax.f32 %v12611, 0.0
  %v12780 = vmax.f32 %v12616, 0.0
  %v12781 = vmax.f32 %v12619, 0.0
  %v12782 = vmax.f32 %v12624, 0.0
  %v12783 = vmax.f32 %v12627, 0.0
  %v12784 = vmax.f32 %v12632, 0.0
  %v12785 = vmax.f32 %v12635, 0.0
  %v12786 = vmax.f32 %v12640, 0.0
  %v12787 = vmax.f32 %v12643, 0.0
  %v12788 = vmax.f32 %v12648, 0.0
  %v12789 = vmax.f32 %v12651, 0.0
  %v12790 = vmax.f32 %v12656, 0.0
  %v12791 = vmax.f32 %v12659, 0.0
  %v12792 = vmax.f32 %v12664, 0.0
  %v12793 = vmax.f32 %v12667, 0.0
  %v12794 = vmax.f32 %v12672, 0.0
  %v12795 = vmax.f32 %v12675, 0.0
  %v12796 = vmax.f32 %v12680, 0.0
  %v12797 = vmax.f32 %v12683, 0.0
  %v12798 = vmax.f32 %v12688, 0.0
  %v12799 = vmax.f32 %v12691, 0.0
  %v12800 = vmax.f32 %v12696, 0.0
  %v12801 = vmax.f32 %v12699, 0.0
  %v12802 = vmax.f32 %v12704, 0.0
  %v12803 = vmax.f32 %v12707, 0.0
  %v12804 = vmax.f32 %v12712, 0.0
  %v12805 = vmax.f32 %v12715, 0.0
  %v12806 = vmax.f32 %v12720, 0.0
  %v12807 = vmax.f32 %v12723, 0.0
  %v12808 = vmax.f32 %v12728, 0.0
  %v12809 = vmax.f32 %v12731, 0.0
  %v12810 = vmax.f32 %v12736, 0.0
  %v12811 = vmax.f32 %v12739, 0.0
  %v12812 = vmax.f32 %v12744, 0.0
  %v12813 = vmax.f32 %v12747, 0.0
  %v12814 = vmin.f32 %v12750, 255.0
  %v12815 = vmin.f32 %v12751, 255.0
  %v12816 = vmin.f32 %v12752, 255.0
  %v12817 = vmin.f32 %v12753, 255.0
  %v12818 = vmin.f32 %v12754, 255.0
  %v12819 = vmin.f32 %v12755, 255.0
  %v12820 = vmin.f32 %v12756, 255.0
  %v12821 = vmin.f32 %v12757, 255.0
  %v12822 = vmin.f32 %v12758, 255.0
  %v12823 = vmin.f32 %v12759, 255.0
  %v12824 = vmin.f32 %v12760, 255.0
  %v12825 = vmin.f32 %v12761, 255.0
  %v12826 = vmin.f32 %v12762, 255.0
  %v12827 = vmin.f32 %v12763, 255.0
  %v12828 = vmin.f32 %v12764, 255.0
  %v12829 = vmin.f32 %v12765, 255.0
  %v12830 = vmin.f32 %v12766, 255.0
  %v12831 = vmin.f32 %v12767, 255.0
  %v12832 = vmin.f32 %v12768, 255.0
  %v12833 = vmin.f32 %v12769, 255.0
  %v12834 = vmin.f32 %v12770, 255.0
  %v12835 = vmin.f32 %v12771, 255.0
  %v12836 = vmin.f32 %v12772, 255.0
  %v12837 = vmin.f32 %v12773, 255.0
  %v12838 = vmin.f32 %v12774, 255.0
  %v12839 = vmin.f32 %v12775, 255.0
  %v12840 = vmin.f32 %v12776, 255.0
  %v12841 = vmin.f32 %v12777, 255.0
  %v12842 = vmin.f32 %v12778, 255.0
  %v12843 = vmin.f32 %v12779, 255.0
  %v12844 = vmin.f32 %v12780, 255.0
  %v12845 = vmin.f32 %v12781, 255.0
  %v12846 = vmin.f32 %v12782, 255.0
  %v12847 = vmin.f32 %v12783, 255.0
  %v12848 = vmin.f32 %v12784, 255.0
  %v12849 = vmin.f32 %v12785, 255.0
  %v12850 = vmin.f32 %v12786, 255.0
  %v12851 = vmin.f32 %v12787, 255.0
  %v12852 = vmin.f32 %v12788, 255.0
  %v12853 = vmin.f32 %v12789, 255.0
  %v12854 = vmin.f32 %v12790, 255.0
  %v12855 = vmin.f32 %v12791, 255.0
  %v12856 = vmin.f32 %v12792, 255.0
  %v12857 = vmin.f32 %v12793, 255.0
  %v12858 = vmin.f32 %v12794, 255.0
  %v12859 = vmin.f32 %v12795, 255.0
  %v12860 = vmin.f32 %v12796, 255.0
  %v12861 = vmin.f32 %v12797, 255.0
  %v12862 = vmin.f32 %v12798, 255.0
  %v12863 = vmin.f32 %v12799, 255.0
  %v12864 = vmin.f32 %v12800, 255.0
  %v12865 = vmin.f32 %v12801, 255.0
  %v12866 = vmin.f32 %v12802, 255.0
  %v12867 = vmin.f32 %v12803, 255.0
  %v12868 = vmin.f32 %v12804, 255.0
  %v12869 = vmin.f32 %v12805, 255.0
  %v12870 = vmin.f32 %v12806, 255.0
  %v12871 = vmin.f32 %v12807, 255.0
  %v12872 = vmin.f32 %v12808, 255.0
  %v12873 = vmin.f32 %v12809, 255.0
  %v12874 = vmin.f32 %v12810, 255.0
  %v12875 = vmin.f32 %v12811, 255.0
  %v12876 = vmin.f32 %v12812, 255.0
  %v12877 = vmin.f32 %v12813, 255.0
  %12878 = vst [vmem:[%s3] sm:$0xff] %v12814
  %12879 = vst [vmem:[%s3 + $0x8] sm:$0xff] %v12815
  %12880 = vst [vmem:[%s3 + $0x10] sm:$0xff] %v12816
  %12881 = vst [vmem:[%s3 + $0x18] sm:$0xff] %v12817
  %12882 = vst [vmem:[%s3 + $0x20] sm:$0xff] %v12818
  %12883 = vst [vmem:[%s3 + $0x28] sm:$0xff] %v12819
  %12884 = vst [vmem:[%s3 + $0x30] sm:$0xff] %v12820
  %12885 = vst [vmem:[%s3 + $0x38] sm:$0xff] %v12821
  %12886 = vst [vmem:[%s3 + $0x40] sm:$0xff] %v12822
  %12887 = vst [vmem:[%s3 + $0x48] sm:$0xff] %v12823
  %12888 = vst [vmem:[%s3 + $0x50] sm:$0xff] %v12824
  %12889 = vst [vmem:[%s3 + $0x58] sm:$0xff] %v12825
  %12890 = vst [vmem:[%s3 + $0x60] sm:$0xff] %v12826
  %12891 = vst [vmem:[%s3 + $0x68] sm:$0xff] %v12827
  %12892 = vst [vmem:[%s3 + $0x70] sm:$0xff] %v12828
  %12893 = vst [vmem:[%s3 + $0x78] sm:$0xff] %v12829
  %12894 = vst [vmem:[%s3 + $0x80] sm:$0xff] %v12830
  %12895 = vst [vmem:[%s3 + $0x88] sm:$0xff] %v12831
  %12896 = vst [vmem:[%s3 + $0x90] sm:$0xff] %v12832
  %12897 = vst [vmem:[%s3 + $0x98] sm:$0xff] %v12833
  %12898 = vst [vmem:[%s3 + $0xa0] sm:$0xff] %v12834
  %12899 = vst [vmem:[%s3 + $0xa8] sm:$0xff] %v12835
  %12900 = vst [vmem:[%s3 + $0xb0] sm:$0xff] %v12836
  %12901 = vst [vmem:[%s3 + $0xb8] sm:$0xff] %v12837
  %12902 = vst [vmem:[%s3 + $0xc0] sm:$0xff] %v12838
  %12903 = vst [vmem:[%s3 + $0xc8] sm:$0xff] %v12839
  %12904 = vst [vmem:[%s3 + $0xd0] sm:$0xff] %v12840
  %12905 = vst [vmem:[%s3 + $0xd8] sm:$0xff] %v12841
  %12906 = vst [vmem:[%s3 + $0xe0] sm:$0xff] %v12842
  %12907 = vst [vmem:[%s3 + $0xe8] sm:$0xff] %v12843
  %12908 = vst [vmem:[%s3 + $0xf0] sm:$0xff] %v12844
  %12909 = vst [vmem:[%s3 + $0xf8] sm:$0xff] %v12845
  %12910 = vst [vmem:[%s3 + $0x100] sm:$0xff] %v12846
  %12911 = vst [vmem:[%s3 + $0x108] sm:$0xff] %v12847
  %12912 = vst [vmem:[%s3 + $0x110] sm:$0xff] %v12848
  %12913 = vst [vmem:[%s3 + $0x118] sm:$0xff] %v12849
  %12914 = vst [vmem:[%s3 + $0x120] sm:$0xff] %v12850
  %12915 = vst [vmem:[%s3 + $0x128] sm:$0xff] %v12851
  %12916 = vst [vmem:[%s3 + $0x130] sm:$0xff] %v12852
  %12917 = vst [vmem:[%s3 + $0x138] sm:$0xff] %v12853
  %12918 = vst [vmem:[%s3 + $0x140] sm:$0xff] %v12854
  %12919 = vst [vmem:[%s3 + $0x148] sm:$0xff] %v12855
  %12920 = vst [vmem:[%s3 + $0x150] sm:$0xff] %v12856
  %12921 = vst [vmem:[%s3 + $0x158] sm:$0xff] %v12857
  %12922 = vst [vmem:[%s3 + $0x160] sm:$0xff] %v12858
  %12923 = vst [vmem:[%s3 + $0x168] sm:$0xff] %v12859
  %12924 = vst [vmem:[%s3 + $0x170] sm:$0xff] %v12860
  %12925 = vst [vmem:[%s3 + $0x178] sm:$0xff] %v12861
  %12926 = vst [vmem:[%s3 + $0x180] sm:$0xff] %v12862
  %12927 = vst [vmem:[%s3 + $0x188] sm:$0xff] %v12863
  %12928 = vst [vmem:[%s3 + $0x190] sm:$0xff] %v12864
  %12929 = vst [vmem:[%s3 + $0x198] sm:$0xff] %v12865
  %12930 = vst [vmem:[%s3 + $0x1a0] sm:$0xff] %v12866
  %12931 = vst [vmem:[%s3 + $0x1a8] sm:$0xff] %v12867
  %12932 = vst [vmem:[%s3 + $0x1b0] sm:$0xff] %v12868
  %12933 = vst [vmem:[%s3 + $0x1b8] sm:$0xff] %v12869
  %12934 = vst [vmem:[%s3 + $0x1c0] sm:$0xff] %v12870
  %12935 = vst [vmem:[%s3 + $0x1c8] sm:$0xff] %v12871
  %12936 = vst [vmem:[%s3 + $0x1d0] sm:$0xff] %v12872
  %12937 = vst [vmem:[%s3 + $0x1d8] sm:$0xff] %v12873
  %12938 = vst [vmem:[%s3 + $0x1e0] sm:$0xff] %v12874
  %12939 = vst [vmem:[%s3 + $0x1e8] sm:$0xff] %v12875
  %12940 = vst [vmem:[%s3 + $0x1f0] sm:$0xff] %v12876
  %12941 = vst [vmem:[%s3 + $0x1f8] sm:$0xff] %v12877
  // Predicated region
  $region14: #{image_pixel_predictor.1} parent=0 // pred_check
    _
  $region15: #{image_pixel_predictor.1} parent=0 // pred_check_branch
    %12943 = sbr.rel (0) target = $region17
  $region16: #{image_pixel_predictor.1} parent=0 // pred_region
    _
  $region17: #{image_pixel_predictor.1} parent=0 // pred_fallthru
    _
  // Predicated region
  $region18: #{image_pixel_predictor.1} parent=0 // pred_check
    _
  $region19: #{image_pixel_predictor.1} parent=0 // pred_check_branch
    %12945 = sbr.rel (0) target = $region21
  $region20: #{image_pixel_predictor.1} parent=0 // pred_region
    _
  $region21: #{image_pixel_predictor.1} parent=0 // pred_fallthru
    _

</llo_original>
